<compile_context>
chip_gen: v6e
topology: v6e:2x2x1
jax: 0.10.0
libtpu: 0.0.40
codegen_flags: <defaults>
</compile_context>

<pallas_src>
import functools

import jax
import jax.numpy as jnp
import numpy as np
from jax.experimental import pallas as pl
from jax.experimental.pallas import tpu as pltpu

_EPS = 1e-5
_VMEM = pl.BlockSpec(memory_space=pltpu.MemorySpace.VMEM)
_ANY = pl.BlockSpec(memory_space=pl.ANY)


def _bn_relu_train(y, gamma, beta):
    """Training-mode BatchNorm (batch stats over rows, biased var) + ReLU.

    Single pass: var = max(E[y^2] - mean^2, 0), scale/offset folded into one
    FMA.  y: (rows, C) float32; statistics stay in f32.
    """
    mean = jnp.mean(y, axis=0, keepdims=True)
    var = jnp.maximum(jnp.mean(y * y, axis=0, keepdims=True) - mean * mean, 0.0)
    scale = gamma * jax.lax.rsqrt(var + _EPS)
    return jnp.maximum(y * scale + (beta - mean * scale), 0.0)


# ---------------------------------------------------------------------------
# Fused kernel: entire forward pass.
# ---------------------------------------------------------------------------
def _fused_kernel(H, W, halo,
                  masks_ref, x_ref, w1_ref, w2_hbm_ref, w3_hbm_ref,
                  headw_ref, pfcw_ref, vfc1w_ref, bnp_ref, vslab_ref,
                  policy_ref, value_ref,
                  w2_vmem, w3_vmem, dma_sem, halo_ref):
    R = x_ref.shape[0]            # B * H * W rows, ordered (b, y, x)
    HW = H * W
    B = R // HW
    num_moves = policy_ref.shape[1]
    lane_c = halo_ref.shape[1]
    # tap t = (dy, dx) in {0,1,2}^2 reads input row r + shift_t
    shifts = [((t // 3) - 1) * W + ((t % 3) - 1) for t in range(9)]

    # Kick off the layer-2 / layer-3 weight DMAs immediately so they overlap
    # with the layer-1 conv + BN compute (no grid => no auto-pipelining).
    cp2 = pltpu.make_async_copy(w2_hbm_ref, w2_vmem, dma_sem.at[0])
    cp3 = pltpu.make_async_copy(w3_hbm_ref, w3_vmem, dma_sem.at[1])
    cp2.start()
    cp3.start()

    # Zero only the halo bands; interior rows are fully overwritten per layer,
    # and the halo rows provide conv zero padding for all three layers.
    halo_ref[0:halo, :] = jnp.zeros((halo, lane_c), jnp.float32)
    halo_ref[halo + R:R + 2 * halo, :] = jnp.zeros((halo, lane_c), jnp.float32)

    masks = masks_ref[...]                                   # (R, 9) f32

    def conv3x3_bn_relu(x, w_tap, gamma, beta, cout):
        # x: (R, Cin) f32; w_tap(t) -> (Cin, Cout) bf16 weight for tap t.
        cin = x.shape[1]
        halo_ref[halo:halo + R, :cin] = x                    # aligned interior store
        y = jnp.zeros((R, cout), jnp.float32)
        for t in range(9):
            s = shifts[t]
            xt = halo_ref[halo + s:halo + s + R, :cin]       # row r sees input r+s
            if s != 0:
                # kill image-border / batch-block-border rows for this tap
                xt = xt * masks[:, t:t + 1]
            y = y + jnp.dot(xt.astype(jnp.bfloat16), w_tap(t),
                            preferred_element_type=jnp.float32)
        # conv bias skipped on purpose: cancelled by training-mode BN.
        return _bn_relu_train(y, gamma, beta)

    cin1 = x_ref.shape[1]
    w1 = w1_ref[...]                                          # (9*Cin, 128) bf16, tiny
    h = conv3x3_bn_relu(x_ref[...], lambda t: w1[t * cin1:(t + 1) * cin1, :],
                        bnp_ref[0:1, :], bnp_ref[1:2, :], 128)
    cp2.wait()
    h = conv3x3_bn_relu(h, lambda t: w2_vmem[t * 128:(t + 1) * 128, :],
                        bnp_ref[2:3, :], bnp_ref[3:4, :], 128)
    cp3.wait()
    h = conv3x3_bn_relu(h, lambda t: w3_vmem[t * 128:(t + 1) * 128, :],
                        bnp_ref[4:5, :], bnp_ref[5:6, :], 128)

    # ---- heads: fused 1x1 convs (policy 2ch + value 1ch), BN + ReLU --------
    # Per-channel BN on the combined 3 columns == separate policy/value BN.
    hv = jnp.dot(h.astype(jnp.bfloat16), headw_ref[...],
                 preferred_element_type=jnp.float32)          # (R, 3)
    row6 = bnp_ref[6:7, :]
    hv = _bn_relu_train(hv, row6[:, 0:3], row6[:, 3:6])

    wp0 = pfcw_ref[0:HW, :]                                   # (HW, M) channel-0 rows
    wp1 = pfcw_ref[HW:2 * HW, :]                              # (HW, M) channel-1 rows
    vfc1w = vfc1w_ref[...]                                    # (HW, 256)
    vfc1_b = vslab_ref[0:1, :]                                # (1, 256)
    vfc2_row = vslab_ref[1:2, :]                              # (1, 256) == vfc2_w.T
    vfc2_b = row6[:, 6:7]                                     # (1, 1)
    pfc_b = bnp_ref[7:8, 0:num_moves]                         # (1, M)

    # Policy / value heads: per-batch broadcast-multiply + reductions.  The
    # NCHW flatten is realised implicitly by the (channel, pixel) split above.
    for b in range(B):
        lo = b * HW
        p0 = hv[lo:lo + HW, 0:1]                              # (HW, 1)
        p1 = hv[lo:lo + HW, 1:2]
        vf = hv[lo:lo + HW, 2:3]
        tmp = p0 * wp0 + p1 * wp1                             # (HW, M)
        policy_ref[b:b + 1, :] = jnp.sum(tmp, axis=0, keepdims=True) + pfc_b
        h1 = jnp.maximum(jnp.sum(vf * vfc1w, axis=0, keepdims=True) + vfc1_b,
                         0.0)                                 # (1, 256)
        v = jnp.sum(h1 * vfc2_row, axis=1, keepdims=True) + vfc2_b
        value_ref[b:b + 1, :] = jnp.tanh(v)


# ---------------------------------------------------------------------------
# Wrapper
# ---------------------------------------------------------------------------
def alphazero_forward(x_nchw, kp):
    B, Cin, H, W = x_nchw.shape
    HW = H * W
    R = B * HW
    halo = max(8, -(-(W + 1) // 8) * 8)    # sublane-aligned halo >= max |shift|
    lane_c = max(128, Cin)
    num_moves = kp["pfcw"].shape[1]

    # Host-built compile-time constant: per-tap validity masks.
    r = np.arange(R)
    yy, xx = (r % HW) // W, r % W
    masks = np.empty((R, 9), np.float32)
    for t in range(9):
        dy, dx = t // 3 - 1, t % 3 - 1
        masks[:, t] = ((yy + dy >= 0) & (yy + dy < H) &
                       (xx + dx >= 0) & (xx + dx < W))

    # NCHW -> row-major (b, y, x) x channel matrix (boundary layout only).
    x_rows = jnp.transpose(x_nchw, (0, 2, 3, 1)).reshape(R, Cin).astype(jnp.float32)

    kernel = functools.partial(_fused_kernel, H, W, halo)
    policy, value = pl.pallas_call(
        kernel,
        out_shape=(jax.ShapeDtypeStruct((B, num_moves), jnp.float32),
                   jax.ShapeDtypeStruct((B, 1), jnp.float32)),
        in_specs=[_VMEM, _VMEM, _VMEM, _ANY, _ANY,
                  _VMEM, _VMEM, _VMEM, _VMEM, _VMEM],
        out_specs=(_VMEM, _VMEM),
        scratch_shapes=[
            pltpu.VMEM(kp["w2"].shape, jnp.bfloat16),          # w2 landing buffer
            pltpu.VMEM(kp["w3"].shape, jnp.bfloat16),          # w3 landing buffer
            pltpu.SemaphoreType.DMA((2,)),
            pltpu.VMEM((R + 2 * halo, lane_c), jnp.float32),   # row-halo scratch
        ],
    )(jnp.asarray(masks), x_rows,
      kp["w1"], kp["w2"], kp["w3"],
      kp["headw"], kp["pfcw"], kp["vfc1w"], kp["bnp"], kp["vslab"])
    return policy, value


# ---------------------------------------------------------------------------
# One-time host-side packing / casting into the kernel's input format.
# ---------------------------------------------------------------------------
def prepare_kernel_params(params):
    num_moves = params["pfc_w"].shape[1]
    assert num_moves <= 128, "packed pfc_b slab assumes num_moves <= 128"

    bnp = jnp.zeros((8, 128), jnp.float32)
    bnp = bnp.at[0, :].set(params["g1"][0])
    bnp = bnp.at[1, :].set(params["bt1"][0])
    bnp = bnp.at[2, :].set(params["g2"][0])
    bnp = bnp.at[3, :].set(params["bt2"][0])
    bnp = bnp.at[4, :].set(params["g3"][0])
    bnp = bnp.at[5, :].set(params["bt3"][0])
    bnp = bnp.at[6, 0:2].set(params["pg"][0])          # head gamma: [pg0, pg1, vg]
    bnp = bnp.at[6, 2].set(params["vg"][0, 0])
    bnp = bnp.at[6, 3:5].set(params["pbt"][0])         # head beta:  [pbt0, pbt1, vbt]
    bnp = bnp.at[6, 5].set(params["vbt"][0, 0])
    bnp = bnp.at[6, 6].set(params["vfc2_b"][0, 0])
    bnp = bnp.at[7, 0:num_moves].set(params["pfc_b"][0])

    vslab = jnp.concatenate(
        [params["vfc1_b"], params["vfc2_w"].reshape(1, -1)], axis=0)  # (2, 256)

    return {
        "w1": params["w1"].astype(jnp.bfloat16),
        "w2": params["w2"].astype(jnp.bfloat16),
        "w3": params["w3"].astype(jnp.bfloat16),
        "headw": jnp.concatenate([params["pw"], params["vw"]],
                                 axis=1).astype(jnp.bfloat16),        # (128, 3)
        "pfcw": params["pfc_w"].astype(jnp.float32),
        "vfc1w": params["vfc1_w"].astype(jnp.float32),
        "bnp": bnp,
        "vslab": vslab.astype(jnp.float32),
    }


# ---------------------------------------------------------------------------
# Deterministic parameter init (shapes follow AlphaZeroNet.__init__)
#   conv weights tap-major as (9*Cin, Cout); 1x1 / FC weights as (in, out);
#   pfc_w rows are in PyTorch NCHW-flatten order (c*H*W + y*W + x).
#   Weights that the kernel stores in bf16 are rounded to bf16 here so the
#   f32 reference and the kernel share identical weight values.
# ---------------------------------------------------------------------------
def init_params(key, input_channels, num_moves, H=8, W=8):
    ks = jax.random.split(key, 26)

    def nrm(k, shape, scale=0.1, bf16_round=False):
        w = (scale * jax.random.normal(k, shape)).astype(jnp.float32)
        if bf16_round:
            w = w.astype(jnp.bfloat16).astype(jnp.float32)
        return w

    HW = H * W
    p = {}
    p["w1"] = nrm(ks[0], (9 * input_channels, 128), bf16_round=True)
    p["b1"] = nrm(ks[1], (1, 128), 0.05)
    p["g1"], p["bt1"] = 1.0 + nrm(ks[2], (1, 128), 0.05), nrm(ks[3], (1, 128), 0.05)
    p["w2"] = nrm(ks[4], (9 * 128, 128), 0.05, bf16_round=True)
    p["b2"] = nrm(ks[5], (1, 128), 0.05)
    p["g2"], p["bt2"] = 1.0 + nrm(ks[6], (1, 128), 0.05), nrm(ks[7], (1, 128), 0.05)
    p["w3"] = nrm(ks[8], (9 * 128, 128), 0.05, bf16_round=True)
    p["b3"] = nrm(ks[9], (1, 128), 0.05)
    p["g3"], p["bt3"] = 1.0 + nrm(ks[10], (1, 128), 0.05), nrm(ks[11], (1, 128), 0.05)
    p["pw"] = nrm(ks[12], (128, 2), bf16_round=True)
    p["pb"] = nrm(ks[13], (1, 2), 0.05)
    p["pg"], p["pbt"] = 1.0 + nrm(ks[14], (1, 2), 0.05), nrm(ks[15], (1, 2), 0.05)
    p["pfc_w"], p["pfc_b"] = nrm(ks[16], (2 * HW, num_moves)), nrm(ks[17], (1, num_moves), 0.05)
    p["vw"] = nrm(ks[18], (128, 1), bf16_round=True)
    p["vb"] = nrm(ks[19], (1, 1), 0.05)
    p["vg"], p["vbt"] = 1.0 + nrm(ks[20], (1, 1), 0.05), nrm(ks[21], (1, 1), 0.05)
    p["vfc1_w"], p["vfc1_b"] = nrm(ks[22], (HW, 256)), nrm(ks[23], (1, 256), 0.05)
    p["vfc2_w"], p["vfc2_b"] = nrm(ks[24], (256, 1)), nrm(ks[25], (1, 1), 0.05)
    return p


# ---------------------------------------------------------------------------
# Pure-JAX reference (mirrors the PyTorch forward: training-mode BN, conv
# biases included, NCHW flatten for the policy head). All f32.
# ---------------------------------------------------------------------------
def _ref_bn_relu(x, gamma, beta):
    mean = jnp.mean(x, axis=0, keepdims=True)
    var = jnp.mean(jnp.square(x - mean), axis=0, keepdims=True)
    return jnp.maximum((x - mean) * jax.lax.rsqrt(var + _EPS) * gamma + beta, 0.0)


def reference_forward(x_nchw, params):
    x = jnp.transpose(x_nchw, (0, 2, 3, 1)).astype(jnp.float32)

    def conv_bn_relu(h, w_flat, b, g, bt):
        Cin = h.shape[-1]
        w = w_flat.reshape(3, 3, Cin, -1)
        y = jax.lax.conv_general_dilated(
            h, w, window_strides=(1, 1), padding="SAME",
            dimension_numbers=("NHWC", "HWIO", "NHWC"),
            precision=jax.lax.Precision.HIGHEST) + b.reshape(1, 1, 1, -1)
        B, H, W, C = y.shape
        return _ref_bn_relu(y.reshape(B * H * W, C), g, bt).reshape(B, H, W, C)

    h = conv_bn_relu(x, params["w1"], params["b1"], params["g1"], params["bt1"])
    h = conv_bn_relu(h, params["w2"], params["b2"], params["g2"], params["bt2"])
    h = conv_bn_relu(h, params["w3"], params["b3"], params["g3"], params["bt3"])
    B, H, W, C = h.shape
    hf = h.reshape(B * H * W, C)

    pf = _ref_bn_relu(hf @ params["pw"] + params["pb"], params["pg"], params["pbt"])
    p_nchw = jnp.transpose(pf.reshape(B, H, W, 2), (0, 3, 1, 2)).reshape(B, -1)
    policy = p_nchw @ params["pfc_w"] + params["pfc_b"]

    vf = _ref_bn_relu(hf @ params["vw"] + params["vb"], params["vg"], params["vbt"])
    v_flat = vf.reshape(B, H * W)
    h1 = jnp.maximum(v_flat @ params["vfc1_w"] + params["vfc1_b"], 0.0)
    value = jnp.tanh(h1 @ params["vfc2_w"] + params["vfc2_b"])
    return policy, value


if __name__ == "__main__":
    key = jax.random.PRNGKey(0)
    input_channels, num_moves = 4, 32
    B, H, W = 2, 8, 8   # policy_fc (2*8*8) and value_fc1 (8*8) imply an 8x8 board

    kx, kp_key = jax.random.split(key)
    x = jax.random.normal(kx, (B, input_channels, H, W), dtype=jnp.float32)
    params = init_params(kp_key, input_channels, num_moves, H, W)
    kparams = prepare_kernel_params(params)      # one-time host-side packing

    policy, value = jax.block_until_ready(jax.jit(alphazero_forward)(x, kparams))

    ref_p, ref_v = reference_forward(x, params)
    np.testing.assert_allclose(np.asarray(policy), np.asarray(ref_p), rtol=2e-2, atol=2e-2)
    np.testing.assert_allclose(np.asarray(value), np.asarray(ref_v), rtol=2e-2, atol=2e-2)
    assert policy.shape == (B, num_moves) and value.shape == (B, 1)
    print("KERNEL_OK")
</pallas_src>

<mosaic_0001>
module attributes {stable_mosaic.version = 11 : i64} {
  func.func @_fused_kernel(%arg0: memref<128x9xf32, #tpu.memory_space<vmem>>, %arg1: memref<128x4xf32, #tpu.memory_space<vmem>>, %arg2: memref<36x128xbf16, #tpu.memory_space<vmem>>, %arg3: memref<1152x128xbf16, #tpu.memory_space<any>>, %arg4: memref<1152x128xbf16, #tpu.memory_space<any>>, %arg5: memref<128x3xbf16, #tpu.memory_space<vmem>>, %arg6: memref<128x32xf32, #tpu.memory_space<vmem>>, %arg7: memref<64x256xf32, #tpu.memory_space<vmem>>, %arg8: memref<8x128xf32, #tpu.memory_space<vmem>>, %arg9: memref<2x256xf32, #tpu.memory_space<vmem>>, %arg10: memref<2x32xf32, #tpu.memory_space<vmem>>, %arg11: memref<2x1xf32, #tpu.memory_space<vmem>>, %arg12: memref<1152x128xbf16, #tpu.memory_space<vmem>>, %arg13: memref<1152x128xbf16, #tpu.memory_space<vmem>>, %arg14: memref<2x!tpu.dma_semaphore, #tpu.memory_space<semaphore_mem>>, %arg15: memref<160x128xf32, #tpu.memory_space<vmem>>) attributes {dimension_semantics = [], scalar_prefetch = 0 : i64, scratch_operands = 4 : i64, tpu.core_type = #tpu.core_type<tc>} {
    %c0_i32 = arith.constant 0 : i32
    %0 = tpu.memref_slice %arg14[%c0_i32] : memref<2x!tpu.dma_semaphore, #tpu.memory_space<semaphore_mem>> -> memref<1x!tpu.dma_semaphore, #tpu.memory_space<semaphore_mem>>
    %1 = tpu.memref_squeeze %0 : memref<1x!tpu.dma_semaphore, #tpu.memory_space<semaphore_mem>> -> memref<!tpu.dma_semaphore, #tpu.memory_space<semaphore_mem>>
    tpu.enqueue_dma source(%arg3 : memref<1152x128xbf16, #tpu.memory_space<any>>) target(%arg12 : memref<1152x128xbf16, #tpu.memory_space<vmem>>) target_semaphore(%1 : memref<!tpu.dma_semaphore, #tpu.memory_space<semaphore_mem>>)
    %c1_i32 = arith.constant 1 : i32
    %2 = tpu.memref_slice %arg14[%c1_i32] : memref<2x!tpu.dma_semaphore, #tpu.memory_space<semaphore_mem>> -> memref<1x!tpu.dma_semaphore, #tpu.memory_space<semaphore_mem>>
    %3 = tpu.memref_squeeze %2 : memref<1x!tpu.dma_semaphore, #tpu.memory_space<semaphore_mem>> -> memref<!tpu.dma_semaphore, #tpu.memory_space<semaphore_mem>>
    tpu.enqueue_dma source(%arg4 : memref<1152x128xbf16, #tpu.memory_space<any>>) target(%arg13 : memref<1152x128xbf16, #tpu.memory_space<vmem>>) target_semaphore(%3 : memref<!tpu.dma_semaphore, #tpu.memory_space<semaphore_mem>>)
    %cst = arith.constant 0.000000e+00 : f32
    %4 = vector.broadcast %cst : f32 to vector<16x128xf32>
    %c0 = arith.constant 0 : index
    %c0_0 = arith.constant 0 : index
    %5 = vector.load %arg15[%c0, %c0_0] : memref<160x128xf32, #tpu.memory_space<vmem>>, vector<16x128xf32>
    tpu.vector_store %arg15[%c0, %c0_0], %4 {strides = array<i32>} : memref<160x128xf32, #tpu.memory_space<vmem>>, vector<16x128xf32>,
    %cst_1 = arith.constant 0.000000e+00 : f32
    %6 = vector.broadcast %cst_1 : f32 to vector<16x128xf32>
    %c144 = arith.constant 144 : index
    %c0_2 = arith.constant 0 : index
    %7 = vector.load %arg15[%c144, %c0_2] : memref<160x128xf32, #tpu.memory_space<vmem>>, vector<16x128xf32>
    tpu.vector_store %arg15[%c144, %c0_2], %6 {strides = array<i32>} : memref<160x128xf32, #tpu.memory_space<vmem>>, vector<16x128xf32>,
    %c0_3 = arith.constant 0 : index
    %c0_4 = arith.constant 0 : index
    %8 = vector.load %arg0[%c0_3, %c0_4] : memref<128x9xf32, #tpu.memory_space<vmem>>, vector<128x9xf32>
    %c0_5 = arith.constant 0 : index
    %c0_6 = arith.constant 0 : index
    %9 = vector.load %arg2[%c0_5, %c0_6] : memref<36x128xbf16, #tpu.memory_space<vmem>>, vector<36x128xbf16>
    %c0_7 = arith.constant 0 : index
    %c0_8 = arith.constant 0 : index
    %10 = vector.load %arg1[%c0_7, %c0_8] : memref<128x4xf32, #tpu.memory_space<vmem>>, vector<128x4xf32>
    %c0_9 = arith.constant 0 : index
    %c0_10 = arith.constant 0 : index
    %11 = vector.load %arg8[%c0_9, %c0_10] : memref<8x128xf32, #tpu.memory_space<vmem>>, vector<1x128xf32>
    %c1 = arith.constant 1 : index
    %c0_11 = arith.constant 0 : index
    %12 = vector.load %arg8[%c1, %c0_11] : memref<8x128xf32, #tpu.memory_space<vmem>>, vector<1x128xf32>
    %c16 = arith.constant 16 : index
    %c0_12 = arith.constant 0 : index
    %13 = vector.load %arg15[%c16, %c0_12] : memref<160x128xf32, #tpu.memory_space<vmem>>, vector<128x4xf32>
    tpu.vector_store %arg15[%c16, %c0_12], %10 {strides = array<i32>} : memref<160x128xf32, #tpu.memory_space<vmem>>, vector<128x4xf32>,
    %cst_13 = arith.constant 0.000000e+00 : f32
    %14 = vector.broadcast %cst_13 : f32 to vector<128x128xf32>
    %c7 = arith.constant 7 : index
    %c0_14 = arith.constant 0 : index
    %15 = vector.load %arg15[%c7, %c0_14] : memref<160x128xf32, #tpu.memory_space<vmem>>, vector<128x4xf32>
    %16 = vector.extract_strided_slice %8 {offsets = [0, 0], sizes = [128, 1], strides = [1, 1]} : vector<128x9xf32> to vector<128x1xf32>
    %17 = vector.broadcast %16 : vector<128x1xf32> to vector<128x4xf32>
    %18 = arith.mulf %15, %17 : vector<128x4xf32>
    %19 = arith.truncf %18 : vector<128x4xf32> to vector<128x4xbf16>
    %20 = vector.extract_strided_slice %9 {offsets = [0, 0], sizes = [4, 128], strides = [1, 1]} : vector<36x128xbf16> to vector<4x128xbf16>
    %cst_15 = arith.constant dense<0.000000e+00> : vector<128x128xf32>
    %21 = tpu.matmul %19, %20, %cst_15 {dimension_numbers = #tpu.dot_dimension_numbers<[1], [0], [0], [1], [0, 0, 1, 1], [], []>} : vector<128x4xbf16>, vector<4x128xbf16>, vector<128x128xf32> -> vector<128x128xf32>
    %22 = arith.addf %14, %21 : vector<128x128xf32>
    %c8 = arith.constant 8 : index
    %c0_16 = arith.constant 0 : index
    %23 = vector.load %arg15[%c8, %c0_16] : memref<160x128xf32, #tpu.memory_space<vmem>>, vector<128x4xf32>
    %24 = vector.extract_strided_slice %8 {offsets = [0, 1], sizes = [128, 1], strides = [1, 1]} : vector<128x9xf32> to vector<128x1xf32>
    %25 = vector.broadcast %24 : vector<128x1xf32> to vector<128x4xf32>
    %26 = arith.mulf %23, %25 : vector<128x4xf32>
    %27 = arith.truncf %26 : vector<128x4xf32> to vector<128x4xbf16>
    %28 = vector.extract_strided_slice %9 {offsets = [4, 0], sizes = [4, 128], strides = [1, 1]} : vector<36x128xbf16> to vector<4x128xbf16>
    %cst_17 = arith.constant dense<0.000000e+00> : vector<128x128xf32>
    %29 = tpu.matmul %27, %28, %cst_17 {dimension_numbers = #tpu.dot_dimension_numbers<[1], [0], [0], [1], [0, 0, 1, 1], [], []>} : vector<128x4xbf16>, vector<4x128xbf16>, vector<128x128xf32> -> vector<128x128xf32>
    %30 = arith.addf %22, %29 : vector<128x128xf32>
    %c9 = arith.constant 9 : index
    %c0_18 = arith.constant 0 : index
    %31 = vector.load %arg15[%c9, %c0_18] : memref<160x128xf32, #tpu.memory_space<vmem>>, vector<128x4xf32>
    %32 = vector.extract_strided_slice %8 {offsets = [0, 2], sizes = [128, 1], strides = [1, 1]} : vector<128x9xf32> to vector<128x1xf32>
    %33 = vector.broadcast %32 : vector<128x1xf32> to vector<128x4xf32>
    %34 = arith.mulf %31, %33 : vector<128x4xf32>
    %35 = arith.truncf %34 : vector<128x4xf32> to vector<128x4xbf16>
    %36 = vector.extract_strided_slice %9 {offsets = [8, 0], sizes = [4, 128], strides = [1, 1]} : vector<36x128xbf16> to vector<4x128xbf16>
    %cst_19 = arith.constant dense<0.000000e+00> : vector<128x128xf32>
    %37 = tpu.matmul %35, %36, %cst_19 {dimension_numbers = #tpu.dot_dimension_numbers<[1], [0], [0], [1], [0, 0, 1, 1], [], []>} : vector<128x4xbf16>, vector<4x128xbf16>, vector<128x128xf32> -> vector<128x128xf32>
    %38 = arith.addf %30, %37 : vector<128x128xf32>
    %c15 = arith.constant 15 : index
    %c0_20 = arith.constant 0 : index
    %39 = vector.load %arg15[%c15, %c0_20] : memref<160x128xf32, #tpu.memory_space<vmem>>, vector<128x4xf32>
    %40 = vector.extract_strided_slice %8 {offsets = [0, 3], sizes = [128, 1], strides = [1, 1]} : vector<128x9xf32> to vector<128x1xf32>
    %41 = vector.broadcast %40 : vector<128x1xf32> to vector<128x4xf32>
    %42 = arith.mulf %39, %41 : vector<128x4xf32>
    %43 = arith.truncf %42 : vector<128x4xf32> to vector<128x4xbf16>
    %44 = vector.extract_strided_slice %9 {offsets = [12, 0], sizes = [4, 128], strides = [1, 1]} : vector<36x128xbf16> to vector<4x128xbf16>
    %cst_21 = arith.constant dense<0.000000e+00> : vector<128x128xf32>
    %45 = tpu.matmul %43, %44, %cst_21 {dimension_numbers = #tpu.dot_dimension_numbers<[1], [0], [0], [1], [0, 0, 1, 1], [], []>} : vector<128x4xbf16>, vector<4x128xbf16>, vector<128x128xf32> -> vector<128x128xf32>
    %46 = arith.addf %38, %45 : vector<128x128xf32>
    %c16_22 = arith.constant 16 : index
    %c0_23 = arith.constant 0 : index
    %47 = vector.load %arg15[%c16_22, %c0_23] : memref<160x128xf32, #tpu.memory_space<vmem>>, vector<128x4xf32>
    %48 = arith.truncf %47 : vector<128x4xf32> to vector<128x4xbf16>
    %49 = vector.extract_strided_slice %9 {offsets = [16, 0], sizes = [4, 128], strides = [1, 1]} : vector<36x128xbf16> to vector<4x128xbf16>
    %cst_24 = arith.constant dense<0.000000e+00> : vector<128x128xf32>
    %50 = tpu.matmul %48, %49, %cst_24 {dimension_numbers = #tpu.dot_dimension_numbers<[1], [0], [0], [1], [0, 0, 1, 1], [], []>} : vector<128x4xbf16>, vector<4x128xbf16>, vector<128x128xf32> -> vector<128x128xf32>
    %51 = arith.addf %46, %50 : vector<128x128xf32>
    %c17 = arith.constant 17 : index
    %c0_25 = arith.constant 0 : index
    %52 = vector.load %arg15[%c17, %c0_25] : memref<160x128xf32, #tpu.memory_space<vmem>>, vector<128x4xf32>
    %53 = vector.extract_strided_slice %8 {offsets = [0, 5], sizes = [128, 1], strides = [1, 1]} : vector<128x9xf32> to vector<128x1xf32>
    %54 = vector.broadcast %53 : vector<128x1xf32> to vector<128x4xf32>
    %55 = arith.mulf %52, %54 : vector<128x4xf32>
    %56 = arith.truncf %55 : vector<128x4xf32> to vector<128x4xbf16>
    %57 = vector.extract_strided_slice %9 {offsets = [20, 0], sizes = [4, 128], strides = [1, 1]} : vector<36x128xbf16> to vector<4x128xbf16>
    %cst_26 = arith.constant dense<0.000000e+00> : vector<128x128xf32>
    %58 = tpu.matmul %56, %57, %cst_26 {dimension_numbers = #tpu.dot_dimension_numbers<[1], [0], [0], [1], [0, 0, 1, 1], [], []>} : vector<128x4xbf16>, vector<4x128xbf16>, vector<128x128xf32> -> vector<128x128xf32>
    %59 = arith.addf %51, %58 : vector<128x128xf32>
    %c23 = arith.constant 23 : index
    %c0_27 = arith.constant 0 : index
    %60 = vector.load %arg15[%c23, %c0_27] : memref<160x128xf32, #tpu.memory_space<vmem>>, vector<128x4xf32>
    %61 = vector.extract_strided_slice %8 {offsets = [0, 6], sizes = [128, 1], strides = [1, 1]} : vector<128x9xf32> to vector<128x1xf32>
    %62 = vector.broadcast %61 : vector<128x1xf32> to vector<128x4xf32>
    %63 = arith.mulf %60, %62 : vector<128x4xf32>
    %64 = arith.truncf %63 : vector<128x4xf32> to vector<128x4xbf16>
    %65 = vector.extract_strided_slice %9 {offsets = [24, 0], sizes = [4, 128], strides = [1, 1]} : vector<36x128xbf16> to vector<4x128xbf16>
    %cst_28 = arith.constant dense<0.000000e+00> : vector<128x128xf32>
    %66 = tpu.matmul %64, %65, %cst_28 {dimension_numbers = #tpu.dot_dimension_numbers<[1], [0], [0], [1], [0, 0, 1, 1], [], []>} : vector<128x4xbf16>, vector<4x128xbf16>, vector<128x128xf32> -> vector<128x128xf32>
    %67 = arith.addf %59, %66 : vector<128x128xf32>
    %c24 = arith.constant 24 : index
    %c0_29 = arith.constant 0 : index
    %68 = vector.load %arg15[%c24, %c0_29] : memref<160x128xf32, #tpu.memory_space<vmem>>, vector<128x4xf32>
    %69 = vector.extract_strided_slice %8 {offsets = [0, 7], sizes = [128, 1], strides = [1, 1]} : vector<128x9xf32> to vector<128x1xf32>
    %70 = vector.broadcast %69 : vector<128x1xf32> to vector<128x4xf32>
    %71 = arith.mulf %68, %70 : vector<128x4xf32>
    %72 = arith.truncf %71 : vector<128x4xf32> to vector<128x4xbf16>
    %73 = vector.extract_strided_slice %9 {offsets = [28, 0], sizes = [4, 128], strides = [1, 1]} : vector<36x128xbf16> to vector<4x128xbf16>
    %cst_30 = arith.constant dense<0.000000e+00> : vector<128x128xf32>
    %74 = tpu.matmul %72, %73, %cst_30 {dimension_numbers = #tpu.dot_dimension_numbers<[1], [0], [0], [1], [0, 0, 1, 1], [], []>} : vector<128x4xbf16>, vector<4x128xbf16>, vector<128x128xf32> -> vector<128x128xf32>
    %75 = arith.addf %67, %74 : vector<128x128xf32>
    %c25 = arith.constant 25 : index
    %c0_31 = arith.constant 0 : index
    %76 = vector.load %arg15[%c25, %c0_31] : memref<160x128xf32, #tpu.memory_space<vmem>>, vector<128x4xf32>
    %77 = vector.extract_strided_slice %8 {offsets = [0, 8], sizes = [128, 1], strides = [1, 1]} : vector<128x9xf32> to vector<128x1xf32>
    %78 = vector.broadcast %77 : vector<128x1xf32> to vector<128x4xf32>
    %79 = arith.mulf %76, %78 : vector<128x4xf32>
    %80 = arith.truncf %79 : vector<128x4xf32> to vector<128x4xbf16>
    %81 = vector.extract_strided_slice %9 {offsets = [32, 0], sizes = [4, 128], strides = [1, 1]} : vector<36x128xbf16> to vector<4x128xbf16>
    %cst_32 = arith.constant dense<0.000000e+00> : vector<128x128xf32>
    %82 = tpu.matmul %80, %81, %cst_32 {dimension_numbers = #tpu.dot_dimension_numbers<[1], [0], [0], [1], [0, 0, 1, 1], [], []>} : vector<128x4xbf16>, vector<4x128xbf16>, vector<128x128xf32> -> vector<128x128xf32>
    %83 = arith.addf %75, %82 : vector<128x128xf32>
    %cst_33 = arith.constant dense<0.000000e+00> : vector<128xf32>
    %84 = vector.multi_reduction <add>, %83, %cst_33 [0] : vector<128x128xf32> to vector<128xf32>
    %85 = vector.shape_cast %84 : vector<128xf32> to vector<1x128xf32>
    %cst_34 = arith.constant 1.280000e+02 : f32
    %86 = vector.broadcast %cst_34 : f32 to vector<1x128xf32>
    %87 = arith.divf %85, %86 : vector<1x128xf32>
    %88 = arith.mulf %83, %83 : vector<128x128xf32>
    %cst_35 = arith.constant dense<0.000000e+00> : vector<128xf32>
    %89 = vector.multi_reduction <add>, %88, %cst_35 [0] : vector<128x128xf32> to vector<128xf32>
    %90 = vector.shape_cast %89 : vector<128xf32> to vector<1x128xf32>
    %cst_36 = arith.constant 1.280000e+02 : f32
    %91 = vector.broadcast %cst_36 : f32 to vector<1x128xf32>
    %92 = arith.divf %90, %91 : vector<1x128xf32>
    %93 = arith.mulf %87, %87 : vector<1x128xf32>
    %94 = arith.subf %92, %93 : vector<1x128xf32>
    %cst_37 = arith.constant 0.000000e+00 : f32
    %95 = vector.broadcast %cst_37 : f32 to vector<1x128xf32>
    %96 = arith.maximumf %94, %95 : vector<1x128xf32>
    %cst_38 = arith.constant 9.99999974E-6 : f32
    %97 = vector.broadcast %cst_38 : f32 to vector<1x128xf32>
    %98 = arith.addf %96, %97 : vector<1x128xf32>
    %99 = math.rsqrt %98 : vector<1x128xf32>
    %100 = arith.mulf %11, %99 : vector<1x128xf32>
    %101 = vector.broadcast %100 : vector<1x128xf32> to vector<128x128xf32>
    %102 = arith.mulf %83, %101 : vector<128x128xf32>
    %103 = arith.mulf %87, %100 : vector<1x128xf32>
    %104 = arith.subf %12, %103 : vector<1x128xf32>
    %105 = vector.broadcast %104 : vector<1x128xf32> to vector<128x128xf32>
    %106 = arith.addf %102, %105 : vector<128x128xf32>
    %cst_39 = arith.constant 0.000000e+00 : f32
    %107 = vector.broadcast %cst_39 : f32 to vector<128x128xf32>
    %108 = arith.maximumf %106, %107 : vector<128x128xf32>
    %c0_i32_40 = arith.constant 0 : i32
    %109 = tpu.memref_slice %arg14[%c0_i32_40] : memref<2x!tpu.dma_semaphore, #tpu.memory_space<semaphore_mem>> -> memref<1x!tpu.dma_semaphore, #tpu.memory_space<semaphore_mem>>
    %110 = tpu.memref_squeeze %109 : memref<1x!tpu.dma_semaphore, #tpu.memory_space<semaphore_mem>> -> memref<!tpu.dma_semaphore, #tpu.memory_space<semaphore_mem>>
    tpu.wait_dma2 semaphore(%110 : memref<!tpu.dma_semaphore, #tpu.memory_space<semaphore_mem>>) src(%arg3 : memref<1152x128xbf16, #tpu.memory_space<any>>) dst(%arg12 : memref<1152x128xbf16, #tpu.memory_space<vmem>>)
    %c2 = arith.constant 2 : index
    %c0_41 = arith.constant 0 : index
    %111 = vector.load %arg8[%c2, %c0_41] : memref<8x128xf32, #tpu.memory_space<vmem>>, vector<1x128xf32>
    %c3 = arith.constant 3 : index
    %c0_42 = arith.constant 0 : index
    %112 = vector.load %arg8[%c3, %c0_42] : memref<8x128xf32, #tpu.memory_space<vmem>>, vector<1x128xf32>
    %c16_43 = arith.constant 16 : index
    %c0_44 = arith.constant 0 : index
    %113 = vector.load %arg15[%c16_43, %c0_44] : memref<160x128xf32, #tpu.memory_space<vmem>>, vector<128x128xf32>
    tpu.vector_store %arg15[%c16_43, %c0_44], %108 {strides = array<i32>} : memref<160x128xf32, #tpu.memory_space<vmem>>, vector<128x128xf32>,
    %cst_45 = arith.constant 0.000000e+00 : f32
    %114 = vector.broadcast %cst_45 : f32 to vector<128x128xf32>
    %c7_46 = arith.constant 7 : index
    %c0_47 = arith.constant 0 : index
    %115 = vector.load %arg15[%c7_46, %c0_47] : memref<160x128xf32, #tpu.memory_space<vmem>>, vector<128x128xf32>
    %116 = vector.extract_strided_slice %8 {offsets = [0, 0], sizes = [128, 1], strides = [1, 1]} : vector<128x9xf32> to vector<128x1xf32>
    %117 = vector.broadcast %116 : vector<128x1xf32> to vector<128x128xf32>
    %118 = arith.mulf %115, %117 : vector<128x128xf32>
    %119 = arith.truncf %118 : vector<128x128xf32> to vector<128x128xbf16>
    %c0_48 = arith.constant 0 : index
    %c0_49 = arith.constant 0 : index
    %120 = vector.load %arg12[%c0_48, %c0_49] : memref<1152x128xbf16, #tpu.memory_space<vmem>>, vector<128x128xbf16>
    %cst_50 = arith.constant dense<0.000000e+00> : vector<128x128xf32>
    %121 = tpu.matmul %119, %120, %cst_50 {dimension_numbers = #tpu.dot_dimension_numbers<[1], [0], [0], [1], [0, 0, 1, 1], [], []>} : vector<128x128xbf16>, vector<128x128xbf16>, vector<128x128xf32> -> vector<128x128xf32>
    %122 = arith.addf %114, %121 : vector<128x128xf32>
    %c8_51 = arith.constant 8 : index
    %c0_52 = arith.constant 0 : index
    %123 = vector.load %arg15[%c8_51, %c0_52] : memref<160x128xf32, #tpu.memory_space<vmem>>, vector<128x128xf32>
    %124 = vector.extract_strided_slice %8 {offsets = [0, 1], sizes = [128, 1], strides = [1, 1]} : vector<128x9xf32> to vector<128x1xf32>
    %125 = vector.broadcast %124 : vector<128x1xf32> to vector<128x128xf32>
    %126 = arith.mulf %123, %125 : vector<128x128xf32>
    %127 = arith.truncf %126 : vector<128x128xf32> to vector<128x128xbf16>
    %c128 = arith.constant 128 : index
    %c0_53 = arith.constant 0 : index
    %128 = vector.load %arg12[%c128, %c0_53] : memref<1152x128xbf16, #tpu.memory_space<vmem>>, vector<128x128xbf16>
    %cst_54 = arith.constant dense<0.000000e+00> : vector<128x128xf32>
    %129 = tpu.matmul %127, %128, %cst_54 {dimension_numbers = #tpu.dot_dimension_numbers<[1], [0], [0], [1], [0, 0, 1, 1], [], []>} : vector<128x128xbf16>, vector<128x128xbf16>, vector<128x128xf32> -> vector<128x128xf32>
    %130 = arith.addf %122, %129 : vector<128x128xf32>
    %c9_55 = arith.constant 9 : index
    %c0_56 = arith.constant 0 : index
    %131 = vector.load %arg15[%c9_55, %c0_56] : memref<160x128xf32, #tpu.memory_space<vmem>>, vector<128x128xf32>
    %132 = vector.extract_strided_slice %8 {offsets = [0, 2], sizes = [128, 1], strides = [1, 1]} : vector<128x9xf32> to vector<128x1xf32>
    %133 = vector.broadcast %132 : vector<128x1xf32> to vector<128x128xf32>
    %134 = arith.mulf %131, %133 : vector<128x128xf32>
    %135 = arith.truncf %134 : vector<128x128xf32> to vector<128x128xbf16>
    %c256 = arith.constant 256 : index
    %c0_57 = arith.constant 0 : index
    %136 = vector.load %arg12[%c256, %c0_57] : memref<1152x128xbf16, #tpu.memory_space<vmem>>, vector<128x128xbf16>
    %cst_58 = arith.constant dense<0.000000e+00> : vector<128x128xf32>
    %137 = tpu.matmul %135, %136, %cst_58 {dimension_numbers = #tpu.dot_dimension_numbers<[1], [0], [0], [1], [0, 0, 1, 1], [], []>} : vector<128x128xbf16>, vector<128x128xbf16>, vector<128x128xf32> -> vector<128x128xf32>
    %138 = arith.addf %130, %137 : vector<128x128xf32>
    %c15_59 = arith.constant 15 : index
    %c0_60 = arith.constant 0 : index
    %139 = vector.load %arg15[%c15_59, %c0_60] : memref<160x128xf32, #tpu.memory_space<vmem>>, vector<128x128xf32>
    %140 = vector.extract_strided_slice %8 {offsets = [0, 3], sizes = [128, 1], strides = [1, 1]} : vector<128x9xf32> to vector<128x1xf32>
    %141 = vector.broadcast %140 : vector<128x1xf32> to vector<128x128xf32>
    %142 = arith.mulf %139, %141 : vector<128x128xf32>
    %143 = arith.truncf %142 : vector<128x128xf32> to vector<128x128xbf16>
    %c384 = arith.constant 384 : index
    %c0_61 = arith.constant 0 : index
    %144 = vector.load %arg12[%c384, %c0_61] : memref<1152x128xbf16, #tpu.memory_space<vmem>>, vector<128x128xbf16>
    %cst_62 = arith.constant dense<0.000000e+00> : vector<128x128xf32>
    %145 = tpu.matmul %143, %144, %cst_62 {dimension_numbers = #tpu.dot_dimension_numbers<[1], [0], [0], [1], [0, 0, 1, 1], [], []>} : vector<128x128xbf16>, vector<128x128xbf16>, vector<128x128xf32> -> vector<128x128xf32>
    %146 = arith.addf %138, %145 : vector<128x128xf32>
    %c16_63 = arith.constant 16 : index
    %c0_64 = arith.constant 0 : index
    %147 = vector.load %arg15[%c16_63, %c0_64] : memref<160x128xf32, #tpu.memory_space<vmem>>, vector<128x128xf32>
    %148 = arith.truncf %147 : vector<128x128xf32> to vector<128x128xbf16>
    %c512 = arith.constant 512 : index
    %c0_65 = arith.constant 0 : index
    %149 = vector.load %arg12[%c512, %c0_65] : memref<1152x128xbf16, #tpu.memory_space<vmem>>, vector<128x128xbf16>
    %cst_66 = arith.constant dense<0.000000e+00> : vector<128x128xf32>
    %150 = tpu.matmul %148, %149, %cst_66 {dimension_numbers = #tpu.dot_dimension_numbers<[1], [0], [0], [1], [0, 0, 1, 1], [], []>} : vector<128x128xbf16>, vector<128x128xbf16>, vector<128x128xf32> -> vector<128x128xf32>
    %151 = arith.addf %146, %150 : vector<128x128xf32>
    %c17_67 = arith.constant 17 : index
    %c0_68 = arith.constant 0 : index
    %152 = vector.load %arg15[%c17_67, %c0_68] : memref<160x128xf32, #tpu.memory_space<vmem>>, vector<128x128xf32>
    %153 = vector.extract_strided_slice %8 {offsets = [0, 5], sizes = [128, 1], strides = [1, 1]} : vector<128x9xf32> to vector<128x1xf32>
    %154 = vector.broadcast %153 : vector<128x1xf32> to vector<128x128xf32>
    %155 = arith.mulf %152, %154 : vector<128x128xf32>
    %156 = arith.truncf %155 : vector<128x128xf32> to vector<128x128xbf16>
    %c640 = arith.constant 640 : index
    %c0_69 = arith.constant 0 : index
    %157 = vector.load %arg12[%c640, %c0_69] : memref<1152x128xbf16, #tpu.memory_space<vmem>>, vector<128x128xbf16>
    %cst_70 = arith.constant dense<0.000000e+00> : vector<128x128xf32>
    %158 = tpu.matmul %156, %157, %cst_70 {dimension_numbers = #tpu.dot_dimension_numbers<[1], [0], [0], [1], [0, 0, 1, 1], [], []>} : vector<128x128xbf16>, vector<128x128xbf16>, vector<128x128xf32> -> vector<128x128xf32>
    %159 = arith.addf %151, %158 : vector<128x128xf32>
    %c23_71 = arith.constant 23 : index
    %c0_72 = arith.constant 0 : index
    %160 = vector.load %arg15[%c23_71, %c0_72] : memref<160x128xf32, #tpu.memory_space<vmem>>, vector<128x128xf32>
    %161 = vector.extract_strided_slice %8 {offsets = [0, 6], sizes = [128, 1], strides = [1, 1]} : vector<128x9xf32> to vector<128x1xf32>
    %162 = vector.broadcast %161 : vector<128x1xf32> to vector<128x128xf32>
    %163 = arith.mulf %160, %162 : vector<128x128xf32>
    %164 = arith.truncf %163 : vector<128x128xf32> to vector<128x128xbf16>
    %c768 = arith.constant 768 : index
    %c0_73 = arith.constant 0 : index
    %165 = vector.load %arg12[%c768, %c0_73] : memref<1152x128xbf16, #tpu.memory_space<vmem>>, vector<128x128xbf16>
    %cst_74 = arith.constant dense<0.000000e+00> : vector<128x128xf32>
    %166 = tpu.matmul %164, %165, %cst_74 {dimension_numbers = #tpu.dot_dimension_numbers<[1], [0], [0], [1], [0, 0, 1, 1], [], []>} : vector<128x128xbf16>, vector<128x128xbf16>, vector<128x128xf32> -> vector<128x128xf32>
    %167 = arith.addf %159, %166 : vector<128x128xf32>
    %c24_75 = arith.constant 24 : index
    %c0_76 = arith.constant 0 : index
    %168 = vector.load %arg15[%c24_75, %c0_76] : memref<160x128xf32, #tpu.memory_space<vmem>>, vector<128x128xf32>
    %169 = vector.extract_strided_slice %8 {offsets = [0, 7], sizes = [128, 1], strides = [1, 1]} : vector<128x9xf32> to vector<128x1xf32>
    %170 = vector.broadcast %169 : vector<128x1xf32> to vector<128x128xf32>
    %171 = arith.mulf %168, %170 : vector<128x128xf32>
    %172 = arith.truncf %171 : vector<128x128xf32> to vector<128x128xbf16>
    %c896 = arith.constant 896 : index
    %c0_77 = arith.constant 0 : index
    %173 = vector.load %arg12[%c896, %c0_77] : memref<1152x128xbf16, #tpu.memory_space<vmem>>, vector<128x128xbf16>
    %cst_78 = arith.constant dense<0.000000e+00> : vector<128x128xf32>
    %174 = tpu.matmul %172, %173, %cst_78 {dimension_numbers = #tpu.dot_dimension_numbers<[1], [0], [0], [1], [0, 0, 1, 1], [], []>} : vector<128x128xbf16>, vector<128x128xbf16>, vector<128x128xf32> -> vector<128x128xf32>
    %175 = arith.addf %167, %174 : vector<128x128xf32>
    %c25_79 = arith.constant 25 : index
    %c0_80 = arith.constant 0 : index
    %176 = vector.load %arg15[%c25_79, %c0_80] : memref<160x128xf32, #tpu.memory_space<vmem>>, vector<128x128xf32>
    %177 = vector.extract_strided_slice %8 {offsets = [0, 8], sizes = [128, 1], strides = [1, 1]} : vector<128x9xf32> to vector<128x1xf32>
    %178 = vector.broadcast %177 : vector<128x1xf32> to vector<128x128xf32>
    %179 = arith.mulf %176, %178 : vector<128x128xf32>
    %180 = arith.truncf %179 : vector<128x128xf32> to vector<128x128xbf16>
    %c1024 = arith.constant 1024 : index
    %c0_81 = arith.constant 0 : index
    %181 = vector.load %arg12[%c1024, %c0_81] : memref<1152x128xbf16, #tpu.memory_space<vmem>>, vector<128x128xbf16>
    %cst_82 = arith.constant dense<0.000000e+00> : vector<128x128xf32>
    %182 = tpu.matmul %180, %181, %cst_82 {dimension_numbers = #tpu.dot_dimension_numbers<[1], [0], [0], [1], [0, 0, 1, 1], [], []>} : vector<128x128xbf16>, vector<128x128xbf16>, vector<128x128xf32> -> vector<128x128xf32>
    %183 = arith.addf %175, %182 : vector<128x128xf32>
    %cst_83 = arith.constant dense<0.000000e+00> : vector<128xf32>
    %184 = vector.multi_reduction <add>, %183, %cst_83 [0] : vector<128x128xf32> to vector<128xf32>
    %185 = vector.shape_cast %184 : vector<128xf32> to vector<1x128xf32>
    %cst_84 = arith.constant 1.280000e+02 : f32
    %186 = vector.broadcast %cst_84 : f32 to vector<1x128xf32>
    %187 = arith.divf %185, %186 : vector<1x128xf32>
    %188 = arith.mulf %183, %183 : vector<128x128xf32>
    %cst_85 = arith.constant dense<0.000000e+00> : vector<128xf32>
    %189 = vector.multi_reduction <add>, %188, %cst_85 [0] : vector<128x128xf32> to vector<128xf32>
    %190 = vector.shape_cast %189 : vector<128xf32> to vector<1x128xf32>
    %cst_86 = arith.constant 1.280000e+02 : f32
    %191 = vector.broadcast %cst_86 : f32 to vector<1x128xf32>
    %192 = arith.divf %190, %191 : vector<1x128xf32>
    %193 = arith.mulf %187, %187 : vector<1x128xf32>
    %194 = arith.subf %192, %193 : vector<1x128xf32>
    %cst_87 = arith.constant 0.000000e+00 : f32
    %195 = vector.broadcast %cst_87 : f32 to vector<1x128xf32>
    %196 = arith.maximumf %194, %195 : vector<1x128xf32>
    %cst_88 = arith.constant 9.99999974E-6 : f32
    %197 = vector.broadcast %cst_88 : f32 to vector<1x128xf32>
    %198 = arith.addf %196, %197 : vector<1x128xf32>
    %199 = math.rsqrt %198 : vector<1x128xf32>
    %200 = arith.mulf %111, %199 : vector<1x128xf32>
    %201 = vector.broadcast %200 : vector<1x128xf32> to vector<128x128xf32>
    %202 = arith.mulf %183, %201 : vector<128x128xf32>
    %203 = arith.mulf %187, %200 : vector<1x128xf32>
    %204 = arith.subf %112, %203 : vector<1x128xf32>
    %205 = vector.broadcast %204 : vector<1x128xf32> to vector<128x128xf32>
    %206 = arith.addf %202, %205 : vector<128x128xf32>
    %cst_89 = arith.constant 0.000000e+00 : f32
    %207 = vector.broadcast %cst_89 : f32 to vector<128x128xf32>
    %208 = arith.maximumf %206, %207 : vector<128x128xf32>
    %c1_i32_90 = arith.constant 1 : i32
    %209 = tpu.memref_slice %arg14[%c1_i32_90] : memref<2x!tpu.dma_semaphore, #tpu.memory_space<semaphore_mem>> -> memref<1x!tpu.dma_semaphore, #tpu.memory_space<semaphore_mem>>
    %210 = tpu.memref_squeeze %209 : memref<1x!tpu.dma_semaphore, #tpu.memory_space<semaphore_mem>> -> memref<!tpu.dma_semaphore, #tpu.memory_space<semaphore_mem>>
    tpu.wait_dma2 semaphore(%210 : memref<!tpu.dma_semaphore, #tpu.memory_space<semaphore_mem>>) src(%arg4 : memref<1152x128xbf16, #tpu.memory_space<any>>) dst(%arg13 : memref<1152x128xbf16, #tpu.memory_space<vmem>>)
    %c4 = arith.constant 4 : index
    %c0_91 = arith.constant 0 : index
    %211 = vector.load %arg8[%c4, %c0_91] : memref<8x128xf32, #tpu.memory_space<vmem>>, vector<1x128xf32>
    %c5 = arith.constant 5 : index
    %c0_92 = arith.constant 0 : index
    %212 = vector.load %arg8[%c5, %c0_92] : memref<8x128xf32, #tpu.memory_space<vmem>>, vector<1x128xf32>
    %c16_93 = arith.constant 16 : index
    %c0_94 = arith.constant 0 : index
    %213 = vector.load %arg15[%c16_93, %c0_94] : memref<160x128xf32, #tpu.memory_space<vmem>>, vector<128x128xf32>
    tpu.vector_store %arg15[%c16_93, %c0_94], %208 {strides = array<i32>} : memref<160x128xf32, #tpu.memory_space<vmem>>, vector<128x128xf32>,
    %cst_95 = arith.constant 0.000000e+00 : f32
    %214 = vector.broadcast %cst_95 : f32 to vector<128x128xf32>
    %c7_96 = arith.constant 7 : index
    %c0_97 = arith.constant 0 : index
    %215 = vector.load %arg15[%c7_96, %c0_97] : memref<160x128xf32, #tpu.memory_space<vmem>>, vector<128x128xf32>
    %216 = vector.extract_strided_slice %8 {offsets = [0, 0], sizes = [128, 1], strides = [1, 1]} : vector<128x9xf32> to vector<128x1xf32>
    %217 = vector.broadcast %216 : vector<128x1xf32> to vector<128x128xf32>
    %218 = arith.mulf %215, %217 : vector<128x128xf32>
    %219 = arith.truncf %218 : vector<128x128xf32> to vector<128x128xbf16>
    %c0_98 = arith.constant 0 : index
    %c0_99 = arith.constant 0 : index
    %220 = vector.load %arg13[%c0_98, %c0_99] : memref<1152x128xbf16, #tpu.memory_space<vmem>>, vector<128x128xbf16>
    %cst_100 = arith.constant dense<0.000000e+00> : vector<128x128xf32>
    %221 = tpu.matmul %219, %220, %cst_100 {dimension_numbers = #tpu.dot_dimension_numbers<[1], [0], [0], [1], [0, 0, 1, 1], [], []>} : vector<128x128xbf16>, vector<128x128xbf16>, vector<128x128xf32> -> vector<128x128xf32>
    %222 = arith.addf %214, %221 : vector<128x128xf32>
    %c8_101 = arith.constant 8 : index
    %c0_102 = arith.constant 0 : index
    %223 = vector.load %arg15[%c8_101, %c0_102] : memref<160x128xf32, #tpu.memory_space<vmem>>, vector<128x128xf32>
    %224 = vector.extract_strided_slice %8 {offsets = [0, 1], sizes = [128, 1], strides = [1, 1]} : vector<128x9xf32> to vector<128x1xf32>
    %225 = vector.broadcast %224 : vector<128x1xf32> to vector<128x128xf32>
    %226 = arith.mulf %223, %225 : vector<128x128xf32>
    %227 = arith.truncf %226 : vector<128x128xf32> to vector<128x128xbf16>
    %c128_103 = arith.constant 128 : index
    %c0_104 = arith.constant 0 : index
    %228 = vector.load %arg13[%c128_103, %c0_104] : memref<1152x128xbf16, #tpu.memory_space<vmem>>, vector<128x128xbf16>
    %cst_105 = arith.constant dense<0.000000e+00> : vector<128x128xf32>
    %229 = tpu.matmul %227, %228, %cst_105 {dimension_numbers = #tpu.dot_dimension_numbers<[1], [0], [0], [1], [0, 0, 1, 1], [], []>} : vector<128x128xbf16>, vector<128x128xbf16>, vector<128x128xf32> -> vector<128x128xf32>
    %230 = arith.addf %222, %229 : vector<128x128xf32>
    %c9_106 = arith.constant 9 : index
    %c0_107 = arith.constant 0 : index
    %231 = vector.load %arg15[%c9_106, %c0_107] : memref<160x128xf32, #tpu.memory_space<vmem>>, vector<128x128xf32>
    %232 = vector.extract_strided_slice %8 {offsets = [0, 2], sizes = [128, 1], strides = [1, 1]} : vector<128x9xf32> to vector<128x1xf32>
    %233 = vector.broadcast %232 : vector<128x1xf32> to vector<128x128xf32>
    %234 = arith.mulf %231, %233 : vector<128x128xf32>
    %235 = arith.truncf %234 : vector<128x128xf32> to vector<128x128xbf16>
    %c256_108 = arith.constant 256 : index
    %c0_109 = arith.constant 0 : index
    %236 = vector.load %arg13[%c256_108, %c0_109] : memref<1152x128xbf16, #tpu.memory_space<vmem>>, vector<128x128xbf16>
    %cst_110 = arith.constant dense<0.000000e+00> : vector<128x128xf32>
    %237 = tpu.matmul %235, %236, %cst_110 {dimension_numbers = #tpu.dot_dimension_numbers<[1], [0], [0], [1], [0, 0, 1, 1], [], []>} : vector<128x128xbf16>, vector<128x128xbf16>, vector<128x128xf32> -> vector<128x128xf32>
    %238 = arith.addf %230, %237 : vector<128x128xf32>
    %c15_111 = arith.constant 15 : index
    %c0_112 = arith.constant 0 : index
    %239 = vector.load %arg15[%c15_111, %c0_112] : memref<160x128xf32, #tpu.memory_space<vmem>>, vector<128x128xf32>
    %240 = vector.extract_strided_slice %8 {offsets = [0, 3], sizes = [128, 1], strides = [1, 1]} : vector<128x9xf32> to vector<128x1xf32>
    %241 = vector.broadcast %240 : vector<128x1xf32> to vector<128x128xf32>
    %242 = arith.mulf %239, %241 : vector<128x128xf32>
    %243 = arith.truncf %242 : vector<128x128xf32> to vector<128x128xbf16>
    %c384_113 = arith.constant 384 : index
    %c0_114 = arith.constant 0 : index
    %244 = vector.load %arg13[%c384_113, %c0_114] : memref<1152x128xbf16, #tpu.memory_space<vmem>>, vector<128x128xbf16>
    %cst_115 = arith.constant dense<0.000000e+00> : vector<128x128xf32>
    %245 = tpu.matmul %243, %244, %cst_115 {dimension_numbers = #tpu.dot_dimension_numbers<[1], [0], [0], [1], [0, 0, 1, 1], [], []>} : vector<128x128xbf16>, vector<128x128xbf16>, vector<128x128xf32> -> vector<128x128xf32>
    %246 = arith.addf %238, %245 : vector<128x128xf32>
    %c16_116 = arith.constant 16 : index
    %c0_117 = arith.constant 0 : index
    %247 = vector.load %arg15[%c16_116, %c0_117] : memref<160x128xf32, #tpu.memory_space<vmem>>, vector<128x128xf32>
    %248 = arith.truncf %247 : vector<128x128xf32> to vector<128x128xbf16>
    %c512_118 = arith.constant 512 : index
    %c0_119 = arith.constant 0 : index
    %249 = vector.load %arg13[%c512_118, %c0_119] : memref<1152x128xbf16, #tpu.memory_space<vmem>>, vector<128x128xbf16>
    %cst_120 = arith.constant dense<0.000000e+00> : vector<128x128xf32>
    %250 = tpu.matmul %248, %249, %cst_120 {dimension_numbers = #tpu.dot_dimension_numbers<[1], [0], [0], [1], [0, 0, 1, 1], [], []>} : vector<128x128xbf16>, vector<128x128xbf16>, vector<128x128xf32> -> vector<128x128xf32>
    %251 = arith.addf %246, %250 : vector<128x128xf32>
    %c17_121 = arith.constant 17 : index
    %c0_122 = arith.constant 0 : index
    %252 = vector.load %arg15[%c17_121, %c0_122] : memref<160x128xf32, #tpu.memory_space<vmem>>, vector<128x128xf32>
    %253 = vector.extract_strided_slice %8 {offsets = [0, 5], sizes = [128, 1], strides = [1, 1]} : vector<128x9xf32> to vector<128x1xf32>
    %254 = vector.broadcast %253 : vector<128x1xf32> to vector<128x128xf32>
    %255 = arith.mulf %252, %254 : vector<128x128xf32>
    %256 = arith.truncf %255 : vector<128x128xf32> to vector<128x128xbf16>
    %c640_123 = arith.constant 640 : index
    %c0_124 = arith.constant 0 : index
    %257 = vector.load %arg13[%c640_123, %c0_124] : memref<1152x128xbf16, #tpu.memory_space<vmem>>, vector<128x128xbf16>
    %cst_125 = arith.constant dense<0.000000e+00> : vector<128x128xf32>
    %258 = tpu.matmul %256, %257, %cst_125 {dimension_numbers = #tpu.dot_dimension_numbers<[1], [0], [0], [1], [0, 0, 1, 1], [], []>} : vector<128x128xbf16>, vector<128x128xbf16>, vector<128x128xf32> -> vector<128x128xf32>
    %259 = arith.addf %251, %258 : vector<128x128xf32>
    %c23_126 = arith.constant 23 : index
    %c0_127 = arith.constant 0 : index
    %260 = vector.load %arg15[%c23_126, %c0_127] : memref<160x128xf32, #tpu.memory_space<vmem>>, vector<128x128xf32>
    %261 = vector.extract_strided_slice %8 {offsets = [0, 6], sizes = [128, 1], strides = [1, 1]} : vector<128x9xf32> to vector<128x1xf32>
    %262 = vector.broadcast %261 : vector<128x1xf32> to vector<128x128xf32>
    %263 = arith.mulf %260, %262 : vector<128x128xf32>
    %264 = arith.truncf %263 : vector<128x128xf32> to vector<128x128xbf16>
    %c768_128 = arith.constant 768 : index
    %c0_129 = arith.constant 0 : index
    %265 = vector.load %arg13[%c768_128, %c0_129] : memref<1152x128xbf16, #tpu.memory_space<vmem>>, vector<128x128xbf16>
    %cst_130 = arith.constant dense<0.000000e+00> : vector<128x128xf32>
    %266 = tpu.matmul %264, %265, %cst_130 {dimension_numbers = #tpu.dot_dimension_numbers<[1], [0], [0], [1], [0, 0, 1, 1], [], []>} : vector<128x128xbf16>, vector<128x128xbf16>, vector<128x128xf32> -> vector<128x128xf32>
    %267 = arith.addf %259, %266 : vector<128x128xf32>
    %c24_131 = arith.constant 24 : index
    %c0_132 = arith.constant 0 : index
    %268 = vector.load %arg15[%c24_131, %c0_132] : memref<160x128xf32, #tpu.memory_space<vmem>>, vector<128x128xf32>
    %269 = vector.extract_strided_slice %8 {offsets = [0, 7], sizes = [128, 1], strides = [1, 1]} : vector<128x9xf32> to vector<128x1xf32>
    %270 = vector.broadcast %269 : vector<128x1xf32> to vector<128x128xf32>
    %271 = arith.mulf %268, %270 : vector<128x128xf32>
    %272 = arith.truncf %271 : vector<128x128xf32> to vector<128x128xbf16>
    %c896_133 = arith.constant 896 : index
    %c0_134 = arith.constant 0 : index
    %273 = vector.load %arg13[%c896_133, %c0_134] : memref<1152x128xbf16, #tpu.memory_space<vmem>>, vector<128x128xbf16>
    %cst_135 = arith.constant dense<0.000000e+00> : vector<128x128xf32>
    %274 = tpu.matmul %272, %273, %cst_135 {dimension_numbers = #tpu.dot_dimension_numbers<[1], [0], [0], [1], [0, 0, 1, 1], [], []>} : vector<128x128xbf16>, vector<128x128xbf16>, vector<128x128xf32> -> vector<128x128xf32>
    %275 = arith.addf %267, %274 : vector<128x128xf32>
    %c25_136 = arith.constant 25 : index
    %c0_137 = arith.constant 0 : index
    %276 = vector.load %arg15[%c25_136, %c0_137] : memref<160x128xf32, #tpu.memory_space<vmem>>, vector<128x128xf32>
    %277 = vector.extract_strided_slice %8 {offsets = [0, 8], sizes = [128, 1], strides = [1, 1]} : vector<128x9xf32> to vector<128x1xf32>
    %278 = vector.broadcast %277 : vector<128x1xf32> to vector<128x128xf32>
    %279 = arith.mulf %276, %278 : vector<128x128xf32>
    %280 = arith.truncf %279 : vector<128x128xf32> to vector<128x128xbf16>
    %c1024_138 = arith.constant 1024 : index
    %c0_139 = arith.constant 0 : index
    %281 = vector.load %arg13[%c1024_138, %c0_139] : memref<1152x128xbf16, #tpu.memory_space<vmem>>, vector<128x128xbf16>
    %cst_140 = arith.constant dense<0.000000e+00> : vector<128x128xf32>
    %282 = tpu.matmul %280, %281, %cst_140 {dimension_numbers = #tpu.dot_dimension_numbers<[1], [0], [0], [1], [0, 0, 1, 1], [], []>} : vector<128x128xbf16>, vector<128x128xbf16>, vector<128x128xf32> -> vector<128x128xf32>
    %283 = arith.addf %275, %282 : vector<128x128xf32>
    %cst_141 = arith.constant dense<0.000000e+00> : vector<128xf32>
    %284 = vector.multi_reduction <add>, %283, %cst_141 [0] : vector<128x128xf32> to vector<128xf32>
    %285 = vector.shape_cast %284 : vector<128xf32> to vector<1x128xf32>
    %cst_142 = arith.constant 1.280000e+02 : f32
    %286 = vector.broadcast %cst_142 : f32 to vector<1x128xf32>
    %287 = arith.divf %285, %286 : vector<1x128xf32>
    %288 = arith.mulf %283, %283 : vector<128x128xf32>
    %cst_143 = arith.constant dense<0.000000e+00> : vector<128xf32>
    %289 = vector.multi_reduction <add>, %288, %cst_143 [0] : vector<128x128xf32> to vector<128xf32>
    %290 = vector.shape_cast %289 : vector<128xf32> to vector<1x128xf32>
    %cst_144 = arith.constant 1.280000e+02 : f32
    %291 = vector.broadcast %cst_144 : f32 to vector<1x128xf32>
    %292 = arith.divf %290, %291 : vector<1x128xf32>
    %293 = arith.mulf %287, %287 : vector<1x128xf32>
    %294 = arith.subf %292, %293 : vector<1x128xf32>
    %cst_145 = arith.constant 0.000000e+00 : f32
    %295 = vector.broadcast %cst_145 : f32 to vector<1x128xf32>
    %296 = arith.maximumf %294, %295 : vector<1x128xf32>
    %cst_146 = arith.constant 9.99999974E-6 : f32
    %297 = vector.broadcast %cst_146 : f32 to vector<1x128xf32>
    %298 = arith.addf %296, %297 : vector<1x128xf32>
    %299 = math.rsqrt %298 : vector<1x128xf32>
    %300 = arith.mulf %211, %299 : vector<1x128xf32>
    %301 = vector.broadcast %300 : vector<1x128xf32> to vector<128x128xf32>
    %302 = arith.mulf %283, %301 : vector<128x128xf32>
    %303 = arith.mulf %287, %300 : vector<1x128xf32>
    %304 = arith.subf %212, %303 : vector<1x128xf32>
    %305 = vector.broadcast %304 : vector<1x128xf32> to vector<128x128xf32>
    %306 = arith.addf %302, %305 : vector<128x128xf32>
    %cst_147 = arith.constant 0.000000e+00 : f32
    %307 = vector.broadcast %cst_147 : f32 to vector<128x128xf32>
    %308 = arith.maximumf %306, %307 : vector<128x128xf32>
    %309 = arith.truncf %308 : vector<128x128xf32> to vector<128x128xbf16>
    %c0_148 = arith.constant 0 : index
    %c0_149 = arith.constant 0 : index
    %310 = vector.load %arg5[%c0_148, %c0_149] : memref<128x3xbf16, #tpu.memory_space<vmem>>, vector<128x3xbf16>
    %cst_150 = arith.constant dense<0.000000e+00> : vector<128x3xf32>
    %311 = tpu.matmul %309, %310, %cst_150 {dimension_numbers = #tpu.dot_dimension_numbers<[1], [0], [0], [1], [0, 0, 1, 1], [], []>} : vector<128x128xbf16>, vector<128x3xbf16>, vector<128x3xf32> -> vector<128x3xf32>
    %c6 = arith.constant 6 : index
    %c0_151 = arith.constant 0 : index
    %312 = vector.load %arg8[%c6, %c0_151] : memref<8x128xf32, #tpu.memory_space<vmem>>, vector<1x128xf32>
    %313 = vector.extract_strided_slice %312 {offsets = [0, 0], sizes = [1, 3], strides = [1, 1]} : vector<1x128xf32> to vector<1x3xf32>
    %314 = vector.extract_strided_slice %312 {offsets = [0, 3], sizes = [1, 3], strides = [1, 1]} : vector<1x128xf32> to vector<1x3xf32>
    %cst_152 = arith.constant dense<0.000000e+00> : vector<3xf32>
    %315 = vector.multi_reduction <add>, %311, %cst_152 [0] : vector<128x3xf32> to vector<3xf32>
    %316 = vector.shape_cast %315 : vector<3xf32> to vector<1x3xf32>
    %cst_153 = arith.constant 1.280000e+02 : f32
    %317 = vector.broadcast %cst_153 : f32 to vector<1x3xf32>
    %318 = arith.divf %316, %317 : vector<1x3xf32>
    %319 = arith.mulf %311, %311 : vector<128x3xf32>
    %cst_154 = arith.constant dense<0.000000e+00> : vector<3xf32>
    %320 = vector.multi_reduction <add>, %319, %cst_154 [0] : vector<128x3xf32> to vector<3xf32>
    %321 = vector.shape_cast %320 : vector<3xf32> to vector<1x3xf32>
    %cst_155 = arith.constant 1.280000e+02 : f32
    %322 = vector.broadcast %cst_155 : f32 to vector<1x3xf32>
    %323 = arith.divf %321, %322 : vector<1x3xf32>
    %324 = arith.mulf %318, %318 : vector<1x3xf32>
    %325 = arith.subf %323, %324 : vector<1x3xf32>
    %cst_156 = arith.constant 0.000000e+00 : f32
    %326 = vector.broadcast %cst_156 : f32 to vector<1x3xf32>
    %327 = arith.maximumf %325, %326 : vector<1x3xf32>
    %cst_157 = arith.constant 9.99999974E-6 : f32
    %328 = vector.broadcast %cst_157 : f32 to vector<1x3xf32>
    %329 = arith.addf %327, %328 : vector<1x3xf32>
    %330 = math.rsqrt %329 : vector<1x3xf32>
    %331 = arith.mulf %313, %330 : vector<1x3xf32>
    %332 = vector.broadcast %331 : vector<1x3xf32> to vector<128x3xf32>
    %333 = arith.mulf %311, %332 : vector<128x3xf32>
    %334 = arith.mulf %318, %331 : vector<1x3xf32>
    %335 = arith.subf %314, %334 : vector<1x3xf32>
    %336 = vector.broadcast %335 : vector<1x3xf32> to vector<128x3xf32>
    %337 = arith.addf %333, %336 : vector<128x3xf32>
    %cst_158 = arith.constant 0.000000e+00 : f32
    %338 = vector.broadcast %cst_158 : f32 to vector<128x3xf32>
    %339 = arith.maximumf %337, %338 : vector<128x3xf32>
    %c0_159 = arith.constant 0 : index
    %c0_160 = arith.constant 0 : index
    %340 = vector.load %arg6[%c0_159, %c0_160] : memref<128x32xf32, #tpu.memory_space<vmem>>, vector<64x32xf32>
    %c64 = arith.constant 64 : index
    %c0_161 = arith.constant 0 : index
    %341 = vector.load %arg6[%c64, %c0_161] : memref<128x32xf32, #tpu.memory_space<vmem>>, vector<64x32xf32>
    %c0_162 = arith.constant 0 : index
    %c0_163 = arith.constant 0 : index
    %342 = vector.load %arg7[%c0_162, %c0_163] : memref<64x256xf32, #tpu.memory_space<vmem>>, vector<64x256xf32>
    %c0_164 = arith.constant 0 : index
    %c0_165 = arith.constant 0 : index
    %343 = vector.load %arg9[%c0_164, %c0_165] : memref<2x256xf32, #tpu.memory_space<vmem>>, vector<1x256xf32>
    %c1_166 = arith.constant 1 : index
    %c0_167 = arith.constant 0 : index
    %344 = vector.load %arg9[%c1_166, %c0_167] : memref<2x256xf32, #tpu.memory_space<vmem>>, vector<1x256xf32>
    %345 = vector.extract_strided_slice %312 {offsets = [0, 6], sizes = [1, 1], strides = [1, 1]} : vector<1x128xf32> to vector<1x1xf32>
    %c7_168 = arith.constant 7 : index
    %c0_169 = arith.constant 0 : index
    %346 = vector.load %arg8[%c7_168, %c0_169] : memref<8x128xf32, #tpu.memory_space<vmem>>, vector<1x32xf32>
    %347 = vector.extract_strided_slice %339 {offsets = [0, 0], sizes = [64, 1], strides = [1, 1]} : vector<128x3xf32> to vector<64x1xf32>
    %348 = vector.extract_strided_slice %339 {offsets = [0, 1], sizes = [64, 1], strides = [1, 1]} : vector<128x3xf32> to vector<64x1xf32>
    %349 = vector.extract_strided_slice %339 {offsets = [0, 2], sizes = [64, 1], strides = [1, 1]} : vector<128x3xf32> to vector<64x1xf32>
    %350 = vector.broadcast %347 : vector<64x1xf32> to vector<64x32xf32>
    %351 = arith.mulf %350, %340 : vector<64x32xf32>
    %352 = vector.broadcast %348 : vector<64x1xf32> to vector<64x32xf32>
    %353 = arith.mulf %352, %341 : vector<64x32xf32>
    %354 = arith.addf %351, %353 : vector<64x32xf32>
    %cst_170 = arith.constant dense<0.000000e+00> : vector<32xf32>
    %355 = vector.multi_reduction <add>, %354, %cst_170 [0] : vector<64x32xf32> to vector<32xf32>
    %356 = vector.shape_cast %355 : vector<32xf32> to vector<1x32xf32>
    %357 = arith.addf %356, %346 : vector<1x32xf32>
    %c0_171 = arith.constant 0 : index
    %c0_172 = arith.constant 0 : index
    %358 = vector.load %arg10[%c0_171, %c0_172] : memref<2x32xf32, #tpu.memory_space<vmem>>, vector<1x32xf32>
    tpu.vector_store %arg10[%c0_171, %c0_172], %357 {strides = array<i32>} : memref<2x32xf32, #tpu.memory_space<vmem>>, vector<1x32xf32>,
    %359 = vector.broadcast %349 : vector<64x1xf32> to vector<64x256xf32>
    %360 = arith.mulf %359, %342 : vector<64x256xf32>
    %cst_173 = arith.constant dense<0.000000e+00> : vector<256xf32>
    %361 = vector.multi_reduction <add>, %360, %cst_173 [0] : vector<64x256xf32> to vector<256xf32>
    %362 = vector.shape_cast %361 : vector<256xf32> to vector<1x256xf32>
    %363 = arith.addf %362, %343 : vector<1x256xf32>
    %cst_174 = arith.constant 0.000000e+00 : f32
    %364 = vector.broadcast %cst_174 : f32 to vector<1x256xf32>
    %365 = arith.maximumf %363, %364 : vector<1x256xf32>
    %366 = arith.mulf %365, %344 : vector<1x256xf32>
    %cst_175 = arith.constant dense<0.000000e+00> : vector<1xf32>
    %367 = vector.multi_reduction <add>, %366, %cst_175 [1] : vector<1x256xf32> to vector<1xf32>
    %368 = vector.shape_cast %367 : vector<1xf32> to vector<1x1xf32>
    %369 = arith.addf %368, %345 : vector<1x1xf32>
    %370 = math.tanh %369 : vector<1x1xf32>
    %c0_176 = arith.constant 0 : index
    %c0_177 = arith.constant 0 : index
    %371 = vector.load %arg11[%c0_176, %c0_177] : memref<2x1xf32, #tpu.memory_space<vmem>>, vector<1x1xf32>
    tpu.vector_store %arg11[%c0_176, %c0_177], %370 {strides = array<i32>} : memref<2x1xf32, #tpu.memory_space<vmem>>, vector<1x1xf32>,
    %372 = vector.extract_strided_slice %339 {offsets = [64, 0], sizes = [64, 1], strides = [1, 1]} : vector<128x3xf32> to vector<64x1xf32>
    %373 = vector.extract_strided_slice %339 {offsets = [64, 1], sizes = [64, 1], strides = [1, 1]} : vector<128x3xf32> to vector<64x1xf32>
    %374 = vector.extract_strided_slice %339 {offsets = [64, 2], sizes = [64, 1], strides = [1, 1]} : vector<128x3xf32> to vector<64x1xf32>
    %375 = vector.broadcast %372 : vector<64x1xf32> to vector<64x32xf32>
    %376 = arith.mulf %375, %340 : vector<64x32xf32>
    %377 = vector.broadcast %373 : vector<64x1xf32> to vector<64x32xf32>
    %378 = arith.mulf %377, %341 : vector<64x32xf32>
    %379 = arith.addf %376, %378 : vector<64x32xf32>
    %cst_178 = arith.constant dense<0.000000e+00> : vector<32xf32>
    %380 = vector.multi_reduction <add>, %379, %cst_178 [0] : vector<64x32xf32> to vector<32xf32>
    %381 = vector.shape_cast %380 : vector<32xf32> to vector<1x32xf32>
    %382 = arith.addf %381, %346 : vector<1x32xf32>
    %c1_179 = arith.constant 1 : index
    %c0_180 = arith.constant 0 : index
    %383 = vector.load %arg10[%c1_179, %c0_180] : memref<2x32xf32, #tpu.memory_space<vmem>>, vector<1x32xf32>
    tpu.vector_store %arg10[%c1_179, %c0_180], %382 {strides = array<i32>} : memref<2x32xf32, #tpu.memory_space<vmem>>, vector<1x32xf32>,
    %384 = vector.broadcast %374 : vector<64x1xf32> to vector<64x256xf32>
    %385 = arith.mulf %384, %342 : vector<64x256xf32>
    %cst_181 = arith.constant dense<0.000000e+00> : vector<256xf32>
    %386 = vector.multi_reduction <add>, %385, %cst_181 [0] : vector<64x256xf32> to vector<256xf32>
    %387 = vector.shape_cast %386 : vector<256xf32> to vector<1x256xf32>
    %388 = arith.addf %387, %343 : vector<1x256xf32>
    %cst_182 = arith.constant 0.000000e+00 : f32
    %389 = vector.broadcast %cst_182 : f32 to vector<1x256xf32>
    %390 = arith.maximumf %388, %389 : vector<1x256xf32>
    %391 = arith.mulf %390, %344 : vector<1x256xf32>
    %cst_183 = arith.constant dense<0.000000e+00> : vector<1xf32>
    %392 = vector.multi_reduction <add>, %391, %cst_183 [1] : vector<1x256xf32> to vector<1xf32>
    %393 = vector.shape_cast %392 : vector<1xf32> to vector<1x1xf32>
    %394 = arith.addf %393, %345 : vector<1x1xf32>
    %395 = math.tanh %394 : vector<1x1xf32>
    %c1_184 = arith.constant 1 : index
    %c0_185 = arith.constant 0 : index
    %396 = vector.load %arg11[%c1_184, %c0_185] : memref<2x1xf32, #tpu.memory_space<vmem>>, vector<1x1xf32>
    tpu.vector_store %arg11[%c1_184, %c0_185], %395 {strides = array<i32>} : memref<2x1xf32, #tpu.memory_space<vmem>>, vector<1x1xf32>,
    return
  }
}

</mosaic_0001>

<llo_original>
// kernel: alphazero_forward.1
$region0: #{alphazero_forward.1}
  #allocation0 [shape = 'u32[]', space=smem, size = 0x4, offset = 0x4, fixed_abs, tag = 'smem constant byte address 0x4 - core index']
  #allocation1 [shape = 'u32[144,128]{1,0:T(1,128)}', space=vmem, size = 0x12000, scoped, tag = 'internal scratch']
  #allocation2 [shape = 'bf16[1152,128]{1,0:T(8,128)(2,1)}', space=vmem, size = 0x48000, scoped, tag = 'scratch operand']
  #allocation3 [shape = 'bf16[1152,128]{1,0:T(8,128)(2,1)}', space=vmem, size = 0x48000, scoped, tag = 'scratch operand']
  #allocation4 [shape = 's32[2]{0}', space=sflag, size = 0x8, scoped, tag = 'scratch operand']
  #allocation5 [shape = 'f32[160,128]{1,0:T(8,128)}', space=vmem, size = 0x14000, scoped, tag = 'scratch operand']
  #allocation8 [shape = 's32[]', space=sflag, size = 0x4, offset = 0, fixed_abs, tag = 'sflag constant byte address 0x0 - dummy sync flag']
  #allocation9 [shape = 's32[]', space=sflag, size = 0x4, offset = 0, fixed_abs, tag = 'sflag constant byte address 0x0 - dummy sync flag']
  #allocation10 [shape = 'u32[]', space=smem, size = 0x4, offset = 0x44, fixed_abs, tag = 'smem constant byte address 0x44 - assertion arg 0']
  #allocation11 [shape = 'u32[]', space=smem, size = 0x4, offset = 0x48, fixed_abs, tag = 'smem constant byte address 0x48 - assertion arg 1']
  #allocation12 [shape = 's32[]', space=sflag, size = 0x4, offset = 0, fixed_abs, tag = 'sflag constant byte address 0x0 - dummy sync flag']
  #allocation13 [shape = 's32[]', space=sflag, size = 0x4, offset = 0, fixed_abs, tag = 'sflag constant byte address 0x0 - dummy sync flag']
  %s0 = inlined_call_operand.vmem [shape: f32[128,9], index: 0, kind: input, shape index: {}]
  %s1 = inlined_call_operand.vmem [shape: f32[128,4], index: 1, kind: input, shape index: {}]
  %s2 = inlined_call_operand.vmem [shape: bf16[36,128], index: 2, kind: input, shape index: {}]
  %s3 = inlined_call_operand.hbm [shape: bf16[1152,128], index: 3, kind: input, shape index: {}]
  %s4 = inlined_call_operand.hbm [shape: bf16[1152,128], index: 4, kind: input, shape index: {}]
  %s5 = inlined_call_operand.vmem [shape: bf16[128,3], index: 5, kind: input, shape index: {}]
  %s6 = inlined_call_operand.vmem [shape: f32[128,32], index: 6, kind: input, shape index: {}]
  %s7 = inlined_call_operand.vmem [shape: f32[64,256], index: 7, kind: input, shape index: {}]
  %s8 = inlined_call_operand.vmem [shape: f32[8,128], index: 8, kind: input, shape index: {}]
  %s9 = inlined_call_operand.vmem [shape: f32[2,256], index: 9, kind: input, shape index: {}]
  %s10 = inlined_call_operand.hbm [shape: f32[2,32], index: 10, kind: output, shape index: {0}]
  %s11 = inlined_call_operand.vmem [shape: f32[2,1], index: 11, kind: output, shape index: {1}]
  %12 = xla_tuple %s10, %s11
  %s13 = sld [smem:[#allocation0]]
  $region58: #{alphazero_forward.1} parent=0
    _
  %s15 = ssub.s32 1, %s13
  %s16 = scalar_select 0, %s15, %s13
  $region1: #{alphazero_forward.1} parent=0
    #allocation6 [shape = 'u8[1024]{0}', space=vmem, size = 0x400, scoped, tag = 'output window, operand 0, single buffered']
    #allocation7 [shape = 's32[1]{0}', space=sflag, size = 0x4, scoped, tag = 'scoped memory for alphazero_forward.1']
    %17 = vsyncpa [#allocation7], 0
    // Predicated region
    $region2: #{alphazero_forward.1} parent=1 // pred_check
      _
    $region3: #{alphazero_forward.1} parent=1 // pred_check_branch
      %19 = sbr.rel (0) target = $region5
    $region4: #{alphazero_forward.1} parent=1 // pred_region
      _
    $region5: #{alphazero_forward.1} parent=1 // pred_fallthru
      _
    // Predicated region
    $region6: #{alphazero_forward.1} parent=1 // pred_check
      _
    $region7: #{alphazero_forward.1} parent=1 // pred_check_branch
      %21 = sbr.rel (0) target = $region9
    $region8: #{alphazero_forward.1} parent=1 // pred_region
      _
    $region9: #{alphazero_forward.1} parent=1 // pred_fallthru
      _
    // Predicated region
    $region10: #{alphazero_forward.1} parent=1 // pred_check
      _
    $region11: #{alphazero_forward.1} parent=1 // pred_check_branch
      %23 = sbr.rel (0) target = $region13
    $region12: #{alphazero_forward.1} parent=1 // pred_region
      _
    $region13: #{alphazero_forward.1} parent=1 // pred_fallthru
      _
    // Predicated region
    $region14: #{alphazero_forward.1} parent=1 // pred_check
      _
    $region15: #{alphazero_forward.1} parent=1 // pred_check_branch
      %25 = sbr.rel (0) target = $region17
    $region16: #{alphazero_forward.1} parent=1 // pred_region
      _
    $region17: #{alphazero_forward.1} parent=1 // pred_fallthru
      _
    // Predicated region
    $region18: #{alphazero_forward.1} parent=1 // pred_check
      _
    $region19: #{alphazero_forward.1} parent=1 // pred_check_branch
      %27 = sbr.rel (0) target = $region21
    $region20: #{alphazero_forward.1} parent=1 // pred_region
      _
    $region21: #{alphazero_forward.1} parent=1 // pred_fallthru
      _
    // Predicated region
    $region22: #{alphazero_forward.1} parent=1 // pred_check
      _
    $region23: #{alphazero_forward.1} parent=1 // pred_check_branch
      %29 = sbr.rel (0) target = $region25
    $region24: #{alphazero_forward.1} parent=1 // pred_region
      _
    $region25: #{alphazero_forward.1} parent=1 // pred_fallthru
      _
    // Predicated region
    $region26: #{alphazero_forward.1} parent=1 // pred_check
      _
    $region27: #{alphazero_forward.1} parent=1 // pred_check_branch
      %31 = sbr.rel (0) target = $region29
    $region28: #{alphazero_forward.1} parent=1 // pred_region
      _
    $region29: #{alphazero_forward.1} parent=1 // pred_fallthru
      _
    // Predicated region
    $region30: #{alphazero_forward.1} parent=1 // pred_check
      _
    $region31: #{alphazero_forward.1} parent=1 // pred_check_branch
      %33 = sbr.rel (0) target = $region33
    $region32: #{alphazero_forward.1} parent=1 // pred_region
      _
    $region33: #{alphazero_forward.1} parent=1 // pred_fallthru
      _
    // Predicated region
    $region34: #{alphazero_forward.1} parent=1 // pred_check
      _
    $region35: #{alphazero_forward.1} parent=1 // pred_check_branch
      %36 = sbr.rel target = $region37
    $region36: #{alphazero_forward.1} parent=1 // pred_region
      %37 = sst [smem:[#allocation10]] [#allocation9]
      %38 = sst [smem:[#allocation11]] [#allocation8]
    $region37: #{alphazero_forward.1} parent=1 // pred_fallthru
      _
    %40 = shalt.err (0)
    %s42 = sshll.u32 [#allocation2], 4
    %s43 = int_to_ptr.vmem [resolvable:$true] %s42
    %45 = dma.hbm_to_vmem [thread:$0]  %s3, 9216, %s43, [#allocation4]
    %s46 = scalar_lea.sflag [#allocation4], 1
    // Predicated region
    $region38: #{alphazero_forward.1} parent=1 // pred_check
      _
    $region39: #{alphazero_forward.1} parent=1 // pred_check_branch
      %48 = sbr.rel target = $region41
    $region40: #{alphazero_forward.1} parent=1 // pred_region
      %49 = sst [smem:[#allocation10]] [#allocation13]
      %50 = sst [smem:[#allocation11]] [#allocation12]
    $region41: #{alphazero_forward.1} parent=1 // pred_fallthru
      _
    %52 = shalt.err (0)
    %s54 = sshll.u32 [#allocation3], 4
    %s55 = int_to_ptr.vmem [resolvable:$true] %s54
    %57 = dma.hbm_to_vmem [thread:$0]  %s4, 9216, %s55, %s46
    %58 = vst [vmem:[#allocation5] sm:$0xff] 0.0
    %59 = vst [vmem:[#allocation5 + $0x8] sm:$0xff] 0.0
    %60 = vst [vmem:[#allocation5 + $0x90] sm:$0xff] 0.0
    %61 = vst [vmem:[#allocation5 + $0x98] sm:$0xff] 0.0
    %v62 = vld [vmem:[%s0] sm:$0xff]
    %v63 = vld [vmem:[%s0 + $0x8] sm:$0xff]
    %v64 = vld [vmem:[%s0 + $0x10] sm:$0xff]
    %v65 = vld [vmem:[%s0 + $0x18] sm:$0xff]
    %v66 = vld [vmem:[%s0 + $0x20] sm:$0xff]
    %v67 = vld [vmem:[%s0 + $0x28] sm:$0xff]
    %v68 = vld [vmem:[%s0 + $0x30] sm:$0xff]
    %v69 = vld [vmem:[%s0 + $0x38] sm:$0xff]
    %v70 = vld [vmem:[%s0 + $0x40] sm:$0xff]
    %v71 = vld [vmem:[%s0 + $0x48] sm:$0xff]
    %v72 = vld [vmem:[%s0 + $0x50] sm:$0xff]
    %v73 = vld [vmem:[%s0 + $0x58] sm:$0xff]
    %v74 = vld [vmem:[%s0 + $0x60] sm:$0xff]
    %v75 = vld [vmem:[%s0 + $0x68] sm:$0xff]
    %v76 = vld [vmem:[%s0 + $0x70] sm:$0xff]
    %v77 = vld [vmem:[%s0 + $0x78] sm:$0xff]
    %v78 = vld [vmem:[%s2] sm:$0xf]
    %v79 = vld [vmem:[%s2 + $0x4] sm:$0xf]
    %v80 = vld [vmem:[%s2 + $0x8] sm:$0xf]
    %v81 = vld [vmem:[%s2 + $0xc] sm:$0xf]
    %v82 = vld [vmem:[%s2 + $0x10] sm:$0x3]
    %v83 = vld [vmem:[%s1] sm:$0xff]
    %v84 = vld [vmem:[%s1 + $0x8] sm:$0xff]
    %v85 = vld [vmem:[%s1 + $0x10] sm:$0xff]
    %v86 = vld [vmem:[%s1 + $0x18] sm:$0xff]
    %v87 = vld [vmem:[%s1 + $0x20] sm:$0xff]
    %v88 = vld [vmem:[%s1 + $0x28] sm:$0xff]
    %v89 = vld [vmem:[%s1 + $0x30] sm:$0xff]
    %v90 = vld [vmem:[%s1 + $0x38] sm:$0xff]
    %v91 = vld [vmem:[%s1 + $0x40] sm:$0xff]
    %v92 = vld [vmem:[%s1 + $0x48] sm:$0xff]
    %v93 = vld [vmem:[%s1 + $0x50] sm:$0xff]
    %v94 = vld [vmem:[%s1 + $0x58] sm:$0xff]
    %v95 = vld [vmem:[%s1 + $0x60] sm:$0xff]
    %v96 = vld [vmem:[%s1 + $0x68] sm:$0xff]
    %v97 = vld [vmem:[%s1 + $0x70] sm:$0xff]
    %v98 = vld [vmem:[%s1 + $0x78] sm:$0xff]
    %v99 = vld [vmem:[%s8] sm:$0x1]
    %v100 = vld [vmem:[%s8 + $0x1] sm:$0x1]
    %vm101 = vcmask 31744
    %102 = vst.msk [vmem:[#allocation5 + $0x10] sm:$0xff] %vm101, %v83
    %103 = vst.msk [vmem:[#allocation5 + $0x18] sm:$0xff] %vm101, %v84
    %104 = vst.msk [vmem:[#allocation5 + $0x20] sm:$0xff] %vm101, %v85
    %105 = vst.msk [vmem:[#allocation5 + $0x28] sm:$0xff] %vm101, %v86
    %106 = vst.msk [vmem:[#allocation5 + $0x30] sm:$0xff] %vm101, %v87
    %107 = vst.msk [vmem:[#allocation5 + $0x38] sm:$0xff] %vm101, %v88
    %108 = vst.msk [vmem:[#allocation5 + $0x40] sm:$0xff] %vm101, %v89
    %109 = vst.msk [vmem:[#allocation5 + $0x48] sm:$0xff] %vm101, %v90
    %110 = vst.msk [vmem:[#allocation5 + $0x50] sm:$0xff] %vm101, %v91
    %111 = vst.msk [vmem:[#allocation5 + $0x58] sm:$0xff] %vm101, %v92
    %112 = vst.msk [vmem:[#allocation5 + $0x60] sm:$0xff] %vm101, %v93
    %113 = vst.msk [vmem:[#allocation5 + $0x68] sm:$0xff] %vm101, %v94
    %114 = vst.msk [vmem:[#allocation5 + $0x70] sm:$0xff] %vm101, %v95
    %115 = vst.msk [vmem:[#allocation5 + $0x78] sm:$0xff] %vm101, %v96
    %116 = vst.msk [vmem:[#allocation5 + $0x80] sm:$0xff] %vm101, %v97
    %117 = vst.msk [vmem:[#allocation5 + $0x88] sm:$0xff] %vm101, %v98
    %v118 = vld [vmem:[#allocation5 + $0x7] sm:$0xff]
    %v119 = vld [vmem:[#allocation5 + $0xf] sm:$0xff]
    %v120 = vld [vmem:[#allocation5 + $0x17] sm:$0xff]
    %v121 = vld [vmem:[#allocation5 + $0x1f] sm:$0xff]
    %v122 = vld [vmem:[#allocation5 + $0x27] sm:$0xff]
    %v123 = vld [vmem:[#allocation5 + $0x2f] sm:$0xff]
    %v124 = vld [vmem:[#allocation5 + $0x37] sm:$0xff]
    %v125 = vld [vmem:[#allocation5 + $0x3f] sm:$0xff]
    %v126 = vld [vmem:[#allocation5 + $0x47] sm:$0xff]
    %v127 = vld [vmem:[#allocation5 + $0x4f] sm:$0xff]
    %v128 = vld [vmem:[#allocation5 + $0x57] sm:$0xff]
    %v129 = vld [vmem:[#allocation5 + $0x5f] sm:$0xff]
    %v130 = vld [vmem:[#allocation5 + $0x67] sm:$0xff]
    %v131 = vld [vmem:[#allocation5 + $0x6f] sm:$0xff]
    %v132 = vld [vmem:[#allocation5 + $0x77] sm:$0xff]
    %v133 = vld [vmem:[#allocation5 + $0x7f] sm:$0xff]
    %135 = vset.pattern.permute.xlu0 0
    %136 = vperm.xlu0 %135, %v62
    %v137 = vpop.permute.xlu0 %136
    %140 = vset.pattern.permute.xlu0 0
    %141 = vperm.xlu0 %140, %v63
    %v142 = vpop.permute.xlu0 %141
    %145 = vset.pattern.permute.xlu0 0
    %146 = vperm.xlu0 %145, %v64
    %v147 = vpop.permute.xlu0 %146
    %150 = vset.pattern.permute.xlu0 0
    %151 = vperm.xlu0 %150, %v65
    %v152 = vpop.permute.xlu0 %151
    %155 = vset.pattern.permute.xlu0 0
    %156 = vperm.xlu0 %155, %v66
    %v157 = vpop.permute.xlu0 %156
    %160 = vset.pattern.permute.xlu0 0
    %161 = vperm.xlu0 %160, %v67
    %v162 = vpop.permute.xlu0 %161
    %165 = vset.pattern.permute.xlu0 0
    %166 = vperm.xlu0 %165, %v68
    %v167 = vpop.permute.xlu0 %166
    %170 = vset.pattern.permute.xlu0 0
    %171 = vperm.xlu0 %170, %v69
    %v172 = vpop.permute.xlu0 %171
    %175 = vset.pattern.permute.xlu0 0
    %176 = vperm.xlu0 %175, %v70
    %v177 = vpop.permute.xlu0 %176
    %180 = vset.pattern.permute.xlu0 0
    %181 = vperm.xlu0 %180, %v71
    %v182 = vpop.permute.xlu0 %181
    %185 = vset.pattern.permute.xlu0 0
    %186 = vperm.xlu0 %185, %v72
    %v187 = vpop.permute.xlu0 %186
    %190 = vset.pattern.permute.xlu0 0
    %191 = vperm.xlu0 %190, %v73
    %v192 = vpop.permute.xlu0 %191
    %195 = vset.pattern.permute.xlu0 0
    %196 = vperm.xlu0 %195, %v74
    %v197 = vpop.permute.xlu0 %196
    %200 = vset.pattern.permute.xlu0 0
    %201 = vperm.xlu0 %200, %v75
    %v202 = vpop.permute.xlu0 %201
    %205 = vset.pattern.permute.xlu0 0
    %206 = vperm.xlu0 %205, %v76
    %v207 = vpop.permute.xlu0 %206
    %210 = vset.pattern.permute.xlu0 0
    %211 = vperm.xlu0 %210, %v77
    %v212 = vpop.permute.xlu0 %211
    %v214 = vmul.f32 %v118, %v137
    %v215 = vmul.f32 %v119, %v142
    %v216 = vmul.f32 %v120, %v147
    %v217 = vmul.f32 %v121, %v152
    %v218 = vmul.f32 %v122, %v157
    %v219 = vmul.f32 %v123, %v162
    %v220 = vmul.f32 %v124, %v167
    %v221 = vmul.f32 %v125, %v172
    %v222 = vmul.f32 %v126, %v177
    %v223 = vmul.f32 %v127, %v182
    %v224 = vmul.f32 %v128, %v187
    %v225 = vmul.f32 %v129, %v192
    %v226 = vmul.f32 %v130, %v197
    %v227 = vmul.f32 %v131, %v202
    %v228 = vmul.f32 %v132, %v207
    %v229 = vmul.f32 %v133, %v212
    %v230 = vpack.c.bf16 %v215, %v214
    %v231 = vpack.c.bf16 %v217, %v216
    %v232 = vpack.c.bf16 %v219, %v218
    %v233 = vpack.c.bf16 %v221, %v220
    %v234 = vpack.c.bf16 %v223, %v222
    %v235 = vpack.c.bf16 %v225, %v224
    %v236 = vpack.c.bf16 %v227, %v226
    %v237 = vpack.c.bf16 %v229, %v228
    %v238 = vld [vmem:[#allocation5 + $0x8] sm:$0xff]
    %v239 = vld [vmem:[#allocation5 + $0x10] sm:$0xff]
    %v240 = vld [vmem:[#allocation5 + $0x18] sm:$0xff]
    %v241 = vld [vmem:[#allocation5 + $0x20] sm:$0xff]
    %v242 = vld [vmem:[#allocation5 + $0x28] sm:$0xff]
    %v243 = vld [vmem:[#allocation5 + $0x30] sm:$0xff]
    %v244 = vld [vmem:[#allocation5 + $0x38] sm:$0xff]
    %v245 = vld [vmem:[#allocation5 + $0x40] sm:$0xff]
    %v246 = vld [vmem:[#allocation5 + $0x48] sm:$0xff]
    %v247 = vld [vmem:[#allocation5 + $0x50] sm:$0xff]
    %v248 = vld [vmem:[#allocation5 + $0x58] sm:$0xff]
    %v249 = vld [vmem:[#allocation5 + $0x60] sm:$0xff]
    %v250 = vld [vmem:[#allocation5 + $0x68] sm:$0xff]
    %v251 = vld [vmem:[#allocation5 + $0x70] sm:$0xff]
    %v252 = vld [vmem:[#allocation5 + $0x78] sm:$0xff]
    %v253 = vld [vmem:[#allocation5 + $0x80] sm:$0xff]
    %254 = vset.pattern.permute.xlu0 1
    %255 = vperm.xlu0 %254, %v62
    %v256 = vpop.permute.xlu0 %255
    %258 = vset.pattern.permute.xlu0 1
    %259 = vperm.xlu0 %258, %v63
    %v260 = vpop.permute.xlu0 %259
    %262 = vset.pattern.permute.xlu0 1
    %263 = vperm.xlu0 %262, %v64
    %v264 = vpop.permute.xlu0 %263
    %266 = vset.pattern.permute.xlu0 1
    %267 = vperm.xlu0 %266, %v65
    %v268 = vpop.permute.xlu0 %267
    %270 = vset.pattern.permute.xlu0 1
    %271 = vperm.xlu0 %270, %v66
    %v272 = vpop.permute.xlu0 %271
    %274 = vset.pattern.permute.xlu0 1
    %275 = vperm.xlu0 %274, %v67
    %v276 = vpop.permute.xlu0 %275
    %278 = vset.pattern.permute.xlu0 1
    %279 = vperm.xlu0 %278, %v68
    %v280 = vpop.permute.xlu0 %279
    %282 = vset.pattern.permute.xlu0 1
    %283 = vperm.xlu0 %282, %v69
    %v284 = vpop.permute.xlu0 %283
    %286 = vset.pattern.permute.xlu0 1
    %287 = vperm.xlu0 %286, %v70
    %v288 = vpop.permute.xlu0 %287
    %290 = vset.pattern.permute.xlu0 1
    %291 = vperm.xlu0 %290, %v71
    %v292 = vpop.permute.xlu0 %291
    %294 = vset.pattern.permute.xlu0 1
    %295 = vperm.xlu0 %294, %v72
    %v296 = vpop.permute.xlu0 %295
    %298 = vset.pattern.permute.xlu0 1
    %299 = vperm.xlu0 %298, %v73
    %v300 = vpop.permute.xlu0 %299
    %302 = vset.pattern.permute.xlu0 1
    %303 = vperm.xlu0 %302, %v74
    %v304 = vpop.permute.xlu0 %303
    %306 = vset.pattern.permute.xlu0 1
    %307 = vperm.xlu0 %306, %v75
    %v308 = vpop.permute.xlu0 %307
    %310 = vset.pattern.permute.xlu0 1
    %311 = vperm.xlu0 %310, %v76
    %v312 = vpop.permute.xlu0 %311
    %314 = vset.pattern.permute.xlu0 1
    %315 = vperm.xlu0 %314, %v77
    %v316 = vpop.permute.xlu0 %315
    %v318 = vmul.f32 %v238, %v256
    %v319 = vmul.f32 %v239, %v260
    %v320 = vmul.f32 %v240, %v264
    %v321 = vmul.f32 %v241, %v268
    %v322 = vmul.f32 %v242, %v272
    %v323 = vmul.f32 %v243, %v276
    %v324 = vmul.f32 %v244, %v280
    %v325 = vmul.f32 %v245, %v284
    %v326 = vmul.f32 %v246, %v288
    %v327 = vmul.f32 %v247, %v292
    %v328 = vmul.f32 %v248, %v296
    %v329 = vmul.f32 %v249, %v300
    %v330 = vmul.f32 %v250, %v304
    %v331 = vmul.f32 %v251, %v308
    %v332 = vmul.f32 %v252, %v312
    %v333 = vmul.f32 %v253, %v316
    %v334 = vpack.c.bf16 %v319, %v318
    %v335 = vpack.c.bf16 %v321, %v320
    %v336 = vpack.c.bf16 %v323, %v322
    %v337 = vpack.c.bf16 %v325, %v324
    %v338 = vpack.c.bf16 %v327, %v326
    %v339 = vpack.c.bf16 %v329, %v328
    %v340 = vpack.c.bf16 %v331, %v330
    %v341 = vpack.c.bf16 %v333, %v332
    %v343 = vunpack.c.l.b16 %v78
    %v344 = vpack.c.b16 %v343, %v343
    %v345 = vrot.slane %v344, 2
    %v347 = vsel %vm101, %v334, 0
    %v350 = vsel %vm101, %v335, 0
    %v353 = vsel %vm101, %v336, 0
    %v356 = vsel %vm101, %v337, 0
    %v359 = vsel %vm101, %v338, 0
    %v362 = vsel %vm101, %v339, 0
    %v365 = vsel %vm101, %v340, 0
    %v368 = vsel %vm101, %v341, 0
    %vm370 = vcmask 1041408
    %v372 = vsel %vm370, %v345, 0
    %374 = vmatprep.subr.bf16.mxu0 0
    %375 = vmatpush1.bf16.msra.mxu0 0
    %376 = vmatprep.subr.bf16.mxu0 0
    %377 = vmatpush1.bf16.msra.mxu0 0
    %378 = vmatprep.subr.bf16.mxu0 0
    %379 = vmatpush1.bf16.msra.mxu0 0
    %380 = vmatprep.subr.bf16.mxu0 0
    %381 = vmatpush1.bf16.msra.mxu0 0
    %382 = vmatprep.subr.bf16.mxu0 0
    %383 = vmatpush1.bf16.msra.mxu0 0
    %384 = vmatprep.subr.bf16.mxu0 0
    %385 = vmatpush1.bf16.msra.mxu0 0
    %386 = vmatprep.subr.bf16.mxu0 0
    %387 = vmatpush1.bf16.msra.mxu0 0
    %388 = vmatprep.subr.bf16.mxu0 0
    %389 = vmatpush1.bf16.msra.mxu0 %v372
    %390 = vmatprep.subr.bf16.mxu0 0
    %391 = vmatpush2.bf16.msra.mxu0 0
    %392 = vmatprep.subr.bf16.mxu0 0
    %393 = vmatpush2.bf16.msra.mxu0 0
    %394 = vmatprep.subr.bf16.mxu0 0
    %395 = vmatpush2.bf16.msra.mxu0 0
    %396 = vmatprep.subr.bf16.mxu0 0
    %397 = vmatpush2.bf16.msra.mxu0 0
    %398 = vmatprep.subr.bf16.mxu0 0
    %399 = vmatpush2.bf16.msra.mxu0 0
    %400 = vmatprep.subr.bf16.mxu0 0
    %401 = vmatpush2.bf16.msra.mxu0 0
    %402 = vmatprep.subr.bf16.mxu0 0
    %403 = vmatpush2.bf16.msra.mxu0 0
    %404 = vmatprep.subr.bf16.mxu0 0
    %405 = vmatpush2.bf16.msra.mxu0 0
    %406 = vmatprep.mubr.bf16.mxu0 0
    %407 = vmatmul.mubr.bf16.gmra.mxu0 %v347
    %v408 = vpop.f32.mrf.mxu0
    %v409 = vadd.f32 0.0, %v408
    %v410 = vpop.f32.mrf.mxu0
    %v411 = vpop.f32.mrf.mxu0
    %v412 = vadd.f32 0.0, %v411
    %v413 = vpop.f32.mrf.mxu0
    %414 = vmatprep.mubr.bf16.mxu0 0
    %415 = vmatmul.mubr.bf16.gmra.mxu0 %v350
    %v416 = vpop.f32.mrf.mxu0
    %v417 = vadd.f32 0.0, %v416
    %v418 = vpop.f32.mrf.mxu0
    %v419 = vpop.f32.mrf.mxu0
    %v420 = vadd.f32 0.0, %v419
    %v421 = vpop.f32.mrf.mxu0
    %422 = vmatprep.mubr.bf16.mxu0 0
    %423 = vmatmul.mubr.bf16.gmra.mxu0 %v353
    %v424 = vpop.f32.mrf.mxu0
    %v425 = vadd.f32 0.0, %v424
    %v426 = vpop.f32.mrf.mxu0
    %v427 = vpop.f32.mrf.mxu0
    %v428 = vadd.f32 0.0, %v427
    %v429 = vpop.f32.mrf.mxu0
    %430 = vmatprep.mubr.bf16.mxu0 0
    %431 = vmatmul.mubr.bf16.gmra.mxu0 %v356
    %v432 = vpop.f32.mrf.mxu0
    %v433 = vadd.f32 0.0, %v432
    %v434 = vpop.f32.mrf.mxu0
    %v435 = vpop.f32.mrf.mxu0
    %v436 = vadd.f32 0.0, %v435
    %v437 = vpop.f32.mrf.mxu0
    %438 = vmatprep.mubr.bf16.mxu0 0
    %439 = vmatmul.mubr.bf16.gmra.mxu0 %v359
    %v440 = vpop.f32.mrf.mxu0
    %v441 = vadd.f32 0.0, %v440
    %v442 = vpop.f32.mrf.mxu0
    %v443 = vpop.f32.mrf.mxu0
    %v444 = vadd.f32 0.0, %v443
    %v445 = vpop.f32.mrf.mxu0
    %446 = vmatprep.mubr.bf16.mxu0 0
    %447 = vmatmul.mubr.bf16.gmra.mxu0 %v362
    %v448 = vpop.f32.mrf.mxu0
    %v449 = vadd.f32 0.0, %v448
    %v450 = vpop.f32.mrf.mxu0
    %v451 = vpop.f32.mrf.mxu0
    %v452 = vadd.f32 0.0, %v451
    %v453 = vpop.f32.mrf.mxu0
    %454 = vmatprep.mubr.bf16.mxu0 0
    %455 = vmatmul.mubr.bf16.gmra.mxu0 %v365
    %v456 = vpop.f32.mrf.mxu0
    %v457 = vadd.f32 0.0, %v456
    %v458 = vpop.f32.mrf.mxu0
    %v459 = vpop.f32.mrf.mxu0
    %v460 = vadd.f32 0.0, %v459
    %v461 = vpop.f32.mrf.mxu0
    %462 = vmatprep.mubr.bf16.mxu0 0
    %463 = vmatmul.mubr.bf16.gmra.mxu0 %v368
    %v464 = vpop.f32.mrf.mxu0
    %v465 = vadd.f32 0.0, %v464
    %v466 = vpop.f32.mrf.mxu0
    %v467 = vpop.f32.mrf.mxu0
    %v468 = vadd.f32 0.0, %v467
    %v469 = vpop.f32.mrf.mxu0
    %470 = vdwg.mxu0
    %v472 = vsel %vm101, %v230, 0
    %v475 = vsel %vm101, %v231, 0
    %v478 = vsel %vm101, %v232, 0
    %v481 = vsel %vm101, %v233, 0
    %v484 = vsel %vm101, %v234, 0
    %v487 = vsel %vm101, %v235, 0
    %v490 = vsel %vm101, %v236, 0
    %v493 = vsel %vm101, %v237, 0
    %v496 = vsel %vm370, %v78, 0
    %498 = vmatprep.subr.bf16.mxu0 0
    %499 = vmatpush1.bf16.msra.mxu0 0
    %500 = vmatprep.subr.bf16.mxu0 0
    %501 = vmatpush1.bf16.msra.mxu0 0
    %502 = vmatprep.subr.bf16.mxu0 0
    %503 = vmatpush1.bf16.msra.mxu0 0
    %504 = vmatprep.subr.bf16.mxu0 0
    %505 = vmatpush1.bf16.msra.mxu0 0
    %506 = vmatprep.subr.bf16.mxu0 0
    %507 = vmatpush1.bf16.msra.mxu0 0
    %508 = vmatprep.subr.bf16.mxu0 0
    %509 = vmatpush1.bf16.msra.mxu0 0
    %510 = vmatprep.subr.bf16.mxu0 0
    %511 = vmatpush1.bf16.msra.mxu0 0
    %512 = vmatprep.subr.bf16.mxu0 0
    %513 = vmatpush1.bf16.msra.mxu0 %v496
    %514 = vmatprep.subr.bf16.mxu0 0
    %515 = vmatpush2.bf16.msra.mxu0 0
    %516 = vmatprep.subr.bf16.mxu0 0
    %517 = vmatpush2.bf16.msra.mxu0 0
    %518 = vmatprep.subr.bf16.mxu0 0
    %519 = vmatpush2.bf16.msra.mxu0 0
    %520 = vmatprep.subr.bf16.mxu0 0
    %521 = vmatpush2.bf16.msra.mxu0 0
    %522 = vmatprep.subr.bf16.mxu0 0
    %523 = vmatpush2.bf16.msra.mxu0 0
    %524 = vmatprep.subr.bf16.mxu0 0
    %525 = vmatpush2.bf16.msra.mxu0 0
    %526 = vmatprep.subr.bf16.mxu0 0
    %527 = vmatpush2.bf16.msra.mxu0 0
    %528 = vmatprep.subr.bf16.mxu0 0
    %529 = vmatpush2.bf16.msra.mxu0 0
    %530 = vmatprep.mubr.bf16.mxu0 0
    %531 = vmatmul.mubr.bf16.gmra.mxu0 %v472
    %v532 = vpop.f32.mrf.mxu0
    %v533 = vadd.f32 %v409, %v532
    %v534 = vpop.f32.mrf.mxu0
    %v535 = vpop.f32.mrf.mxu0
    %v536 = vadd.f32 %v412, %v535
    %v537 = vpop.f32.mrf.mxu0
    %538 = vmatprep.mubr.bf16.mxu0 0
    %539 = vmatmul.mubr.bf16.gmra.mxu0 %v475
    %v540 = vpop.f32.mrf.mxu0
    %v541 = vadd.f32 %v417, %v540
    %v542 = vpop.f32.mrf.mxu0
    %v543 = vpop.f32.mrf.mxu0
    %v544 = vadd.f32 %v420, %v543
    %v545 = vpop.f32.mrf.mxu0
    %546 = vmatprep.mubr.bf16.mxu0 0
    %547 = vmatmul.mubr.bf16.gmra.mxu0 %v478
    %v548 = vpop.f32.mrf.mxu0
    %v549 = vadd.f32 %v425, %v548
    %v550 = vpop.f32.mrf.mxu0
    %v551 = vpop.f32.mrf.mxu0
    %v552 = vadd.f32 %v428, %v551
    %v553 = vpop.f32.mrf.mxu0
    %554 = vmatprep.mubr.bf16.mxu0 0
    %555 = vmatmul.mubr.bf16.gmra.mxu0 %v481
    %v556 = vpop.f32.mrf.mxu0
    %v557 = vadd.f32 %v433, %v556
    %v558 = vpop.f32.mrf.mxu0
    %v559 = vpop.f32.mrf.mxu0
    %v560 = vadd.f32 %v436, %v559
    %v561 = vpop.f32.mrf.mxu0
    %562 = vmatprep.mubr.bf16.mxu0 0
    %563 = vmatmul.mubr.bf16.gmra.mxu0 %v484
    %v564 = vpop.f32.mrf.mxu0
    %v565 = vadd.f32 %v441, %v564
    %v566 = vpop.f32.mrf.mxu0
    %v567 = vpop.f32.mrf.mxu0
    %v568 = vadd.f32 %v444, %v567
    %v569 = vpop.f32.mrf.mxu0
    %570 = vmatprep.mubr.bf16.mxu0 0
    %571 = vmatmul.mubr.bf16.gmra.mxu0 %v487
    %v572 = vpop.f32.mrf.mxu0
    %v573 = vadd.f32 %v449, %v572
    %v574 = vpop.f32.mrf.mxu0
    %v575 = vpop.f32.mrf.mxu0
    %v576 = vadd.f32 %v452, %v575
    %v577 = vpop.f32.mrf.mxu0
    %578 = vmatprep.mubr.bf16.mxu0 0
    %579 = vmatmul.mubr.bf16.gmra.mxu0 %v490
    %v580 = vpop.f32.mrf.mxu0
    %v581 = vadd.f32 %v457, %v580
    %v582 = vpop.f32.mrf.mxu0
    %v583 = vpop.f32.mrf.mxu0
    %v584 = vadd.f32 %v460, %v583
    %v585 = vpop.f32.mrf.mxu0
    %586 = vmatprep.mubr.bf16.mxu0 0
    %587 = vmatmul.mubr.bf16.gmra.mxu0 %v493
    %v588 = vpop.f32.mrf.mxu0
    %v589 = vadd.f32 %v465, %v588
    %v590 = vpop.f32.mrf.mxu0
    %v591 = vpop.f32.mrf.mxu0
    %v592 = vadd.f32 %v468, %v591
    %v593 = vpop.f32.mrf.mxu0
    %594 = vdwg.mxu0
    %v595 = vld [vmem:[#allocation5 + $0x9] sm:$0xff]
    %v596 = vld [vmem:[#allocation5 + $0x11] sm:$0xff]
    %v597 = vld [vmem:[#allocation5 + $0x19] sm:$0xff]
    %v598 = vld [vmem:[#allocation5 + $0x21] sm:$0xff]
    %v599 = vld [vmem:[#allocation5 + $0x29] sm:$0xff]
    %v600 = vld [vmem:[#allocation5 + $0x31] sm:$0xff]
    %v601 = vld [vmem:[#allocation5 + $0x39] sm:$0xff]
    %v602 = vld [vmem:[#allocation5 + $0x41] sm:$0xff]
    %v603 = vld [vmem:[#allocation5 + $0x49] sm:$0xff]
    %v604 = vld [vmem:[#allocation5 + $0x51] sm:$0xff]
    %v605 = vld [vmem:[#allocation5 + $0x59] sm:$0xff]
    %v606 = vld [vmem:[#allocation5 + $0x61] sm:$0xff]
    %v607 = vld [vmem:[#allocation5 + $0x69] sm:$0xff]
    %v608 = vld [vmem:[#allocation5 + $0x71] sm:$0xff]
    %v609 = vld [vmem:[#allocation5 + $0x79] sm:$0xff]
    %v610 = vld [vmem:[#allocation5 + $0x81] sm:$0xff]
    %611 = vset.pattern.permute.xlu0 2
    %612 = vperm.xlu0 %611, %v62
    %v613 = vpop.permute.xlu0 %612
    %615 = vset.pattern.permute.xlu0 2
    %616 = vperm.xlu0 %615, %v63
    %v617 = vpop.permute.xlu0 %616
    %619 = vset.pattern.permute.xlu0 2
    %620 = vperm.xlu0 %619, %v64
    %v621 = vpop.permute.xlu0 %620
    %623 = vset.pattern.permute.xlu0 2
    %624 = vperm.xlu0 %623, %v65
    %v625 = vpop.permute.xlu0 %624
    %627 = vset.pattern.permute.xlu0 2
    %628 = vperm.xlu0 %627, %v66
    %v629 = vpop.permute.xlu0 %628
    %631 = vset.pattern.permute.xlu0 2
    %632 = vperm.xlu0 %631, %v67
    %v633 = vpop.permute.xlu0 %632
    %635 = vset.pattern.permute.xlu0 2
    %636 = vperm.xlu0 %635, %v68
    %v637 = vpop.permute.xlu0 %636
    %639 = vset.pattern.permute.xlu0 2
    %640 = vperm.xlu0 %639, %v69
    %v641 = vpop.permute.xlu0 %640
    %643 = vset.pattern.permute.xlu0 2
    %644 = vperm.xlu0 %643, %v70
    %v645 = vpop.permute.xlu0 %644
    %647 = vset.pattern.permute.xlu0 2
    %648 = vperm.xlu0 %647, %v71
    %v649 = vpop.permute.xlu0 %648
    %651 = vset.pattern.permute.xlu0 2
    %652 = vperm.xlu0 %651, %v72
    %v653 = vpop.permute.xlu0 %652
    %655 = vset.pattern.permute.xlu0 2
    %656 = vperm.xlu0 %655, %v73
    %v657 = vpop.permute.xlu0 %656
    %659 = vset.pattern.permute.xlu0 2
    %660 = vperm.xlu0 %659, %v74
    %v661 = vpop.permute.xlu0 %660
    %663 = vset.pattern.permute.xlu0 2
    %664 = vperm.xlu0 %663, %v75
    %v665 = vpop.permute.xlu0 %664
    %667 = vset.pattern.permute.xlu0 2
    %668 = vperm.xlu0 %667, %v76
    %v669 = vpop.permute.xlu0 %668
    %671 = vset.pattern.permute.xlu0 2
    %672 = vperm.xlu0 %671, %v77
    %v673 = vpop.permute.xlu0 %672
    %v675 = vmul.f32 %v595, %v613
    %v676 = vmul.f32 %v596, %v617
    %v677 = vmul.f32 %v597, %v621
    %v678 = vmul.f32 %v598, %v625
    %v679 = vmul.f32 %v599, %v629
    %v680 = vmul.f32 %v600, %v633
    %v681 = vmul.f32 %v601, %v637
    %v682 = vmul.f32 %v602, %v641
    %v683 = vmul.f32 %v603, %v645
    %v684 = vmul.f32 %v604, %v649
    %v685 = vmul.f32 %v605, %v653
    %v686 = vmul.f32 %v606, %v657
    %v687 = vmul.f32 %v607, %v661
    %v688 = vmul.f32 %v608, %v665
    %v689 = vmul.f32 %v609, %v669
    %v690 = vmul.f32 %v610, %v673
    %v691 = vpack.c.bf16 %v676, %v675
    %v692 = vpack.c.bf16 %v678, %v677
    %v693 = vpack.c.bf16 %v680, %v679
    %v694 = vpack.c.bf16 %v682, %v681
    %v695 = vpack.c.bf16 %v684, %v683
    %v696 = vpack.c.bf16 %v686, %v685
    %v697 = vpack.c.bf16 %v688, %v687
    %v698 = vpack.c.bf16 %v690, %v689
    %v700 = vsel %vm101, %v691, 0
    %v703 = vsel %vm101, %v692, 0
    %v706 = vsel %vm101, %v693, 0
    %v709 = vsel %vm101, %v694, 0
    %v712 = vsel %vm101, %v695, 0
    %v715 = vsel %vm101, %v696, 0
    %v718 = vsel %vm101, %v697, 0
    %v721 = vsel %vm101, %v698, 0
    %v724 = vsel %vm370, %v79, 0
    %726 = vmatprep.subr.bf16.mxu0 0
    %727 = vmatpush1.bf16.msra.mxu0 0
    %728 = vmatprep.subr.bf16.mxu0 0
    %729 = vmatpush1.bf16.msra.mxu0 0
    %730 = vmatprep.subr.bf16.mxu0 0
    %731 = vmatpush1.bf16.msra.mxu0 0
    %732 = vmatprep.subr.bf16.mxu0 0
    %733 = vmatpush1.bf16.msra.mxu0 0
    %734 = vmatprep.subr.bf16.mxu0 0
    %735 = vmatpush1.bf16.msra.mxu0 0
    %736 = vmatprep.subr.bf16.mxu0 0
    %737 = vmatpush1.bf16.msra.mxu0 0
    %738 = vmatprep.subr.bf16.mxu0 0
    %739 = vmatpush1.bf16.msra.mxu0 0
    %740 = vmatprep.subr.bf16.mxu0 0
    %741 = vmatpush1.bf16.msra.mxu0 %v724
    %742 = vmatprep.subr.bf16.mxu0 0
    %743 = vmatpush2.bf16.msra.mxu0 0
    %744 = vmatprep.subr.bf16.mxu0 0
    %745 = vmatpush2.bf16.msra.mxu0 0
    %746 = vmatprep.subr.bf16.mxu0 0
    %747 = vmatpush2.bf16.msra.mxu0 0
    %748 = vmatprep.subr.bf16.mxu0 0
    %749 = vmatpush2.bf16.msra.mxu0 0
    %750 = vmatprep.subr.bf16.mxu0 0
    %751 = vmatpush2.bf16.msra.mxu0 0
    %752 = vmatprep.subr.bf16.mxu0 0
    %753 = vmatpush2.bf16.msra.mxu0 0
    %754 = vmatprep.subr.bf16.mxu0 0
    %755 = vmatpush2.bf16.msra.mxu0 0
    %756 = vmatprep.subr.bf16.mxu0 0
    %757 = vmatpush2.bf16.msra.mxu0 0
    %758 = vmatprep.mubr.bf16.mxu0 0
    %759 = vmatmul.mubr.bf16.gmra.mxu0 %v700
    %v760 = vpop.f32.mrf.mxu0
    %v761 = vadd.f32 0.0, %v760
    %v762 = vpop.f32.mrf.mxu0
    %v763 = vpop.f32.mrf.mxu0
    %v764 = vadd.f32 0.0, %v763
    %v765 = vpop.f32.mrf.mxu0
    %766 = vmatprep.mubr.bf16.mxu0 0
    %767 = vmatmul.mubr.bf16.gmra.mxu0 %v703
    %v768 = vpop.f32.mrf.mxu0
    %v769 = vadd.f32 0.0, %v768
    %v770 = vpop.f32.mrf.mxu0
    %v771 = vpop.f32.mrf.mxu0
    %v772 = vadd.f32 0.0, %v771
    %v773 = vpop.f32.mrf.mxu0
    %774 = vmatprep.mubr.bf16.mxu0 0
    %775 = vmatmul.mubr.bf16.gmra.mxu0 %v706
    %v776 = vpop.f32.mrf.mxu0
    %v777 = vadd.f32 0.0, %v776
    %v778 = vpop.f32.mrf.mxu0
    %v779 = vpop.f32.mrf.mxu0
    %v780 = vadd.f32 0.0, %v779
    %v781 = vpop.f32.mrf.mxu0
    %782 = vmatprep.mubr.bf16.mxu0 0
    %783 = vmatmul.mubr.bf16.gmra.mxu0 %v709
    %v784 = vpop.f32.mrf.mxu0
    %v785 = vadd.f32 0.0, %v784
    %v786 = vpop.f32.mrf.mxu0
    %v787 = vpop.f32.mrf.mxu0
    %v788 = vadd.f32 0.0, %v787
    %v789 = vpop.f32.mrf.mxu0
    %790 = vmatprep.mubr.bf16.mxu0 0
    %791 = vmatmul.mubr.bf16.gmra.mxu0 %v712
    %v792 = vpop.f32.mrf.mxu0
    %v793 = vadd.f32 0.0, %v792
    %v794 = vpop.f32.mrf.mxu0
    %v795 = vpop.f32.mrf.mxu0
    %v796 = vadd.f32 0.0, %v795
    %v797 = vpop.f32.mrf.mxu0
    %798 = vmatprep.mubr.bf16.mxu0 0
    %799 = vmatmul.mubr.bf16.gmra.mxu0 %v715
    %v800 = vpop.f32.mrf.mxu0
    %v801 = vadd.f32 0.0, %v800
    %v802 = vpop.f32.mrf.mxu0
    %v803 = vpop.f32.mrf.mxu0
    %v804 = vadd.f32 0.0, %v803
    %v805 = vpop.f32.mrf.mxu0
    %806 = vmatprep.mubr.bf16.mxu0 0
    %807 = vmatmul.mubr.bf16.gmra.mxu0 %v718
    %v808 = vpop.f32.mrf.mxu0
    %v809 = vadd.f32 0.0, %v808
    %v810 = vpop.f32.mrf.mxu0
    %v811 = vpop.f32.mrf.mxu0
    %v812 = vadd.f32 0.0, %v811
    %v813 = vpop.f32.mrf.mxu0
    %814 = vmatprep.mubr.bf16.mxu0 0
    %815 = vmatmul.mubr.bf16.gmra.mxu0 %v721
    %v816 = vpop.f32.mrf.mxu0
    %v817 = vadd.f32 0.0, %v816
    %v818 = vpop.f32.mrf.mxu0
    %v819 = vpop.f32.mrf.mxu0
    %v820 = vadd.f32 0.0, %v819
    %v821 = vpop.f32.mrf.mxu0
    %822 = vdwg.mxu0
    %v823 = vadd.f32 %v533, %v761
    %v824 = vadd.f32 %v536, %v764
    %v825 = vadd.f32 %v541, %v769
    %v826 = vadd.f32 %v544, %v772
    %v827 = vadd.f32 %v549, %v777
    %v828 = vadd.f32 %v552, %v780
    %v829 = vadd.f32 %v557, %v785
    %v830 = vadd.f32 %v560, %v788
    %v831 = vadd.f32 %v565, %v793
    %v832 = vadd.f32 %v568, %v796
    %v833 = vadd.f32 %v573, %v801
    %v834 = vadd.f32 %v576, %v804
    %v835 = vadd.f32 %v581, %v809
    %v836 = vadd.f32 %v584, %v812
    %v837 = vadd.f32 %v589, %v817
    %v838 = vadd.f32 %v592, %v820
    %v839 = vld [vmem:[#allocation5 + $0xf] sm:$0xff]
    %v840 = vld [vmem:[#allocation5 + $0x17] sm:$0xff]
    %v841 = vld [vmem:[#allocation5 + $0x1f] sm:$0xff]
    %v842 = vld [vmem:[#allocation5 + $0x27] sm:$0xff]
    %v843 = vld [vmem:[#allocation5 + $0x2f] sm:$0xff]
    %v844 = vld [vmem:[#allocation5 + $0x37] sm:$0xff]
    %v845 = vld [vmem:[#allocation5 + $0x3f] sm:$0xff]
    %v846 = vld [vmem:[#allocation5 + $0x47] sm:$0xff]
    %v847 = vld [vmem:[#allocation5 + $0x4f] sm:$0xff]
    %v848 = vld [vmem:[#allocation5 + $0x57] sm:$0xff]
    %v849 = vld [vmem:[#allocation5 + $0x5f] sm:$0xff]
    %v850 = vld [vmem:[#allocation5 + $0x67] sm:$0xff]
    %v851 = vld [vmem:[#allocation5 + $0x6f] sm:$0xff]
    %v852 = vld [vmem:[#allocation5 + $0x77] sm:$0xff]
    %v853 = vld [vmem:[#allocation5 + $0x7f] sm:$0xff]
    %v854 = vld [vmem:[#allocation5 + $0x87] sm:$0xff]
    %855 = vset.pattern.permute.xlu0 3
    %856 = vperm.xlu0 %855, %v62
    %v857 = vpop.permute.xlu0 %856
    %859 = vset.pattern.permute.xlu0 3
    %860 = vperm.xlu0 %859, %v63
    %v861 = vpop.permute.xlu0 %860
    %863 = vset.pattern.permute.xlu0 3
    %864 = vperm.xlu0 %863, %v64
    %v865 = vpop.permute.xlu0 %864
    %867 = vset.pattern.permute.xlu0 3
    %868 = vperm.xlu0 %867, %v65
    %v869 = vpop.permute.xlu0 %868
    %871 = vset.pattern.permute.xlu0 3
    %872 = vperm.xlu0 %871, %v66
    %v873 = vpop.permute.xlu0 %872
    %875 = vset.pattern.permute.xlu0 3
    %876 = vperm.xlu0 %875, %v67
    %v877 = vpop.permute.xlu0 %876
    %879 = vset.pattern.permute.xlu0 3
    %880 = vperm.xlu0 %879, %v68
    %v881 = vpop.permute.xlu0 %880
    %883 = vset.pattern.permute.xlu0 3
    %884 = vperm.xlu0 %883, %v69
    %v885 = vpop.permute.xlu0 %884
    %887 = vset.pattern.permute.xlu0 3
    %888 = vperm.xlu0 %887, %v70
    %v889 = vpop.permute.xlu0 %888
    %891 = vset.pattern.permute.xlu0 3
    %892 = vperm.xlu0 %891, %v71
    %v893 = vpop.permute.xlu0 %892
    %895 = vset.pattern.permute.xlu0 3
    %896 = vperm.xlu0 %895, %v72
    %v897 = vpop.permute.xlu0 %896
    %899 = vset.pattern.permute.xlu0 3
    %900 = vperm.xlu0 %899, %v73
    %v901 = vpop.permute.xlu0 %900
    %903 = vset.pattern.permute.xlu0 3
    %904 = vperm.xlu0 %903, %v74
    %v905 = vpop.permute.xlu0 %904
    %907 = vset.pattern.permute.xlu0 3
    %908 = vperm.xlu0 %907, %v75
    %v909 = vpop.permute.xlu0 %908
    %911 = vset.pattern.permute.xlu0 3
    %912 = vperm.xlu0 %911, %v76
    %v913 = vpop.permute.xlu0 %912
    %915 = vset.pattern.permute.xlu0 3
    %916 = vperm.xlu0 %915, %v77
    %v917 = vpop.permute.xlu0 %916
    %v919 = vmul.f32 %v839, %v857
    %v920 = vmul.f32 %v840, %v861
    %v921 = vmul.f32 %v841, %v865
    %v922 = vmul.f32 %v842, %v869
    %v923 = vmul.f32 %v843, %v873
    %v924 = vmul.f32 %v844, %v877
    %v925 = vmul.f32 %v845, %v881
    %v926 = vmul.f32 %v846, %v885
    %v927 = vmul.f32 %v847, %v889
    %v928 = vmul.f32 %v848, %v893
    %v929 = vmul.f32 %v849, %v897
    %v930 = vmul.f32 %v850, %v901
    %v931 = vmul.f32 %v851, %v905
    %v932 = vmul.f32 %v852, %v909
    %v933 = vmul.f32 %v853, %v913
    %v934 = vmul.f32 %v854, %v917
    %v935 = vpack.c.bf16 %v920, %v919
    %v936 = vpack.c.bf16 %v922, %v921
    %v937 = vpack.c.bf16 %v924, %v923
    %v938 = vpack.c.bf16 %v926, %v925
    %v939 = vpack.c.bf16 %v928, %v927
    %v940 = vpack.c.bf16 %v930, %v929
    %v941 = vpack.c.bf16 %v932, %v931
    %v942 = vpack.c.bf16 %v934, %v933
    %v944 = vunpack.c.l.b16 %v79
    %v945 = vpack.c.b16 %v944, %v944
    %v946 = vrot.slane %v945, 2
    %v948 = vsel %vm101, %v935, 0
    %v951 = vsel %vm101, %v936, 0
    %v954 = vsel %vm101, %v937, 0
    %v957 = vsel %vm101, %v938, 0
    %v960 = vsel %vm101, %v939, 0
    %v963 = vsel %vm101, %v940, 0
    %v966 = vsel %vm101, %v941, 0
    %v969 = vsel %vm101, %v942, 0
    %v972 = vsel %vm370, %v946, 0
    %974 = vmatprep.subr.bf16.mxu0 0
    %975 = vmatpush1.bf16.msra.mxu0 0
    %976 = vmatprep.subr.bf16.mxu0 0
    %977 = vmatpush1.bf16.msra.mxu0 0
    %978 = vmatprep.subr.bf16.mxu0 0
    %979 = vmatpush1.bf16.msra.mxu0 0
    %980 = vmatprep.subr.bf16.mxu0 0
    %981 = vmatpush1.bf16.msra.mxu0 0
    %982 = vmatprep.subr.bf16.mxu0 0
    %983 = vmatpush1.bf16.msra.mxu0 0
    %984 = vmatprep.subr.bf16.mxu0 0
    %985 = vmatpush1.bf16.msra.mxu0 0
    %986 = vmatprep.subr.bf16.mxu0 0
    %987 = vmatpush1.bf16.msra.mxu0 0
    %988 = vmatprep.subr.bf16.mxu0 0
    %989 = vmatpush1.bf16.msra.mxu0 %v972
    %990 = vmatprep.subr.bf16.mxu0 0
    %991 = vmatpush2.bf16.msra.mxu0 0
    %992 = vmatprep.subr.bf16.mxu0 0
    %993 = vmatpush2.bf16.msra.mxu0 0
    %994 = vmatprep.subr.bf16.mxu0 0
    %995 = vmatpush2.bf16.msra.mxu0 0
    %996 = vmatprep.subr.bf16.mxu0 0
    %997 = vmatpush2.bf16.msra.mxu0 0
    %998 = vmatprep.subr.bf16.mxu0 0
    %999 = vmatpush2.bf16.msra.mxu0 0
    %1000 = vmatprep.subr.bf16.mxu0 0
    %1001 = vmatpush2.bf16.msra.mxu0 0
    %1002 = vmatprep.subr.bf16.mxu0 0
    %1003 = vmatpush2.bf16.msra.mxu0 0
    %1004 = vmatprep.subr.bf16.mxu0 0
    %1005 = vmatpush2.bf16.msra.mxu0 0
    %1006 = vmatprep.mubr.bf16.mxu0 0
    %1007 = vmatmul.mubr.bf16.gmra.mxu0 %v948
    %v1008 = vpop.f32.mrf.mxu0
    %v1009 = vadd.f32 0.0, %v1008
    %v1010 = vpop.f32.mrf.mxu0
    %v1011 = vpop.f32.mrf.mxu0
    %v1012 = vadd.f32 0.0, %v1011
    %v1013 = vpop.f32.mrf.mxu0
    %1014 = vmatprep.mubr.bf16.mxu0 0
    %1015 = vmatmul.mubr.bf16.gmra.mxu0 %v951
    %v1016 = vpop.f32.mrf.mxu0
    %v1017 = vadd.f32 0.0, %v1016
    %v1018 = vpop.f32.mrf.mxu0
    %v1019 = vpop.f32.mrf.mxu0
    %v1020 = vadd.f32 0.0, %v1019
    %v1021 = vpop.f32.mrf.mxu0
    %1022 = vmatprep.mubr.bf16.mxu0 0
    %1023 = vmatmul.mubr.bf16.gmra.mxu0 %v954
    %v1024 = vpop.f32.mrf.mxu0
    %v1025 = vadd.f32 0.0, %v1024
    %v1026 = vpop.f32.mrf.mxu0
    %v1027 = vpop.f32.mrf.mxu0
    %v1028 = vadd.f32 0.0, %v1027
    %v1029 = vpop.f32.mrf.mxu0
    %1030 = vmatprep.mubr.bf16.mxu0 0
    %1031 = vmatmul.mubr.bf16.gmra.mxu0 %v957
    %v1032 = vpop.f32.mrf.mxu0
    %v1033 = vadd.f32 0.0, %v1032
    %v1034 = vpop.f32.mrf.mxu0
    %v1035 = vpop.f32.mrf.mxu0
    %v1036 = vadd.f32 0.0, %v1035
    %v1037 = vpop.f32.mrf.mxu0
    %1038 = vmatprep.mubr.bf16.mxu0 0
    %1039 = vmatmul.mubr.bf16.gmra.mxu0 %v960
    %v1040 = vpop.f32.mrf.mxu0
    %v1041 = vadd.f32 0.0, %v1040
    %v1042 = vpop.f32.mrf.mxu0
    %v1043 = vpop.f32.mrf.mxu0
    %v1044 = vadd.f32 0.0, %v1043
    %v1045 = vpop.f32.mrf.mxu0
    %1046 = vmatprep.mubr.bf16.mxu0 0
    %1047 = vmatmul.mubr.bf16.gmra.mxu0 %v963
    %v1048 = vpop.f32.mrf.mxu0
    %v1049 = vadd.f32 0.0, %v1048
    %v1050 = vpop.f32.mrf.mxu0
    %v1051 = vpop.f32.mrf.mxu0
    %v1052 = vadd.f32 0.0, %v1051
    %v1053 = vpop.f32.mrf.mxu0
    %1054 = vmatprep.mubr.bf16.mxu0 0
    %1055 = vmatmul.mubr.bf16.gmra.mxu0 %v966
    %v1056 = vpop.f32.mrf.mxu0
    %v1057 = vadd.f32 0.0, %v1056
    %v1058 = vpop.f32.mrf.mxu0
    %v1059 = vpop.f32.mrf.mxu0
    %v1060 = vadd.f32 0.0, %v1059
    %v1061 = vpop.f32.mrf.mxu0
    %1062 = vmatprep.mubr.bf16.mxu0 0
    %1063 = vmatmul.mubr.bf16.gmra.mxu0 %v969
    %v1064 = vpop.f32.mrf.mxu0
    %v1065 = vadd.f32 0.0, %v1064
    %v1066 = vpop.f32.mrf.mxu0
    %v1067 = vpop.f32.mrf.mxu0
    %v1068 = vadd.f32 0.0, %v1067
    %v1069 = vpop.f32.mrf.mxu0
    %1070 = vdwg.mxu0
    %v1071 = vadd.f32 %v823, %v1009
    %v1072 = vadd.f32 %v824, %v1012
    %v1073 = vadd.f32 %v825, %v1017
    %v1074 = vadd.f32 %v826, %v1020
    %v1075 = vadd.f32 %v827, %v1025
    %v1076 = vadd.f32 %v828, %v1028
    %v1077 = vadd.f32 %v829, %v1033
    %v1078 = vadd.f32 %v830, %v1036
    %v1079 = vadd.f32 %v831, %v1041
    %v1080 = vadd.f32 %v832, %v1044
    %v1081 = vadd.f32 %v833, %v1049
    %v1082 = vadd.f32 %v834, %v1052
    %v1083 = vadd.f32 %v835, %v1057
    %v1084 = vadd.f32 %v836, %v1060
    %v1085 = vadd.f32 %v837, %v1065
    %v1086 = vadd.f32 %v838, %v1068
    %v1087 = vld [vmem:[#allocation5 + $0x10] sm:$0xff]
    %v1088 = vld [vmem:[#allocation5 + $0x18] sm:$0xff]
    %v1089 = vld [vmem:[#allocation5 + $0x20] sm:$0xff]
    %v1090 = vld [vmem:[#allocation5 + $0x28] sm:$0xff]
    %v1091 = vld [vmem:[#allocation5 + $0x30] sm:$0xff]
    %v1092 = vld [vmem:[#allocation5 + $0x38] sm:$0xff]
    %v1093 = vld [vmem:[#allocation5 + $0x40] sm:$0xff]
    %v1094 = vld [vmem:[#allocation5 + $0x48] sm:$0xff]
    %v1095 = vld [vmem:[#allocation5 + $0x50] sm:$0xff]
    %v1096 = vld [vmem:[#allocation5 + $0x58] sm:$0xff]
    %v1097 = vld [vmem:[#allocation5 + $0x60] sm:$0xff]
    %v1098 = vld [vmem:[#allocation5 + $0x68] sm:$0xff]
    %v1099 = vld [vmem:[#allocation5 + $0x70] sm:$0xff]
    %v1100 = vld [vmem:[#allocation5 + $0x78] sm:$0xff]
    %v1101 = vld [vmem:[#allocation5 + $0x80] sm:$0xff]
    %v1102 = vld [vmem:[#allocation5 + $0x88] sm:$0xff]
    %v1103 = vpack.c.bf16 %v1088, %v1087
    %v1104 = vpack.c.bf16 %v1090, %v1089
    %v1105 = vpack.c.bf16 %v1092, %v1091
    %v1106 = vpack.c.bf16 %v1094, %v1093
    %v1107 = vpack.c.bf16 %v1096, %v1095
    %v1108 = vpack.c.bf16 %v1098, %v1097
    %v1109 = vpack.c.bf16 %v1100, %v1099
    %v1110 = vpack.c.bf16 %v1102, %v1101
    %v1112 = vsel %vm101, %v1103, 0
    %v1115 = vsel %vm101, %v1104, 0
    %v1118 = vsel %vm101, %v1105, 0
    %v1121 = vsel %vm101, %v1106, 0
    %v1124 = vsel %vm101, %v1107, 0
    %v1127 = vsel %vm101, %v1108, 0
    %v1130 = vsel %vm101, %v1109, 0
    %v1133 = vsel %vm101, %v1110, 0
    %v1136 = vsel %vm370, %v80, 0
    %1138 = vmatprep.subr.bf16.mxu0 0
    %1139 = vmatpush1.bf16.msra.mxu0 0
    %1140 = vmatprep.subr.bf16.mxu0 0
    %1141 = vmatpush1.bf16.msra.mxu0 0
    %1142 = vmatprep.subr.bf16.mxu0 0
    %1143 = vmatpush1.bf16.msra.mxu0 0
    %1144 = vmatprep.subr.bf16.mxu0 0
    %1145 = vmatpush1.bf16.msra.mxu0 0
    %1146 = vmatprep.subr.bf16.mxu0 0
    %1147 = vmatpush1.bf16.msra.mxu0 0
    %1148 = vmatprep.subr.bf16.mxu0 0
    %1149 = vmatpush1.bf16.msra.mxu0 0
    %1150 = vmatprep.subr.bf16.mxu0 0
    %1151 = vmatpush1.bf16.msra.mxu0 0
    %1152 = vmatprep.subr.bf16.mxu0 0
    %1153 = vmatpush1.bf16.msra.mxu0 %v1136
    %1154 = vmatprep.subr.bf16.mxu0 0
    %1155 = vmatpush2.bf16.msra.mxu0 0
    %1156 = vmatprep.subr.bf16.mxu0 0
    %1157 = vmatpush2.bf16.msra.mxu0 0
    %1158 = vmatprep.subr.bf16.mxu0 0
    %1159 = vmatpush2.bf16.msra.mxu0 0
    %1160 = vmatprep.subr.bf16.mxu0 0
    %1161 = vmatpush2.bf16.msra.mxu0 0
    %1162 = vmatprep.subr.bf16.mxu0 0
    %1163 = vmatpush2.bf16.msra.mxu0 0
    %1164 = vmatprep.subr.bf16.mxu0 0
    %1165 = vmatpush2.bf16.msra.mxu0 0
    %1166 = vmatprep.subr.bf16.mxu0 0
    %1167 = vmatpush2.bf16.msra.mxu0 0
    %1168 = vmatprep.subr.bf16.mxu0 0
    %1169 = vmatpush2.bf16.msra.mxu0 0
    %1170 = vmatprep.mubr.bf16.mxu0 0
    %1171 = vmatmul.mubr.bf16.gmra.mxu0 %v1112
    %v1172 = vpop.f32.mrf.mxu0
    %v1173 = vadd.f32 0.0, %v1172
    %v1174 = vpop.f32.mrf.mxu0
    %v1175 = vpop.f32.mrf.mxu0
    %v1176 = vadd.f32 0.0, %v1175
    %v1177 = vpop.f32.mrf.mxu0
    %1178 = vmatprep.mubr.bf16.mxu0 0
    %1179 = vmatmul.mubr.bf16.gmra.mxu0 %v1115
    %v1180 = vpop.f32.mrf.mxu0
    %v1181 = vadd.f32 0.0, %v1180
    %v1182 = vpop.f32.mrf.mxu0
    %v1183 = vpop.f32.mrf.mxu0
    %v1184 = vadd.f32 0.0, %v1183
    %v1185 = vpop.f32.mrf.mxu0
    %1186 = vmatprep.mubr.bf16.mxu0 0
    %1187 = vmatmul.mubr.bf16.gmra.mxu0 %v1118
    %v1188 = vpop.f32.mrf.mxu0
    %v1189 = vadd.f32 0.0, %v1188
    %v1190 = vpop.f32.mrf.mxu0
    %v1191 = vpop.f32.mrf.mxu0
    %v1192 = vadd.f32 0.0, %v1191
    %v1193 = vpop.f32.mrf.mxu0
    %1194 = vmatprep.mubr.bf16.mxu0 0
    %1195 = vmatmul.mubr.bf16.gmra.mxu0 %v1121
    %v1196 = vpop.f32.mrf.mxu0
    %v1197 = vadd.f32 0.0, %v1196
    %v1198 = vpop.f32.mrf.mxu0
    %v1199 = vpop.f32.mrf.mxu0
    %v1200 = vadd.f32 0.0, %v1199
    %v1201 = vpop.f32.mrf.mxu0
    %1202 = vmatprep.mubr.bf16.mxu0 0
    %1203 = vmatmul.mubr.bf16.gmra.mxu0 %v1124
    %v1204 = vpop.f32.mrf.mxu0
    %v1205 = vadd.f32 0.0, %v1204
    %v1206 = vpop.f32.mrf.mxu0
    %v1207 = vpop.f32.mrf.mxu0
    %v1208 = vadd.f32 0.0, %v1207
    %v1209 = vpop.f32.mrf.mxu0
    %1210 = vmatprep.mubr.bf16.mxu0 0
    %1211 = vmatmul.mubr.bf16.gmra.mxu0 %v1127
    %v1212 = vpop.f32.mrf.mxu0
    %v1213 = vadd.f32 0.0, %v1212
    %v1214 = vpop.f32.mrf.mxu0
    %v1215 = vpop.f32.mrf.mxu0
    %v1216 = vadd.f32 0.0, %v1215
    %v1217 = vpop.f32.mrf.mxu0
    %1218 = vmatprep.mubr.bf16.mxu0 0
    %1219 = vmatmul.mubr.bf16.gmra.mxu0 %v1130
    %v1220 = vpop.f32.mrf.mxu0
    %v1221 = vadd.f32 0.0, %v1220
    %v1222 = vpop.f32.mrf.mxu0
    %v1223 = vpop.f32.mrf.mxu0
    %v1224 = vadd.f32 0.0, %v1223
    %v1225 = vpop.f32.mrf.mxu0
    %1226 = vmatprep.mubr.bf16.mxu0 0
    %1227 = vmatmul.mubr.bf16.gmra.mxu0 %v1133
    %v1228 = vpop.f32.mrf.mxu0
    %v1229 = vadd.f32 0.0, %v1228
    %v1230 = vpop.f32.mrf.mxu0
    %v1231 = vpop.f32.mrf.mxu0
    %v1232 = vadd.f32 0.0, %v1231
    %v1233 = vpop.f32.mrf.mxu0
    %1234 = vdwg.mxu0
    %v1235 = vadd.f32 %v1071, %v1173
    %v1236 = vadd.f32 %v1072, %v1176
    %v1237 = vadd.f32 %v1073, %v1181
    %v1238 = vadd.f32 %v1074, %v1184
    %v1239 = vadd.f32 %v1075, %v1189
    %v1240 = vadd.f32 %v1076, %v1192
    %v1241 = vadd.f32 %v1077, %v1197
    %v1242 = vadd.f32 %v1078, %v1200
    %v1243 = vadd.f32 %v1079, %v1205
    %v1244 = vadd.f32 %v1080, %v1208
    %v1245 = vadd.f32 %v1081, %v1213
    %v1246 = vadd.f32 %v1082, %v1216
    %v1247 = vadd.f32 %v1083, %v1221
    %v1248 = vadd.f32 %v1084, %v1224
    %v1249 = vadd.f32 %v1085, %v1229
    %v1250 = vadd.f32 %v1086, %v1232
    %v1251 = vld [vmem:[#allocation5 + $0x11] sm:$0xff]
    %v1252 = vld [vmem:[#allocation5 + $0x19] sm:$0xff]
    %v1253 = vld [vmem:[#allocation5 + $0x21] sm:$0xff]
    %v1254 = vld [vmem:[#allocation5 + $0x29] sm:$0xff]
    %v1255 = vld [vmem:[#allocation5 + $0x31] sm:$0xff]
    %v1256 = vld [vmem:[#allocation5 + $0x39] sm:$0xff]
    %v1257 = vld [vmem:[#allocation5 + $0x41] sm:$0xff]
    %v1258 = vld [vmem:[#allocation5 + $0x49] sm:$0xff]
    %v1259 = vld [vmem:[#allocation5 + $0x51] sm:$0xff]
    %v1260 = vld [vmem:[#allocation5 + $0x59] sm:$0xff]
    %v1261 = vld [vmem:[#allocation5 + $0x61] sm:$0xff]
    %v1262 = vld [vmem:[#allocation5 + $0x69] sm:$0xff]
    %v1263 = vld [vmem:[#allocation5 + $0x71] sm:$0xff]
    %v1264 = vld [vmem:[#allocation5 + $0x79] sm:$0xff]
    %v1265 = vld [vmem:[#allocation5 + $0x81] sm:$0xff]
    %v1266 = vld [vmem:[#allocation5 + $0x89] sm:$0xff]
    %1267 = vset.pattern.permute.xlu0 5
    %1268 = vperm.xlu0 %1267, %v62
    %v1269 = vpop.permute.xlu0 %1268
    %1271 = vset.pattern.permute.xlu0 5
    %1272 = vperm.xlu0 %1271, %v63
    %v1273 = vpop.permute.xlu0 %1272
    %1275 = vset.pattern.permute.xlu0 5
    %1276 = vperm.xlu0 %1275, %v64
    %v1277 = vpop.permute.xlu0 %1276
    %1279 = vset.pattern.permute.xlu0 5
    %1280 = vperm.xlu0 %1279, %v65
    %v1281 = vpop.permute.xlu0 %1280
    %1283 = vset.pattern.permute.xlu0 5
    %1284 = vperm.xlu0 %1283, %v66
    %v1285 = vpop.permute.xlu0 %1284
    %1287 = vset.pattern.permute.xlu0 5
    %1288 = vperm.xlu0 %1287, %v67
    %v1289 = vpop.permute.xlu0 %1288
    %1291 = vset.pattern.permute.xlu0 5
    %1292 = vperm.xlu0 %1291, %v68
    %v1293 = vpop.permute.xlu0 %1292
    %1295 = vset.pattern.permute.xlu0 5
    %1296 = vperm.xlu0 %1295, %v69
    %v1297 = vpop.permute.xlu0 %1296
    %1299 = vset.pattern.permute.xlu0 5
    %1300 = vperm.xlu0 %1299, %v70
    %v1301 = vpop.permute.xlu0 %1300
    %1303 = vset.pattern.permute.xlu0 5
    %1304 = vperm.xlu0 %1303, %v71
    %v1305 = vpop.permute.xlu0 %1304
    %1307 = vset.pattern.permute.xlu0 5
    %1308 = vperm.xlu0 %1307, %v72
    %v1309 = vpop.permute.xlu0 %1308
    %1311 = vset.pattern.permute.xlu0 5
    %1312 = vperm.xlu0 %1311, %v73
    %v1313 = vpop.permute.xlu0 %1312
    %1315 = vset.pattern.permute.xlu0 5
    %1316 = vperm.xlu0 %1315, %v74
    %v1317 = vpop.permute.xlu0 %1316
    %1319 = vset.pattern.permute.xlu0 5
    %1320 = vperm.xlu0 %1319, %v75
    %v1321 = vpop.permute.xlu0 %1320
    %1323 = vset.pattern.permute.xlu0 5
    %1324 = vperm.xlu0 %1323, %v76
    %v1325 = vpop.permute.xlu0 %1324
    %1327 = vset.pattern.permute.xlu0 5
    %1328 = vperm.xlu0 %1327, %v77
    %v1329 = vpop.permute.xlu0 %1328
    %v1331 = vmul.f32 %v1251, %v1269
    %v1332 = vmul.f32 %v1252, %v1273
    %v1333 = vmul.f32 %v1253, %v1277
    %v1334 = vmul.f32 %v1254, %v1281
    %v1335 = vmul.f32 %v1255, %v1285
    %v1336 = vmul.f32 %v1256, %v1289
    %v1337 = vmul.f32 %v1257, %v1293
    %v1338 = vmul.f32 %v1258, %v1297
    %v1339 = vmul.f32 %v1259, %v1301
    %v1340 = vmul.f32 %v1260, %v1305
    %v1341 = vmul.f32 %v1261, %v1309
    %v1342 = vmul.f32 %v1262, %v1313
    %v1343 = vmul.f32 %v1263, %v1317
    %v1344 = vmul.f32 %v1264, %v1321
    %v1345 = vmul.f32 %v1265, %v1325
    %v1346 = vmul.f32 %v1266, %v1329
    %v1347 = vpack.c.bf16 %v1332, %v1331
    %v1348 = vpack.c.bf16 %v1334, %v1333
    %v1349 = vpack.c.bf16 %v1336, %v1335
    %v1350 = vpack.c.bf16 %v1338, %v1337
    %v1351 = vpack.c.bf16 %v1340, %v1339
    %v1352 = vpack.c.bf16 %v1342, %v1341
    %v1353 = vpack.c.bf16 %v1344, %v1343
    %v1354 = vpack.c.bf16 %v1346, %v1345
    %v1356 = vunpack.c.l.b16 %v80
    %v1357 = vpack.c.b16 %v1356, %v1356
    %v1358 = vrot.slane %v1357, 2
    %v1360 = vsel %vm101, %v1347, 0
    %v1363 = vsel %vm101, %v1348, 0
    %v1366 = vsel %vm101, %v1349, 0
    %v1369 = vsel %vm101, %v1350, 0
    %v1372 = vsel %vm101, %v1351, 0
    %v1375 = vsel %vm101, %v1352, 0
    %v1378 = vsel %vm101, %v1353, 0
    %v1381 = vsel %vm101, %v1354, 0
    %v1384 = vsel %vm370, %v1358, 0
    %1386 = vmatprep.subr.bf16.mxu0 0
    %1387 = vmatpush1.bf16.msra.mxu0 0
    %1388 = vmatprep.subr.bf16.mxu0 0
    %1389 = vmatpush1.bf16.msra.mxu0 0
    %1390 = vmatprep.subr.bf16.mxu0 0
    %1391 = vmatpush1.bf16.msra.mxu0 0
    %1392 = vmatprep.subr.bf16.mxu0 0
    %1393 = vmatpush1.bf16.msra.mxu0 0
    %1394 = vmatprep.subr.bf16.mxu0 0
    %1395 = vmatpush1.bf16.msra.mxu0 0
    %1396 = vmatprep.subr.bf16.mxu0 0
    %1397 = vmatpush1.bf16.msra.mxu0 0
    %1398 = vmatprep.subr.bf16.mxu0 0
    %1399 = vmatpush1.bf16.msra.mxu0 0
    %1400 = vmatprep.subr.bf16.mxu0 0
    %1401 = vmatpush1.bf16.msra.mxu0 %v1384
    %1402 = vmatprep.subr.bf16.mxu0 0
    %1403 = vmatpush2.bf16.msra.mxu0 0
    %1404 = vmatprep.subr.bf16.mxu0 0
    %1405 = vmatpush2.bf16.msra.mxu0 0
    %1406 = vmatprep.subr.bf16.mxu0 0
    %1407 = vmatpush2.bf16.msra.mxu0 0
    %1408 = vmatprep.subr.bf16.mxu0 0
    %1409 = vmatpush2.bf16.msra.mxu0 0
    %1410 = vmatprep.subr.bf16.mxu0 0
    %1411 = vmatpush2.bf16.msra.mxu0 0
    %1412 = vmatprep.subr.bf16.mxu0 0
    %1413 = vmatpush2.bf16.msra.mxu0 0
    %1414 = vmatprep.subr.bf16.mxu0 0
    %1415 = vmatpush2.bf16.msra.mxu0 0
    %1416 = vmatprep.subr.bf16.mxu0 0
    %1417 = vmatpush2.bf16.msra.mxu0 0
    %1418 = vmatprep.mubr.bf16.mxu0 0
    %1419 = vmatmul.mubr.bf16.gmra.mxu0 %v1360
    %v1420 = vpop.f32.mrf.mxu0
    %v1421 = vadd.f32 0.0, %v1420
    %v1422 = vpop.f32.mrf.mxu0
    %v1423 = vpop.f32.mrf.mxu0
    %v1424 = vadd.f32 0.0, %v1423
    %v1425 = vpop.f32.mrf.mxu0
    %1426 = vmatprep.mubr.bf16.mxu0 0
    %1427 = vmatmul.mubr.bf16.gmra.mxu0 %v1363
    %v1428 = vpop.f32.mrf.mxu0
    %v1429 = vadd.f32 0.0, %v1428
    %v1430 = vpop.f32.mrf.mxu0
    %v1431 = vpop.f32.mrf.mxu0
    %v1432 = vadd.f32 0.0, %v1431
    %v1433 = vpop.f32.mrf.mxu0
    %1434 = vmatprep.mubr.bf16.mxu0 0
    %1435 = vmatmul.mubr.bf16.gmra.mxu0 %v1366
    %v1436 = vpop.f32.mrf.mxu0
    %v1437 = vadd.f32 0.0, %v1436
    %v1438 = vpop.f32.mrf.mxu0
    %v1439 = vpop.f32.mrf.mxu0
    %v1440 = vadd.f32 0.0, %v1439
    %v1441 = vpop.f32.mrf.mxu0
    %1442 = vmatprep.mubr.bf16.mxu0 0
    %1443 = vmatmul.mubr.bf16.gmra.mxu0 %v1369
    %v1444 = vpop.f32.mrf.mxu0
    %v1445 = vadd.f32 0.0, %v1444
    %v1446 = vpop.f32.mrf.mxu0
    %v1447 = vpop.f32.mrf.mxu0
    %v1448 = vadd.f32 0.0, %v1447
    %v1449 = vpop.f32.mrf.mxu0
    %1450 = vmatprep.mubr.bf16.mxu0 0
    %1451 = vmatmul.mubr.bf16.gmra.mxu0 %v1372
    %v1452 = vpop.f32.mrf.mxu0
    %v1453 = vadd.f32 0.0, %v1452
    %v1454 = vpop.f32.mrf.mxu0
    %v1455 = vpop.f32.mrf.mxu0
    %v1456 = vadd.f32 0.0, %v1455
    %v1457 = vpop.f32.mrf.mxu0
    %1458 = vmatprep.mubr.bf16.mxu0 0
    %1459 = vmatmul.mubr.bf16.gmra.mxu0 %v1375
    %v1460 = vpop.f32.mrf.mxu0
    %v1461 = vadd.f32 0.0, %v1460
    %v1462 = vpop.f32.mrf.mxu0
    %v1463 = vpop.f32.mrf.mxu0
    %v1464 = vadd.f32 0.0, %v1463
    %v1465 = vpop.f32.mrf.mxu0
    %1466 = vmatprep.mubr.bf16.mxu0 0
    %1467 = vmatmul.mubr.bf16.gmra.mxu0 %v1378
    %v1468 = vpop.f32.mrf.mxu0
    %v1469 = vadd.f32 0.0, %v1468
    %v1470 = vpop.f32.mrf.mxu0
    %v1471 = vpop.f32.mrf.mxu0
    %v1472 = vadd.f32 0.0, %v1471
    %v1473 = vpop.f32.mrf.mxu0
    %1474 = vmatprep.mubr.bf16.mxu0 0
    %1475 = vmatmul.mubr.bf16.gmra.mxu0 %v1381
    %v1476 = vpop.f32.mrf.mxu0
    %v1477 = vadd.f32 0.0, %v1476
    %v1478 = vpop.f32.mrf.mxu0
    %v1479 = vpop.f32.mrf.mxu0
    %v1480 = vadd.f32 0.0, %v1479
    %v1481 = vpop.f32.mrf.mxu0
    %1482 = vdwg.mxu0
    %v1483 = vadd.f32 %v1235, %v1421
    %v1484 = vadd.f32 %v1236, %v1424
    %v1485 = vadd.f32 %v1237, %v1429
    %v1486 = vadd.f32 %v1238, %v1432
    %v1487 = vadd.f32 %v1239, %v1437
    %v1488 = vadd.f32 %v1240, %v1440
    %v1489 = vadd.f32 %v1241, %v1445
    %v1490 = vadd.f32 %v1242, %v1448
    %v1491 = vadd.f32 %v1243, %v1453
    %v1492 = vadd.f32 %v1244, %v1456
    %v1493 = vadd.f32 %v1245, %v1461
    %v1494 = vadd.f32 %v1246, %v1464
    %v1495 = vadd.f32 %v1247, %v1469
    %v1496 = vadd.f32 %v1248, %v1472
    %v1497 = vadd.f32 %v1249, %v1477
    %v1498 = vadd.f32 %v1250, %v1480
    %v1499 = vld [vmem:[#allocation5 + $0x17] sm:$0xff]
    %v1500 = vld [vmem:[#allocation5 + $0x1f] sm:$0xff]
    %v1501 = vld [vmem:[#allocation5 + $0x27] sm:$0xff]
    %v1502 = vld [vmem:[#allocation5 + $0x2f] sm:$0xff]
    %v1503 = vld [vmem:[#allocation5 + $0x37] sm:$0xff]
    %v1504 = vld [vmem:[#allocation5 + $0x3f] sm:$0xff]
    %v1505 = vld [vmem:[#allocation5 + $0x47] sm:$0xff]
    %v1506 = vld [vmem:[#allocation5 + $0x4f] sm:$0xff]
    %v1507 = vld [vmem:[#allocation5 + $0x57] sm:$0xff]
    %v1508 = vld [vmem:[#allocation5 + $0x5f] sm:$0xff]
    %v1509 = vld [vmem:[#allocation5 + $0x67] sm:$0xff]
    %v1510 = vld [vmem:[#allocation5 + $0x6f] sm:$0xff]
    %v1511 = vld [vmem:[#allocation5 + $0x77] sm:$0xff]
    %v1512 = vld [vmem:[#allocation5 + $0x7f] sm:$0xff]
    %v1513 = vld [vmem:[#allocation5 + $0x87] sm:$0xff]
    %v1514 = vld [vmem:[#allocation5 + $0x8f] sm:$0xff]
    %1515 = vset.pattern.permute.xlu0 6
    %1516 = vperm.xlu0 %1515, %v62
    %v1517 = vpop.permute.xlu0 %1516
    %1519 = vset.pattern.permute.xlu0 6
    %1520 = vperm.xlu0 %1519, %v63
    %v1521 = vpop.permute.xlu0 %1520
    %1523 = vset.pattern.permute.xlu0 6
    %1524 = vperm.xlu0 %1523, %v64
    %v1525 = vpop.permute.xlu0 %1524
    %1527 = vset.pattern.permute.xlu0 6
    %1528 = vperm.xlu0 %1527, %v65
    %v1529 = vpop.permute.xlu0 %1528
    %1531 = vset.pattern.permute.xlu0 6
    %1532 = vperm.xlu0 %1531, %v66
    %v1533 = vpop.permute.xlu0 %1532
    %1535 = vset.pattern.permute.xlu0 6
    %1536 = vperm.xlu0 %1535, %v67
    %v1537 = vpop.permute.xlu0 %1536
    %1539 = vset.pattern.permute.xlu0 6
    %1540 = vperm.xlu0 %1539, %v68
    %v1541 = vpop.permute.xlu0 %1540
    %1543 = vset.pattern.permute.xlu0 6
    %1544 = vperm.xlu0 %1543, %v69
    %v1545 = vpop.permute.xlu0 %1544
    %1547 = vset.pattern.permute.xlu0 6
    %1548 = vperm.xlu0 %1547, %v70
    %v1549 = vpop.permute.xlu0 %1548
    %1551 = vset.pattern.permute.xlu0 6
    %1552 = vperm.xlu0 %1551, %v71
    %v1553 = vpop.permute.xlu0 %1552
    %1555 = vset.pattern.permute.xlu0 6
    %1556 = vperm.xlu0 %1555, %v72
    %v1557 = vpop.permute.xlu0 %1556
    %1559 = vset.pattern.permute.xlu0 6
    %1560 = vperm.xlu0 %1559, %v73
    %v1561 = vpop.permute.xlu0 %1560
    %1563 = vset.pattern.permute.xlu0 6
    %1564 = vperm.xlu0 %1563, %v74
    %v1565 = vpop.permute.xlu0 %1564
    %1567 = vset.pattern.permute.xlu0 6
    %1568 = vperm.xlu0 %1567, %v75
    %v1569 = vpop.permute.xlu0 %1568
    %1571 = vset.pattern.permute.xlu0 6
    %1572 = vperm.xlu0 %1571, %v76
    %v1573 = vpop.permute.xlu0 %1572
    %1575 = vset.pattern.permute.xlu0 6
    %1576 = vperm.xlu0 %1575, %v77
    %v1577 = vpop.permute.xlu0 %1576
    %v1579 = vmul.f32 %v1499, %v1517
    %v1580 = vmul.f32 %v1500, %v1521
    %v1581 = vmul.f32 %v1501, %v1525
    %v1582 = vmul.f32 %v1502, %v1529
    %v1583 = vmul.f32 %v1503, %v1533
    %v1584 = vmul.f32 %v1504, %v1537
    %v1585 = vmul.f32 %v1505, %v1541
    %v1586 = vmul.f32 %v1506, %v1545
    %v1587 = vmul.f32 %v1507, %v1549
    %v1588 = vmul.f32 %v1508, %v1553
    %v1589 = vmul.f32 %v1509, %v1557
    %v1590 = vmul.f32 %v1510, %v1561
    %v1591 = vmul.f32 %v1511, %v1565
    %v1592 = vmul.f32 %v1512, %v1569
    %v1593 = vmul.f32 %v1513, %v1573
    %v1594 = vmul.f32 %v1514, %v1577
    %v1595 = vpack.c.bf16 %v1580, %v1579
    %v1596 = vpack.c.bf16 %v1582, %v1581
    %v1597 = vpack.c.bf16 %v1584, %v1583
    %v1598 = vpack.c.bf16 %v1586, %v1585
    %v1599 = vpack.c.bf16 %v1588, %v1587
    %v1600 = vpack.c.bf16 %v1590, %v1589
    %v1601 = vpack.c.bf16 %v1592, %v1591
    %v1602 = vpack.c.bf16 %v1594, %v1593
    %v1604 = vsel %vm101, %v1595, 0
    %v1607 = vsel %vm101, %v1596, 0
    %v1610 = vsel %vm101, %v1597, 0
    %v1613 = vsel %vm101, %v1598, 0
    %v1616 = vsel %vm101, %v1599, 0
    %v1619 = vsel %vm101, %v1600, 0
    %v1622 = vsel %vm101, %v1601, 0
    %v1625 = vsel %vm101, %v1602, 0
    %v1628 = vsel %vm370, %v81, 0
    %1630 = vmatprep.subr.bf16.mxu0 0
    %1631 = vmatpush1.bf16.msra.mxu0 0
    %1632 = vmatprep.subr.bf16.mxu0 0
    %1633 = vmatpush1.bf16.msra.mxu0 0
    %1634 = vmatprep.subr.bf16.mxu0 0
    %1635 = vmatpush1.bf16.msra.mxu0 0
    %1636 = vmatprep.subr.bf16.mxu0 0
    %1637 = vmatpush1.bf16.msra.mxu0 0
    %1638 = vmatprep.subr.bf16.mxu0 0
    %1639 = vmatpush1.bf16.msra.mxu0 0
    %1640 = vmatprep.subr.bf16.mxu0 0
    %1641 = vmatpush1.bf16.msra.mxu0 0
    %1642 = vmatprep.subr.bf16.mxu0 0
    %1643 = vmatpush1.bf16.msra.mxu0 0
    %1644 = vmatprep.subr.bf16.mxu0 0
    %1645 = vmatpush1.bf16.msra.mxu0 %v1628
    %1646 = vmatprep.subr.bf16.mxu0 0
    %1647 = vmatpush2.bf16.msra.mxu0 0
    %1648 = vmatprep.subr.bf16.mxu0 0
    %1649 = vmatpush2.bf16.msra.mxu0 0
    %1650 = vmatprep.subr.bf16.mxu0 0
    %1651 = vmatpush2.bf16.msra.mxu0 0
    %1652 = vmatprep.subr.bf16.mxu0 0
    %1653 = vmatpush2.bf16.msra.mxu0 0
    %1654 = vmatprep.subr.bf16.mxu0 0
    %1655 = vmatpush2.bf16.msra.mxu0 0
    %1656 = vmatprep.subr.bf16.mxu0 0
    %1657 = vmatpush2.bf16.msra.mxu0 0
    %1658 = vmatprep.subr.bf16.mxu0 0
    %1659 = vmatpush2.bf16.msra.mxu0 0
    %1660 = vmatprep.subr.bf16.mxu0 0
    %1661 = vmatpush2.bf16.msra.mxu0 0
    %1662 = vmatprep.mubr.bf16.mxu0 0
    %1663 = vmatmul.mubr.bf16.gmra.mxu0 %v1604
    %v1664 = vpop.f32.mrf.mxu0
    %v1665 = vadd.f32 0.0, %v1664
    %v1666 = vpop.f32.mrf.mxu0
    %v1667 = vpop.f32.mrf.mxu0
    %v1668 = vadd.f32 0.0, %v1667
    %v1669 = vpop.f32.mrf.mxu0
    %1670 = vmatprep.mubr.bf16.mxu0 0
    %1671 = vmatmul.mubr.bf16.gmra.mxu0 %v1607
    %v1672 = vpop.f32.mrf.mxu0
    %v1673 = vadd.f32 0.0, %v1672
    %v1674 = vpop.f32.mrf.mxu0
    %v1675 = vpop.f32.mrf.mxu0
    %v1676 = vadd.f32 0.0, %v1675
    %v1677 = vpop.f32.mrf.mxu0
    %1678 = vmatprep.mubr.bf16.mxu0 0
    %1679 = vmatmul.mubr.bf16.gmra.mxu0 %v1610
    %v1680 = vpop.f32.mrf.mxu0
    %v1681 = vadd.f32 0.0, %v1680
    %v1682 = vpop.f32.mrf.mxu0
    %v1683 = vpop.f32.mrf.mxu0
    %v1684 = vadd.f32 0.0, %v1683
    %v1685 = vpop.f32.mrf.mxu0
    %1686 = vmatprep.mubr.bf16.mxu0 0
    %1687 = vmatmul.mubr.bf16.gmra.mxu0 %v1613
    %v1688 = vpop.f32.mrf.mxu0
    %v1689 = vadd.f32 0.0, %v1688
    %v1690 = vpop.f32.mrf.mxu0
    %v1691 = vpop.f32.mrf.mxu0
    %v1692 = vadd.f32 0.0, %v1691
    %v1693 = vpop.f32.mrf.mxu0
    %1694 = vmatprep.mubr.bf16.mxu0 0
    %1695 = vmatmul.mubr.bf16.gmra.mxu0 %v1616
    %v1696 = vpop.f32.mrf.mxu0
    %v1697 = vadd.f32 0.0, %v1696
    %v1698 = vpop.f32.mrf.mxu0
    %v1699 = vpop.f32.mrf.mxu0
    %v1700 = vadd.f32 0.0, %v1699
    %v1701 = vpop.f32.mrf.mxu0
    %1702 = vmatprep.mubr.bf16.mxu0 0
    %1703 = vmatmul.mubr.bf16.gmra.mxu0 %v1619
    %v1704 = vpop.f32.mrf.mxu0
    %v1705 = vadd.f32 0.0, %v1704
    %v1706 = vpop.f32.mrf.mxu0
    %v1707 = vpop.f32.mrf.mxu0
    %v1708 = vadd.f32 0.0, %v1707
    %v1709 = vpop.f32.mrf.mxu0
    %1710 = vmatprep.mubr.bf16.mxu0 0
    %1711 = vmatmul.mubr.bf16.gmra.mxu0 %v1622
    %v1712 = vpop.f32.mrf.mxu0
    %v1713 = vadd.f32 0.0, %v1712
    %v1714 = vpop.f32.mrf.mxu0
    %v1715 = vpop.f32.mrf.mxu0
    %v1716 = vadd.f32 0.0, %v1715
    %v1717 = vpop.f32.mrf.mxu0
    %1718 = vmatprep.mubr.bf16.mxu0 0
    %1719 = vmatmul.mubr.bf16.gmra.mxu0 %v1625
    %v1720 = vpop.f32.mrf.mxu0
    %v1721 = vadd.f32 0.0, %v1720
    %v1722 = vpop.f32.mrf.mxu0
    %v1723 = vpop.f32.mrf.mxu0
    %v1724 = vadd.f32 0.0, %v1723
    %v1725 = vpop.f32.mrf.mxu0
    %1726 = vdwg.mxu0
    %v1727 = vadd.f32 %v1483, %v1665
    %v1728 = vadd.f32 %v1484, %v1668
    %v1729 = vadd.f32 %v1485, %v1673
    %v1730 = vadd.f32 %v1486, %v1676
    %v1731 = vadd.f32 %v1487, %v1681
    %v1732 = vadd.f32 %v1488, %v1684
    %v1733 = vadd.f32 %v1489, %v1689
    %v1734 = vadd.f32 %v1490, %v1692
    %v1735 = vadd.f32 %v1491, %v1697
    %v1736 = vadd.f32 %v1492, %v1700
    %v1737 = vadd.f32 %v1493, %v1705
    %v1738 = vadd.f32 %v1494, %v1708
    %v1739 = vadd.f32 %v1495, %v1713
    %v1740 = vadd.f32 %v1496, %v1716
    %v1741 = vadd.f32 %v1497, %v1721
    %v1742 = vadd.f32 %v1498, %v1724
    %v1743 = vld [vmem:[#allocation5 + $0x18] sm:$0xff]
    %v1744 = vld [vmem:[#allocation5 + $0x20] sm:$0xff]
    %v1745 = vld [vmem:[#allocation5 + $0x28] sm:$0xff]
    %v1746 = vld [vmem:[#allocation5 + $0x30] sm:$0xff]
    %v1747 = vld [vmem:[#allocation5 + $0x38] sm:$0xff]
    %v1748 = vld [vmem:[#allocation5 + $0x40] sm:$0xff]
    %v1749 = vld [vmem:[#allocation5 + $0x48] sm:$0xff]
    %v1750 = vld [vmem:[#allocation5 + $0x50] sm:$0xff]
    %v1751 = vld [vmem:[#allocation5 + $0x58] sm:$0xff]
    %v1752 = vld [vmem:[#allocation5 + $0x60] sm:$0xff]
    %v1753 = vld [vmem:[#allocation5 + $0x68] sm:$0xff]
    %v1754 = vld [vmem:[#allocation5 + $0x70] sm:$0xff]
    %v1755 = vld [vmem:[#allocation5 + $0x78] sm:$0xff]
    %v1756 = vld [vmem:[#allocation5 + $0x80] sm:$0xff]
    %v1757 = vld [vmem:[#allocation5 + $0x88] sm:$0xff]
    %v1758 = vld [vmem:[#allocation5 + $0x90] sm:$0xff]
    %1759 = vset.pattern.permute.xlu0 7
    %1760 = vperm.xlu0 %1759, %v62
    %v1761 = vpop.permute.xlu0 %1760
    %1763 = vset.pattern.permute.xlu0 7
    %1764 = vperm.xlu0 %1763, %v63
    %v1765 = vpop.permute.xlu0 %1764
    %1767 = vset.pattern.permute.xlu0 7
    %1768 = vperm.xlu0 %1767, %v64
    %v1769 = vpop.permute.xlu0 %1768
    %1771 = vset.pattern.permute.xlu0 7
    %1772 = vperm.xlu0 %1771, %v65
    %v1773 = vpop.permute.xlu0 %1772
    %1775 = vset.pattern.permute.xlu0 7
    %1776 = vperm.xlu0 %1775, %v66
    %v1777 = vpop.permute.xlu0 %1776
    %1779 = vset.pattern.permute.xlu0 7
    %1780 = vperm.xlu0 %1779, %v67
    %v1781 = vpop.permute.xlu0 %1780
    %1783 = vset.pattern.permute.xlu0 7
    %1784 = vperm.xlu0 %1783, %v68
    %v1785 = vpop.permute.xlu0 %1784
    %1787 = vset.pattern.permute.xlu0 7
    %1788 = vperm.xlu0 %1787, %v69
    %v1789 = vpop.permute.xlu0 %1788
    %1791 = vset.pattern.permute.xlu0 7
    %1792 = vperm.xlu0 %1791, %v70
    %v1793 = vpop.permute.xlu0 %1792
    %1795 = vset.pattern.permute.xlu0 7
    %1796 = vperm.xlu0 %1795, %v71
    %v1797 = vpop.permute.xlu0 %1796
    %1799 = vset.pattern.permute.xlu0 7
    %1800 = vperm.xlu0 %1799, %v72
    %v1801 = vpop.permute.xlu0 %1800
    %1803 = vset.pattern.permute.xlu0 7
    %1804 = vperm.xlu0 %1803, %v73
    %v1805 = vpop.permute.xlu0 %1804
    %1807 = vset.pattern.permute.xlu0 7
    %1808 = vperm.xlu0 %1807, %v74
    %v1809 = vpop.permute.xlu0 %1808
    %1811 = vset.pattern.permute.xlu0 7
    %1812 = vperm.xlu0 %1811, %v75
    %v1813 = vpop.permute.xlu0 %1812
    %1815 = vset.pattern.permute.xlu0 7
    %1816 = vperm.xlu0 %1815, %v76
    %v1817 = vpop.permute.xlu0 %1816
    %1819 = vset.pattern.permute.xlu0 7
    %1820 = vperm.xlu0 %1819, %v77
    %v1821 = vpop.permute.xlu0 %1820
    %v1823 = vmul.f32 %v1743, %v1761
    %v1824 = vmul.f32 %v1744, %v1765
    %v1825 = vmul.f32 %v1745, %v1769
    %v1826 = vmul.f32 %v1746, %v1773
    %v1827 = vmul.f32 %v1747, %v1777
    %v1828 = vmul.f32 %v1748, %v1781
    %v1829 = vmul.f32 %v1749, %v1785
    %v1830 = vmul.f32 %v1750, %v1789
    %v1831 = vmul.f32 %v1751, %v1793
    %v1832 = vmul.f32 %v1752, %v1797
    %v1833 = vmul.f32 %v1753, %v1801
    %v1834 = vmul.f32 %v1754, %v1805
    %v1835 = vmul.f32 %v1755, %v1809
    %v1836 = vmul.f32 %v1756, %v1813
    %v1837 = vmul.f32 %v1757, %v1817
    %v1838 = vmul.f32 %v1758, %v1821
    %v1839 = vpack.c.bf16 %v1824, %v1823
    %v1840 = vpack.c.bf16 %v1826, %v1825
    %v1841 = vpack.c.bf16 %v1828, %v1827
    %v1842 = vpack.c.bf16 %v1830, %v1829
    %v1843 = vpack.c.bf16 %v1832, %v1831
    %v1844 = vpack.c.bf16 %v1834, %v1833
    %v1845 = vpack.c.bf16 %v1836, %v1835
    %v1846 = vpack.c.bf16 %v1838, %v1837
    %v1848 = vunpack.c.l.b16 %v81
    %v1849 = vpack.c.b16 %v1848, %v1848
    %v1850 = vrot.slane %v1849, 2
    %v1852 = vsel %vm101, %v1839, 0
    %v1855 = vsel %vm101, %v1840, 0
    %v1858 = vsel %vm101, %v1841, 0
    %v1861 = vsel %vm101, %v1842, 0
    %v1864 = vsel %vm101, %v1843, 0
    %v1867 = vsel %vm101, %v1844, 0
    %v1870 = vsel %vm101, %v1845, 0
    %v1873 = vsel %vm101, %v1846, 0
    %v1876 = vsel %vm370, %v1850, 0
    %1878 = vmatprep.subr.bf16.mxu0 0
    %1879 = vmatpush1.bf16.msra.mxu0 0
    %1880 = vmatprep.subr.bf16.mxu0 0
    %1881 = vmatpush1.bf16.msra.mxu0 0
    %1882 = vmatprep.subr.bf16.mxu0 0
    %1883 = vmatpush1.bf16.msra.mxu0 0
    %1884 = vmatprep.subr.bf16.mxu0 0
    %1885 = vmatpush1.bf16.msra.mxu0 0
    %1886 = vmatprep.subr.bf16.mxu0 0
    %1887 = vmatpush1.bf16.msra.mxu0 0
    %1888 = vmatprep.subr.bf16.mxu0 0
    %1889 = vmatpush1.bf16.msra.mxu0 0
    %1890 = vmatprep.subr.bf16.mxu0 0
    %1891 = vmatpush1.bf16.msra.mxu0 0
    %1892 = vmatprep.subr.bf16.mxu0 0
    %1893 = vmatpush1.bf16.msra.mxu0 %v1876
    %1894 = vmatprep.subr.bf16.mxu0 0
    %1895 = vmatpush2.bf16.msra.mxu0 0
    %1896 = vmatprep.subr.bf16.mxu0 0
    %1897 = vmatpush2.bf16.msra.mxu0 0
    %1898 = vmatprep.subr.bf16.mxu0 0
    %1899 = vmatpush2.bf16.msra.mxu0 0
    %1900 = vmatprep.subr.bf16.mxu0 0
    %1901 = vmatpush2.bf16.msra.mxu0 0
    %1902 = vmatprep.subr.bf16.mxu0 0
    %1903 = vmatpush2.bf16.msra.mxu0 0
    %1904 = vmatprep.subr.bf16.mxu0 0
    %1905 = vmatpush2.bf16.msra.mxu0 0
    %1906 = vmatprep.subr.bf16.mxu0 0
    %1907 = vmatpush2.bf16.msra.mxu0 0
    %1908 = vmatprep.subr.bf16.mxu0 0
    %1909 = vmatpush2.bf16.msra.mxu0 0
    %1910 = vmatprep.mubr.bf16.mxu0 0
    %1911 = vmatmul.mubr.bf16.gmra.mxu0 %v1852
    %v1912 = vpop.f32.mrf.mxu0
    %v1913 = vadd.f32 0.0, %v1912
    %v1914 = vpop.f32.mrf.mxu0
    %v1915 = vpop.f32.mrf.mxu0
    %v1916 = vadd.f32 0.0, %v1915
    %v1917 = vpop.f32.mrf.mxu0
    %1918 = vmatprep.mubr.bf16.mxu0 0
    %1919 = vmatmul.mubr.bf16.gmra.mxu0 %v1855
    %v1920 = vpop.f32.mrf.mxu0
    %v1921 = vadd.f32 0.0, %v1920
    %v1922 = vpop.f32.mrf.mxu0
    %v1923 = vpop.f32.mrf.mxu0
    %v1924 = vadd.f32 0.0, %v1923
    %v1925 = vpop.f32.mrf.mxu0
    %1926 = vmatprep.mubr.bf16.mxu0 0
    %1927 = vmatmul.mubr.bf16.gmra.mxu0 %v1858
    %v1928 = vpop.f32.mrf.mxu0
    %v1929 = vadd.f32 0.0, %v1928
    %v1930 = vpop.f32.mrf.mxu0
    %v1931 = vpop.f32.mrf.mxu0
    %v1932 = vadd.f32 0.0, %v1931
    %v1933 = vpop.f32.mrf.mxu0
    %1934 = vmatprep.mubr.bf16.mxu0 0
    %1935 = vmatmul.mubr.bf16.gmra.mxu0 %v1861
    %v1936 = vpop.f32.mrf.mxu0
    %v1937 = vadd.f32 0.0, %v1936
    %v1938 = vpop.f32.mrf.mxu0
    %v1939 = vpop.f32.mrf.mxu0
    %v1940 = vadd.f32 0.0, %v1939
    %v1941 = vpop.f32.mrf.mxu0
    %1942 = vmatprep.mubr.bf16.mxu0 0
    %1943 = vmatmul.mubr.bf16.gmra.mxu0 %v1864
    %v1944 = vpop.f32.mrf.mxu0
    %v1945 = vadd.f32 0.0, %v1944
    %v1946 = vpop.f32.mrf.mxu0
    %v1947 = vpop.f32.mrf.mxu0
    %v1948 = vadd.f32 0.0, %v1947
    %v1949 = vpop.f32.mrf.mxu0
    %1950 = vmatprep.mubr.bf16.mxu0 0
    %1951 = vmatmul.mubr.bf16.gmra.mxu0 %v1867
    %v1952 = vpop.f32.mrf.mxu0
    %v1953 = vadd.f32 0.0, %v1952
    %v1954 = vpop.f32.mrf.mxu0
    %v1955 = vpop.f32.mrf.mxu0
    %v1956 = vadd.f32 0.0, %v1955
    %v1957 = vpop.f32.mrf.mxu0
    %1958 = vmatprep.mubr.bf16.mxu0 0
    %1959 = vmatmul.mubr.bf16.gmra.mxu0 %v1870
    %v1960 = vpop.f32.mrf.mxu0
    %v1961 = vadd.f32 0.0, %v1960
    %v1962 = vpop.f32.mrf.mxu0
    %v1963 = vpop.f32.mrf.mxu0
    %v1964 = vadd.f32 0.0, %v1963
    %v1965 = vpop.f32.mrf.mxu0
    %1966 = vmatprep.mubr.bf16.mxu0 0
    %1967 = vmatmul.mubr.bf16.gmra.mxu0 %v1873
    %v1968 = vpop.f32.mrf.mxu0
    %v1969 = vadd.f32 0.0, %v1968
    %v1970 = vpop.f32.mrf.mxu0
    %v1971 = vpop.f32.mrf.mxu0
    %v1972 = vadd.f32 0.0, %v1971
    %v1973 = vpop.f32.mrf.mxu0
    %1974 = vdwg.mxu0
    %v1975 = vadd.f32 %v1727, %v1913
    %v1976 = vadd.f32 %v1728, %v1916
    %v1977 = vadd.f32 %v1729, %v1921
    %v1978 = vadd.f32 %v1730, %v1924
    %v1979 = vadd.f32 %v1731, %v1929
    %v1980 = vadd.f32 %v1732, %v1932
    %v1981 = vadd.f32 %v1733, %v1937
    %v1982 = vadd.f32 %v1734, %v1940
    %v1983 = vadd.f32 %v1735, %v1945
    %v1984 = vadd.f32 %v1736, %v1948
    %v1985 = vadd.f32 %v1737, %v1953
    %v1986 = vadd.f32 %v1738, %v1956
    %v1987 = vadd.f32 %v1739, %v1961
    %v1988 = vadd.f32 %v1740, %v1964
    %v1989 = vadd.f32 %v1741, %v1969
    %v1990 = vadd.f32 %v1742, %v1972
    %v1991 = vld [vmem:[#allocation5 + $0x19] sm:$0xff]
    %v1992 = vld [vmem:[#allocation5 + $0x21] sm:$0xff]
    %v1993 = vld [vmem:[#allocation5 + $0x29] sm:$0xff]
    %v1994 = vld [vmem:[#allocation5 + $0x31] sm:$0xff]
    %v1995 = vld [vmem:[#allocation5 + $0x39] sm:$0xff]
    %v1996 = vld [vmem:[#allocation5 + $0x41] sm:$0xff]
    %v1997 = vld [vmem:[#allocation5 + $0x49] sm:$0xff]
    %v1998 = vld [vmem:[#allocation5 + $0x51] sm:$0xff]
    %v1999 = vld [vmem:[#allocation5 + $0x59] sm:$0xff]
    %v2000 = vld [vmem:[#allocation5 + $0x61] sm:$0xff]
    %v2001 = vld [vmem:[#allocation5 + $0x69] sm:$0xff]
    %v2002 = vld [vmem:[#allocation5 + $0x71] sm:$0xff]
    %v2003 = vld [vmem:[#allocation5 + $0x79] sm:$0xff]
    %v2004 = vld [vmem:[#allocation5 + $0x81] sm:$0xff]
    %v2005 = vld [vmem:[#allocation5 + $0x89] sm:$0xff]
    %v2006 = vld [vmem:[#allocation5 + $0x91] sm:$0xff]
    %2007 = vset.pattern.permute.xlu0 8
    %2008 = vperm.xlu0 %2007, %v62
    %v2009 = vpop.permute.xlu0 %2008
    %2011 = vset.pattern.permute.xlu0 8
    %2012 = vperm.xlu0 %2011, %v63
    %v2013 = vpop.permute.xlu0 %2012
    %2015 = vset.pattern.permute.xlu0 8
    %2016 = vperm.xlu0 %2015, %v64
    %v2017 = vpop.permute.xlu0 %2016
    %2019 = vset.pattern.permute.xlu0 8
    %2020 = vperm.xlu0 %2019, %v65
    %v2021 = vpop.permute.xlu0 %2020
    %2023 = vset.pattern.permute.xlu0 8
    %2024 = vperm.xlu0 %2023, %v66
    %v2025 = vpop.permute.xlu0 %2024
    %2027 = vset.pattern.permute.xlu0 8
    %2028 = vperm.xlu0 %2027, %v67
    %v2029 = vpop.permute.xlu0 %2028
    %2031 = vset.pattern.permute.xlu0 8
    %2032 = vperm.xlu0 %2031, %v68
    %v2033 = vpop.permute.xlu0 %2032
    %2035 = vset.pattern.permute.xlu0 8
    %2036 = vperm.xlu0 %2035, %v69
    %v2037 = vpop.permute.xlu0 %2036
    %2039 = vset.pattern.permute.xlu0 8
    %2040 = vperm.xlu0 %2039, %v70
    %v2041 = vpop.permute.xlu0 %2040
    %2043 = vset.pattern.permute.xlu0 8
    %2044 = vperm.xlu0 %2043, %v71
    %v2045 = vpop.permute.xlu0 %2044
    %2047 = vset.pattern.permute.xlu0 8
    %2048 = vperm.xlu0 %2047, %v72
    %v2049 = vpop.permute.xlu0 %2048
    %2051 = vset.pattern.permute.xlu0 8
    %2052 = vperm.xlu0 %2051, %v73
    %v2053 = vpop.permute.xlu0 %2052
    %2055 = vset.pattern.permute.xlu0 8
    %2056 = vperm.xlu0 %2055, %v74
    %v2057 = vpop.permute.xlu0 %2056
    %2059 = vset.pattern.permute.xlu0 8
    %2060 = vperm.xlu0 %2059, %v75
    %v2061 = vpop.permute.xlu0 %2060
    %2063 = vset.pattern.permute.xlu0 8
    %2064 = vperm.xlu0 %2063, %v76
    %v2065 = vpop.permute.xlu0 %2064
    %2067 = vset.pattern.permute.xlu0 8
    %2068 = vperm.xlu0 %2067, %v77
    %v2069 = vpop.permute.xlu0 %2068
    %v2071 = vmul.f32 %v1991, %v2009
    %v2072 = vmul.f32 %v1992, %v2013
    %v2073 = vmul.f32 %v1993, %v2017
    %v2074 = vmul.f32 %v1994, %v2021
    %v2075 = vmul.f32 %v1995, %v2025
    %v2076 = vmul.f32 %v1996, %v2029
    %v2077 = vmul.f32 %v1997, %v2033
    %v2078 = vmul.f32 %v1998, %v2037
    %v2079 = vmul.f32 %v1999, %v2041
    %v2080 = vmul.f32 %v2000, %v2045
    %v2081 = vmul.f32 %v2001, %v2049
    %v2082 = vmul.f32 %v2002, %v2053
    %v2083 = vmul.f32 %v2003, %v2057
    %v2084 = vmul.f32 %v2004, %v2061
    %v2085 = vmul.f32 %v2005, %v2065
    %v2086 = vmul.f32 %v2006, %v2069
    %v2087 = vpack.c.bf16 %v2072, %v2071
    %v2088 = vpack.c.bf16 %v2074, %v2073
    %v2089 = vpack.c.bf16 %v2076, %v2075
    %v2090 = vpack.c.bf16 %v2078, %v2077
    %v2091 = vpack.c.bf16 %v2080, %v2079
    %v2092 = vpack.c.bf16 %v2082, %v2081
    %v2093 = vpack.c.bf16 %v2084, %v2083
    %v2094 = vpack.c.bf16 %v2086, %v2085
    %v2096 = vsel %vm101, %v2087, 0
    %v2099 = vsel %vm101, %v2088, 0
    %v2102 = vsel %vm101, %v2089, 0
    %v2105 = vsel %vm101, %v2090, 0
    %v2108 = vsel %vm101, %v2091, 0
    %v2111 = vsel %vm101, %v2092, 0
    %v2114 = vsel %vm101, %v2093, 0
    %v2117 = vsel %vm101, %v2094, 0
    %v2120 = vsel %vm370, %v82, 0
    %2122 = vmatprep.subr.bf16.mxu0 0
    %2123 = vmatpush1.bf16.msra.mxu0 0
    %2124 = vmatprep.subr.bf16.mxu0 0
    %2125 = vmatpush1.bf16.msra.mxu0 0
    %2126 = vmatprep.subr.bf16.mxu0 0
    %2127 = vmatpush1.bf16.msra.mxu0 0
    %2128 = vmatprep.subr.bf16.mxu0 0
    %2129 = vmatpush1.bf16.msra.mxu0 0
    %2130 = vmatprep.subr.bf16.mxu0 0
    %2131 = vmatpush1.bf16.msra.mxu0 0
    %2132 = vmatprep.subr.bf16.mxu0 0
    %2133 = vmatpush1.bf16.msra.mxu0 0
    %2134 = vmatprep.subr.bf16.mxu0 0
    %2135 = vmatpush1.bf16.msra.mxu0 0
    %2136 = vmatprep.subr.bf16.mxu0 0
    %2137 = vmatpush1.bf16.msra.mxu0 %v2120
    %2138 = vmatprep.subr.bf16.mxu0 0
    %2139 = vmatpush2.bf16.msra.mxu0 0
    %2140 = vmatprep.subr.bf16.mxu0 0
    %2141 = vmatpush2.bf16.msra.mxu0 0
    %2142 = vmatprep.subr.bf16.mxu0 0
    %2143 = vmatpush2.bf16.msra.mxu0 0
    %2144 = vmatprep.subr.bf16.mxu0 0
    %2145 = vmatpush2.bf16.msra.mxu0 0
    %2146 = vmatprep.subr.bf16.mxu0 0
    %2147 = vmatpush2.bf16.msra.mxu0 0
    %2148 = vmatprep.subr.bf16.mxu0 0
    %2149 = vmatpush2.bf16.msra.mxu0 0
    %2150 = vmatprep.subr.bf16.mxu0 0
    %2151 = vmatpush2.bf16.msra.mxu0 0
    %2152 = vmatprep.subr.bf16.mxu0 0
    %2153 = vmatpush2.bf16.msra.mxu0 0
    %2154 = vmatprep.mubr.bf16.mxu0 0
    %2155 = vmatmul.mubr.bf16.gmra.mxu0 %v2096
    %v2156 = vpop.f32.mrf.mxu0
    %v2157 = vadd.f32 0.0, %v2156
    %v2158 = vpop.f32.mrf.mxu0
    %v2159 = vpop.f32.mrf.mxu0
    %v2160 = vadd.f32 0.0, %v2159
    %v2161 = vpop.f32.mrf.mxu0
    %2162 = vmatprep.mubr.bf16.mxu0 0
    %2163 = vmatmul.mubr.bf16.gmra.mxu0 %v2099
    %v2164 = vpop.f32.mrf.mxu0
    %v2165 = vadd.f32 0.0, %v2164
    %v2166 = vpop.f32.mrf.mxu0
    %v2167 = vpop.f32.mrf.mxu0
    %v2168 = vadd.f32 0.0, %v2167
    %v2169 = vpop.f32.mrf.mxu0
    %2170 = vmatprep.mubr.bf16.mxu0 0
    %2171 = vmatmul.mubr.bf16.gmra.mxu0 %v2102
    %v2172 = vpop.f32.mrf.mxu0
    %v2173 = vadd.f32 0.0, %v2172
    %v2174 = vpop.f32.mrf.mxu0
    %v2175 = vpop.f32.mrf.mxu0
    %v2176 = vadd.f32 0.0, %v2175
    %v2177 = vpop.f32.mrf.mxu0
    %2178 = vmatprep.mubr.bf16.mxu0 0
    %2179 = vmatmul.mubr.bf16.gmra.mxu0 %v2105
    %v2180 = vpop.f32.mrf.mxu0
    %v2181 = vadd.f32 0.0, %v2180
    %v2182 = vpop.f32.mrf.mxu0
    %v2183 = vpop.f32.mrf.mxu0
    %v2184 = vadd.f32 0.0, %v2183
    %v2185 = vpop.f32.mrf.mxu0
    %2186 = vmatprep.mubr.bf16.mxu0 0
    %2187 = vmatmul.mubr.bf16.gmra.mxu0 %v2108
    %v2188 = vpop.f32.mrf.mxu0
    %v2189 = vadd.f32 0.0, %v2188
    %v2190 = vpop.f32.mrf.mxu0
    %v2191 = vpop.f32.mrf.mxu0
    %v2192 = vadd.f32 0.0, %v2191
    %v2193 = vpop.f32.mrf.mxu0
    %2194 = vmatprep.mubr.bf16.mxu0 0
    %2195 = vmatmul.mubr.bf16.gmra.mxu0 %v2111
    %v2196 = vpop.f32.mrf.mxu0
    %v2197 = vadd.f32 0.0, %v2196
    %v2198 = vpop.f32.mrf.mxu0
    %v2199 = vpop.f32.mrf.mxu0
    %v2200 = vadd.f32 0.0, %v2199
    %v2201 = vpop.f32.mrf.mxu0
    %2202 = vmatprep.mubr.bf16.mxu0 0
    %2203 = vmatmul.mubr.bf16.gmra.mxu0 %v2114
    %v2204 = vpop.f32.mrf.mxu0
    %v2205 = vadd.f32 0.0, %v2204
    %v2206 = vpop.f32.mrf.mxu0
    %v2207 = vpop.f32.mrf.mxu0
    %v2208 = vadd.f32 0.0, %v2207
    %v2209 = vpop.f32.mrf.mxu0
    %2210 = vmatprep.mubr.bf16.mxu0 0
    %2211 = vmatmul.mubr.bf16.gmra.mxu0 %v2117
    %v2212 = vpop.f32.mrf.mxu0
    %v2213 = vadd.f32 0.0, %v2212
    %v2214 = vpop.f32.mrf.mxu0
    %v2215 = vpop.f32.mrf.mxu0
    %v2216 = vadd.f32 0.0, %v2215
    %v2217 = vpop.f32.mrf.mxu0
    %2218 = vdwg.mxu0
    %v2219 = vadd.f32 %v1975, %v2157
    %v2220 = vadd.f32 %v1976, %v2160
    %v2221 = vadd.f32 %v1977, %v2165
    %v2222 = vadd.f32 %v1978, %v2168
    %v2223 = vadd.f32 %v1979, %v2173
    %v2224 = vadd.f32 %v1980, %v2176
    %v2225 = vadd.f32 %v1981, %v2181
    %v2226 = vadd.f32 %v1982, %v2184
    %v2227 = vadd.f32 %v1983, %v2189
    %v2228 = vadd.f32 %v1984, %v2192
    %v2229 = vadd.f32 %v1985, %v2197
    %v2230 = vadd.f32 %v1986, %v2200
    %v2231 = vadd.f32 %v1987, %v2205
    %v2232 = vadd.f32 %v1988, %v2208
    %v2233 = vadd.f32 %v1989, %v2213
    %v2234 = vadd.f32 %v1990, %v2216
    %v2235 = vadd.f32 %v2219, %v2220
    %v2236 = vadd.f32 %v2235, %v2221
    %v2237 = vadd.f32 %v2236, %v2222
    %v2238 = vadd.f32 %v2237, %v2223
    %v2239 = vadd.f32 %v2238, %v2224
    %v2240 = vadd.f32 %v2239, %v2225
    %v2241 = vadd.f32 %v2240, %v2226
    %v2242 = vadd.f32 %v2241, %v2227
    %v2243 = vadd.f32 %v2242, %v2228
    %v2244 = vadd.f32 %v2243, %v2229
    %v2245 = vadd.f32 %v2244, %v2230
    %v2246 = vadd.f32 %v2245, %v2231
    %v2247 = vadd.f32 %v2246, %v2232
    %v2248 = vadd.f32 %v2247, %v2233
    %v2249 = vadd.f32 %v2248, %v2234
    %v2250 = vrot.slane %v2249, 4
    %v2251 = vadd.f32 %v2249, %v2250
    %v2252 = vrot.slane %v2251, 2
    %v2253 = vadd.f32 %v2251, %v2252
    %v2254 = vrot.slane %v2253, 1
    %v2255 = vadd.f32 %v2253, %v2254
    %v2256 = vrcp.pop 128.0
    %v2257 = vmul.f32 %v2255, %v2256
    %v2258 = vmul.f32 %v2219, %v2219
    %v2259 = vmul.f32 %v2220, %v2220
    %v2260 = vmul.f32 %v2221, %v2221
    %v2261 = vmul.f32 %v2222, %v2222
    %v2262 = vmul.f32 %v2223, %v2223
    %v2263 = vmul.f32 %v2224, %v2224
    %v2264 = vmul.f32 %v2225, %v2225
    %v2265 = vmul.f32 %v2226, %v2226
    %v2266 = vmul.f32 %v2227, %v2227
    %v2267 = vmul.f32 %v2228, %v2228
    %v2268 = vmul.f32 %v2229, %v2229
    %v2269 = vmul.f32 %v2230, %v2230
    %v2270 = vmul.f32 %v2231, %v2231
    %v2271 = vmul.f32 %v2232, %v2232
    %v2272 = vmul.f32 %v2233, %v2233
    %v2273 = vmul.f32 %v2234, %v2234
    %v2274 = vadd.f32 %v2258, %v2259
    %v2275 = vadd.f32 %v2274, %v2260
    %v2276 = vadd.f32 %v2275, %v2261
    %v2277 = vadd.f32 %v2276, %v2262
    %v2278 = vadd.f32 %v2277, %v2263
    %v2279 = vadd.f32 %v2278, %v2264
    %v2280 = vadd.f32 %v2279, %v2265
    %v2281 = vadd.f32 %v2280, %v2266
    %v2282 = vadd.f32 %v2281, %v2267
    %v2283 = vadd.f32 %v2282, %v2268
    %v2284 = vadd.f32 %v2283, %v2269
    %v2285 = vadd.f32 %v2284, %v2270
    %v2286 = vadd.f32 %v2285, %v2271
    %v2287 = vadd.f32 %v2286, %v2272
    %v2288 = vadd.f32 %v2287, %v2273
    %v2289 = vrot.slane %v2288, 4
    %v2290 = vadd.f32 %v2288, %v2289
    %v2291 = vrot.slane %v2290, 2
    %v2292 = vadd.f32 %v2290, %v2291
    %v2293 = vrot.slane %v2292, 1
    %v2294 = vadd.f32 %v2292, %v2293
    %v2295 = vmul.f32 %v2294, %v2256
    %v2296 = vmul.f32 %v2257, %v2257
    %v2297 = vsub.f32 %v2295, %v2296
    %v2298 = vmax.f32 %v2297, 0.0
    %v2299 = vadd.f32 %v2298, 1e-05
    %v2300 = vrsqrt.pop %v2299
    %v2301 = vmul.f32 %v99, %v2300
    %v2302 = vlaneseq
    %v2303 = vshrl.u32 %v2302, 7
    %v2304 = vsub.s32 0, %v2303
    %v2305 = vrot.slane %v2301, %v2304
    %v2306 = vmul.f32 %v2219, %v2305
    %v2307 = vmul.f32 %v2220, %v2305
    %v2308 = vmul.f32 %v2221, %v2305
    %v2309 = vmul.f32 %v2222, %v2305
    %v2310 = vmul.f32 %v2223, %v2305
    %v2311 = vmul.f32 %v2224, %v2305
    %v2312 = vmul.f32 %v2225, %v2305
    %v2313 = vmul.f32 %v2226, %v2305
    %v2314 = vmul.f32 %v2227, %v2305
    %v2315 = vmul.f32 %v2228, %v2305
    %v2316 = vmul.f32 %v2229, %v2305
    %v2317 = vmul.f32 %v2230, %v2305
    %v2318 = vmul.f32 %v2231, %v2305
    %v2319 = vmul.f32 %v2232, %v2305
    %v2320 = vmul.f32 %v2233, %v2305
    %v2321 = vmul.f32 %v2234, %v2305
    %v2322 = vmul.f32 %v2257, %v2301
    %v2323 = vsub.f32 %v100, %v2322
    %v2324 = vlaneseq
    %v2325 = vshrl.u32 %v2324, 7
    %v2326 = vsub.s32 0, %v2325
    %v2327 = vrot.slane %v2323, %v2326
    %v2328 = vadd.f32 %v2306, %v2327
    %v2329 = vadd.f32 %v2307, %v2327
    %v2330 = vadd.f32 %v2308, %v2327
    %v2331 = vadd.f32 %v2309, %v2327
    %v2332 = vadd.f32 %v2310, %v2327
    %v2333 = vadd.f32 %v2311, %v2327
    %v2334 = vadd.f32 %v2312, %v2327
    %v2335 = vadd.f32 %v2313, %v2327
    %v2336 = vadd.f32 %v2314, %v2327
    %v2337 = vadd.f32 %v2315, %v2327
    %v2338 = vadd.f32 %v2316, %v2327
    %v2339 = vadd.f32 %v2317, %v2327
    %v2340 = vadd.f32 %v2318, %v2327
    %v2341 = vadd.f32 %v2319, %v2327
    %v2342 = vadd.f32 %v2320, %v2327
    %v2343 = vadd.f32 %v2321, %v2327
    %v2344 = vmax.f32 %v2328, 0.0
    %v2345 = vmax.f32 %v2329, 0.0
    %v2346 = vmax.f32 %v2330, 0.0
    %v2347 = vmax.f32 %v2331, 0.0
    %v2348 = vmax.f32 %v2332, 0.0
    %v2349 = vmax.f32 %v2333, 0.0
    %v2350 = vmax.f32 %v2334, 0.0
    %v2351 = vmax.f32 %v2335, 0.0
    %v2352 = vmax.f32 %v2336, 0.0
    %v2353 = vmax.f32 %v2337, 0.0
    %v2354 = vmax.f32 %v2338, 0.0
    %v2355 = vmax.f32 %v2339, 0.0
    %v2356 = vmax.f32 %v2340, 0.0
    %v2357 = vmax.f32 %v2341, 0.0
    %v2358 = vmax.f32 %v2342, 0.0
    %v2359 = vmax.f32 %v2343, 0.0
    %s2360 = smul.u32 4, 144
    %s2361 = smul.u32 %s2360, 1
    %s2362 = sshll.u32 %s2361, 4
    %2363 = dma.done [#allocation4], %s2362
    %v2364 = vld [vmem:[%s8 + $0x2] sm:$0x1]
    %v2365 = vld [vmem:[%s8 + $0x3] sm:$0x1]
    %2366 = vst [vmem:[#allocation5 + $0x10] sm:$0xff] %v2344
    %2367 = vst [vmem:[#allocation5 + $0x18] sm:$0xff] %v2345
    %2368 = vst [vmem:[#allocation5 + $0x20] sm:$0xff] %v2346
    %2369 = vst [vmem:[#allocation5 + $0x28] sm:$0xff] %v2347
    %2370 = vst [vmem:[#allocation5 + $0x30] sm:$0xff] %v2348
    %2371 = vst [vmem:[#allocation5 + $0x38] sm:$0xff] %v2349
    %2372 = vst [vmem:[#allocation5 + $0x40] sm:$0xff] %v2350
    %2373 = vst [vmem:[#allocation5 + $0x48] sm:$0xff] %v2351
    %2374 = vst [vmem:[#allocation5 + $0x50] sm:$0xff] %v2352
    %2375 = vst [vmem:[#allocation5 + $0x58] sm:$0xff] %v2353
    %2376 = vst [vmem:[#allocation5 + $0x60] sm:$0xff] %v2354
    %2377 = vst [vmem:[#allocation5 + $0x68] sm:$0xff] %v2355
    %2378 = vst [vmem:[#allocation5 + $0x70] sm:$0xff] %v2356
    %2379 = vst [vmem:[#allocation5 + $0x78] sm:$0xff] %v2357
    %2380 = vst [vmem:[#allocation5 + $0x80] sm:$0xff] %v2358
    %2381 = vst [vmem:[#allocation5 + $0x88] sm:$0xff] %v2359
    %v2382 = vld [vmem:[#allocation5 + $0x7] sm:$0xff]
    %v2383 = vld [vmem:[#allocation5 + $0xf] sm:$0xff]
    %v2384 = vld [vmem:[#allocation5 + $0x17] sm:$0xff]
    %v2385 = vld [vmem:[#allocation5 + $0x1f] sm:$0xff]
    %v2386 = vld [vmem:[#allocation5 + $0x27] sm:$0xff]
    %v2387 = vld [vmem:[#allocation5 + $0x2f] sm:$0xff]
    %v2388 = vld [vmem:[#allocation5 + $0x37] sm:$0xff]
    %v2389 = vld [vmem:[#allocation5 + $0x3f] sm:$0xff]
    %v2390 = vld [vmem:[#allocation5 + $0x47] sm:$0xff]
    %v2391 = vld [vmem:[#allocation5 + $0x4f] sm:$0xff]
    %v2392 = vld [vmem:[#allocation5 + $0x57] sm:$0xff]
    %v2393 = vld [vmem:[#allocation5 + $0x5f] sm:$0xff]
    %v2394 = vld [vmem:[#allocation5 + $0x67] sm:$0xff]
    %v2395 = vld [vmem:[#allocation5 + $0x6f] sm:$0xff]
    %v2396 = vld [vmem:[#allocation5 + $0x77] sm:$0xff]
    %v2397 = vld [vmem:[#allocation5 + $0x7f] sm:$0xff]
    %v2398 = vmul.f32 %v2382, %v137
    %v2399 = vmul.f32 %v2383, %v142
    %v2400 = vmul.f32 %v2384, %v147
    %v2401 = vmul.f32 %v2385, %v152
    %v2402 = vmul.f32 %v2386, %v157
    %v2403 = vmul.f32 %v2387, %v162
    %v2404 = vmul.f32 %v2388, %v167
    %v2405 = vmul.f32 %v2389, %v172
    %v2406 = vmul.f32 %v2390, %v177
    %v2407 = vmul.f32 %v2391, %v182
    %v2408 = vmul.f32 %v2392, %v187
    %v2409 = vmul.f32 %v2393, %v192
    %v2410 = vmul.f32 %v2394, %v197
    %v2411 = vmul.f32 %v2395, %v202
    %v2412 = vmul.f32 %v2396, %v207
    %v2413 = vmul.f32 %v2397, %v212
    %v2414 = vpack.c.bf16 %v2399, %v2398
    %v2415 = vpack.c.bf16 %v2401, %v2400
    %v2416 = vpack.c.bf16 %v2403, %v2402
    %v2417 = vpack.c.bf16 %v2405, %v2404
    %v2418 = vpack.c.bf16 %v2407, %v2406
    %v2419 = vpack.c.bf16 %v2409, %v2408
    %v2420 = vpack.c.bf16 %v2411, %v2410
    %v2421 = vpack.c.bf16 %v2413, %v2412
    %v2422 = vld [vmem:[#allocation2] sm:$0xf]
    %v2423 = vld [vmem:[#allocation2 + $0x4] sm:$0xf]
    %v2424 = vld [vmem:[#allocation2 + $0x8] sm:$0xf]
    %v2425 = vld [vmem:[#allocation2 + $0xc] sm:$0xf]
    %v2426 = vld [vmem:[#allocation2 + $0x10] sm:$0xf]
    %v2427 = vld [vmem:[#allocation2 + $0x14] sm:$0xf]
    %v2428 = vld [vmem:[#allocation2 + $0x18] sm:$0xf]
    %v2429 = vld [vmem:[#allocation2 + $0x1c] sm:$0xf]
    %v2430 = vld [vmem:[#allocation2 + $0x20] sm:$0xf]
    %v2431 = vld [vmem:[#allocation2 + $0x24] sm:$0xf]
    %v2432 = vld [vmem:[#allocation2 + $0x28] sm:$0xf]
    %v2433 = vld [vmem:[#allocation2 + $0x2c] sm:$0xf]
    %v2434 = vld [vmem:[#allocation2 + $0x30] sm:$0xf]
    %v2435 = vld [vmem:[#allocation2 + $0x34] sm:$0xf]
    %v2436 = vld [vmem:[#allocation2 + $0x38] sm:$0xf]
    %v2437 = vld [vmem:[#allocation2 + $0x3c] sm:$0xf]
    %v2438 = vld [vmem:[#allocation5 + $0x8] sm:$0xff]
    %v2439 = vld [vmem:[#allocation5 + $0x10] sm:$0xff]
    %v2440 = vld [vmem:[#allocation5 + $0x18] sm:$0xff]
    %v2441 = vld [vmem:[#allocation5 + $0x20] sm:$0xff]
    %v2442 = vld [vmem:[#allocation5 + $0x28] sm:$0xff]
    %v2443 = vld [vmem:[#allocation5 + $0x30] sm:$0xff]
    %v2444 = vld [vmem:[#allocation5 + $0x38] sm:$0xff]
    %v2445 = vld [vmem:[#allocation5 + $0x40] sm:$0xff]
    %v2446 = vld [vmem:[#allocation5 + $0x48] sm:$0xff]
    %v2447 = vld [vmem:[#allocation5 + $0x50] sm:$0xff]
    %v2448 = vld [vmem:[#allocation5 + $0x58] sm:$0xff]
    %v2449 = vld [vmem:[#allocation5 + $0x60] sm:$0xff]
    %v2450 = vld [vmem:[#allocation5 + $0x68] sm:$0xff]
    %v2451 = vld [vmem:[#allocation5 + $0x70] sm:$0xff]
    %v2452 = vld [vmem:[#allocation5 + $0x78] sm:$0xff]
    %v2453 = vld [vmem:[#allocation5 + $0x80] sm:$0xff]
    %v2454 = vmul.f32 %v2438, %v256
    %v2455 = vmul.f32 %v2439, %v260
    %v2456 = vmul.f32 %v2440, %v264
    %v2457 = vmul.f32 %v2441, %v268
    %v2458 = vmul.f32 %v2442, %v272
    %v2459 = vmul.f32 %v2443, %v276
    %v2460 = vmul.f32 %v2444, %v280
    %v2461 = vmul.f32 %v2445, %v284
    %v2462 = vmul.f32 %v2446, %v288
    %v2463 = vmul.f32 %v2447, %v292
    %v2464 = vmul.f32 %v2448, %v296
    %v2465 = vmul.f32 %v2449, %v300
    %v2466 = vmul.f32 %v2450, %v304
    %v2467 = vmul.f32 %v2451, %v308
    %v2468 = vmul.f32 %v2452, %v312
    %v2469 = vmul.f32 %v2453, %v316
    %v2470 = vpack.c.bf16 %v2455, %v2454
    %v2471 = vpack.c.bf16 %v2457, %v2456
    %v2472 = vpack.c.bf16 %v2459, %v2458
    %v2473 = vpack.c.bf16 %v2461, %v2460
    %v2474 = vpack.c.bf16 %v2463, %v2462
    %v2475 = vpack.c.bf16 %v2465, %v2464
    %v2476 = vpack.c.bf16 %v2467, %v2466
    %v2477 = vpack.c.bf16 %v2469, %v2468
    %v2478 = vld [vmem:[#allocation2 + $0x40] sm:$0xf]
    %v2479 = vld [vmem:[#allocation2 + $0x44] sm:$0xf]
    %v2480 = vld [vmem:[#allocation2 + $0x48] sm:$0xf]
    %v2481 = vld [vmem:[#allocation2 + $0x4c] sm:$0xf]
    %v2482 = vld [vmem:[#allocation2 + $0x50] sm:$0xf]
    %v2483 = vld [vmem:[#allocation2 + $0x54] sm:$0xf]
    %v2484 = vld [vmem:[#allocation2 + $0x58] sm:$0xf]
    %v2485 = vld [vmem:[#allocation2 + $0x5c] sm:$0xf]
    %v2486 = vld [vmem:[#allocation2 + $0x60] sm:$0xf]
    %v2487 = vld [vmem:[#allocation2 + $0x64] sm:$0xf]
    %v2488 = vld [vmem:[#allocation2 + $0x68] sm:$0xf]
    %v2489 = vld [vmem:[#allocation2 + $0x6c] sm:$0xf]
    %v2490 = vld [vmem:[#allocation2 + $0x70] sm:$0xf]
    %v2491 = vld [vmem:[#allocation2 + $0x74] sm:$0xf]
    %v2492 = vld [vmem:[#allocation2 + $0x78] sm:$0xf]
    %v2493 = vld [vmem:[#allocation2 + $0x7c] sm:$0xf]
    %v2510 = vunpack.c.l.b16 %v2478
    %v2511 = vunpack.c.l.b16 %v2479
    %v2512 = vunpack.c.l.b16 %v2480
    %v2513 = vunpack.c.l.b16 %v2481
    %v2514 = vunpack.c.l.b16 %v2482
    %v2515 = vunpack.c.l.b16 %v2483
    %v2516 = vunpack.c.l.b16 %v2484
    %v2517 = vunpack.c.l.b16 %v2485
    %v2518 = vunpack.c.l.b16 %v2486
    %v2519 = vunpack.c.l.b16 %v2487
    %v2520 = vunpack.c.l.b16 %v2488
    %v2521 = vunpack.c.l.b16 %v2489
    %v2522 = vunpack.c.l.b16 %v2490
    %v2523 = vunpack.c.l.b16 %v2491
    %v2524 = vunpack.c.l.b16 %v2492
    %v2525 = vunpack.c.l.b16 %v2493
    %v2526 = vpack.c.b16 %v2511, %v2510
    %v2527 = vpack.c.b16 %v2513, %v2512
    %v2528 = vpack.c.b16 %v2515, %v2514
    %v2529 = vpack.c.b16 %v2517, %v2516
    %v2530 = vpack.c.b16 %v2519, %v2518
    %v2531 = vpack.c.b16 %v2521, %v2520
    %v2532 = vpack.c.b16 %v2523, %v2522
    %v2533 = vpack.c.b16 %v2525, %v2524
    %2542 = vmatprep.subr.bf16.mxu0 0
    %2543 = vmatpush1.bf16.msra.mxu0 %v2533
    %2544 = vmatprep.subr.bf16.mxu0 0
    %2545 = vmatpush1.bf16.msra.mxu0 %v2532
    %2546 = vmatprep.subr.bf16.mxu0 0
    %2547 = vmatpush1.bf16.msra.mxu0 %v2531
    %2548 = vmatprep.subr.bf16.mxu0 0
    %2549 = vmatpush1.bf16.msra.mxu0 %v2530
    %2550 = vmatprep.subr.bf16.mxu0 0
    %2551 = vmatpush1.bf16.msra.mxu0 %v2529
    %2552 = vmatprep.subr.bf16.mxu0 0
    %2553 = vmatpush1.bf16.msra.mxu0 %v2528
    %2554 = vmatprep.subr.bf16.mxu0 0
    %2555 = vmatpush1.bf16.msra.mxu0 %v2527
    %2556 = vmatprep.subr.bf16.mxu0 0
    %2557 = vmatpush1.bf16.msra.mxu0 %v2526
    %2558 = vmatprep.subr.bf16.mxu0 0
    %2559 = vmatpush2.bf16.msra.mxu0 0
    %2560 = vmatprep.subr.bf16.mxu0 0
    %2561 = vmatpush2.bf16.msra.mxu0 0
    %2562 = vmatprep.subr.bf16.mxu0 0
    %2563 = vmatpush2.bf16.msra.mxu0 0
    %2564 = vmatprep.subr.bf16.mxu0 0
    %2565 = vmatpush2.bf16.msra.mxu0 0
    %2566 = vmatprep.subr.bf16.mxu0 0
    %2567 = vmatpush2.bf16.msra.mxu0 0
    %2568 = vmatprep.subr.bf16.mxu0 0
    %2569 = vmatpush2.bf16.msra.mxu0 0
    %2570 = vmatprep.subr.bf16.mxu0 0
    %2571 = vmatpush2.bf16.msra.mxu0 0
    %2572 = vmatprep.subr.bf16.mxu0 0
    %2573 = vmatpush2.bf16.msra.mxu0 0
    %2574 = vmatprep.mubr.bf16.mxu0 0
    %2575 = vmatmul.mubr.bf16.gmra.mxu0 %v2470
    %v2576 = vpop.f32.mrf.mxu0
    %v2577 = vadd.f32 0.0, %v2576
    %v2578 = vpop.f32.mrf.mxu0
    %v2579 = vpop.f32.mrf.mxu0
    %v2580 = vadd.f32 0.0, %v2579
    %v2581 = vpop.f32.mrf.mxu0
    %2582 = vmatprep.mubr.bf16.mxu0 0
    %2583 = vmatmul.mubr.bf16.gmra.mxu0 %v2471
    %v2584 = vpop.f32.mrf.mxu0
    %v2585 = vadd.f32 0.0, %v2584
    %v2586 = vpop.f32.mrf.mxu0
    %v2587 = vpop.f32.mrf.mxu0
    %v2588 = vadd.f32 0.0, %v2587
    %v2589 = vpop.f32.mrf.mxu0
    %2590 = vmatprep.mubr.bf16.mxu0 0
    %2591 = vmatmul.mubr.bf16.gmra.mxu0 %v2472
    %v2592 = vpop.f32.mrf.mxu0
    %v2593 = vadd.f32 0.0, %v2592
    %v2594 = vpop.f32.mrf.mxu0
    %v2595 = vpop.f32.mrf.mxu0
    %v2596 = vadd.f32 0.0, %v2595
    %v2597 = vpop.f32.mrf.mxu0
    %2598 = vmatprep.mubr.bf16.mxu0 0
    %2599 = vmatmul.mubr.bf16.gmra.mxu0 %v2473
    %v2600 = vpop.f32.mrf.mxu0
    %v2601 = vadd.f32 0.0, %v2600
    %v2602 = vpop.f32.mrf.mxu0
    %v2603 = vpop.f32.mrf.mxu0
    %v2604 = vadd.f32 0.0, %v2603
    %v2605 = vpop.f32.mrf.mxu0
    %2606 = vmatprep.mubr.bf16.mxu0 0
    %2607 = vmatmul.mubr.bf16.gmra.mxu0 %v2474
    %v2608 = vpop.f32.mrf.mxu0
    %v2609 = vadd.f32 0.0, %v2608
    %v2610 = vpop.f32.mrf.mxu0
    %v2611 = vpop.f32.mrf.mxu0
    %v2612 = vadd.f32 0.0, %v2611
    %v2613 = vpop.f32.mrf.mxu0
    %2614 = vmatprep.mubr.bf16.mxu0 0
    %2615 = vmatmul.mubr.bf16.gmra.mxu0 %v2475
    %v2616 = vpop.f32.mrf.mxu0
    %v2617 = vadd.f32 0.0, %v2616
    %v2618 = vpop.f32.mrf.mxu0
    %v2619 = vpop.f32.mrf.mxu0
    %v2620 = vadd.f32 0.0, %v2619
    %v2621 = vpop.f32.mrf.mxu0
    %2622 = vmatprep.mubr.bf16.mxu0 0
    %2623 = vmatmul.mubr.bf16.gmra.mxu0 %v2476
    %v2624 = vpop.f32.mrf.mxu0
    %v2625 = vadd.f32 0.0, %v2624
    %v2626 = vpop.f32.mrf.mxu0
    %v2627 = vpop.f32.mrf.mxu0
    %v2628 = vadd.f32 0.0, %v2627
    %v2629 = vpop.f32.mrf.mxu0
    %2630 = vmatprep.mubr.bf16.mxu0 0
    %2631 = vmatmul.mubr.bf16.gmra.mxu0 %v2477
    %v2632 = vpop.f32.mrf.mxu0
    %v2633 = vadd.f32 0.0, %v2632
    %v2634 = vpop.f32.mrf.mxu0
    %v2635 = vpop.f32.mrf.mxu0
    %v2636 = vadd.f32 0.0, %v2635
    %v2637 = vpop.f32.mrf.mxu0
    %2638 = vdwg.mxu0
    %v2655 = vunpack.c.l.b16 %v2422
    %v2656 = vunpack.c.l.b16 %v2423
    %v2657 = vunpack.c.l.b16 %v2424
    %v2658 = vunpack.c.l.b16 %v2425
    %v2659 = vunpack.c.l.b16 %v2426
    %v2660 = vunpack.c.l.b16 %v2427
    %v2661 = vunpack.c.l.b16 %v2428
    %v2662 = vunpack.c.l.b16 %v2429
    %v2663 = vunpack.c.l.b16 %v2430
    %v2664 = vunpack.c.l.b16 %v2431
    %v2665 = vunpack.c.l.b16 %v2432
    %v2666 = vunpack.c.l.b16 %v2433
    %v2667 = vunpack.c.l.b16 %v2434
    %v2668 = vunpack.c.l.b16 %v2435
    %v2669 = vunpack.c.l.b16 %v2436
    %v2670 = vunpack.c.l.b16 %v2437
    %v2671 = vpack.c.b16 %v2656, %v2655
    %v2672 = vpack.c.b16 %v2658, %v2657
    %v2673 = vpack.c.b16 %v2660, %v2659
    %v2674 = vpack.c.b16 %v2662, %v2661
    %v2675 = vpack.c.b16 %v2664, %v2663
    %v2676 = vpack.c.b16 %v2666, %v2665
    %v2677 = vpack.c.b16 %v2668, %v2667
    %v2678 = vpack.c.b16 %v2670, %v2669
    %2687 = vmatprep.subr.bf16.mxu0 0
    %2688 = vmatpush1.bf16.msra.mxu0 %v2678
    %2689 = vmatprep.subr.bf16.mxu0 0
    %2690 = vmatpush1.bf16.msra.mxu0 %v2677
    %2691 = vmatprep.subr.bf16.mxu0 0
    %2692 = vmatpush1.bf16.msra.mxu0 %v2676
    %2693 = vmatprep.subr.bf16.mxu0 0
    %2694 = vmatpush1.bf16.msra.mxu0 %v2675
    %2695 = vmatprep.subr.bf16.mxu0 0
    %2696 = vmatpush1.bf16.msra.mxu0 %v2674
    %2697 = vmatprep.subr.bf16.mxu0 0
    %2698 = vmatpush1.bf16.msra.mxu0 %v2673
    %2699 = vmatprep.subr.bf16.mxu0 0
    %2700 = vmatpush1.bf16.msra.mxu0 %v2672
    %2701 = vmatprep.subr.bf16.mxu0 0
    %2702 = vmatpush1.bf16.msra.mxu0 %v2671
    %2703 = vmatprep.subr.bf16.mxu0 0
    %2704 = vmatpush2.bf16.msra.mxu0 0
    %2705 = vmatprep.subr.bf16.mxu0 0
    %2706 = vmatpush2.bf16.msra.mxu0 0
    %2707 = vmatprep.subr.bf16.mxu0 0
    %2708 = vmatpush2.bf16.msra.mxu0 0
    %2709 = vmatprep.subr.bf16.mxu0 0
    %2710 = vmatpush2.bf16.msra.mxu0 0
    %2711 = vmatprep.subr.bf16.mxu0 0
    %2712 = vmatpush2.bf16.msra.mxu0 0
    %2713 = vmatprep.subr.bf16.mxu0 0
    %2714 = vmatpush2.bf16.msra.mxu0 0
    %2715 = vmatprep.subr.bf16.mxu0 0
    %2716 = vmatpush2.bf16.msra.mxu0 0
    %2717 = vmatprep.subr.bf16.mxu0 0
    %2718 = vmatpush2.bf16.msra.mxu0 0
    %2719 = vmatprep.mubr.bf16.mxu0 0
    %2720 = vmatmul.mubr.bf16.gmra.mxu0 %v2414
    %v2721 = vpop.f32.mrf.mxu0
    %v2722 = vadd.f32 %v2577, %v2721
    %v2723 = vpop.f32.mrf.mxu0
    %v2724 = vpop.f32.mrf.mxu0
    %v2725 = vadd.f32 %v2580, %v2724
    %v2726 = vpop.f32.mrf.mxu0
    %2727 = vmatprep.mubr.bf16.mxu0 0
    %2728 = vmatmul.mubr.bf16.gmra.mxu0 %v2415
    %v2729 = vpop.f32.mrf.mxu0
    %v2730 = vadd.f32 %v2585, %v2729
    %v2731 = vpop.f32.mrf.mxu0
    %v2732 = vpop.f32.mrf.mxu0
    %v2733 = vadd.f32 %v2588, %v2732
    %v2734 = vpop.f32.mrf.mxu0
    %2735 = vmatprep.mubr.bf16.mxu0 0
    %2736 = vmatmul.mubr.bf16.gmra.mxu0 %v2416
    %v2737 = vpop.f32.mrf.mxu0
    %v2738 = vadd.f32 %v2593, %v2737
    %v2739 = vpop.f32.mrf.mxu0
    %v2740 = vpop.f32.mrf.mxu0
    %v2741 = vadd.f32 %v2596, %v2740
    %v2742 = vpop.f32.mrf.mxu0
    %2743 = vmatprep.mubr.bf16.mxu0 0
    %2744 = vmatmul.mubr.bf16.gmra.mxu0 %v2417
    %v2745 = vpop.f32.mrf.mxu0
    %v2746 = vadd.f32 %v2601, %v2745
    %v2747 = vpop.f32.mrf.mxu0
    %v2748 = vpop.f32.mrf.mxu0
    %v2749 = vadd.f32 %v2604, %v2748
    %v2750 = vpop.f32.mrf.mxu0
    %2751 = vmatprep.mubr.bf16.mxu0 0
    %2752 = vmatmul.mubr.bf16.gmra.mxu0 %v2418
    %v2753 = vpop.f32.mrf.mxu0
    %v2754 = vadd.f32 %v2609, %v2753
    %v2755 = vpop.f32.mrf.mxu0
    %v2756 = vpop.f32.mrf.mxu0
    %v2757 = vadd.f32 %v2612, %v2756
    %v2758 = vpop.f32.mrf.mxu0
    %2759 = vmatprep.mubr.bf16.mxu0 0
    %2760 = vmatmul.mubr.bf16.gmra.mxu0 %v2419
    %v2761 = vpop.f32.mrf.mxu0
    %v2762 = vadd.f32 %v2617, %v2761
    %v2763 = vpop.f32.mrf.mxu0
    %v2764 = vpop.f32.mrf.mxu0
    %v2765 = vadd.f32 %v2620, %v2764
    %v2766 = vpop.f32.mrf.mxu0
    %2767 = vmatprep.mubr.bf16.mxu0 0
    %2768 = vmatmul.mubr.bf16.gmra.mxu0 %v2420
    %v2769 = vpop.f32.mrf.mxu0
    %v2770 = vadd.f32 %v2625, %v2769
    %v2771 = vpop.f32.mrf.mxu0
    %v2772 = vpop.f32.mrf.mxu0
    %v2773 = vadd.f32 %v2628, %v2772
    %v2774 = vpop.f32.mrf.mxu0
    %2775 = vmatprep.mubr.bf16.mxu0 0
    %2776 = vmatmul.mubr.bf16.gmra.mxu0 %v2421
    %v2777 = vpop.f32.mrf.mxu0
    %v2778 = vadd.f32 %v2633, %v2777
    %v2779 = vpop.f32.mrf.mxu0
    %v2780 = vpop.f32.mrf.mxu0
    %v2781 = vadd.f32 %v2636, %v2780
    %v2782 = vpop.f32.mrf.mxu0
    %2783 = vdwg.mxu0
    %v2784 = vld [vmem:[#allocation5 + $0x9] sm:$0xff]
    %v2785 = vld [vmem:[#allocation5 + $0x11] sm:$0xff]
    %v2786 = vld [vmem:[#allocation5 + $0x19] sm:$0xff]
    %v2787 = vld [vmem:[#allocation5 + $0x21] sm:$0xff]
    %v2788 = vld [vmem:[#allocation5 + $0x29] sm:$0xff]
    %v2789 = vld [vmem:[#allocation5 + $0x31] sm:$0xff]
    %v2790 = vld [vmem:[#allocation5 + $0x39] sm:$0xff]
    %v2791 = vld [vmem:[#allocation5 + $0x41] sm:$0xff]
    %v2792 = vld [vmem:[#allocation5 + $0x49] sm:$0xff]
    %v2793 = vld [vmem:[#allocation5 + $0x51] sm:$0xff]
    %v2794 = vld [vmem:[#allocation5 + $0x59] sm:$0xff]
    %v2795 = vld [vmem:[#allocation5 + $0x61] sm:$0xff]
    %v2796 = vld [vmem:[#allocation5 + $0x69] sm:$0xff]
    %v2797 = vld [vmem:[#allocation5 + $0x71] sm:$0xff]
    %v2798 = vld [vmem:[#allocation5 + $0x79] sm:$0xff]
    %v2799 = vld [vmem:[#allocation5 + $0x81] sm:$0xff]
    %v2800 = vmul.f32 %v2784, %v613
    %v2801 = vmul.f32 %v2785, %v617
    %v2802 = vmul.f32 %v2786, %v621
    %v2803 = vmul.f32 %v2787, %v625
    %v2804 = vmul.f32 %v2788, %v629
    %v2805 = vmul.f32 %v2789, %v633
    %v2806 = vmul.f32 %v2790, %v637
    %v2807 = vmul.f32 %v2791, %v641
    %v2808 = vmul.f32 %v2792, %v645
    %v2809 = vmul.f32 %v2793, %v649
    %v2810 = vmul.f32 %v2794, %v653
    %v2811 = vmul.f32 %v2795, %v657
    %v2812 = vmul.f32 %v2796, %v661
    %v2813 = vmul.f32 %v2797, %v665
    %v2814 = vmul.f32 %v2798, %v669
    %v2815 = vmul.f32 %v2799, %v673
    %v2816 = vpack.c.bf16 %v2801, %v2800
    %v2817 = vpack.c.bf16 %v2803, %v2802
    %v2818 = vpack.c.bf16 %v2805, %v2804
    %v2819 = vpack.c.bf16 %v2807, %v2806
    %v2820 = vpack.c.bf16 %v2809, %v2808
    %v2821 = vpack.c.bf16 %v2811, %v2810
    %v2822 = vpack.c.bf16 %v2813, %v2812
    %v2823 = vpack.c.bf16 %v2815, %v2814
    %v2824 = vld [vmem:[#allocation2 + $0x80] sm:$0xf]
    %v2825 = vld [vmem:[#allocation2 + $0x84] sm:$0xf]
    %v2826 = vld [vmem:[#allocation2 + $0x88] sm:$0xf]
    %v2827 = vld [vmem:[#allocation2 + $0x8c] sm:$0xf]
    %v2828 = vld [vmem:[#allocation2 + $0x90] sm:$0xf]
    %v2829 = vld [vmem:[#allocation2 + $0x94] sm:$0xf]
    %v2830 = vld [vmem:[#allocation2 + $0x98] sm:$0xf]
    %v2831 = vld [vmem:[#allocation2 + $0x9c] sm:$0xf]
    %v2832 = vld [vmem:[#allocation2 + $0xa0] sm:$0xf]
    %v2833 = vld [vmem:[#allocation2 + $0xa4] sm:$0xf]
    %v2834 = vld [vmem:[#allocation2 + $0xa8] sm:$0xf]
    %v2835 = vld [vmem:[#allocation2 + $0xac] sm:$0xf]
    %v2836 = vld [vmem:[#allocation2 + $0xb0] sm:$0xf]
    %v2837 = vld [vmem:[#allocation2 + $0xb4] sm:$0xf]
    %v2838 = vld [vmem:[#allocation2 + $0xb8] sm:$0xf]
    %v2839 = vld [vmem:[#allocation2 + $0xbc] sm:$0xf]
    %v2856 = vunpack.c.l.b16 %v2824
    %v2857 = vunpack.c.l.b16 %v2825
    %v2858 = vunpack.c.l.b16 %v2826
    %v2859 = vunpack.c.l.b16 %v2827
    %v2860 = vunpack.c.l.b16 %v2828
    %v2861 = vunpack.c.l.b16 %v2829
    %v2862 = vunpack.c.l.b16 %v2830
    %v2863 = vunpack.c.l.b16 %v2831
    %v2864 = vunpack.c.l.b16 %v2832
    %v2865 = vunpack.c.l.b16 %v2833
    %v2866 = vunpack.c.l.b16 %v2834
    %v2867 = vunpack.c.l.b16 %v2835
    %v2868 = vunpack.c.l.b16 %v2836
    %v2869 = vunpack.c.l.b16 %v2837
    %v2870 = vunpack.c.l.b16 %v2838
    %v2871 = vunpack.c.l.b16 %v2839
    %v2872 = vpack.c.b16 %v2857, %v2856
    %v2873 = vpack.c.b16 %v2859, %v2858
    %v2874 = vpack.c.b16 %v2861, %v2860
    %v2875 = vpack.c.b16 %v2863, %v2862
    %v2876 = vpack.c.b16 %v2865, %v2864
    %v2877 = vpack.c.b16 %v2867, %v2866
    %v2878 = vpack.c.b16 %v2869, %v2868
    %v2879 = vpack.c.b16 %v2871, %v2870
    %2888 = vmatprep.subr.bf16.mxu0 0
    %2889 = vmatpush1.bf16.msra.mxu0 %v2879
    %2890 = vmatprep.subr.bf16.mxu0 0
    %2891 = vmatpush1.bf16.msra.mxu0 %v2878
    %2892 = vmatprep.subr.bf16.mxu0 0
    %2893 = vmatpush1.bf16.msra.mxu0 %v2877
    %2894 = vmatprep.subr.bf16.mxu0 0
    %2895 = vmatpush1.bf16.msra.mxu0 %v2876
    %2896 = vmatprep.subr.bf16.mxu0 0
    %2897 = vmatpush1.bf16.msra.mxu0 %v2875
    %2898 = vmatprep.subr.bf16.mxu0 0
    %2899 = vmatpush1.bf16.msra.mxu0 %v2874
    %2900 = vmatprep.subr.bf16.mxu0 0
    %2901 = vmatpush1.bf16.msra.mxu0 %v2873
    %2902 = vmatprep.subr.bf16.mxu0 0
    %2903 = vmatpush1.bf16.msra.mxu0 %v2872
    %2904 = vmatprep.subr.bf16.mxu0 0
    %2905 = vmatpush2.bf16.msra.mxu0 0
    %2906 = vmatprep.subr.bf16.mxu0 0
    %2907 = vmatpush2.bf16.msra.mxu0 0
    %2908 = vmatprep.subr.bf16.mxu0 0
    %2909 = vmatpush2.bf16.msra.mxu0 0
    %2910 = vmatprep.subr.bf16.mxu0 0
    %2911 = vmatpush2.bf16.msra.mxu0 0
    %2912 = vmatprep.subr.bf16.mxu0 0
    %2913 = vmatpush2.bf16.msra.mxu0 0
    %2914 = vmatprep.subr.bf16.mxu0 0
    %2915 = vmatpush2.bf16.msra.mxu0 0
    %2916 = vmatprep.subr.bf16.mxu0 0
    %2917 = vmatpush2.bf16.msra.mxu0 0
    %2918 = vmatprep.subr.bf16.mxu0 0
    %2919 = vmatpush2.bf16.msra.mxu0 0
    %2920 = vmatprep.mubr.bf16.mxu0 0
    %2921 = vmatmul.mubr.bf16.gmra.mxu0 %v2816
    %v2922 = vpop.f32.mrf.mxu0
    %v2923 = vadd.f32 0.0, %v2922
    %v2924 = vpop.f32.mrf.mxu0
    %v2925 = vpop.f32.mrf.mxu0
    %v2926 = vadd.f32 0.0, %v2925
    %v2927 = vpop.f32.mrf.mxu0
    %2928 = vmatprep.mubr.bf16.mxu0 0
    %2929 = vmatmul.mubr.bf16.gmra.mxu0 %v2817
    %v2930 = vpop.f32.mrf.mxu0
    %v2931 = vadd.f32 0.0, %v2930
    %v2932 = vpop.f32.mrf.mxu0
    %v2933 = vpop.f32.mrf.mxu0
    %v2934 = vadd.f32 0.0, %v2933
    %v2935 = vpop.f32.mrf.mxu0
    %2936 = vmatprep.mubr.bf16.mxu0 0
    %2937 = vmatmul.mubr.bf16.gmra.mxu0 %v2818
    %v2938 = vpop.f32.mrf.mxu0
    %v2939 = vadd.f32 0.0, %v2938
    %v2940 = vpop.f32.mrf.mxu0
    %v2941 = vpop.f32.mrf.mxu0
    %v2942 = vadd.f32 0.0, %v2941
    %v2943 = vpop.f32.mrf.mxu0
    %2944 = vmatprep.mubr.bf16.mxu0 0
    %2945 = vmatmul.mubr.bf16.gmra.mxu0 %v2819
    %v2946 = vpop.f32.mrf.mxu0
    %v2947 = vadd.f32 0.0, %v2946
    %v2948 = vpop.f32.mrf.mxu0
    %v2949 = vpop.f32.mrf.mxu0
    %v2950 = vadd.f32 0.0, %v2949
    %v2951 = vpop.f32.mrf.mxu0
    %2952 = vmatprep.mubr.bf16.mxu0 0
    %2953 = vmatmul.mubr.bf16.gmra.mxu0 %v2820
    %v2954 = vpop.f32.mrf.mxu0
    %v2955 = vadd.f32 0.0, %v2954
    %v2956 = vpop.f32.mrf.mxu0
    %v2957 = vpop.f32.mrf.mxu0
    %v2958 = vadd.f32 0.0, %v2957
    %v2959 = vpop.f32.mrf.mxu0
    %2960 = vmatprep.mubr.bf16.mxu0 0
    %2961 = vmatmul.mubr.bf16.gmra.mxu0 %v2821
    %v2962 = vpop.f32.mrf.mxu0
    %v2963 = vadd.f32 0.0, %v2962
    %v2964 = vpop.f32.mrf.mxu0
    %v2965 = vpop.f32.mrf.mxu0
    %v2966 = vadd.f32 0.0, %v2965
    %v2967 = vpop.f32.mrf.mxu0
    %2968 = vmatprep.mubr.bf16.mxu0 0
    %2969 = vmatmul.mubr.bf16.gmra.mxu0 %v2822
    %v2970 = vpop.f32.mrf.mxu0
    %v2971 = vadd.f32 0.0, %v2970
    %v2972 = vpop.f32.mrf.mxu0
    %v2973 = vpop.f32.mrf.mxu0
    %v2974 = vadd.f32 0.0, %v2973
    %v2975 = vpop.f32.mrf.mxu0
    %2976 = vmatprep.mubr.bf16.mxu0 0
    %2977 = vmatmul.mubr.bf16.gmra.mxu0 %v2823
    %v2978 = vpop.f32.mrf.mxu0
    %v2979 = vadd.f32 0.0, %v2978
    %v2980 = vpop.f32.mrf.mxu0
    %v2981 = vpop.f32.mrf.mxu0
    %v2982 = vadd.f32 0.0, %v2981
    %v2983 = vpop.f32.mrf.mxu0
    %2984 = vdwg.mxu0
    %v2985 = vadd.f32 %v2722, %v2923
    %v2986 = vadd.f32 %v2725, %v2926
    %v2987 = vadd.f32 %v2730, %v2931
    %v2988 = vadd.f32 %v2733, %v2934
    %v2989 = vadd.f32 %v2738, %v2939
    %v2990 = vadd.f32 %v2741, %v2942
    %v2991 = vadd.f32 %v2746, %v2947
    %v2992 = vadd.f32 %v2749, %v2950
    %v2993 = vadd.f32 %v2754, %v2955
    %v2994 = vadd.f32 %v2757, %v2958
    %v2995 = vadd.f32 %v2762, %v2963
    %v2996 = vadd.f32 %v2765, %v2966
    %v2997 = vadd.f32 %v2770, %v2971
    %v2998 = vadd.f32 %v2773, %v2974
    %v2999 = vadd.f32 %v2778, %v2979
    %v3000 = vadd.f32 %v2781, %v2982
    %v3001 = vld [vmem:[#allocation5 + $0xf] sm:$0xff]
    %v3002 = vld [vmem:[#allocation5 + $0x17] sm:$0xff]
    %v3003 = vld [vmem:[#allocation5 + $0x1f] sm:$0xff]
    %v3004 = vld [vmem:[#allocation5 + $0x27] sm:$0xff]
    %v3005 = vld [vmem:[#allocation5 + $0x2f] sm:$0xff]
    %v3006 = vld [vmem:[#allocation5 + $0x37] sm:$0xff]
    %v3007 = vld [vmem:[#allocation5 + $0x3f] sm:$0xff]
    %v3008 = vld [vmem:[#allocation5 + $0x47] sm:$0xff]
    %v3009 = vld [vmem:[#allocation5 + $0x4f] sm:$0xff]
    %v3010 = vld [vmem:[#allocation5 + $0x57] sm:$0xff]
    %v3011 = vld [vmem:[#allocation5 + $0x5f] sm:$0xff]
    %v3012 = vld [vmem:[#allocation5 + $0x67] sm:$0xff]
    %v3013 = vld [vmem:[#allocation5 + $0x6f] sm:$0xff]
    %v3014 = vld [vmem:[#allocation5 + $0x77] sm:$0xff]
    %v3015 = vld [vmem:[#allocation5 + $0x7f] sm:$0xff]
    %v3016 = vld [vmem:[#allocation5 + $0x87] sm:$0xff]
    %v3017 = vmul.f32 %v3001, %v857
    %v3018 = vmul.f32 %v3002, %v861
    %v3019 = vmul.f32 %v3003, %v865
    %v3020 = vmul.f32 %v3004, %v869
    %v3021 = vmul.f32 %v3005, %v873
    %v3022 = vmul.f32 %v3006, %v877
    %v3023 = vmul.f32 %v3007, %v881
    %v3024 = vmul.f32 %v3008, %v885
    %v3025 = vmul.f32 %v3009, %v889
    %v3026 = vmul.f32 %v3010, %v893
    %v3027 = vmul.f32 %v3011, %v897
    %v3028 = vmul.f32 %v3012, %v901
    %v3029 = vmul.f32 %v3013, %v905
    %v3030 = vmul.f32 %v3014, %v909
    %v3031 = vmul.f32 %v3015, %v913
    %v3032 = vmul.f32 %v3016, %v917
    %v3033 = vpack.c.bf16 %v3018, %v3017
    %v3034 = vpack.c.bf16 %v3020, %v3019
    %v3035 = vpack.c.bf16 %v3022, %v3021
    %v3036 = vpack.c.bf16 %v3024, %v3023
    %v3037 = vpack.c.bf16 %v3026, %v3025
    %v3038 = vpack.c.bf16 %v3028, %v3027
    %v3039 = vpack.c.bf16 %v3030, %v3029
    %v3040 = vpack.c.bf16 %v3032, %v3031
    %v3041 = vld [vmem:[#allocation2 + $0xc0] sm:$0xf]
    %v3042 = vld [vmem:[#allocation2 + $0xc4] sm:$0xf]
    %v3043 = vld [vmem:[#allocation2 + $0xc8] sm:$0xf]
    %v3044 = vld [vmem:[#allocation2 + $0xcc] sm:$0xf]
    %v3045 = vld [vmem:[#allocation2 + $0xd0] sm:$0xf]
    %v3046 = vld [vmem:[#allocation2 + $0xd4] sm:$0xf]
    %v3047 = vld [vmem:[#allocation2 + $0xd8] sm:$0xf]
    %v3048 = vld [vmem:[#allocation2 + $0xdc] sm:$0xf]
    %v3049 = vld [vmem:[#allocation2 + $0xe0] sm:$0xf]
    %v3050 = vld [vmem:[#allocation2 + $0xe4] sm:$0xf]
    %v3051 = vld [vmem:[#allocation2 + $0xe8] sm:$0xf]
    %v3052 = vld [vmem:[#allocation2 + $0xec] sm:$0xf]
    %v3053 = vld [vmem:[#allocation2 + $0xf0] sm:$0xf]
    %v3054 = vld [vmem:[#allocation2 + $0xf4] sm:$0xf]
    %v3055 = vld [vmem:[#allocation2 + $0xf8] sm:$0xf]
    %v3056 = vld [vmem:[#allocation2 + $0xfc] sm:$0xf]
    %v3073 = vunpack.c.l.b16 %v3041
    %v3074 = vunpack.c.l.b16 %v3042
    %v3075 = vunpack.c.l.b16 %v3043
    %v3076 = vunpack.c.l.b16 %v3044
    %v3077 = vunpack.c.l.b16 %v3045
    %v3078 = vunpack.c.l.b16 %v3046
    %v3079 = vunpack.c.l.b16 %v3047
    %v3080 = vunpack.c.l.b16 %v3048
    %v3081 = vunpack.c.l.b16 %v3049
    %v3082 = vunpack.c.l.b16 %v3050
    %v3083 = vunpack.c.l.b16 %v3051
    %v3084 = vunpack.c.l.b16 %v3052
    %v3085 = vunpack.c.l.b16 %v3053
    %v3086 = vunpack.c.l.b16 %v3054
    %v3087 = vunpack.c.l.b16 %v3055
    %v3088 = vunpack.c.l.b16 %v3056
    %v3089 = vpack.c.b16 %v3074, %v3073
    %v3090 = vpack.c.b16 %v3076, %v3075
    %v3091 = vpack.c.b16 %v3078, %v3077
    %v3092 = vpack.c.b16 %v3080, %v3079
    %v3093 = vpack.c.b16 %v3082, %v3081
    %v3094 = vpack.c.b16 %v3084, %v3083
    %v3095 = vpack.c.b16 %v3086, %v3085
    %v3096 = vpack.c.b16 %v3088, %v3087
    %3105 = vmatprep.subr.bf16.mxu0 0
    %3106 = vmatpush1.bf16.msra.mxu0 %v3096
    %3107 = vmatprep.subr.bf16.mxu0 0
    %3108 = vmatpush1.bf16.msra.mxu0 %v3095
    %3109 = vmatprep.subr.bf16.mxu0 0
    %3110 = vmatpush1.bf16.msra.mxu0 %v3094
    %3111 = vmatprep.subr.bf16.mxu0 0
    %3112 = vmatpush1.bf16.msra.mxu0 %v3093
    %3113 = vmatprep.subr.bf16.mxu0 0
    %3114 = vmatpush1.bf16.msra.mxu0 %v3092
    %3115 = vmatprep.subr.bf16.mxu0 0
    %3116 = vmatpush1.bf16.msra.mxu0 %v3091
    %3117 = vmatprep.subr.bf16.mxu0 0
    %3118 = vmatpush1.bf16.msra.mxu0 %v3090
    %3119 = vmatprep.subr.bf16.mxu0 0
    %3120 = vmatpush1.bf16.msra.mxu0 %v3089
    %3121 = vmatprep.subr.bf16.mxu0 0
    %3122 = vmatpush2.bf16.msra.mxu0 0
    %3123 = vmatprep.subr.bf16.mxu0 0
    %3124 = vmatpush2.bf16.msra.mxu0 0
    %3125 = vmatprep.subr.bf16.mxu0 0
    %3126 = vmatpush2.bf16.msra.mxu0 0
    %3127 = vmatprep.subr.bf16.mxu0 0
    %3128 = vmatpush2.bf16.msra.mxu0 0
    %3129 = vmatprep.subr.bf16.mxu0 0
    %3130 = vmatpush2.bf16.msra.mxu0 0
    %3131 = vmatprep.subr.bf16.mxu0 0
    %3132 = vmatpush2.bf16.msra.mxu0 0
    %3133 = vmatprep.subr.bf16.mxu0 0
    %3134 = vmatpush2.bf16.msra.mxu0 0
    %3135 = vmatprep.subr.bf16.mxu0 0
    %3136 = vmatpush2.bf16.msra.mxu0 0
    %3137 = vmatprep.mubr.bf16.mxu0 0
    %3138 = vmatmul.mubr.bf16.gmra.mxu0 %v3033
    %v3139 = vpop.f32.mrf.mxu0
    %v3140 = vadd.f32 0.0, %v3139
    %v3141 = vpop.f32.mrf.mxu0
    %v3142 = vpop.f32.mrf.mxu0
    %v3143 = vadd.f32 0.0, %v3142
    %v3144 = vpop.f32.mrf.mxu0
    %3145 = vmatprep.mubr.bf16.mxu0 0
    %3146 = vmatmul.mubr.bf16.gmra.mxu0 %v3034
    %v3147 = vpop.f32.mrf.mxu0
    %v3148 = vadd.f32 0.0, %v3147
    %v3149 = vpop.f32.mrf.mxu0
    %v3150 = vpop.f32.mrf.mxu0
    %v3151 = vadd.f32 0.0, %v3150
    %v3152 = vpop.f32.mrf.mxu0
    %3153 = vmatprep.mubr.bf16.mxu0 0
    %3154 = vmatmul.mubr.bf16.gmra.mxu0 %v3035
    %v3155 = vpop.f32.mrf.mxu0
    %v3156 = vadd.f32 0.0, %v3155
    %v3157 = vpop.f32.mrf.mxu0
    %v3158 = vpop.f32.mrf.mxu0
    %v3159 = vadd.f32 0.0, %v3158
    %v3160 = vpop.f32.mrf.mxu0
    %3161 = vmatprep.mubr.bf16.mxu0 0
    %3162 = vmatmul.mubr.bf16.gmra.mxu0 %v3036
    %v3163 = vpop.f32.mrf.mxu0
    %v3164 = vadd.f32 0.0, %v3163
    %v3165 = vpop.f32.mrf.mxu0
    %v3166 = vpop.f32.mrf.mxu0
    %v3167 = vadd.f32 0.0, %v3166
    %v3168 = vpop.f32.mrf.mxu0
    %3169 = vmatprep.mubr.bf16.mxu0 0
    %3170 = vmatmul.mubr.bf16.gmra.mxu0 %v3037
    %v3171 = vpop.f32.mrf.mxu0
    %v3172 = vadd.f32 0.0, %v3171
    %v3173 = vpop.f32.mrf.mxu0
    %v3174 = vpop.f32.mrf.mxu0
    %v3175 = vadd.f32 0.0, %v3174
    %v3176 = vpop.f32.mrf.mxu0
    %3177 = vmatprep.mubr.bf16.mxu0 0
    %3178 = vmatmul.mubr.bf16.gmra.mxu0 %v3038
    %v3179 = vpop.f32.mrf.mxu0
    %v3180 = vadd.f32 0.0, %v3179
    %v3181 = vpop.f32.mrf.mxu0
    %v3182 = vpop.f32.mrf.mxu0
    %v3183 = vadd.f32 0.0, %v3182
    %v3184 = vpop.f32.mrf.mxu0
    %3185 = vmatprep.mubr.bf16.mxu0 0
    %3186 = vmatmul.mubr.bf16.gmra.mxu0 %v3039
    %v3187 = vpop.f32.mrf.mxu0
    %v3188 = vadd.f32 0.0, %v3187
    %v3189 = vpop.f32.mrf.mxu0
    %v3190 = vpop.f32.mrf.mxu0
    %v3191 = vadd.f32 0.0, %v3190
    %v3192 = vpop.f32.mrf.mxu0
    %3193 = vmatprep.mubr.bf16.mxu0 0
    %3194 = vmatmul.mubr.bf16.gmra.mxu0 %v3040
    %v3195 = vpop.f32.mrf.mxu0
    %v3196 = vadd.f32 0.0, %v3195
    %v3197 = vpop.f32.mrf.mxu0
    %v3198 = vpop.f32.mrf.mxu0
    %v3199 = vadd.f32 0.0, %v3198
    %v3200 = vpop.f32.mrf.mxu0
    %3201 = vdwg.mxu0
    %v3202 = vadd.f32 %v2985, %v3140
    %v3203 = vadd.f32 %v2986, %v3143
    %v3204 = vadd.f32 %v2987, %v3148
    %v3205 = vadd.f32 %v2988, %v3151
    %v3206 = vadd.f32 %v2989, %v3156
    %v3207 = vadd.f32 %v2990, %v3159
    %v3208 = vadd.f32 %v2991, %v3164
    %v3209 = vadd.f32 %v2992, %v3167
    %v3210 = vadd.f32 %v2993, %v3172
    %v3211 = vadd.f32 %v2994, %v3175
    %v3212 = vadd.f32 %v2995, %v3180
    %v3213 = vadd.f32 %v2996, %v3183
    %v3214 = vadd.f32 %v2997, %v3188
    %v3215 = vadd.f32 %v2998, %v3191
    %v3216 = vadd.f32 %v2999, %v3196
    %v3217 = vadd.f32 %v3000, %v3199
    %v3218 = vld [vmem:[#allocation5 + $0x10] sm:$0xff]
    %v3219 = vld [vmem:[#allocation5 + $0x18] sm:$0xff]
    %v3220 = vld [vmem:[#allocation5 + $0x20] sm:$0xff]
    %v3221 = vld [vmem:[#allocation5 + $0x28] sm:$0xff]
    %v3222 = vld [vmem:[#allocation5 + $0x30] sm:$0xff]
    %v3223 = vld [vmem:[#allocation5 + $0x38] sm:$0xff]
    %v3224 = vld [vmem:[#allocation5 + $0x40] sm:$0xff]
    %v3225 = vld [vmem:[#allocation5 + $0x48] sm:$0xff]
    %v3226 = vld [vmem:[#allocation5 + $0x50] sm:$0xff]
    %v3227 = vld [vmem:[#allocation5 + $0x58] sm:$0xff]
    %v3228 = vld [vmem:[#allocation5 + $0x60] sm:$0xff]
    %v3229 = vld [vmem:[#allocation5 + $0x68] sm:$0xff]
    %v3230 = vld [vmem:[#allocation5 + $0x70] sm:$0xff]
    %v3231 = vld [vmem:[#allocation5 + $0x78] sm:$0xff]
    %v3232 = vld [vmem:[#allocation5 + $0x80] sm:$0xff]
    %v3233 = vld [vmem:[#allocation5 + $0x88] sm:$0xff]
    %v3234 = vpack.c.bf16 %v3219, %v3218
    %v3235 = vpack.c.bf16 %v3221, %v3220
    %v3236 = vpack.c.bf16 %v3223, %v3222
    %v3237 = vpack.c.bf16 %v3225, %v3224
    %v3238 = vpack.c.bf16 %v3227, %v3226
    %v3239 = vpack.c.bf16 %v3229, %v3228
    %v3240 = vpack.c.bf16 %v3231, %v3230
    %v3241 = vpack.c.bf16 %v3233, %v3232
    %v3242 = vld [vmem:[#allocation2 + $0x100] sm:$0xf]
    %v3243 = vld [vmem:[#allocation2 + $0x104] sm:$0xf]
    %v3244 = vld [vmem:[#allocation2 + $0x108] sm:$0xf]
    %v3245 = vld [vmem:[#allocation2 + $0x10c] sm:$0xf]
    %v3246 = vld [vmem:[#allocation2 + $0x110] sm:$0xf]
    %v3247 = vld [vmem:[#allocation2 + $0x114] sm:$0xf]
    %v3248 = vld [vmem:[#allocation2 + $0x118] sm:$0xf]
    %v3249 = vld [vmem:[#allocation2 + $0x11c] sm:$0xf]
    %v3250 = vld [vmem:[#allocation2 + $0x120] sm:$0xf]
    %v3251 = vld [vmem:[#allocation2 + $0x124] sm:$0xf]
    %v3252 = vld [vmem:[#allocation2 + $0x128] sm:$0xf]
    %v3253 = vld [vmem:[#allocation2 + $0x12c] sm:$0xf]
    %v3254 = vld [vmem:[#allocation2 + $0x130] sm:$0xf]
    %v3255 = vld [vmem:[#allocation2 + $0x134] sm:$0xf]
    %v3256 = vld [vmem:[#allocation2 + $0x138] sm:$0xf]
    %v3257 = vld [vmem:[#allocation2 + $0x13c] sm:$0xf]
    %v3274 = vunpack.c.l.b16 %v3242
    %v3275 = vunpack.c.l.b16 %v3243
    %v3276 = vunpack.c.l.b16 %v3244
    %v3277 = vunpack.c.l.b16 %v3245
    %v3278 = vunpack.c.l.b16 %v3246
    %v3279 = vunpack.c.l.b16 %v3247
    %v3280 = vunpack.c.l.b16 %v3248
    %v3281 = vunpack.c.l.b16 %v3249
    %v3282 = vunpack.c.l.b16 %v3250
    %v3283 = vunpack.c.l.b16 %v3251
    %v3284 = vunpack.c.l.b16 %v3252
    %v3285 = vunpack.c.l.b16 %v3253
    %v3286 = vunpack.c.l.b16 %v3254
    %v3287 = vunpack.c.l.b16 %v3255
    %v3288 = vunpack.c.l.b16 %v3256
    %v3289 = vunpack.c.l.b16 %v3257
    %v3290 = vpack.c.b16 %v3275, %v3274
    %v3291 = vpack.c.b16 %v3277, %v3276
    %v3292 = vpack.c.b16 %v3279, %v3278
    %v3293 = vpack.c.b16 %v3281, %v3280
    %v3294 = vpack.c.b16 %v3283, %v3282
    %v3295 = vpack.c.b16 %v3285, %v3284
    %v3296 = vpack.c.b16 %v3287, %v3286
    %v3297 = vpack.c.b16 %v3289, %v3288
    %3306 = vmatprep.subr.bf16.mxu0 0
    %3307 = vmatpush1.bf16.msra.mxu0 %v3297
    %3308 = vmatprep.subr.bf16.mxu0 0
    %3309 = vmatpush1.bf16.msra.mxu0 %v3296
    %3310 = vmatprep.subr.bf16.mxu0 0
    %3311 = vmatpush1.bf16.msra.mxu0 %v3295
    %3312 = vmatprep.subr.bf16.mxu0 0
    %3313 = vmatpush1.bf16.msra.mxu0 %v3294
    %3314 = vmatprep.subr.bf16.mxu0 0
    %3315 = vmatpush1.bf16.msra.mxu0 %v3293
    %3316 = vmatprep.subr.bf16.mxu0 0
    %3317 = vmatpush1.bf16.msra.mxu0 %v3292
    %3318 = vmatprep.subr.bf16.mxu0 0
    %3319 = vmatpush1.bf16.msra.mxu0 %v3291
    %3320 = vmatprep.subr.bf16.mxu0 0
    %3321 = vmatpush1.bf16.msra.mxu0 %v3290
    %3322 = vmatprep.subr.bf16.mxu0 0
    %3323 = vmatpush2.bf16.msra.mxu0 0
    %3324 = vmatprep.subr.bf16.mxu0 0
    %3325 = vmatpush2.bf16.msra.mxu0 0
    %3326 = vmatprep.subr.bf16.mxu0 0
    %3327 = vmatpush2.bf16.msra.mxu0 0
    %3328 = vmatprep.subr.bf16.mxu0 0
    %3329 = vmatpush2.bf16.msra.mxu0 0
    %3330 = vmatprep.subr.bf16.mxu0 0
    %3331 = vmatpush2.bf16.msra.mxu0 0
    %3332 = vmatprep.subr.bf16.mxu0 0
    %3333 = vmatpush2.bf16.msra.mxu0 0
    %3334 = vmatprep.subr.bf16.mxu0 0
    %3335 = vmatpush2.bf16.msra.mxu0 0
    %3336 = vmatprep.subr.bf16.mxu0 0
    %3337 = vmatpush2.bf16.msra.mxu0 0
    %3338 = vmatprep.mubr.bf16.mxu0 0
    %3339 = vmatmul.mubr.bf16.gmra.mxu0 %v3234
    %v3340 = vpop.f32.mrf.mxu0
    %v3341 = vadd.f32 0.0, %v3340
    %v3342 = vpop.f32.mrf.mxu0
    %v3343 = vpop.f32.mrf.mxu0
    %v3344 = vadd.f32 0.0, %v3343
    %v3345 = vpop.f32.mrf.mxu0
    %3346 = vmatprep.mubr.bf16.mxu0 0
    %3347 = vmatmul.mubr.bf16.gmra.mxu0 %v3235
    %v3348 = vpop.f32.mrf.mxu0
    %v3349 = vadd.f32 0.0, %v3348
    %v3350 = vpop.f32.mrf.mxu0
    %v3351 = vpop.f32.mrf.mxu0
    %v3352 = vadd.f32 0.0, %v3351
    %v3353 = vpop.f32.mrf.mxu0
    %3354 = vmatprep.mubr.bf16.mxu0 0
    %3355 = vmatmul.mubr.bf16.gmra.mxu0 %v3236
    %v3356 = vpop.f32.mrf.mxu0
    %v3357 = vadd.f32 0.0, %v3356
    %v3358 = vpop.f32.mrf.mxu0
    %v3359 = vpop.f32.mrf.mxu0
    %v3360 = vadd.f32 0.0, %v3359
    %v3361 = vpop.f32.mrf.mxu0
    %3362 = vmatprep.mubr.bf16.mxu0 0
    %3363 = vmatmul.mubr.bf16.gmra.mxu0 %v3237
    %v3364 = vpop.f32.mrf.mxu0
    %v3365 = vadd.f32 0.0, %v3364
    %v3366 = vpop.f32.mrf.mxu0
    %v3367 = vpop.f32.mrf.mxu0
    %v3368 = vadd.f32 0.0, %v3367
    %v3369 = vpop.f32.mrf.mxu0
    %3370 = vmatprep.mubr.bf16.mxu0 0
    %3371 = vmatmul.mubr.bf16.gmra.mxu0 %v3238
    %v3372 = vpop.f32.mrf.mxu0
    %v3373 = vadd.f32 0.0, %v3372
    %v3374 = vpop.f32.mrf.mxu0
    %v3375 = vpop.f32.mrf.mxu0
    %v3376 = vadd.f32 0.0, %v3375
    %v3377 = vpop.f32.mrf.mxu0
    %3378 = vmatprep.mubr.bf16.mxu0 0
    %3379 = vmatmul.mubr.bf16.gmra.mxu0 %v3239
    %v3380 = vpop.f32.mrf.mxu0
    %v3381 = vadd.f32 0.0, %v3380
    %v3382 = vpop.f32.mrf.mxu0
    %v3383 = vpop.f32.mrf.mxu0
    %v3384 = vadd.f32 0.0, %v3383
    %v3385 = vpop.f32.mrf.mxu0
    %3386 = vmatprep.mubr.bf16.mxu0 0
    %3387 = vmatmul.mubr.bf16.gmra.mxu0 %v3240
    %v3388 = vpop.f32.mrf.mxu0
    %v3389 = vadd.f32 0.0, %v3388
    %v3390 = vpop.f32.mrf.mxu0
    %v3391 = vpop.f32.mrf.mxu0
    %v3392 = vadd.f32 0.0, %v3391
    %v3393 = vpop.f32.mrf.mxu0
    %3394 = vmatprep.mubr.bf16.mxu0 0
    %3395 = vmatmul.mubr.bf16.gmra.mxu0 %v3241
    %v3396 = vpop.f32.mrf.mxu0
    %v3397 = vadd.f32 0.0, %v3396
    %v3398 = vpop.f32.mrf.mxu0
    %v3399 = vpop.f32.mrf.mxu0
    %v3400 = vadd.f32 0.0, %v3399
    %v3401 = vpop.f32.mrf.mxu0
    %3402 = vdwg.mxu0
    %v3403 = vadd.f32 %v3202, %v3341
    %v3404 = vadd.f32 %v3203, %v3344
    %v3405 = vadd.f32 %v3204, %v3349
    %v3406 = vadd.f32 %v3205, %v3352
    %v3407 = vadd.f32 %v3206, %v3357
    %v3408 = vadd.f32 %v3207, %v3360
    %v3409 = vadd.f32 %v3208, %v3365
    %v3410 = vadd.f32 %v3209, %v3368
    %v3411 = vadd.f32 %v3210, %v3373
    %v3412 = vadd.f32 %v3211, %v3376
    %v3413 = vadd.f32 %v3212, %v3381
    %v3414 = vadd.f32 %v3213, %v3384
    %v3415 = vadd.f32 %v3214, %v3389
    %v3416 = vadd.f32 %v3215, %v3392
    %v3417 = vadd.f32 %v3216, %v3397
    %v3418 = vadd.f32 %v3217, %v3400
    %v3419 = vld [vmem:[#allocation5 + $0x11] sm:$0xff]
    %v3420 = vld [vmem:[#allocation5 + $0x19] sm:$0xff]
    %v3421 = vld [vmem:[#allocation5 + $0x21] sm:$0xff]
    %v3422 = vld [vmem:[#allocation5 + $0x29] sm:$0xff]
    %v3423 = vld [vmem:[#allocation5 + $0x31] sm:$0xff]
    %v3424 = vld [vmem:[#allocation5 + $0x39] sm:$0xff]
    %v3425 = vld [vmem:[#allocation5 + $0x41] sm:$0xff]
    %v3426 = vld [vmem:[#allocation5 + $0x49] sm:$0xff]
    %v3427 = vld [vmem:[#allocation5 + $0x51] sm:$0xff]
    %v3428 = vld [vmem:[#allocation5 + $0x59] sm:$0xff]
    %v3429 = vld [vmem:[#allocation5 + $0x61] sm:$0xff]
    %v3430 = vld [vmem:[#allocation5 + $0x69] sm:$0xff]
    %v3431 = vld [vmem:[#allocation5 + $0x71] sm:$0xff]
    %v3432 = vld [vmem:[#allocation5 + $0x79] sm:$0xff]
    %v3433 = vld [vmem:[#allocation5 + $0x81] sm:$0xff]
    %v3434 = vld [vmem:[#allocation5 + $0x89] sm:$0xff]
    %v3435 = vmul.f32 %v3419, %v1269
    %v3436 = vmul.f32 %v3420, %v1273
    %v3437 = vmul.f32 %v3421, %v1277
    %v3438 = vmul.f32 %v3422, %v1281
    %v3439 = vmul.f32 %v3423, %v1285
    %v3440 = vmul.f32 %v3424, %v1289
    %v3441 = vmul.f32 %v3425, %v1293
    %v3442 = vmul.f32 %v3426, %v1297
    %v3443 = vmul.f32 %v3427, %v1301
    %v3444 = vmul.f32 %v3428, %v1305
    %v3445 = vmul.f32 %v3429, %v1309
    %v3446 = vmul.f32 %v3430, %v1313
    %v3447 = vmul.f32 %v3431, %v1317
    %v3448 = vmul.f32 %v3432, %v1321
    %v3449 = vmul.f32 %v3433, %v1325
    %v3450 = vmul.f32 %v3434, %v1329
    %v3451 = vpack.c.bf16 %v3436, %v3435
    %v3452 = vpack.c.bf16 %v3438, %v3437
    %v3453 = vpack.c.bf16 %v3440, %v3439
    %v3454 = vpack.c.bf16 %v3442, %v3441
    %v3455 = vpack.c.bf16 %v3444, %v3443
    %v3456 = vpack.c.bf16 %v3446, %v3445
    %v3457 = vpack.c.bf16 %v3448, %v3447
    %v3458 = vpack.c.bf16 %v3450, %v3449
    %v3459 = vld [vmem:[#allocation2 + $0x140] sm:$0xf]
    %v3460 = vld [vmem:[#allocation2 + $0x144] sm:$0xf]
    %v3461 = vld [vmem:[#allocation2 + $0x148] sm:$0xf]
    %v3462 = vld [vmem:[#allocation2 + $0x14c] sm:$0xf]
    %v3463 = vld [vmem:[#allocation2 + $0x150] sm:$0xf]
    %v3464 = vld [vmem:[#allocation2 + $0x154] sm:$0xf]
    %v3465 = vld [vmem:[#allocation2 + $0x158] sm:$0xf]
    %v3466 = vld [vmem:[#allocation2 + $0x15c] sm:$0xf]
    %v3467 = vld [vmem:[#allocation2 + $0x160] sm:$0xf]
    %v3468 = vld [vmem:[#allocation2 + $0x164] sm:$0xf]
    %v3469 = vld [vmem:[#allocation2 + $0x168] sm:$0xf]
    %v3470 = vld [vmem:[#allocation2 + $0x16c] sm:$0xf]
    %v3471 = vld [vmem:[#allocation2 + $0x170] sm:$0xf]
    %v3472 = vld [vmem:[#allocation2 + $0x174] sm:$0xf]
    %v3473 = vld [vmem:[#allocation2 + $0x178] sm:$0xf]
    %v3474 = vld [vmem:[#allocation2 + $0x17c] sm:$0xf]
    %v3491 = vunpack.c.l.b16 %v3459
    %v3492 = vunpack.c.l.b16 %v3460
    %v3493 = vunpack.c.l.b16 %v3461
    %v3494 = vunpack.c.l.b16 %v3462
    %v3495 = vunpack.c.l.b16 %v3463
    %v3496 = vunpack.c.l.b16 %v3464
    %v3497 = vunpack.c.l.b16 %v3465
    %v3498 = vunpack.c.l.b16 %v3466
    %v3499 = vunpack.c.l.b16 %v3467
    %v3500 = vunpack.c.l.b16 %v3468
    %v3501 = vunpack.c.l.b16 %v3469
    %v3502 = vunpack.c.l.b16 %v3470
    %v3503 = vunpack.c.l.b16 %v3471
    %v3504 = vunpack.c.l.b16 %v3472
    %v3505 = vunpack.c.l.b16 %v3473
    %v3506 = vunpack.c.l.b16 %v3474
    %v3507 = vpack.c.b16 %v3492, %v3491
    %v3508 = vpack.c.b16 %v3494, %v3493
    %v3509 = vpack.c.b16 %v3496, %v3495
    %v3510 = vpack.c.b16 %v3498, %v3497
    %v3511 = vpack.c.b16 %v3500, %v3499
    %v3512 = vpack.c.b16 %v3502, %v3501
    %v3513 = vpack.c.b16 %v3504, %v3503
    %v3514 = vpack.c.b16 %v3506, %v3505
    %3523 = vmatprep.subr.bf16.mxu0 0
    %3524 = vmatpush1.bf16.msra.mxu0 %v3514
    %3525 = vmatprep.subr.bf16.mxu0 0
    %3526 = vmatpush1.bf16.msra.mxu0 %v3513
    %3527 = vmatprep.subr.bf16.mxu0 0
    %3528 = vmatpush1.bf16.msra.mxu0 %v3512
    %3529 = vmatprep.subr.bf16.mxu0 0
    %3530 = vmatpush1.bf16.msra.mxu0 %v3511
    %3531 = vmatprep.subr.bf16.mxu0 0
    %3532 = vmatpush1.bf16.msra.mxu0 %v3510
    %3533 = vmatprep.subr.bf16.mxu0 0
    %3534 = vmatpush1.bf16.msra.mxu0 %v3509
    %3535 = vmatprep.subr.bf16.mxu0 0
    %3536 = vmatpush1.bf16.msra.mxu0 %v3508
    %3537 = vmatprep.subr.bf16.mxu0 0
    %3538 = vmatpush1.bf16.msra.mxu0 %v3507
    %3539 = vmatprep.subr.bf16.mxu0 0
    %3540 = vmatpush2.bf16.msra.mxu0 0
    %3541 = vmatprep.subr.bf16.mxu0 0
    %3542 = vmatpush2.bf16.msra.mxu0 0
    %3543 = vmatprep.subr.bf16.mxu0 0
    %3544 = vmatpush2.bf16.msra.mxu0 0
    %3545 = vmatprep.subr.bf16.mxu0 0
    %3546 = vmatpush2.bf16.msra.mxu0 0
    %3547 = vmatprep.subr.bf16.mxu0 0
    %3548 = vmatpush2.bf16.msra.mxu0 0
    %3549 = vmatprep.subr.bf16.mxu0 0
    %3550 = vmatpush2.bf16.msra.mxu0 0
    %3551 = vmatprep.subr.bf16.mxu0 0
    %3552 = vmatpush2.bf16.msra.mxu0 0
    %3553 = vmatprep.subr.bf16.mxu0 0
    %3554 = vmatpush2.bf16.msra.mxu0 0
    %3555 = vmatprep.mubr.bf16.mxu0 0
    %3556 = vmatmul.mubr.bf16.gmra.mxu0 %v3451
    %v3557 = vpop.f32.mrf.mxu0
    %v3558 = vadd.f32 0.0, %v3557
    %v3559 = vpop.f32.mrf.mxu0
    %v3560 = vpop.f32.mrf.mxu0
    %v3561 = vadd.f32 0.0, %v3560
    %v3562 = vpop.f32.mrf.mxu0
    %3563 = vmatprep.mubr.bf16.mxu0 0
    %3564 = vmatmul.mubr.bf16.gmra.mxu0 %v3452
    %v3565 = vpop.f32.mrf.mxu0
    %v3566 = vadd.f32 0.0, %v3565
    %v3567 = vpop.f32.mrf.mxu0
    %v3568 = vpop.f32.mrf.mxu0
    %v3569 = vadd.f32 0.0, %v3568
    %v3570 = vpop.f32.mrf.mxu0
    %3571 = vmatprep.mubr.bf16.mxu0 0
    %3572 = vmatmul.mubr.bf16.gmra.mxu0 %v3453
    %v3573 = vpop.f32.mrf.mxu0
    %v3574 = vadd.f32 0.0, %v3573
    %v3575 = vpop.f32.mrf.mxu0
    %v3576 = vpop.f32.mrf.mxu0
    %v3577 = vadd.f32 0.0, %v3576
    %v3578 = vpop.f32.mrf.mxu0
    %3579 = vmatprep.mubr.bf16.mxu0 0
    %3580 = vmatmul.mubr.bf16.gmra.mxu0 %v3454
    %v3581 = vpop.f32.mrf.mxu0
    %v3582 = vadd.f32 0.0, %v3581
    %v3583 = vpop.f32.mrf.mxu0
    %v3584 = vpop.f32.mrf.mxu0
    %v3585 = vadd.f32 0.0, %v3584
    %v3586 = vpop.f32.mrf.mxu0
    %3587 = vmatprep.mubr.bf16.mxu0 0
    %3588 = vmatmul.mubr.bf16.gmra.mxu0 %v3455
    %v3589 = vpop.f32.mrf.mxu0
    %v3590 = vadd.f32 0.0, %v3589
    %v3591 = vpop.f32.mrf.mxu0
    %v3592 = vpop.f32.mrf.mxu0
    %v3593 = vadd.f32 0.0, %v3592
    %v3594 = vpop.f32.mrf.mxu0
    %3595 = vmatprep.mubr.bf16.mxu0 0
    %3596 = vmatmul.mubr.bf16.gmra.mxu0 %v3456
    %v3597 = vpop.f32.mrf.mxu0
    %v3598 = vadd.f32 0.0, %v3597
    %v3599 = vpop.f32.mrf.mxu0
    %v3600 = vpop.f32.mrf.mxu0
    %v3601 = vadd.f32 0.0, %v3600
    %v3602 = vpop.f32.mrf.mxu0
    %3603 = vmatprep.mubr.bf16.mxu0 0
    %3604 = vmatmul.mubr.bf16.gmra.mxu0 %v3457
    %v3605 = vpop.f32.mrf.mxu0
    %v3606 = vadd.f32 0.0, %v3605
    %v3607 = vpop.f32.mrf.mxu0
    %v3608 = vpop.f32.mrf.mxu0
    %v3609 = vadd.f32 0.0, %v3608
    %v3610 = vpop.f32.mrf.mxu0
    %3611 = vmatprep.mubr.bf16.mxu0 0
    %3612 = vmatmul.mubr.bf16.gmra.mxu0 %v3458
    %v3613 = vpop.f32.mrf.mxu0
    %v3614 = vadd.f32 0.0, %v3613
    %v3615 = vpop.f32.mrf.mxu0
    %v3616 = vpop.f32.mrf.mxu0
    %v3617 = vadd.f32 0.0, %v3616
    %v3618 = vpop.f32.mrf.mxu0
    %3619 = vdwg.mxu0
    %v3620 = vadd.f32 %v3403, %v3558
    %v3621 = vadd.f32 %v3404, %v3561
    %v3622 = vadd.f32 %v3405, %v3566
    %v3623 = vadd.f32 %v3406, %v3569
    %v3624 = vadd.f32 %v3407, %v3574
    %v3625 = vadd.f32 %v3408, %v3577
    %v3626 = vadd.f32 %v3409, %v3582
    %v3627 = vadd.f32 %v3410, %v3585
    %v3628 = vadd.f32 %v3411, %v3590
    %v3629 = vadd.f32 %v3412, %v3593
    %v3630 = vadd.f32 %v3413, %v3598
    %v3631 = vadd.f32 %v3414, %v3601
    %v3632 = vadd.f32 %v3415, %v3606
    %v3633 = vadd.f32 %v3416, %v3609
    %v3634 = vadd.f32 %v3417, %v3614
    %v3635 = vadd.f32 %v3418, %v3617
    %v3636 = vld [vmem:[#allocation5 + $0x17] sm:$0xff]
    %v3637 = vld [vmem:[#allocation5 + $0x1f] sm:$0xff]
    %v3638 = vld [vmem:[#allocation5 + $0x27] sm:$0xff]
    %v3639 = vld [vmem:[#allocation5 + $0x2f] sm:$0xff]
    %v3640 = vld [vmem:[#allocation5 + $0x37] sm:$0xff]
    %v3641 = vld [vmem:[#allocation5 + $0x3f] sm:$0xff]
    %v3642 = vld [vmem:[#allocation5 + $0x47] sm:$0xff]
    %v3643 = vld [vmem:[#allocation5 + $0x4f] sm:$0xff]
    %v3644 = vld [vmem:[#allocation5 + $0x57] sm:$0xff]
    %v3645 = vld [vmem:[#allocation5 + $0x5f] sm:$0xff]
    %v3646 = vld [vmem:[#allocation5 + $0x67] sm:$0xff]
    %v3647 = vld [vmem:[#allocation5 + $0x6f] sm:$0xff]
    %v3648 = vld [vmem:[#allocation5 + $0x77] sm:$0xff]
    %v3649 = vld [vmem:[#allocation5 + $0x7f] sm:$0xff]
    %v3650 = vld [vmem:[#allocation5 + $0x87] sm:$0xff]
    %v3651 = vld [vmem:[#allocation5 + $0x8f] sm:$0xff]
    %v3652 = vmul.f32 %v3636, %v1517
    %v3653 = vmul.f32 %v3637, %v1521
    %v3654 = vmul.f32 %v3638, %v1525
    %v3655 = vmul.f32 %v3639, %v1529
    %v3656 = vmul.f32 %v3640, %v1533
    %v3657 = vmul.f32 %v3641, %v1537
    %v3658 = vmul.f32 %v3642, %v1541
    %v3659 = vmul.f32 %v3643, %v1545
    %v3660 = vmul.f32 %v3644, %v1549
    %v3661 = vmul.f32 %v3645, %v1553
    %v3662 = vmul.f32 %v3646, %v1557
    %v3663 = vmul.f32 %v3647, %v1561
    %v3664 = vmul.f32 %v3648, %v1565
    %v3665 = vmul.f32 %v3649, %v1569
    %v3666 = vmul.f32 %v3650, %v1573
    %v3667 = vmul.f32 %v3651, %v1577
    %v3668 = vpack.c.bf16 %v3653, %v3652
    %v3669 = vpack.c.bf16 %v3655, %v3654
    %v3670 = vpack.c.bf16 %v3657, %v3656
    %v3671 = vpack.c.bf16 %v3659, %v3658
    %v3672 = vpack.c.bf16 %v3661, %v3660
    %v3673 = vpack.c.bf16 %v3663, %v3662
    %v3674 = vpack.c.bf16 %v3665, %v3664
    %v3675 = vpack.c.bf16 %v3667, %v3666
    %v3676 = vld [vmem:[#allocation2 + $0x180] sm:$0xf]
    %v3677 = vld [vmem:[#allocation2 + $0x184] sm:$0xf]
    %v3678 = vld [vmem:[#allocation2 + $0x188] sm:$0xf]
    %v3679 = vld [vmem:[#allocation2 + $0x18c] sm:$0xf]
    %v3680 = vld [vmem:[#allocation2 + $0x190] sm:$0xf]
    %v3681 = vld [vmem:[#allocation2 + $0x194] sm:$0xf]
    %v3682 = vld [vmem:[#allocation2 + $0x198] sm:$0xf]
    %v3683 = vld [vmem:[#allocation2 + $0x19c] sm:$0xf]
    %v3684 = vld [vmem:[#allocation2 + $0x1a0] sm:$0xf]
    %v3685 = vld [vmem:[#allocation2 + $0x1a4] sm:$0xf]
    %v3686 = vld [vmem:[#allocation2 + $0x1a8] sm:$0xf]
    %v3687 = vld [vmem:[#allocation2 + $0x1ac] sm:$0xf]
    %v3688 = vld [vmem:[#allocation2 + $0x1b0] sm:$0xf]
    %v3689 = vld [vmem:[#allocation2 + $0x1b4] sm:$0xf]
    %v3690 = vld [vmem:[#allocation2 + $0x1b8] sm:$0xf]
    %v3691 = vld [vmem:[#allocation2 + $0x1bc] sm:$0xf]
    %v3708 = vunpack.c.l.b16 %v3676
    %v3709 = vunpack.c.l.b16 %v3677
    %v3710 = vunpack.c.l.b16 %v3678
    %v3711 = vunpack.c.l.b16 %v3679
    %v3712 = vunpack.c.l.b16 %v3680
    %v3713 = vunpack.c.l.b16 %v3681
    %v3714 = vunpack.c.l.b16 %v3682
    %v3715 = vunpack.c.l.b16 %v3683
    %v3716 = vunpack.c.l.b16 %v3684
    %v3717 = vunpack.c.l.b16 %v3685
    %v3718 = vunpack.c.l.b16 %v3686
    %v3719 = vunpack.c.l.b16 %v3687
    %v3720 = vunpack.c.l.b16 %v3688
    %v3721 = vunpack.c.l.b16 %v3689
    %v3722 = vunpack.c.l.b16 %v3690
    %v3723 = vunpack.c.l.b16 %v3691
    %v3724 = vpack.c.b16 %v3709, %v3708
    %v3725 = vpack.c.b16 %v3711, %v3710
    %v3726 = vpack.c.b16 %v3713, %v3712
    %v3727 = vpack.c.b16 %v3715, %v3714
    %v3728 = vpack.c.b16 %v3717, %v3716
    %v3729 = vpack.c.b16 %v3719, %v3718
    %v3730 = vpack.c.b16 %v3721, %v3720
    %v3731 = vpack.c.b16 %v3723, %v3722
    %3740 = vmatprep.subr.bf16.mxu0 0
    %3741 = vmatpush1.bf16.msra.mxu0 %v3731
    %3742 = vmatprep.subr.bf16.mxu0 0
    %3743 = vmatpush1.bf16.msra.mxu0 %v3730
    %3744 = vmatprep.subr.bf16.mxu0 0
    %3745 = vmatpush1.bf16.msra.mxu0 %v3729
    %3746 = vmatprep.subr.bf16.mxu0 0
    %3747 = vmatpush1.bf16.msra.mxu0 %v3728
    %3748 = vmatprep.subr.bf16.mxu0 0
    %3749 = vmatpush1.bf16.msra.mxu0 %v3727
    %3750 = vmatprep.subr.bf16.mxu0 0
    %3751 = vmatpush1.bf16.msra.mxu0 %v3726
    %3752 = vmatprep.subr.bf16.mxu0 0
    %3753 = vmatpush1.bf16.msra.mxu0 %v3725
    %3754 = vmatprep.subr.bf16.mxu0 0
    %3755 = vmatpush1.bf16.msra.mxu0 %v3724
    %3756 = vmatprep.subr.bf16.mxu0 0
    %3757 = vmatpush2.bf16.msra.mxu0 0
    %3758 = vmatprep.subr.bf16.mxu0 0
    %3759 = vmatpush2.bf16.msra.mxu0 0
    %3760 = vmatprep.subr.bf16.mxu0 0
    %3761 = vmatpush2.bf16.msra.mxu0 0
    %3762 = vmatprep.subr.bf16.mxu0 0
    %3763 = vmatpush2.bf16.msra.mxu0 0
    %3764 = vmatprep.subr.bf16.mxu0 0
    %3765 = vmatpush2.bf16.msra.mxu0 0
    %3766 = vmatprep.subr.bf16.mxu0 0
    %3767 = vmatpush2.bf16.msra.mxu0 0
    %3768 = vmatprep.subr.bf16.mxu0 0
    %3769 = vmatpush2.bf16.msra.mxu0 0
    %3770 = vmatprep.subr.bf16.mxu0 0
    %3771 = vmatpush2.bf16.msra.mxu0 0
    %3772 = vmatprep.mubr.bf16.mxu0 0
    %3773 = vmatmul.mubr.bf16.gmra.mxu0 %v3668
    %v3774 = vpop.f32.mrf.mxu0
    %v3775 = vadd.f32 0.0, %v3774
    %v3776 = vpop.f32.mrf.mxu0
    %v3777 = vpop.f32.mrf.mxu0
    %v3778 = vadd.f32 0.0, %v3777
    %v3779 = vpop.f32.mrf.mxu0
    %3780 = vmatprep.mubr.bf16.mxu0 0
    %3781 = vmatmul.mubr.bf16.gmra.mxu0 %v3669
    %v3782 = vpop.f32.mrf.mxu0
    %v3783 = vadd.f32 0.0, %v3782
    %v3784 = vpop.f32.mrf.mxu0
    %v3785 = vpop.f32.mrf.mxu0
    %v3786 = vadd.f32 0.0, %v3785
    %v3787 = vpop.f32.mrf.mxu0
    %3788 = vmatprep.mubr.bf16.mxu0 0
    %3789 = vmatmul.mubr.bf16.gmra.mxu0 %v3670
    %v3790 = vpop.f32.mrf.mxu0
    %v3791 = vadd.f32 0.0, %v3790
    %v3792 = vpop.f32.mrf.mxu0
    %v3793 = vpop.f32.mrf.mxu0
    %v3794 = vadd.f32 0.0, %v3793
    %v3795 = vpop.f32.mrf.mxu0
    %3796 = vmatprep.mubr.bf16.mxu0 0
    %3797 = vmatmul.mubr.bf16.gmra.mxu0 %v3671
    %v3798 = vpop.f32.mrf.mxu0
    %v3799 = vadd.f32 0.0, %v3798
    %v3800 = vpop.f32.mrf.mxu0
    %v3801 = vpop.f32.mrf.mxu0
    %v3802 = vadd.f32 0.0, %v3801
    %v3803 = vpop.f32.mrf.mxu0
    %3804 = vmatprep.mubr.bf16.mxu0 0
    %3805 = vmatmul.mubr.bf16.gmra.mxu0 %v3672
    %v3806 = vpop.f32.mrf.mxu0
    %v3807 = vadd.f32 0.0, %v3806
    %v3808 = vpop.f32.mrf.mxu0
    %v3809 = vpop.f32.mrf.mxu0
    %v3810 = vadd.f32 0.0, %v3809
    %v3811 = vpop.f32.mrf.mxu0
    %3812 = vmatprep.mubr.bf16.mxu0 0
    %3813 = vmatmul.mubr.bf16.gmra.mxu0 %v3673
    %v3814 = vpop.f32.mrf.mxu0
    %v3815 = vadd.f32 0.0, %v3814
    %v3816 = vpop.f32.mrf.mxu0
    %v3817 = vpop.f32.mrf.mxu0
    %v3818 = vadd.f32 0.0, %v3817
    %v3819 = vpop.f32.mrf.mxu0
    %3820 = vmatprep.mubr.bf16.mxu0 0
    %3821 = vmatmul.mubr.bf16.gmra.mxu0 %v3674
    %v3822 = vpop.f32.mrf.mxu0
    %v3823 = vadd.f32 0.0, %v3822
    %v3824 = vpop.f32.mrf.mxu0
    %v3825 = vpop.f32.mrf.mxu0
    %v3826 = vadd.f32 0.0, %v3825
    %v3827 = vpop.f32.mrf.mxu0
    %3828 = vmatprep.mubr.bf16.mxu0 0
    %3829 = vmatmul.mubr.bf16.gmra.mxu0 %v3675
    %v3830 = vpop.f32.mrf.mxu0
    %v3831 = vadd.f32 0.0, %v3830
    %v3832 = vpop.f32.mrf.mxu0
    %v3833 = vpop.f32.mrf.mxu0
    %v3834 = vadd.f32 0.0, %v3833
    %v3835 = vpop.f32.mrf.mxu0
    %3836 = vdwg.mxu0
    %v3837 = vadd.f32 %v3620, %v3775
    %v3838 = vadd.f32 %v3621, %v3778
    %v3839 = vadd.f32 %v3622, %v3783
    %v3840 = vadd.f32 %v3623, %v3786
    %v3841 = vadd.f32 %v3624, %v3791
    %v3842 = vadd.f32 %v3625, %v3794
    %v3843 = vadd.f32 %v3626, %v3799
    %v3844 = vadd.f32 %v3627, %v3802
    %v3845 = vadd.f32 %v3628, %v3807
    %v3846 = vadd.f32 %v3629, %v3810
    %v3847 = vadd.f32 %v3630, %v3815
    %v3848 = vadd.f32 %v3631, %v3818
    %v3849 = vadd.f32 %v3632, %v3823
    %v3850 = vadd.f32 %v3633, %v3826
    %v3851 = vadd.f32 %v3634, %v3831
    %v3852 = vadd.f32 %v3635, %v3834
    %v3853 = vld [vmem:[#allocation5 + $0x18] sm:$0xff]
    %v3854 = vld [vmem:[#allocation5 + $0x20] sm:$0xff]
    %v3855 = vld [vmem:[#allocation5 + $0x28] sm:$0xff]
    %v3856 = vld [vmem:[#allocation5 + $0x30] sm:$0xff]
    %v3857 = vld [vmem:[#allocation5 + $0x38] sm:$0xff]
    %v3858 = vld [vmem:[#allocation5 + $0x40] sm:$0xff]
    %v3859 = vld [vmem:[#allocation5 + $0x48] sm:$0xff]
    %v3860 = vld [vmem:[#allocation5 + $0x50] sm:$0xff]
    %v3861 = vld [vmem:[#allocation5 + $0x58] sm:$0xff]
    %v3862 = vld [vmem:[#allocation5 + $0x60] sm:$0xff]
    %v3863 = vld [vmem:[#allocation5 + $0x68] sm:$0xff]
    %v3864 = vld [vmem:[#allocation5 + $0x70] sm:$0xff]
    %v3865 = vld [vmem:[#allocation5 + $0x78] sm:$0xff]
    %v3866 = vld [vmem:[#allocation5 + $0x80] sm:$0xff]
    %v3867 = vld [vmem:[#allocation5 + $0x88] sm:$0xff]
    %v3868 = vld [vmem:[#allocation5 + $0x90] sm:$0xff]
    %v3869 = vmul.f32 %v3853, %v1761
    %v3870 = vmul.f32 %v3854, %v1765
    %v3871 = vmul.f32 %v3855, %v1769
    %v3872 = vmul.f32 %v3856, %v1773
    %v3873 = vmul.f32 %v3857, %v1777
    %v3874 = vmul.f32 %v3858, %v1781
    %v3875 = vmul.f32 %v3859, %v1785
    %v3876 = vmul.f32 %v3860, %v1789
    %v3877 = vmul.f32 %v3861, %v1793
    %v3878 = vmul.f32 %v3862, %v1797
    %v3879 = vmul.f32 %v3863, %v1801
    %v3880 = vmul.f32 %v3864, %v1805
    %v3881 = vmul.f32 %v3865, %v1809
    %v3882 = vmul.f32 %v3866, %v1813
    %v3883 = vmul.f32 %v3867, %v1817
    %v3884 = vmul.f32 %v3868, %v1821
    %v3885 = vpack.c.bf16 %v3870, %v3869
    %v3886 = vpack.c.bf16 %v3872, %v3871
    %v3887 = vpack.c.bf16 %v3874, %v3873
    %v3888 = vpack.c.bf16 %v3876, %v3875
    %v3889 = vpack.c.bf16 %v3878, %v3877
    %v3890 = vpack.c.bf16 %v3880, %v3879
    %v3891 = vpack.c.bf16 %v3882, %v3881
    %v3892 = vpack.c.bf16 %v3884, %v3883
    %v3893 = vld [vmem:[#allocation2 + $0x1c0] sm:$0xf]
    %v3894 = vld [vmem:[#allocation2 + $0x1c4] sm:$0xf]
    %v3895 = vld [vmem:[#allocation2 + $0x1c8] sm:$0xf]
    %v3896 = vld [vmem:[#allocation2 + $0x1cc] sm:$0xf]
    %v3897 = vld [vmem:[#allocation2 + $0x1d0] sm:$0xf]
    %v3898 = vld [vmem:[#allocation2 + $0x1d4] sm:$0xf]
    %v3899 = vld [vmem:[#allocation2 + $0x1d8] sm:$0xf]
    %v3900 = vld [vmem:[#allocation2 + $0x1dc] sm:$0xf]
    %v3901 = vld [vmem:[#allocation2 + $0x1e0] sm:$0xf]
    %v3902 = vld [vmem:[#allocation2 + $0x1e4] sm:$0xf]
    %v3903 = vld [vmem:[#allocation2 + $0x1e8] sm:$0xf]
    %v3904 = vld [vmem:[#allocation2 + $0x1ec] sm:$0xf]
    %v3905 = vld [vmem:[#allocation2 + $0x1f0] sm:$0xf]
    %v3906 = vld [vmem:[#allocation2 + $0x1f4] sm:$0xf]
    %v3907 = vld [vmem:[#allocation2 + $0x1f8] sm:$0xf]
    %v3908 = vld [vmem:[#allocation2 + $0x1fc] sm:$0xf]
    %v3925 = vunpack.c.l.b16 %v3893
    %v3926 = vunpack.c.l.b16 %v3894
    %v3927 = vunpack.c.l.b16 %v3895
    %v3928 = vunpack.c.l.b16 %v3896
    %v3929 = vunpack.c.l.b16 %v3897
    %v3930 = vunpack.c.l.b16 %v3898
    %v3931 = vunpack.c.l.b16 %v3899
    %v3932 = vunpack.c.l.b16 %v3900
    %v3933 = vunpack.c.l.b16 %v3901
    %v3934 = vunpack.c.l.b16 %v3902
    %v3935 = vunpack.c.l.b16 %v3903
    %v3936 = vunpack.c.l.b16 %v3904
    %v3937 = vunpack.c.l.b16 %v3905
    %v3938 = vunpack.c.l.b16 %v3906
    %v3939 = vunpack.c.l.b16 %v3907
    %v3940 = vunpack.c.l.b16 %v3908
    %v3941 = vpack.c.b16 %v3926, %v3925
    %v3942 = vpack.c.b16 %v3928, %v3927
    %v3943 = vpack.c.b16 %v3930, %v3929
    %v3944 = vpack.c.b16 %v3932, %v3931
    %v3945 = vpack.c.b16 %v3934, %v3933
    %v3946 = vpack.c.b16 %v3936, %v3935
    %v3947 = vpack.c.b16 %v3938, %v3937
    %v3948 = vpack.c.b16 %v3940, %v3939
    %3957 = vmatprep.subr.bf16.mxu0 0
    %3958 = vmatpush1.bf16.msra.mxu0 %v3948
    %3959 = vmatprep.subr.bf16.mxu0 0
    %3960 = vmatpush1.bf16.msra.mxu0 %v3947
    %3961 = vmatprep.subr.bf16.mxu0 0
    %3962 = vmatpush1.bf16.msra.mxu0 %v3946
    %3963 = vmatprep.subr.bf16.mxu0 0
    %3964 = vmatpush1.bf16.msra.mxu0 %v3945
    %3965 = vmatprep.subr.bf16.mxu0 0
    %3966 = vmatpush1.bf16.msra.mxu0 %v3944
    %3967 = vmatprep.subr.bf16.mxu0 0
    %3968 = vmatpush1.bf16.msra.mxu0 %v3943
    %3969 = vmatprep.subr.bf16.mxu0 0
    %3970 = vmatpush1.bf16.msra.mxu0 %v3942
    %3971 = vmatprep.subr.bf16.mxu0 0
    %3972 = vmatpush1.bf16.msra.mxu0 %v3941
    %3973 = vmatprep.subr.bf16.mxu0 0
    %3974 = vmatpush2.bf16.msra.mxu0 0
    %3975 = vmatprep.subr.bf16.mxu0 0
    %3976 = vmatpush2.bf16.msra.mxu0 0
    %3977 = vmatprep.subr.bf16.mxu0 0
    %3978 = vmatpush2.bf16.msra.mxu0 0
    %3979 = vmatprep.subr.bf16.mxu0 0
    %3980 = vmatpush2.bf16.msra.mxu0 0
    %3981 = vmatprep.subr.bf16.mxu0 0
    %3982 = vmatpush2.bf16.msra.mxu0 0
    %3983 = vmatprep.subr.bf16.mxu0 0
    %3984 = vmatpush2.bf16.msra.mxu0 0
    %3985 = vmatprep.subr.bf16.mxu0 0
    %3986 = vmatpush2.bf16.msra.mxu0 0
    %3987 = vmatprep.subr.bf16.mxu0 0
    %3988 = vmatpush2.bf16.msra.mxu0 0
    %3989 = vmatprep.mubr.bf16.mxu0 0
    %3990 = vmatmul.mubr.bf16.gmra.mxu0 %v3885
    %v3991 = vpop.f32.mrf.mxu0
    %v3992 = vadd.f32 0.0, %v3991
    %v3993 = vpop.f32.mrf.mxu0
    %v3994 = vpop.f32.mrf.mxu0
    %v3995 = vadd.f32 0.0, %v3994
    %v3996 = vpop.f32.mrf.mxu0
    %3997 = vmatprep.mubr.bf16.mxu0 0
    %3998 = vmatmul.mubr.bf16.gmra.mxu0 %v3886
    %v3999 = vpop.f32.mrf.mxu0
    %v4000 = vadd.f32 0.0, %v3999
    %v4001 = vpop.f32.mrf.mxu0
    %v4002 = vpop.f32.mrf.mxu0
    %v4003 = vadd.f32 0.0, %v4002
    %v4004 = vpop.f32.mrf.mxu0
    %4005 = vmatprep.mubr.bf16.mxu0 0
    %4006 = vmatmul.mubr.bf16.gmra.mxu0 %v3887
    %v4007 = vpop.f32.mrf.mxu0
    %v4008 = vadd.f32 0.0, %v4007
    %v4009 = vpop.f32.mrf.mxu0
    %v4010 = vpop.f32.mrf.mxu0
    %v4011 = vadd.f32 0.0, %v4010
    %v4012 = vpop.f32.mrf.mxu0
    %4013 = vmatprep.mubr.bf16.mxu0 0
    %4014 = vmatmul.mubr.bf16.gmra.mxu0 %v3888
    %v4015 = vpop.f32.mrf.mxu0
    %v4016 = vadd.f32 0.0, %v4015
    %v4017 = vpop.f32.mrf.mxu0
    %v4018 = vpop.f32.mrf.mxu0
    %v4019 = vadd.f32 0.0, %v4018
    %v4020 = vpop.f32.mrf.mxu0
    %4021 = vmatprep.mubr.bf16.mxu0 0
    %4022 = vmatmul.mubr.bf16.gmra.mxu0 %v3889
    %v4023 = vpop.f32.mrf.mxu0
    %v4024 = vadd.f32 0.0, %v4023
    %v4025 = vpop.f32.mrf.mxu0
    %v4026 = vpop.f32.mrf.mxu0
    %v4027 = vadd.f32 0.0, %v4026
    %v4028 = vpop.f32.mrf.mxu0
    %4029 = vmatprep.mubr.bf16.mxu0 0
    %4030 = vmatmul.mubr.bf16.gmra.mxu0 %v3890
    %v4031 = vpop.f32.mrf.mxu0
    %v4032 = vadd.f32 0.0, %v4031
    %v4033 = vpop.f32.mrf.mxu0
    %v4034 = vpop.f32.mrf.mxu0
    %v4035 = vadd.f32 0.0, %v4034
    %v4036 = vpop.f32.mrf.mxu0
    %4037 = vmatprep.mubr.bf16.mxu0 0
    %4038 = vmatmul.mubr.bf16.gmra.mxu0 %v3891
    %v4039 = vpop.f32.mrf.mxu0
    %v4040 = vadd.f32 0.0, %v4039
    %v4041 = vpop.f32.mrf.mxu0
    %v4042 = vpop.f32.mrf.mxu0
    %v4043 = vadd.f32 0.0, %v4042
    %v4044 = vpop.f32.mrf.mxu0
    %4045 = vmatprep.mubr.bf16.mxu0 0
    %4046 = vmatmul.mubr.bf16.gmra.mxu0 %v3892
    %v4047 = vpop.f32.mrf.mxu0
    %v4048 = vadd.f32 0.0, %v4047
    %v4049 = vpop.f32.mrf.mxu0
    %v4050 = vpop.f32.mrf.mxu0
    %v4051 = vadd.f32 0.0, %v4050
    %v4052 = vpop.f32.mrf.mxu0
    %4053 = vdwg.mxu0
    %v4054 = vadd.f32 %v3837, %v3992
    %v4055 = vadd.f32 %v3838, %v3995
    %v4056 = vadd.f32 %v3839, %v4000
    %v4057 = vadd.f32 %v3840, %v4003
    %v4058 = vadd.f32 %v3841, %v4008
    %v4059 = vadd.f32 %v3842, %v4011
    %v4060 = vadd.f32 %v3843, %v4016
    %v4061 = vadd.f32 %v3844, %v4019
    %v4062 = vadd.f32 %v3845, %v4024
    %v4063 = vadd.f32 %v3846, %v4027
    %v4064 = vadd.f32 %v3847, %v4032
    %v4065 = vadd.f32 %v3848, %v4035
    %v4066 = vadd.f32 %v3849, %v4040
    %v4067 = vadd.f32 %v3850, %v4043
    %v4068 = vadd.f32 %v3851, %v4048
    %v4069 = vadd.f32 %v3852, %v4051
    %v4070 = vld [vmem:[#allocation5 + $0x19] sm:$0xff]
    %v4071 = vld [vmem:[#allocation5 + $0x21] sm:$0xff]
    %v4072 = vld [vmem:[#allocation5 + $0x29] sm:$0xff]
    %v4073 = vld [vmem:[#allocation5 + $0x31] sm:$0xff]
    %v4074 = vld [vmem:[#allocation5 + $0x39] sm:$0xff]
    %v4075 = vld [vmem:[#allocation5 + $0x41] sm:$0xff]
    %v4076 = vld [vmem:[#allocation5 + $0x49] sm:$0xff]
    %v4077 = vld [vmem:[#allocation5 + $0x51] sm:$0xff]
    %v4078 = vld [vmem:[#allocation5 + $0x59] sm:$0xff]
    %v4079 = vld [vmem:[#allocation5 + $0x61] sm:$0xff]
    %v4080 = vld [vmem:[#allocation5 + $0x69] sm:$0xff]
    %v4081 = vld [vmem:[#allocation5 + $0x71] sm:$0xff]
    %v4082 = vld [vmem:[#allocation5 + $0x79] sm:$0xff]
    %v4083 = vld [vmem:[#allocation5 + $0x81] sm:$0xff]
    %v4084 = vld [vmem:[#allocation5 + $0x89] sm:$0xff]
    %v4085 = vld [vmem:[#allocation5 + $0x91] sm:$0xff]
    %v4086 = vmul.f32 %v4070, %v2009
    %v4087 = vmul.f32 %v4071, %v2013
    %v4088 = vmul.f32 %v4072, %v2017
    %v4089 = vmul.f32 %v4073, %v2021
    %v4090 = vmul.f32 %v4074, %v2025
    %v4091 = vmul.f32 %v4075, %v2029
    %v4092 = vmul.f32 %v4076, %v2033
    %v4093 = vmul.f32 %v4077, %v2037
    %v4094 = vmul.f32 %v4078, %v2041
    %v4095 = vmul.f32 %v4079, %v2045
    %v4096 = vmul.f32 %v4080, %v2049
    %v4097 = vmul.f32 %v4081, %v2053
    %v4098 = vmul.f32 %v4082, %v2057
    %v4099 = vmul.f32 %v4083, %v2061
    %v4100 = vmul.f32 %v4084, %v2065
    %v4101 = vmul.f32 %v4085, %v2069
    %v4102 = vpack.c.bf16 %v4087, %v4086
    %v4103 = vpack.c.bf16 %v4089, %v4088
    %v4104 = vpack.c.bf16 %v4091, %v4090
    %v4105 = vpack.c.bf16 %v4093, %v4092
    %v4106 = vpack.c.bf16 %v4095, %v4094
    %v4107 = vpack.c.bf16 %v4097, %v4096
    %v4108 = vpack.c.bf16 %v4099, %v4098
    %v4109 = vpack.c.bf16 %v4101, %v4100
    %v4110 = vld [vmem:[#allocation2 + $0x200] sm:$0xf]
    %v4111 = vld [vmem:[#allocation2 + $0x204] sm:$0xf]
    %v4112 = vld [vmem:[#allocation2 + $0x208] sm:$0xf]
    %v4113 = vld [vmem:[#allocation2 + $0x20c] sm:$0xf]
    %v4114 = vld [vmem:[#allocation2 + $0x210] sm:$0xf]
    %v4115 = vld [vmem:[#allocation2 + $0x214] sm:$0xf]
    %v4116 = vld [vmem:[#allocation2 + $0x218] sm:$0xf]
    %v4117 = vld [vmem:[#allocation2 + $0x21c] sm:$0xf]
    %v4118 = vld [vmem:[#allocation2 + $0x220] sm:$0xf]
    %v4119 = vld [vmem:[#allocation2 + $0x224] sm:$0xf]
    %v4120 = vld [vmem:[#allocation2 + $0x228] sm:$0xf]
    %v4121 = vld [vmem:[#allocation2 + $0x22c] sm:$0xf]
    %v4122 = vld [vmem:[#allocation2 + $0x230] sm:$0xf]
    %v4123 = vld [vmem:[#allocation2 + $0x234] sm:$0xf]
    %v4124 = vld [vmem:[#allocation2 + $0x238] sm:$0xf]
    %v4125 = vld [vmem:[#allocation2 + $0x23c] sm:$0xf]
    %v4142 = vunpack.c.l.b16 %v4110
    %v4143 = vunpack.c.l.b16 %v4111
    %v4144 = vunpack.c.l.b16 %v4112
    %v4145 = vunpack.c.l.b16 %v4113
    %v4146 = vunpack.c.l.b16 %v4114
    %v4147 = vunpack.c.l.b16 %v4115
    %v4148 = vunpack.c.l.b16 %v4116
    %v4149 = vunpack.c.l.b16 %v4117
    %v4150 = vunpack.c.l.b16 %v4118
    %v4151 = vunpack.c.l.b16 %v4119
    %v4152 = vunpack.c.l.b16 %v4120
    %v4153 = vunpack.c.l.b16 %v4121
    %v4154 = vunpack.c.l.b16 %v4122
    %v4155 = vunpack.c.l.b16 %v4123
    %v4156 = vunpack.c.l.b16 %v4124
    %v4157 = vunpack.c.l.b16 %v4125
    %v4158 = vpack.c.b16 %v4143, %v4142
    %v4159 = vpack.c.b16 %v4145, %v4144
    %v4160 = vpack.c.b16 %v4147, %v4146
    %v4161 = vpack.c.b16 %v4149, %v4148
    %v4162 = vpack.c.b16 %v4151, %v4150
    %v4163 = vpack.c.b16 %v4153, %v4152
    %v4164 = vpack.c.b16 %v4155, %v4154
    %v4165 = vpack.c.b16 %v4157, %v4156
    %4174 = vmatprep.subr.bf16.mxu0 0
    %4175 = vmatpush1.bf16.msra.mxu0 %v4165
    %4176 = vmatprep.subr.bf16.mxu0 0
    %4177 = vmatpush1.bf16.msra.mxu0 %v4164
    %4178 = vmatprep.subr.bf16.mxu0 0
    %4179 = vmatpush1.bf16.msra.mxu0 %v4163
    %4180 = vmatprep.subr.bf16.mxu0 0
    %4181 = vmatpush1.bf16.msra.mxu0 %v4162
    %4182 = vmatprep.subr.bf16.mxu0 0
    %4183 = vmatpush1.bf16.msra.mxu0 %v4161
    %4184 = vmatprep.subr.bf16.mxu0 0
    %4185 = vmatpush1.bf16.msra.mxu0 %v4160
    %4186 = vmatprep.subr.bf16.mxu0 0
    %4187 = vmatpush1.bf16.msra.mxu0 %v4159
    %4188 = vmatprep.subr.bf16.mxu0 0
    %4189 = vmatpush1.bf16.msra.mxu0 %v4158
    %4190 = vmatprep.subr.bf16.mxu0 0
    %4191 = vmatpush2.bf16.msra.mxu0 0
    %4192 = vmatprep.subr.bf16.mxu0 0
    %4193 = vmatpush2.bf16.msra.mxu0 0
    %4194 = vmatprep.subr.bf16.mxu0 0
    %4195 = vmatpush2.bf16.msra.mxu0 0
    %4196 = vmatprep.subr.bf16.mxu0 0
    %4197 = vmatpush2.bf16.msra.mxu0 0
    %4198 = vmatprep.subr.bf16.mxu0 0
    %4199 = vmatpush2.bf16.msra.mxu0 0
    %4200 = vmatprep.subr.bf16.mxu0 0
    %4201 = vmatpush2.bf16.msra.mxu0 0
    %4202 = vmatprep.subr.bf16.mxu0 0
    %4203 = vmatpush2.bf16.msra.mxu0 0
    %4204 = vmatprep.subr.bf16.mxu0 0
    %4205 = vmatpush2.bf16.msra.mxu0 0
    %4206 = vmatprep.mubr.bf16.mxu0 0
    %4207 = vmatmul.mubr.bf16.gmra.mxu0 %v4102
    %v4208 = vpop.f32.mrf.mxu0
    %v4209 = vadd.f32 0.0, %v4208
    %v4210 = vpop.f32.mrf.mxu0
    %v4211 = vpop.f32.mrf.mxu0
    %v4212 = vadd.f32 0.0, %v4211
    %v4213 = vpop.f32.mrf.mxu0
    %4214 = vmatprep.mubr.bf16.mxu0 0
    %4215 = vmatmul.mubr.bf16.gmra.mxu0 %v4103
    %v4216 = vpop.f32.mrf.mxu0
    %v4217 = vadd.f32 0.0, %v4216
    %v4218 = vpop.f32.mrf.mxu0
    %v4219 = vpop.f32.mrf.mxu0
    %v4220 = vadd.f32 0.0, %v4219
    %v4221 = vpop.f32.mrf.mxu0
    %4222 = vmatprep.mubr.bf16.mxu0 0
    %4223 = vmatmul.mubr.bf16.gmra.mxu0 %v4104
    %v4224 = vpop.f32.mrf.mxu0
    %v4225 = vadd.f32 0.0, %v4224
    %v4226 = vpop.f32.mrf.mxu0
    %v4227 = vpop.f32.mrf.mxu0
    %v4228 = vadd.f32 0.0, %v4227
    %v4229 = vpop.f32.mrf.mxu0
    %4230 = vmatprep.mubr.bf16.mxu0 0
    %4231 = vmatmul.mubr.bf16.gmra.mxu0 %v4105
    %v4232 = vpop.f32.mrf.mxu0
    %v4233 = vadd.f32 0.0, %v4232
    %v4234 = vpop.f32.mrf.mxu0
    %v4235 = vpop.f32.mrf.mxu0
    %v4236 = vadd.f32 0.0, %v4235
    %v4237 = vpop.f32.mrf.mxu0
    %4238 = vmatprep.mubr.bf16.mxu0 0
    %4239 = vmatmul.mubr.bf16.gmra.mxu0 %v4106
    %v4240 = vpop.f32.mrf.mxu0
    %v4241 = vadd.f32 0.0, %v4240
    %v4242 = vpop.f32.mrf.mxu0
    %v4243 = vpop.f32.mrf.mxu0
    %v4244 = vadd.f32 0.0, %v4243
    %v4245 = vpop.f32.mrf.mxu0
    %4246 = vmatprep.mubr.bf16.mxu0 0
    %4247 = vmatmul.mubr.bf16.gmra.mxu0 %v4107
    %v4248 = vpop.f32.mrf.mxu0
    %v4249 = vadd.f32 0.0, %v4248
    %v4250 = vpop.f32.mrf.mxu0
    %v4251 = vpop.f32.mrf.mxu0
    %v4252 = vadd.f32 0.0, %v4251
    %v4253 = vpop.f32.mrf.mxu0
    %4254 = vmatprep.mubr.bf16.mxu0 0
    %4255 = vmatmul.mubr.bf16.gmra.mxu0 %v4108
    %v4256 = vpop.f32.mrf.mxu0
    %v4257 = vadd.f32 0.0, %v4256
    %v4258 = vpop.f32.mrf.mxu0
    %v4259 = vpop.f32.mrf.mxu0
    %v4260 = vadd.f32 0.0, %v4259
    %v4261 = vpop.f32.mrf.mxu0
    %4262 = vmatprep.mubr.bf16.mxu0 0
    %4263 = vmatmul.mubr.bf16.gmra.mxu0 %v4109
    %v4264 = vpop.f32.mrf.mxu0
    %v4265 = vadd.f32 0.0, %v4264
    %v4266 = vpop.f32.mrf.mxu0
    %v4267 = vpop.f32.mrf.mxu0
    %v4268 = vadd.f32 0.0, %v4267
    %v4269 = vpop.f32.mrf.mxu0
    %4270 = vdwg.mxu0
    %v4271 = vadd.f32 %v4054, %v4209
    %v4272 = vadd.f32 %v4055, %v4212
    %v4273 = vadd.f32 %v4056, %v4217
    %v4274 = vadd.f32 %v4057, %v4220
    %v4275 = vadd.f32 %v4058, %v4225
    %v4276 = vadd.f32 %v4059, %v4228
    %v4277 = vadd.f32 %v4060, %v4233
    %v4278 = vadd.f32 %v4061, %v4236
    %v4279 = vadd.f32 %v4062, %v4241
    %v4280 = vadd.f32 %v4063, %v4244
    %v4281 = vadd.f32 %v4064, %v4249
    %v4282 = vadd.f32 %v4065, %v4252
    %v4283 = vadd.f32 %v4066, %v4257
    %v4284 = vadd.f32 %v4067, %v4260
    %v4285 = vadd.f32 %v4068, %v4265
    %v4286 = vadd.f32 %v4069, %v4268
    %v4287 = vadd.f32 %v4271, %v4272
    %v4288 = vadd.f32 %v4287, %v4273
    %v4289 = vadd.f32 %v4288, %v4274
    %v4290 = vadd.f32 %v4289, %v4275
    %v4291 = vadd.f32 %v4290, %v4276
    %v4292 = vadd.f32 %v4291, %v4277
    %v4293 = vadd.f32 %v4292, %v4278
    %v4294 = vadd.f32 %v4293, %v4279
    %v4295 = vadd.f32 %v4294, %v4280
    %v4296 = vadd.f32 %v4295, %v4281
    %v4297 = vadd.f32 %v4296, %v4282
    %v4298 = vadd.f32 %v4297, %v4283
    %v4299 = vadd.f32 %v4298, %v4284
    %v4300 = vadd.f32 %v4299, %v4285
    %v4301 = vadd.f32 %v4300, %v4286
    %v4302 = vrot.slane %v4301, 4
    %v4303 = vadd.f32 %v4301, %v4302
    %v4304 = vrot.slane %v4303, 2
    %v4305 = vadd.f32 %v4303, %v4304
    %v4306 = vrot.slane %v4305, 1
    %v4307 = vadd.f32 %v4305, %v4306
    %v4308 = vmul.f32 %v4307, %v2256
    %v4309 = vmul.f32 %v4271, %v4271
    %v4310 = vmul.f32 %v4272, %v4272
    %v4311 = vmul.f32 %v4273, %v4273
    %v4312 = vmul.f32 %v4274, %v4274
    %v4313 = vmul.f32 %v4275, %v4275
    %v4314 = vmul.f32 %v4276, %v4276
    %v4315 = vmul.f32 %v4277, %v4277
    %v4316 = vmul.f32 %v4278, %v4278
    %v4317 = vmul.f32 %v4279, %v4279
    %v4318 = vmul.f32 %v4280, %v4280
    %v4319 = vmul.f32 %v4281, %v4281
    %v4320 = vmul.f32 %v4282, %v4282
    %v4321 = vmul.f32 %v4283, %v4283
    %v4322 = vmul.f32 %v4284, %v4284
    %v4323 = vmul.f32 %v4285, %v4285
    %v4324 = vmul.f32 %v4286, %v4286
    %v4325 = vadd.f32 %v4309, %v4310
    %v4326 = vadd.f32 %v4325, %v4311
    %v4327 = vadd.f32 %v4326, %v4312
    %v4328 = vadd.f32 %v4327, %v4313
    %v4329 = vadd.f32 %v4328, %v4314
    %v4330 = vadd.f32 %v4329, %v4315
    %v4331 = vadd.f32 %v4330, %v4316
    %v4332 = vadd.f32 %v4331, %v4317
    %v4333 = vadd.f32 %v4332, %v4318
    %v4334 = vadd.f32 %v4333, %v4319
    %v4335 = vadd.f32 %v4334, %v4320
    %v4336 = vadd.f32 %v4335, %v4321
    %v4337 = vadd.f32 %v4336, %v4322
    %v4338 = vadd.f32 %v4337, %v4323
    %v4339 = vadd.f32 %v4338, %v4324
    %v4340 = vrot.slane %v4339, 4
    %v4341 = vadd.f32 %v4339, %v4340
    %v4342 = vrot.slane %v4341, 2
    %v4343 = vadd.f32 %v4341, %v4342
    %v4344 = vrot.slane %v4343, 1
    %v4345 = vadd.f32 %v4343, %v4344
    %v4346 = vmul.f32 %v4345, %v2256
    %v4347 = vmul.f32 %v4308, %v4308
    %v4348 = vsub.f32 %v4346, %v4347
    %v4349 = vmax.f32 %v4348, 0.0
    %v4350 = vadd.f32 %v4349, 1e-05
    %v4351 = vrsqrt.pop %v4350
    %v4352 = vmul.f32 %v2364, %v4351
    %v4353 = vlaneseq
    %v4354 = vshrl.u32 %v4353, 7
    %v4355 = vsub.s32 0, %v4354
    %v4356 = vrot.slane %v4352, %v4355
    %v4357 = vmul.f32 %v4271, %v4356
    %v4358 = vmul.f32 %v4272, %v4356
    %v4359 = vmul.f32 %v4273, %v4356
    %v4360 = vmul.f32 %v4274, %v4356
    %v4361 = vmul.f32 %v4275, %v4356
    %v4362 = vmul.f32 %v4276, %v4356
    %v4363 = vmul.f32 %v4277, %v4356
    %v4364 = vmul.f32 %v4278, %v4356
    %v4365 = vmul.f32 %v4279, %v4356
    %v4366 = vmul.f32 %v4280, %v4356
    %v4367 = vmul.f32 %v4281, %v4356
    %v4368 = vmul.f32 %v4282, %v4356
    %v4369 = vmul.f32 %v4283, %v4356
    %v4370 = vmul.f32 %v4284, %v4356
    %v4371 = vmul.f32 %v4285, %v4356
    %v4372 = vmul.f32 %v4286, %v4356
    %v4373 = vmul.f32 %v4308, %v4352
    %v4374 = vsub.f32 %v2365, %v4373
    %v4375 = vlaneseq
    %v4376 = vshrl.u32 %v4375, 7
    %v4377 = vsub.s32 0, %v4376
    %v4378 = vrot.slane %v4374, %v4377
    %v4379 = vadd.f32 %v4357, %v4378
    %v4380 = vadd.f32 %v4358, %v4378
    %v4381 = vadd.f32 %v4359, %v4378
    %v4382 = vadd.f32 %v4360, %v4378
    %v4383 = vadd.f32 %v4361, %v4378
    %v4384 = vadd.f32 %v4362, %v4378
    %v4385 = vadd.f32 %v4363, %v4378
    %v4386 = vadd.f32 %v4364, %v4378
    %v4387 = vadd.f32 %v4365, %v4378
    %v4388 = vadd.f32 %v4366, %v4378
    %v4389 = vadd.f32 %v4367, %v4378
    %v4390 = vadd.f32 %v4368, %v4378
    %v4391 = vadd.f32 %v4369, %v4378
    %v4392 = vadd.f32 %v4370, %v4378
    %v4393 = vadd.f32 %v4371, %v4378
    %v4394 = vadd.f32 %v4372, %v4378
    %v4395 = vmax.f32 %v4379, 0.0
    %v4396 = vmax.f32 %v4380, 0.0
    %v4397 = vmax.f32 %v4381, 0.0
    %v4398 = vmax.f32 %v4382, 0.0
    %v4399 = vmax.f32 %v4383, 0.0
    %v4400 = vmax.f32 %v4384, 0.0
    %v4401 = vmax.f32 %v4385, 0.0
    %v4402 = vmax.f32 %v4386, 0.0
    %v4403 = vmax.f32 %v4387, 0.0
    %v4404 = vmax.f32 %v4388, 0.0
    %v4405 = vmax.f32 %v4389, 0.0
    %v4406 = vmax.f32 %v4390, 0.0
    %v4407 = vmax.f32 %v4391, 0.0
    %v4408 = vmax.f32 %v4392, 0.0
    %v4409 = vmax.f32 %v4393, 0.0
    %v4410 = vmax.f32 %v4394, 0.0
    %s4411 = sshll.u32 %s2361, 4
    %4412 = dma.done %s46, %s4411
    %v4413 = vld [vmem:[%s8 + $0x4] sm:$0x1]
    %v4414 = vld [vmem:[%s8 + $0x5] sm:$0x1]
    %4415 = vst [vmem:[#allocation5 + $0x10] sm:$0xff] %v4395
    %4416 = vst [vmem:[#allocation5 + $0x18] sm:$0xff] %v4396
    %4417 = vst [vmem:[#allocation5 + $0x20] sm:$0xff] %v4397
    %4418 = vst [vmem:[#allocation5 + $0x28] sm:$0xff] %v4398
    %4419 = vst [vmem:[#allocation5 + $0x30] sm:$0xff] %v4399
    %4420 = vst [vmem:[#allocation5 + $0x38] sm:$0xff] %v4400
    %4421 = vst [vmem:[#allocation5 + $0x40] sm:$0xff] %v4401
    %4422 = vst [vmem:[#allocation5 + $0x48] sm:$0xff] %v4402
    %4423 = vst [vmem:[#allocation5 + $0x50] sm:$0xff] %v4403
    %4424 = vst [vmem:[#allocation5 + $0x58] sm:$0xff] %v4404
    %4425 = vst [vmem:[#allocation5 + $0x60] sm:$0xff] %v4405
    %4426 = vst [vmem:[#allocation5 + $0x68] sm:$0xff] %v4406
    %4427 = vst [vmem:[#allocation5 + $0x70] sm:$0xff] %v4407
    %4428 = vst [vmem:[#allocation5 + $0x78] sm:$0xff] %v4408
    %4429 = vst [vmem:[#allocation5 + $0x80] sm:$0xff] %v4409
    %4430 = vst [vmem:[#allocation5 + $0x88] sm:$0xff] %v4410
    %v4431 = vld [vmem:[#allocation5 + $0x7] sm:$0xff]
    %v4432 = vld [vmem:[#allocation5 + $0xf] sm:$0xff]
    %v4433 = vld [vmem:[#allocation5 + $0x17] sm:$0xff]
    %v4434 = vld [vmem:[#allocation5 + $0x1f] sm:$0xff]
    %v4435 = vld [vmem:[#allocation5 + $0x27] sm:$0xff]
    %v4436 = vld [vmem:[#allocation5 + $0x2f] sm:$0xff]
    %v4437 = vld [vmem:[#allocation5 + $0x37] sm:$0xff]
    %v4438 = vld [vmem:[#allocation5 + $0x3f] sm:$0xff]
    %v4439 = vld [vmem:[#allocation5 + $0x47] sm:$0xff]
    %v4440 = vld [vmem:[#allocation5 + $0x4f] sm:$0xff]
    %v4441 = vld [vmem:[#allocation5 + $0x57] sm:$0xff]
    %v4442 = vld [vmem:[#allocation5 + $0x5f] sm:$0xff]
    %v4443 = vld [vmem:[#allocation5 + $0x67] sm:$0xff]
    %v4444 = vld [vmem:[#allocation5 + $0x6f] sm:$0xff]
    %v4445 = vld [vmem:[#allocation5 + $0x77] sm:$0xff]
    %v4446 = vld [vmem:[#allocation5 + $0x7f] sm:$0xff]
    %v4447 = vmul.f32 %v4431, %v137
    %v4448 = vmul.f32 %v4432, %v142
    %v4449 = vmul.f32 %v4433, %v147
    %v4450 = vmul.f32 %v4434, %v152
    %v4451 = vmul.f32 %v4435, %v157
    %v4452 = vmul.f32 %v4436, %v162
    %v4453 = vmul.f32 %v4437, %v167
    %v4454 = vmul.f32 %v4438, %v172
    %v4455 = vmul.f32 %v4439, %v177
    %v4456 = vmul.f32 %v4440, %v182
    %v4457 = vmul.f32 %v4441, %v187
    %v4458 = vmul.f32 %v4442, %v192
    %v4459 = vmul.f32 %v4443, %v197
    %v4460 = vmul.f32 %v4444, %v202
    %v4461 = vmul.f32 %v4445, %v207
    %v4462 = vmul.f32 %v4446, %v212
    %v4463 = vpack.c.bf16 %v4448, %v4447
    %v4464 = vpack.c.bf16 %v4450, %v4449
    %v4465 = vpack.c.bf16 %v4452, %v4451
    %v4466 = vpack.c.bf16 %v4454, %v4453
    %v4467 = vpack.c.bf16 %v4456, %v4455
    %v4468 = vpack.c.bf16 %v4458, %v4457
    %v4469 = vpack.c.bf16 %v4460, %v4459
    %v4470 = vpack.c.bf16 %v4462, %v4461
    %v4471 = vld [vmem:[#allocation3] sm:$0xf]
    %v4472 = vld [vmem:[#allocation3 + $0x4] sm:$0xf]
    %v4473 = vld [vmem:[#allocation3 + $0x8] sm:$0xf]
    %v4474 = vld [vmem:[#allocation3 + $0xc] sm:$0xf]
    %v4475 = vld [vmem:[#allocation3 + $0x10] sm:$0xf]
    %v4476 = vld [vmem:[#allocation3 + $0x14] sm:$0xf]
    %v4477 = vld [vmem:[#allocation3 + $0x18] sm:$0xf]
    %v4478 = vld [vmem:[#allocation3 + $0x1c] sm:$0xf]
    %v4479 = vld [vmem:[#allocation3 + $0x20] sm:$0xf]
    %v4480 = vld [vmem:[#allocation3 + $0x24] sm:$0xf]
    %v4481 = vld [vmem:[#allocation3 + $0x28] sm:$0xf]
    %v4482 = vld [vmem:[#allocation3 + $0x2c] sm:$0xf]
    %v4483 = vld [vmem:[#allocation3 + $0x30] sm:$0xf]
    %v4484 = vld [vmem:[#allocation3 + $0x34] sm:$0xf]
    %v4485 = vld [vmem:[#allocation3 + $0x38] sm:$0xf]
    %v4486 = vld [vmem:[#allocation3 + $0x3c] sm:$0xf]
    %v4487 = vld [vmem:[#allocation5 + $0x8] sm:$0xff]
    %v4488 = vld [vmem:[#allocation5 + $0x10] sm:$0xff]
    %v4489 = vld [vmem:[#allocation5 + $0x18] sm:$0xff]
    %v4490 = vld [vmem:[#allocation5 + $0x20] sm:$0xff]
    %v4491 = vld [vmem:[#allocation5 + $0x28] sm:$0xff]
    %v4492 = vld [vmem:[#allocation5 + $0x30] sm:$0xff]
    %v4493 = vld [vmem:[#allocation5 + $0x38] sm:$0xff]
    %v4494 = vld [vmem:[#allocation5 + $0x40] sm:$0xff]
    %v4495 = vld [vmem:[#allocation5 + $0x48] sm:$0xff]
    %v4496 = vld [vmem:[#allocation5 + $0x50] sm:$0xff]
    %v4497 = vld [vmem:[#allocation5 + $0x58] sm:$0xff]
    %v4498 = vld [vmem:[#allocation5 + $0x60] sm:$0xff]
    %v4499 = vld [vmem:[#allocation5 + $0x68] sm:$0xff]
    %v4500 = vld [vmem:[#allocation5 + $0x70] sm:$0xff]
    %v4501 = vld [vmem:[#allocation5 + $0x78] sm:$0xff]
    %v4502 = vld [vmem:[#allocation5 + $0x80] sm:$0xff]
    %v4503 = vmul.f32 %v4487, %v256
    %v4504 = vmul.f32 %v4488, %v260
    %v4505 = vmul.f32 %v4489, %v264
    %v4506 = vmul.f32 %v4490, %v268
    %v4507 = vmul.f32 %v4491, %v272
    %v4508 = vmul.f32 %v4492, %v276
    %v4509 = vmul.f32 %v4493, %v280
    %v4510 = vmul.f32 %v4494, %v284
    %v4511 = vmul.f32 %v4495, %v288
    %v4512 = vmul.f32 %v4496, %v292
    %v4513 = vmul.f32 %v4497, %v296
    %v4514 = vmul.f32 %v4498, %v300
    %v4515 = vmul.f32 %v4499, %v304
    %v4516 = vmul.f32 %v4500, %v308
    %v4517 = vmul.f32 %v4501, %v312
    %v4518 = vmul.f32 %v4502, %v316
    %v4519 = vpack.c.bf16 %v4504, %v4503
    %v4520 = vpack.c.bf16 %v4506, %v4505
    %v4521 = vpack.c.bf16 %v4508, %v4507
    %v4522 = vpack.c.bf16 %v4510, %v4509
    %v4523 = vpack.c.bf16 %v4512, %v4511
    %v4524 = vpack.c.bf16 %v4514, %v4513
    %v4525 = vpack.c.bf16 %v4516, %v4515
    %v4526 = vpack.c.bf16 %v4518, %v4517
    %v4527 = vld [vmem:[#allocation3 + $0x40] sm:$0xf]
    %v4528 = vld [vmem:[#allocation3 + $0x44] sm:$0xf]
    %v4529 = vld [vmem:[#allocation3 + $0x48] sm:$0xf]
    %v4530 = vld [vmem:[#allocation3 + $0x4c] sm:$0xf]
    %v4531 = vld [vmem:[#allocation3 + $0x50] sm:$0xf]
    %v4532 = vld [vmem:[#allocation3 + $0x54] sm:$0xf]
    %v4533 = vld [vmem:[#allocation3 + $0x58] sm:$0xf]
    %v4534 = vld [vmem:[#allocation3 + $0x5c] sm:$0xf]
    %v4535 = vld [vmem:[#allocation3 + $0x60] sm:$0xf]
    %v4536 = vld [vmem:[#allocation3 + $0x64] sm:$0xf]
    %v4537 = vld [vmem:[#allocation3 + $0x68] sm:$0xf]
    %v4538 = vld [vmem:[#allocation3 + $0x6c] sm:$0xf]
    %v4539 = vld [vmem:[#allocation3 + $0x70] sm:$0xf]
    %v4540 = vld [vmem:[#allocation3 + $0x74] sm:$0xf]
    %v4541 = vld [vmem:[#allocation3 + $0x78] sm:$0xf]
    %v4542 = vld [vmem:[#allocation3 + $0x7c] sm:$0xf]
    %v4559 = vunpack.c.l.b16 %v4527
    %v4560 = vunpack.c.l.b16 %v4528
    %v4561 = vunpack.c.l.b16 %v4529
    %v4562 = vunpack.c.l.b16 %v4530
    %v4563 = vunpack.c.l.b16 %v4531
    %v4564 = vunpack.c.l.b16 %v4532
    %v4565 = vunpack.c.l.b16 %v4533
    %v4566 = vunpack.c.l.b16 %v4534
    %v4567 = vunpack.c.l.b16 %v4535
    %v4568 = vunpack.c.l.b16 %v4536
    %v4569 = vunpack.c.l.b16 %v4537
    %v4570 = vunpack.c.l.b16 %v4538
    %v4571 = vunpack.c.l.b16 %v4539
    %v4572 = vunpack.c.l.b16 %v4540
    %v4573 = vunpack.c.l.b16 %v4541
    %v4574 = vunpack.c.l.b16 %v4542
    %v4575 = vpack.c.b16 %v4560, %v4559
    %v4576 = vpack.c.b16 %v4562, %v4561
    %v4577 = vpack.c.b16 %v4564, %v4563
    %v4578 = vpack.c.b16 %v4566, %v4565
    %v4579 = vpack.c.b16 %v4568, %v4567
    %v4580 = vpack.c.b16 %v4570, %v4569
    %v4581 = vpack.c.b16 %v4572, %v4571
    %v4582 = vpack.c.b16 %v4574, %v4573
    %4591 = vmatprep.subr.bf16.mxu0 0
    %4592 = vmatpush1.bf16.msra.mxu0 %v4582
    %4593 = vmatprep.subr.bf16.mxu0 0
    %4594 = vmatpush1.bf16.msra.mxu0 %v4581
    %4595 = vmatprep.subr.bf16.mxu0 0
    %4596 = vmatpush1.bf16.msra.mxu0 %v4580
    %4597 = vmatprep.subr.bf16.mxu0 0
    %4598 = vmatpush1.bf16.msra.mxu0 %v4579
    %4599 = vmatprep.subr.bf16.mxu0 0
    %4600 = vmatpush1.bf16.msra.mxu0 %v4578
    %4601 = vmatprep.subr.bf16.mxu0 0
    %4602 = vmatpush1.bf16.msra.mxu0 %v4577
    %4603 = vmatprep.subr.bf16.mxu0 0
    %4604 = vmatpush1.bf16.msra.mxu0 %v4576
    %4605 = vmatprep.subr.bf16.mxu0 0
    %4606 = vmatpush1.bf16.msra.mxu0 %v4575
    %4607 = vmatprep.subr.bf16.mxu0 0
    %4608 = vmatpush2.bf16.msra.mxu0 0
    %4609 = vmatprep.subr.bf16.mxu0 0
    %4610 = vmatpush2.bf16.msra.mxu0 0
    %4611 = vmatprep.subr.bf16.mxu0 0
    %4612 = vmatpush2.bf16.msra.mxu0 0
    %4613 = vmatprep.subr.bf16.mxu0 0
    %4614 = vmatpush2.bf16.msra.mxu0 0
    %4615 = vmatprep.subr.bf16.mxu0 0
    %4616 = vmatpush2.bf16.msra.mxu0 0
    %4617 = vmatprep.subr.bf16.mxu0 0
    %4618 = vmatpush2.bf16.msra.mxu0 0
    %4619 = vmatprep.subr.bf16.mxu0 0
    %4620 = vmatpush2.bf16.msra.mxu0 0
    %4621 = vmatprep.subr.bf16.mxu0 0
    %4622 = vmatpush2.bf16.msra.mxu0 0
    %4623 = vmatprep.mubr.bf16.mxu0 0
    %4624 = vmatmul.mubr.bf16.gmra.mxu0 %v4519
    %v4625 = vpop.f32.mrf.mxu0
    %v4626 = vadd.f32 0.0, %v4625
    %v4627 = vpop.f32.mrf.mxu0
    %v4628 = vpop.f32.mrf.mxu0
    %v4629 = vadd.f32 0.0, %v4628
    %v4630 = vpop.f32.mrf.mxu0
    %4631 = vmatprep.mubr.bf16.mxu0 0
    %4632 = vmatmul.mubr.bf16.gmra.mxu0 %v4520
    %v4633 = vpop.f32.mrf.mxu0
    %v4634 = vadd.f32 0.0, %v4633
    %v4635 = vpop.f32.mrf.mxu0
    %v4636 = vpop.f32.mrf.mxu0
    %v4637 = vadd.f32 0.0, %v4636
    %v4638 = vpop.f32.mrf.mxu0
    %4639 = vmatprep.mubr.bf16.mxu0 0
    %4640 = vmatmul.mubr.bf16.gmra.mxu0 %v4521
    %v4641 = vpop.f32.mrf.mxu0
    %v4642 = vadd.f32 0.0, %v4641
    %v4643 = vpop.f32.mrf.mxu0
    %v4644 = vpop.f32.mrf.mxu0
    %v4645 = vadd.f32 0.0, %v4644
    %v4646 = vpop.f32.mrf.mxu0
    %4647 = vmatprep.mubr.bf16.mxu0 0
    %4648 = vmatmul.mubr.bf16.gmra.mxu0 %v4522
    %v4649 = vpop.f32.mrf.mxu0
    %v4650 = vadd.f32 0.0, %v4649
    %v4651 = vpop.f32.mrf.mxu0
    %v4652 = vpop.f32.mrf.mxu0
    %v4653 = vadd.f32 0.0, %v4652
    %v4654 = vpop.f32.mrf.mxu0
    %4655 = vmatprep.mubr.bf16.mxu0 0
    %4656 = vmatmul.mubr.bf16.gmra.mxu0 %v4523
    %v4657 = vpop.f32.mrf.mxu0
    %v4658 = vadd.f32 0.0, %v4657
    %v4659 = vpop.f32.mrf.mxu0
    %v4660 = vpop.f32.mrf.mxu0
    %v4661 = vadd.f32 0.0, %v4660
    %v4662 = vpop.f32.mrf.mxu0
    %4663 = vmatprep.mubr.bf16.mxu0 0
    %4664 = vmatmul.mubr.bf16.gmra.mxu0 %v4524
    %v4665 = vpop.f32.mrf.mxu0
    %v4666 = vadd.f32 0.0, %v4665
    %v4667 = vpop.f32.mrf.mxu0
    %v4668 = vpop.f32.mrf.mxu0
    %v4669 = vadd.f32 0.0, %v4668
    %v4670 = vpop.f32.mrf.mxu0
    %4671 = vmatprep.mubr.bf16.mxu0 0
    %4672 = vmatmul.mubr.bf16.gmra.mxu0 %v4525
    %v4673 = vpop.f32.mrf.mxu0
    %v4674 = vadd.f32 0.0, %v4673
    %v4675 = vpop.f32.mrf.mxu0
    %v4676 = vpop.f32.mrf.mxu0
    %v4677 = vadd.f32 0.0, %v4676
    %v4678 = vpop.f32.mrf.mxu0
    %4679 = vmatprep.mubr.bf16.mxu0 0
    %4680 = vmatmul.mubr.bf16.gmra.mxu0 %v4526
    %v4681 = vpop.f32.mrf.mxu0
    %v4682 = vadd.f32 0.0, %v4681
    %v4683 = vpop.f32.mrf.mxu0
    %v4684 = vpop.f32.mrf.mxu0
    %v4685 = vadd.f32 0.0, %v4684
    %v4686 = vpop.f32.mrf.mxu0
    %4687 = vdwg.mxu0
    %v4704 = vunpack.c.l.b16 %v4471
    %v4705 = vunpack.c.l.b16 %v4472
    %v4706 = vunpack.c.l.b16 %v4473
    %v4707 = vunpack.c.l.b16 %v4474
    %v4708 = vunpack.c.l.b16 %v4475
    %v4709 = vunpack.c.l.b16 %v4476
    %v4710 = vunpack.c.l.b16 %v4477
    %v4711 = vunpack.c.l.b16 %v4478
    %v4712 = vunpack.c.l.b16 %v4479
    %v4713 = vunpack.c.l.b16 %v4480
    %v4714 = vunpack.c.l.b16 %v4481
    %v4715 = vunpack.c.l.b16 %v4482
    %v4716 = vunpack.c.l.b16 %v4483
    %v4717 = vunpack.c.l.b16 %v4484
    %v4718 = vunpack.c.l.b16 %v4485
    %v4719 = vunpack.c.l.b16 %v4486
    %v4720 = vpack.c.b16 %v4705, %v4704
    %v4721 = vpack.c.b16 %v4707, %v4706
    %v4722 = vpack.c.b16 %v4709, %v4708
    %v4723 = vpack.c.b16 %v4711, %v4710
    %v4724 = vpack.c.b16 %v4713, %v4712
    %v4725 = vpack.c.b16 %v4715, %v4714
    %v4726 = vpack.c.b16 %v4717, %v4716
    %v4727 = vpack.c.b16 %v4719, %v4718
    %4736 = vmatprep.subr.bf16.mxu0 0
    %4737 = vmatpush1.bf16.msra.mxu0 %v4727
    %4738 = vmatprep.subr.bf16.mxu0 0
    %4739 = vmatpush1.bf16.msra.mxu0 %v4726
    %4740 = vmatprep.subr.bf16.mxu0 0
    %4741 = vmatpush1.bf16.msra.mxu0 %v4725
    %4742 = vmatprep.subr.bf16.mxu0 0
    %4743 = vmatpush1.bf16.msra.mxu0 %v4724
    %4744 = vmatprep.subr.bf16.mxu0 0
    %4745 = vmatpush1.bf16.msra.mxu0 %v4723
    %4746 = vmatprep.subr.bf16.mxu0 0
    %4747 = vmatpush1.bf16.msra.mxu0 %v4722
    %4748 = vmatprep.subr.bf16.mxu0 0
    %4749 = vmatpush1.bf16.msra.mxu0 %v4721
    %4750 = vmatprep.subr.bf16.mxu0 0
    %4751 = vmatpush1.bf16.msra.mxu0 %v4720
    %4752 = vmatprep.subr.bf16.mxu0 0
    %4753 = vmatpush2.bf16.msra.mxu0 0
    %4754 = vmatprep.subr.bf16.mxu0 0
    %4755 = vmatpush2.bf16.msra.mxu0 0
    %4756 = vmatprep.subr.bf16.mxu0 0
    %4757 = vmatpush2.bf16.msra.mxu0 0
    %4758 = vmatprep.subr.bf16.mxu0 0
    %4759 = vmatpush2.bf16.msra.mxu0 0
    %4760 = vmatprep.subr.bf16.mxu0 0
    %4761 = vmatpush2.bf16.msra.mxu0 0
    %4762 = vmatprep.subr.bf16.mxu0 0
    %4763 = vmatpush2.bf16.msra.mxu0 0
    %4764 = vmatprep.subr.bf16.mxu0 0
    %4765 = vmatpush2.bf16.msra.mxu0 0
    %4766 = vmatprep.subr.bf16.mxu0 0
    %4767 = vmatpush2.bf16.msra.mxu0 0
    %4768 = vmatprep.mubr.bf16.mxu0 0
    %4769 = vmatmul.mubr.bf16.gmra.mxu0 %v4463
    %v4770 = vpop.f32.mrf.mxu0
    %v4771 = vadd.f32 %v4626, %v4770
    %v4772 = vpop.f32.mrf.mxu0
    %v4773 = vpop.f32.mrf.mxu0
    %v4774 = vadd.f32 %v4629, %v4773
    %v4775 = vpop.f32.mrf.mxu0
    %4776 = vmatprep.mubr.bf16.mxu0 0
    %4777 = vmatmul.mubr.bf16.gmra.mxu0 %v4464
    %v4778 = vpop.f32.mrf.mxu0
    %v4779 = vadd.f32 %v4634, %v4778
    %v4780 = vpop.f32.mrf.mxu0
    %v4781 = vpop.f32.mrf.mxu0
    %v4782 = vadd.f32 %v4637, %v4781
    %v4783 = vpop.f32.mrf.mxu0
    %4784 = vmatprep.mubr.bf16.mxu0 0
    %4785 = vmatmul.mubr.bf16.gmra.mxu0 %v4465
    %v4786 = vpop.f32.mrf.mxu0
    %v4787 = vadd.f32 %v4642, %v4786
    %v4788 = vpop.f32.mrf.mxu0
    %v4789 = vpop.f32.mrf.mxu0
    %v4790 = vadd.f32 %v4645, %v4789
    %v4791 = vpop.f32.mrf.mxu0
    %4792 = vmatprep.mubr.bf16.mxu0 0
    %4793 = vmatmul.mubr.bf16.gmra.mxu0 %v4466
    %v4794 = vpop.f32.mrf.mxu0
    %v4795 = vadd.f32 %v4650, %v4794
    %v4796 = vpop.f32.mrf.mxu0
    %v4797 = vpop.f32.mrf.mxu0
    %v4798 = vadd.f32 %v4653, %v4797
    %v4799 = vpop.f32.mrf.mxu0
    %4800 = vmatprep.mubr.bf16.mxu0 0
    %4801 = vmatmul.mubr.bf16.gmra.mxu0 %v4467
    %v4802 = vpop.f32.mrf.mxu0
    %v4803 = vadd.f32 %v4658, %v4802
    %v4804 = vpop.f32.mrf.mxu0
    %v4805 = vpop.f32.mrf.mxu0
    %v4806 = vadd.f32 %v4661, %v4805
    %v4807 = vpop.f32.mrf.mxu0
    %4808 = vmatprep.mubr.bf16.mxu0 0
    %4809 = vmatmul.mubr.bf16.gmra.mxu0 %v4468
    %v4810 = vpop.f32.mrf.mxu0
    %v4811 = vadd.f32 %v4666, %v4810
    %v4812 = vpop.f32.mrf.mxu0
    %v4813 = vpop.f32.mrf.mxu0
    %v4814 = vadd.f32 %v4669, %v4813
    %v4815 = vpop.f32.mrf.mxu0
    %4816 = vmatprep.mubr.bf16.mxu0 0
    %4817 = vmatmul.mubr.bf16.gmra.mxu0 %v4469
    %v4818 = vpop.f32.mrf.mxu0
    %v4819 = vadd.f32 %v4674, %v4818
    %v4820 = vpop.f32.mrf.mxu0
    %v4821 = vpop.f32.mrf.mxu0
    %v4822 = vadd.f32 %v4677, %v4821
    %v4823 = vpop.f32.mrf.mxu0
    %4824 = vmatprep.mubr.bf16.mxu0 0
    %4825 = vmatmul.mubr.bf16.gmra.mxu0 %v4470
    %v4826 = vpop.f32.mrf.mxu0
    %v4827 = vadd.f32 %v4682, %v4826
    %v4828 = vpop.f32.mrf.mxu0
    %v4829 = vpop.f32.mrf.mxu0
    %v4830 = vadd.f32 %v4685, %v4829
    %v4831 = vpop.f32.mrf.mxu0
    %4832 = vdwg.mxu0
    %v4833 = vld [vmem:[#allocation5 + $0x9] sm:$0xff]
    %v4834 = vld [vmem:[#allocation5 + $0x11] sm:$0xff]
    %v4835 = vld [vmem:[#allocation5 + $0x19] sm:$0xff]
    %v4836 = vld [vmem:[#allocation5 + $0x21] sm:$0xff]
    %v4837 = vld [vmem:[#allocation5 + $0x29] sm:$0xff]
    %v4838 = vld [vmem:[#allocation5 + $0x31] sm:$0xff]
    %v4839 = vld [vmem:[#allocation5 + $0x39] sm:$0xff]
    %v4840 = vld [vmem:[#allocation5 + $0x41] sm:$0xff]
    %v4841 = vld [vmem:[#allocation5 + $0x49] sm:$0xff]
    %v4842 = vld [vmem:[#allocation5 + $0x51] sm:$0xff]
    %v4843 = vld [vmem:[#allocation5 + $0x59] sm:$0xff]
    %v4844 = vld [vmem:[#allocation5 + $0x61] sm:$0xff]
    %v4845 = vld [vmem:[#allocation5 + $0x69] sm:$0xff]
    %v4846 = vld [vmem:[#allocation5 + $0x71] sm:$0xff]
    %v4847 = vld [vmem:[#allocation5 + $0x79] sm:$0xff]
    %v4848 = vld [vmem:[#allocation5 + $0x81] sm:$0xff]
    %v4849 = vmul.f32 %v4833, %v613
    %v4850 = vmul.f32 %v4834, %v617
    %v4851 = vmul.f32 %v4835, %v621
    %v4852 = vmul.f32 %v4836, %v625
    %v4853 = vmul.f32 %v4837, %v629
    %v4854 = vmul.f32 %v4838, %v633
    %v4855 = vmul.f32 %v4839, %v637
    %v4856 = vmul.f32 %v4840, %v641
    %v4857 = vmul.f32 %v4841, %v645
    %v4858 = vmul.f32 %v4842, %v649
    %v4859 = vmul.f32 %v4843, %v653
    %v4860 = vmul.f32 %v4844, %v657
    %v4861 = vmul.f32 %v4845, %v661
    %v4862 = vmul.f32 %v4846, %v665
    %v4863 = vmul.f32 %v4847, %v669
    %v4864 = vmul.f32 %v4848, %v673
    %v4865 = vpack.c.bf16 %v4850, %v4849
    %v4866 = vpack.c.bf16 %v4852, %v4851
    %v4867 = vpack.c.bf16 %v4854, %v4853
    %v4868 = vpack.c.bf16 %v4856, %v4855
    %v4869 = vpack.c.bf16 %v4858, %v4857
    %v4870 = vpack.c.bf16 %v4860, %v4859
    %v4871 = vpack.c.bf16 %v4862, %v4861
    %v4872 = vpack.c.bf16 %v4864, %v4863
    %v4873 = vld [vmem:[#allocation3 + $0x80] sm:$0xf]
    %v4874 = vld [vmem:[#allocation3 + $0x84] sm:$0xf]
    %v4875 = vld [vmem:[#allocation3 + $0x88] sm:$0xf]
    %v4876 = vld [vmem:[#allocation3 + $0x8c] sm:$0xf]
    %v4877 = vld [vmem:[#allocation3 + $0x90] sm:$0xf]
    %v4878 = vld [vmem:[#allocation3 + $0x94] sm:$0xf]
    %v4879 = vld [vmem:[#allocation3 + $0x98] sm:$0xf]
    %v4880 = vld [vmem:[#allocation3 + $0x9c] sm:$0xf]
    %v4881 = vld [vmem:[#allocation3 + $0xa0] sm:$0xf]
    %v4882 = vld [vmem:[#allocation3 + $0xa4] sm:$0xf]
    %v4883 = vld [vmem:[#allocation3 + $0xa8] sm:$0xf]
    %v4884 = vld [vmem:[#allocation3 + $0xac] sm:$0xf]
    %v4885 = vld [vmem:[#allocation3 + $0xb0] sm:$0xf]
    %v4886 = vld [vmem:[#allocation3 + $0xb4] sm:$0xf]
    %v4887 = vld [vmem:[#allocation3 + $0xb8] sm:$0xf]
    %v4888 = vld [vmem:[#allocation3 + $0xbc] sm:$0xf]
    %v4905 = vunpack.c.l.b16 %v4873
    %v4906 = vunpack.c.l.b16 %v4874
    %v4907 = vunpack.c.l.b16 %v4875
    %v4908 = vunpack.c.l.b16 %v4876
    %v4909 = vunpack.c.l.b16 %v4877
    %v4910 = vunpack.c.l.b16 %v4878
    %v4911 = vunpack.c.l.b16 %v4879
    %v4912 = vunpack.c.l.b16 %v4880
    %v4913 = vunpack.c.l.b16 %v4881
    %v4914 = vunpack.c.l.b16 %v4882
    %v4915 = vunpack.c.l.b16 %v4883
    %v4916 = vunpack.c.l.b16 %v4884
    %v4917 = vunpack.c.l.b16 %v4885
    %v4918 = vunpack.c.l.b16 %v4886
    %v4919 = vunpack.c.l.b16 %v4887
    %v4920 = vunpack.c.l.b16 %v4888
    %v4921 = vpack.c.b16 %v4906, %v4905
    %v4922 = vpack.c.b16 %v4908, %v4907
    %v4923 = vpack.c.b16 %v4910, %v4909
    %v4924 = vpack.c.b16 %v4912, %v4911
    %v4925 = vpack.c.b16 %v4914, %v4913
    %v4926 = vpack.c.b16 %v4916, %v4915
    %v4927 = vpack.c.b16 %v4918, %v4917
    %v4928 = vpack.c.b16 %v4920, %v4919
    %4937 = vmatprep.subr.bf16.mxu0 0
    %4938 = vmatpush1.bf16.msra.mxu0 %v4928
    %4939 = vmatprep.subr.bf16.mxu0 0
    %4940 = vmatpush1.bf16.msra.mxu0 %v4927
    %4941 = vmatprep.subr.bf16.mxu0 0
    %4942 = vmatpush1.bf16.msra.mxu0 %v4926
    %4943 = vmatprep.subr.bf16.mxu0 0
    %4944 = vmatpush1.bf16.msra.mxu0 %v4925
    %4945 = vmatprep.subr.bf16.mxu0 0
    %4946 = vmatpush1.bf16.msra.mxu0 %v4924
    %4947 = vmatprep.subr.bf16.mxu0 0
    %4948 = vmatpush1.bf16.msra.mxu0 %v4923
    %4949 = vmatprep.subr.bf16.mxu0 0
    %4950 = vmatpush1.bf16.msra.mxu0 %v4922
    %4951 = vmatprep.subr.bf16.mxu0 0
    %4952 = vmatpush1.bf16.msra.mxu0 %v4921
    %4953 = vmatprep.subr.bf16.mxu0 0
    %4954 = vmatpush2.bf16.msra.mxu0 0
    %4955 = vmatprep.subr.bf16.mxu0 0
    %4956 = vmatpush2.bf16.msra.mxu0 0
    %4957 = vmatprep.subr.bf16.mxu0 0
    %4958 = vmatpush2.bf16.msra.mxu0 0
    %4959 = vmatprep.subr.bf16.mxu0 0
    %4960 = vmatpush2.bf16.msra.mxu0 0
    %4961 = vmatprep.subr.bf16.mxu0 0
    %4962 = vmatpush2.bf16.msra.mxu0 0
    %4963 = vmatprep.subr.bf16.mxu0 0
    %4964 = vmatpush2.bf16.msra.mxu0 0
    %4965 = vmatprep.subr.bf16.mxu0 0
    %4966 = vmatpush2.bf16.msra.mxu0 0
    %4967 = vmatprep.subr.bf16.mxu0 0
    %4968 = vmatpush2.bf16.msra.mxu0 0
    %4969 = vmatprep.mubr.bf16.mxu0 0
    %4970 = vmatmul.mubr.bf16.gmra.mxu0 %v4865
    %v4971 = vpop.f32.mrf.mxu0
    %v4972 = vadd.f32 0.0, %v4971
    %v4973 = vpop.f32.mrf.mxu0
    %v4974 = vpop.f32.mrf.mxu0
    %v4975 = vadd.f32 0.0, %v4974
    %v4976 = vpop.f32.mrf.mxu0
    %4977 = vmatprep.mubr.bf16.mxu0 0
    %4978 = vmatmul.mubr.bf16.gmra.mxu0 %v4866
    %v4979 = vpop.f32.mrf.mxu0
    %v4980 = vadd.f32 0.0, %v4979
    %v4981 = vpop.f32.mrf.mxu0
    %v4982 = vpop.f32.mrf.mxu0
    %v4983 = vadd.f32 0.0, %v4982
    %v4984 = vpop.f32.mrf.mxu0
    %4985 = vmatprep.mubr.bf16.mxu0 0
    %4986 = vmatmul.mubr.bf16.gmra.mxu0 %v4867
    %v4987 = vpop.f32.mrf.mxu0
    %v4988 = vadd.f32 0.0, %v4987
    %v4989 = vpop.f32.mrf.mxu0
    %v4990 = vpop.f32.mrf.mxu0
    %v4991 = vadd.f32 0.0, %v4990
    %v4992 = vpop.f32.mrf.mxu0
    %4993 = vmatprep.mubr.bf16.mxu0 0
    %4994 = vmatmul.mubr.bf16.gmra.mxu0 %v4868
    %v4995 = vpop.f32.mrf.mxu0
    %v4996 = vadd.f32 0.0, %v4995
    %v4997 = vpop.f32.mrf.mxu0
    %v4998 = vpop.f32.mrf.mxu0
    %v4999 = vadd.f32 0.0, %v4998
    %v5000 = vpop.f32.mrf.mxu0
    %5001 = vmatprep.mubr.bf16.mxu0 0
    %5002 = vmatmul.mubr.bf16.gmra.mxu0 %v4869
    %v5003 = vpop.f32.mrf.mxu0
    %v5004 = vadd.f32 0.0, %v5003
    %v5005 = vpop.f32.mrf.mxu0
    %v5006 = vpop.f32.mrf.mxu0
    %v5007 = vadd.f32 0.0, %v5006
    %v5008 = vpop.f32.mrf.mxu0
    %5009 = vmatprep.mubr.bf16.mxu0 0
    %5010 = vmatmul.mubr.bf16.gmra.mxu0 %v4870
    %v5011 = vpop.f32.mrf.mxu0
    %v5012 = vadd.f32 0.0, %v5011
    %v5013 = vpop.f32.mrf.mxu0
    %v5014 = vpop.f32.mrf.mxu0
    %v5015 = vadd.f32 0.0, %v5014
    %v5016 = vpop.f32.mrf.mxu0
    %5017 = vmatprep.mubr.bf16.mxu0 0
    %5018 = vmatmul.mubr.bf16.gmra.mxu0 %v4871
    %v5019 = vpop.f32.mrf.mxu0
    %v5020 = vadd.f32 0.0, %v5019
    %v5021 = vpop.f32.mrf.mxu0
    %v5022 = vpop.f32.mrf.mxu0
    %v5023 = vadd.f32 0.0, %v5022
    %v5024 = vpop.f32.mrf.mxu0
    %5025 = vmatprep.mubr.bf16.mxu0 0
    %5026 = vmatmul.mubr.bf16.gmra.mxu0 %v4872
    %v5027 = vpop.f32.mrf.mxu0
    %v5028 = vadd.f32 0.0, %v5027
    %v5029 = vpop.f32.mrf.mxu0
    %v5030 = vpop.f32.mrf.mxu0
    %v5031 = vadd.f32 0.0, %v5030
    %v5032 = vpop.f32.mrf.mxu0
    %5033 = vdwg.mxu0
    %v5034 = vadd.f32 %v4771, %v4972
    %v5035 = vadd.f32 %v4774, %v4975
    %v5036 = vadd.f32 %v4779, %v4980
    %v5037 = vadd.f32 %v4782, %v4983
    %v5038 = vadd.f32 %v4787, %v4988
    %v5039 = vadd.f32 %v4790, %v4991
    %v5040 = vadd.f32 %v4795, %v4996
    %v5041 = vadd.f32 %v4798, %v4999
    %v5042 = vadd.f32 %v4803, %v5004
    %v5043 = vadd.f32 %v4806, %v5007
    %v5044 = vadd.f32 %v4811, %v5012
    %v5045 = vadd.f32 %v4814, %v5015
    %v5046 = vadd.f32 %v4819, %v5020
    %v5047 = vadd.f32 %v4822, %v5023
    %v5048 = vadd.f32 %v4827, %v5028
    %v5049 = vadd.f32 %v4830, %v5031
    %v5050 = vld [vmem:[#allocation5 + $0xf] sm:$0xff]
    %v5051 = vld [vmem:[#allocation5 + $0x17] sm:$0xff]
    %v5052 = vld [vmem:[#allocation5 + $0x1f] sm:$0xff]
    %v5053 = vld [vmem:[#allocation5 + $0x27] sm:$0xff]
    %v5054 = vld [vmem:[#allocation5 + $0x2f] sm:$0xff]
    %v5055 = vld [vmem:[#allocation5 + $0x37] sm:$0xff]
    %v5056 = vld [vmem:[#allocation5 + $0x3f] sm:$0xff]
    %v5057 = vld [vmem:[#allocation5 + $0x47] sm:$0xff]
    %v5058 = vld [vmem:[#allocation5 + $0x4f] sm:$0xff]
    %v5059 = vld [vmem:[#allocation5 + $0x57] sm:$0xff]
    %v5060 = vld [vmem:[#allocation5 + $0x5f] sm:$0xff]
    %v5061 = vld [vmem:[#allocation5 + $0x67] sm:$0xff]
    %v5062 = vld [vmem:[#allocation5 + $0x6f] sm:$0xff]
    %v5063 = vld [vmem:[#allocation5 + $0x77] sm:$0xff]
    %v5064 = vld [vmem:[#allocation5 + $0x7f] sm:$0xff]
    %v5065 = vld [vmem:[#allocation5 + $0x87] sm:$0xff]
    %v5066 = vmul.f32 %v5050, %v857
    %v5067 = vmul.f32 %v5051, %v861
    %v5068 = vmul.f32 %v5052, %v865
    %v5069 = vmul.f32 %v5053, %v869
    %v5070 = vmul.f32 %v5054, %v873
    %v5071 = vmul.f32 %v5055, %v877
    %v5072 = vmul.f32 %v5056, %v881
    %v5073 = vmul.f32 %v5057, %v885
    %v5074 = vmul.f32 %v5058, %v889
    %v5075 = vmul.f32 %v5059, %v893
    %v5076 = vmul.f32 %v5060, %v897
    %v5077 = vmul.f32 %v5061, %v901
    %v5078 = vmul.f32 %v5062, %v905
    %v5079 = vmul.f32 %v5063, %v909
    %v5080 = vmul.f32 %v5064, %v913
    %v5081 = vmul.f32 %v5065, %v917
    %v5082 = vpack.c.bf16 %v5067, %v5066
    %v5083 = vpack.c.bf16 %v5069, %v5068
    %v5084 = vpack.c.bf16 %v5071, %v5070
    %v5085 = vpack.c.bf16 %v5073, %v5072
    %v5086 = vpack.c.bf16 %v5075, %v5074
    %v5087 = vpack.c.bf16 %v5077, %v5076
    %v5088 = vpack.c.bf16 %v5079, %v5078
    %v5089 = vpack.c.bf16 %v5081, %v5080
    %v5090 = vld [vmem:[#allocation3 + $0xc0] sm:$0xf]
    %v5091 = vld [vmem:[#allocation3 + $0xc4] sm:$0xf]
    %v5092 = vld [vmem:[#allocation3 + $0xc8] sm:$0xf]
    %v5093 = vld [vmem:[#allocation3 + $0xcc] sm:$0xf]
    %v5094 = vld [vmem:[#allocation3 + $0xd0] sm:$0xf]
    %v5095 = vld [vmem:[#allocation3 + $0xd4] sm:$0xf]
    %v5096 = vld [vmem:[#allocation3 + $0xd8] sm:$0xf]
    %v5097 = vld [vmem:[#allocation3 + $0xdc] sm:$0xf]
    %v5098 = vld [vmem:[#allocation3 + $0xe0] sm:$0xf]
    %v5099 = vld [vmem:[#allocation3 + $0xe4] sm:$0xf]
    %v5100 = vld [vmem:[#allocation3 + $0xe8] sm:$0xf]
    %v5101 = vld [vmem:[#allocation3 + $0xec] sm:$0xf]
    %v5102 = vld [vmem:[#allocation3 + $0xf0] sm:$0xf]
    %v5103 = vld [vmem:[#allocation3 + $0xf4] sm:$0xf]
    %v5104 = vld [vmem:[#allocation3 + $0xf8] sm:$0xf]
    %v5105 = vld [vmem:[#allocation3 + $0xfc] sm:$0xf]
    %v5122 = vunpack.c.l.b16 %v5090
    %v5123 = vunpack.c.l.b16 %v5091
    %v5124 = vunpack.c.l.b16 %v5092
    %v5125 = vunpack.c.l.b16 %v5093
    %v5126 = vunpack.c.l.b16 %v5094
    %v5127 = vunpack.c.l.b16 %v5095
    %v5128 = vunpack.c.l.b16 %v5096
    %v5129 = vunpack.c.l.b16 %v5097
    %v5130 = vunpack.c.l.b16 %v5098
    %v5131 = vunpack.c.l.b16 %v5099
    %v5132 = vunpack.c.l.b16 %v5100
    %v5133 = vunpack.c.l.b16 %v5101
    %v5134 = vunpack.c.l.b16 %v5102
    %v5135 = vunpack.c.l.b16 %v5103
    %v5136 = vunpack.c.l.b16 %v5104
    %v5137 = vunpack.c.l.b16 %v5105
    %v5138 = vpack.c.b16 %v5123, %v5122
    %v5139 = vpack.c.b16 %v5125, %v5124
    %v5140 = vpack.c.b16 %v5127, %v5126
    %v5141 = vpack.c.b16 %v5129, %v5128
    %v5142 = vpack.c.b16 %v5131, %v5130
    %v5143 = vpack.c.b16 %v5133, %v5132
    %v5144 = vpack.c.b16 %v5135, %v5134
    %v5145 = vpack.c.b16 %v5137, %v5136
    %5154 = vmatprep.subr.bf16.mxu0 0
    %5155 = vmatpush1.bf16.msra.mxu0 %v5145
    %5156 = vmatprep.subr.bf16.mxu0 0
    %5157 = vmatpush1.bf16.msra.mxu0 %v5144
    %5158 = vmatprep.subr.bf16.mxu0 0
    %5159 = vmatpush1.bf16.msra.mxu0 %v5143
    %5160 = vmatprep.subr.bf16.mxu0 0
    %5161 = vmatpush1.bf16.msra.mxu0 %v5142
    %5162 = vmatprep.subr.bf16.mxu0 0
    %5163 = vmatpush1.bf16.msra.mxu0 %v5141
    %5164 = vmatprep.subr.bf16.mxu0 0
    %5165 = vmatpush1.bf16.msra.mxu0 %v5140
    %5166 = vmatprep.subr.bf16.mxu0 0
    %5167 = vmatpush1.bf16.msra.mxu0 %v5139
    %5168 = vmatprep.subr.bf16.mxu0 0
    %5169 = vmatpush1.bf16.msra.mxu0 %v5138
    %5170 = vmatprep.subr.bf16.mxu0 0
    %5171 = vmatpush2.bf16.msra.mxu0 0
    %5172 = vmatprep.subr.bf16.mxu0 0
    %5173 = vmatpush2.bf16.msra.mxu0 0
    %5174 = vmatprep.subr.bf16.mxu0 0
    %5175 = vmatpush2.bf16.msra.mxu0 0
    %5176 = vmatprep.subr.bf16.mxu0 0
    %5177 = vmatpush2.bf16.msra.mxu0 0
    %5178 = vmatprep.subr.bf16.mxu0 0
    %5179 = vmatpush2.bf16.msra.mxu0 0
    %5180 = vmatprep.subr.bf16.mxu0 0
    %5181 = vmatpush2.bf16.msra.mxu0 0
    %5182 = vmatprep.subr.bf16.mxu0 0
    %5183 = vmatpush2.bf16.msra.mxu0 0
    %5184 = vmatprep.subr.bf16.mxu0 0
    %5185 = vmatpush2.bf16.msra.mxu0 0
    %5186 = vmatprep.mubr.bf16.mxu0 0
    %5187 = vmatmul.mubr.bf16.gmra.mxu0 %v5082
    %v5188 = vpop.f32.mrf.mxu0
    %v5189 = vadd.f32 0.0, %v5188
    %v5190 = vpop.f32.mrf.mxu0
    %v5191 = vpop.f32.mrf.mxu0
    %v5192 = vadd.f32 0.0, %v5191
    %v5193 = vpop.f32.mrf.mxu0
    %5194 = vmatprep.mubr.bf16.mxu0 0
    %5195 = vmatmul.mubr.bf16.gmra.mxu0 %v5083
    %v5196 = vpop.f32.mrf.mxu0
    %v5197 = vadd.f32 0.0, %v5196
    %v5198 = vpop.f32.mrf.mxu0
    %v5199 = vpop.f32.mrf.mxu0
    %v5200 = vadd.f32 0.0, %v5199
    %v5201 = vpop.f32.mrf.mxu0
    %5202 = vmatprep.mubr.bf16.mxu0 0
    %5203 = vmatmul.mubr.bf16.gmra.mxu0 %v5084
    %v5204 = vpop.f32.mrf.mxu0
    %v5205 = vadd.f32 0.0, %v5204
    %v5206 = vpop.f32.mrf.mxu0
    %v5207 = vpop.f32.mrf.mxu0
    %v5208 = vadd.f32 0.0, %v5207
    %v5209 = vpop.f32.mrf.mxu0
    %5210 = vmatprep.mubr.bf16.mxu0 0
    %5211 = vmatmul.mubr.bf16.gmra.mxu0 %v5085
    %v5212 = vpop.f32.mrf.mxu0
    %v5213 = vadd.f32 0.0, %v5212
    %v5214 = vpop.f32.mrf.mxu0
    %v5215 = vpop.f32.mrf.mxu0
    %v5216 = vadd.f32 0.0, %v5215
    %v5217 = vpop.f32.mrf.mxu0
    %5218 = vmatprep.mubr.bf16.mxu0 0
    %5219 = vmatmul.mubr.bf16.gmra.mxu0 %v5086
    %v5220 = vpop.f32.mrf.mxu0
    %v5221 = vadd.f32 0.0, %v5220
    %v5222 = vpop.f32.mrf.mxu0
    %v5223 = vpop.f32.mrf.mxu0
    %v5224 = vadd.f32 0.0, %v5223
    %v5225 = vpop.f32.mrf.mxu0
    %5226 = vmatprep.mubr.bf16.mxu0 0
    %5227 = vmatmul.mubr.bf16.gmra.mxu0 %v5087
    %v5228 = vpop.f32.mrf.mxu0
    %v5229 = vadd.f32 0.0, %v5228
    %v5230 = vpop.f32.mrf.mxu0
    %v5231 = vpop.f32.mrf.mxu0
    %v5232 = vadd.f32 0.0, %v5231
    %v5233 = vpop.f32.mrf.mxu0
    %5234 = vmatprep.mubr.bf16.mxu0 0
    %5235 = vmatmul.mubr.bf16.gmra.mxu0 %v5088
    %v5236 = vpop.f32.mrf.mxu0
    %v5237 = vadd.f32 0.0, %v5236
    %v5238 = vpop.f32.mrf.mxu0
    %v5239 = vpop.f32.mrf.mxu0
    %v5240 = vadd.f32 0.0, %v5239
    %v5241 = vpop.f32.mrf.mxu0
    %5242 = vmatprep.mubr.bf16.mxu0 0
    %5243 = vmatmul.mubr.bf16.gmra.mxu0 %v5089
    %v5244 = vpop.f32.mrf.mxu0
    %v5245 = vadd.f32 0.0, %v5244
    %v5246 = vpop.f32.mrf.mxu0
    %v5247 = vpop.f32.mrf.mxu0
    %v5248 = vadd.f32 0.0, %v5247
    %v5249 = vpop.f32.mrf.mxu0
    %5250 = vdwg.mxu0
    %v5251 = vadd.f32 %v5034, %v5189
    %v5252 = vadd.f32 %v5035, %v5192
    %v5253 = vadd.f32 %v5036, %v5197
    %v5254 = vadd.f32 %v5037, %v5200
    %v5255 = vadd.f32 %v5038, %v5205
    %v5256 = vadd.f32 %v5039, %v5208
    %v5257 = vadd.f32 %v5040, %v5213
    %v5258 = vadd.f32 %v5041, %v5216
    %v5259 = vadd.f32 %v5042, %v5221
    %v5260 = vadd.f32 %v5043, %v5224
    %v5261 = vadd.f32 %v5044, %v5229
    %v5262 = vadd.f32 %v5045, %v5232
    %v5263 = vadd.f32 %v5046, %v5237
    %v5264 = vadd.f32 %v5047, %v5240
    %v5265 = vadd.f32 %v5048, %v5245
    %v5266 = vadd.f32 %v5049, %v5248
    %v5267 = vld [vmem:[#allocation5 + $0x10] sm:$0xff]
    %v5268 = vld [vmem:[#allocation5 + $0x18] sm:$0xff]
    %v5269 = vld [vmem:[#allocation5 + $0x20] sm:$0xff]
    %v5270 = vld [vmem:[#allocation5 + $0x28] sm:$0xff]
    %v5271 = vld [vmem:[#allocation5 + $0x30] sm:$0xff]
    %v5272 = vld [vmem:[#allocation5 + $0x38] sm:$0xff]
    %v5273 = vld [vmem:[#allocation5 + $0x40] sm:$0xff]
    %v5274 = vld [vmem:[#allocation5 + $0x48] sm:$0xff]
    %v5275 = vld [vmem:[#allocation5 + $0x50] sm:$0xff]
    %v5276 = vld [vmem:[#allocation5 + $0x58] sm:$0xff]
    %v5277 = vld [vmem:[#allocation5 + $0x60] sm:$0xff]
    %v5278 = vld [vmem:[#allocation5 + $0x68] sm:$0xff]
    %v5279 = vld [vmem:[#allocation5 + $0x70] sm:$0xff]
    %v5280 = vld [vmem:[#allocation5 + $0x78] sm:$0xff]
    %v5281 = vld [vmem:[#allocation5 + $0x80] sm:$0xff]
    %v5282 = vld [vmem:[#allocation5 + $0x88] sm:$0xff]
    %v5283 = vpack.c.bf16 %v5268, %v5267
    %v5284 = vpack.c.bf16 %v5270, %v5269
    %v5285 = vpack.c.bf16 %v5272, %v5271
    %v5286 = vpack.c.bf16 %v5274, %v5273
    %v5287 = vpack.c.bf16 %v5276, %v5275
    %v5288 = vpack.c.bf16 %v5278, %v5277
    %v5289 = vpack.c.bf16 %v5280, %v5279
    %v5290 = vpack.c.bf16 %v5282, %v5281
    %v5291 = vld [vmem:[#allocation3 + $0x100] sm:$0xf]
    %v5292 = vld [vmem:[#allocation3 + $0x104] sm:$0xf]
    %v5293 = vld [vmem:[#allocation3 + $0x108] sm:$0xf]
    %v5294 = vld [vmem:[#allocation3 + $0x10c] sm:$0xf]
    %v5295 = vld [vmem:[#allocation3 + $0x110] sm:$0xf]
    %v5296 = vld [vmem:[#allocation3 + $0x114] sm:$0xf]
    %v5297 = vld [vmem:[#allocation3 + $0x118] sm:$0xf]
    %v5298 = vld [vmem:[#allocation3 + $0x11c] sm:$0xf]
    %v5299 = vld [vmem:[#allocation3 + $0x120] sm:$0xf]
    %v5300 = vld [vmem:[#allocation3 + $0x124] sm:$0xf]
    %v5301 = vld [vmem:[#allocation3 + $0x128] sm:$0xf]
    %v5302 = vld [vmem:[#allocation3 + $0x12c] sm:$0xf]
    %v5303 = vld [vmem:[#allocation3 + $0x130] sm:$0xf]
    %v5304 = vld [vmem:[#allocation3 + $0x134] sm:$0xf]
    %v5305 = vld [vmem:[#allocation3 + $0x138] sm:$0xf]
    %v5306 = vld [vmem:[#allocation3 + $0x13c] sm:$0xf]
    %v5323 = vunpack.c.l.b16 %v5291
    %v5324 = vunpack.c.l.b16 %v5292
    %v5325 = vunpack.c.l.b16 %v5293
    %v5326 = vunpack.c.l.b16 %v5294
    %v5327 = vunpack.c.l.b16 %v5295
    %v5328 = vunpack.c.l.b16 %v5296
    %v5329 = vunpack.c.l.b16 %v5297
    %v5330 = vunpack.c.l.b16 %v5298
    %v5331 = vunpack.c.l.b16 %v5299
    %v5332 = vunpack.c.l.b16 %v5300
    %v5333 = vunpack.c.l.b16 %v5301
    %v5334 = vunpack.c.l.b16 %v5302
    %v5335 = vunpack.c.l.b16 %v5303
    %v5336 = vunpack.c.l.b16 %v5304
    %v5337 = vunpack.c.l.b16 %v5305
    %v5338 = vunpack.c.l.b16 %v5306
    %v5339 = vpack.c.b16 %v5324, %v5323
    %v5340 = vpack.c.b16 %v5326, %v5325
    %v5341 = vpack.c.b16 %v5328, %v5327
    %v5342 = vpack.c.b16 %v5330, %v5329
    %v5343 = vpack.c.b16 %v5332, %v5331
    %v5344 = vpack.c.b16 %v5334, %v5333
    %v5345 = vpack.c.b16 %v5336, %v5335
    %v5346 = vpack.c.b16 %v5338, %v5337
    %5355 = vmatprep.subr.bf16.mxu0 0
    %5356 = vmatpush1.bf16.msra.mxu0 %v5346
    %5357 = vmatprep.subr.bf16.mxu0 0
    %5358 = vmatpush1.bf16.msra.mxu0 %v5345
    %5359 = vmatprep.subr.bf16.mxu0 0
    %5360 = vmatpush1.bf16.msra.mxu0 %v5344
    %5361 = vmatprep.subr.bf16.mxu0 0
    %5362 = vmatpush1.bf16.msra.mxu0 %v5343
    %5363 = vmatprep.subr.bf16.mxu0 0
    %5364 = vmatpush1.bf16.msra.mxu0 %v5342
    %5365 = vmatprep.subr.bf16.mxu0 0
    %5366 = vmatpush1.bf16.msra.mxu0 %v5341
    %5367 = vmatprep.subr.bf16.mxu0 0
    %5368 = vmatpush1.bf16.msra.mxu0 %v5340
    %5369 = vmatprep.subr.bf16.mxu0 0
    %5370 = vmatpush1.bf16.msra.mxu0 %v5339
    %5371 = vmatprep.subr.bf16.mxu0 0
    %5372 = vmatpush2.bf16.msra.mxu0 0
    %5373 = vmatprep.subr.bf16.mxu0 0
    %5374 = vmatpush2.bf16.msra.mxu0 0
    %5375 = vmatprep.subr.bf16.mxu0 0
    %5376 = vmatpush2.bf16.msra.mxu0 0
    %5377 = vmatprep.subr.bf16.mxu0 0
    %5378 = vmatpush2.bf16.msra.mxu0 0
    %5379 = vmatprep.subr.bf16.mxu0 0
    %5380 = vmatpush2.bf16.msra.mxu0 0
    %5381 = vmatprep.subr.bf16.mxu0 0
    %5382 = vmatpush2.bf16.msra.mxu0 0
    %5383 = vmatprep.subr.bf16.mxu0 0
    %5384 = vmatpush2.bf16.msra.mxu0 0
    %5385 = vmatprep.subr.bf16.mxu0 0
    %5386 = vmatpush2.bf16.msra.mxu0 0
    %5387 = vmatprep.mubr.bf16.mxu0 0
    %5388 = vmatmul.mubr.bf16.gmra.mxu0 %v5283
    %v5389 = vpop.f32.mrf.mxu0
    %v5390 = vadd.f32 0.0, %v5389
    %v5391 = vpop.f32.mrf.mxu0
    %v5392 = vpop.f32.mrf.mxu0
    %v5393 = vadd.f32 0.0, %v5392
    %v5394 = vpop.f32.mrf.mxu0
    %5395 = vmatprep.mubr.bf16.mxu0 0
    %5396 = vmatmul.mubr.bf16.gmra.mxu0 %v5284
    %v5397 = vpop.f32.mrf.mxu0
    %v5398 = vadd.f32 0.0, %v5397
    %v5399 = vpop.f32.mrf.mxu0
    %v5400 = vpop.f32.mrf.mxu0
    %v5401 = vadd.f32 0.0, %v5400
    %v5402 = vpop.f32.mrf.mxu0
    %5403 = vmatprep.mubr.bf16.mxu0 0
    %5404 = vmatmul.mubr.bf16.gmra.mxu0 %v5285
    %v5405 = vpop.f32.mrf.mxu0
    %v5406 = vadd.f32 0.0, %v5405
    %v5407 = vpop.f32.mrf.mxu0
    %v5408 = vpop.f32.mrf.mxu0
    %v5409 = vadd.f32 0.0, %v5408
    %v5410 = vpop.f32.mrf.mxu0
    %5411 = vmatprep.mubr.bf16.mxu0 0
    %5412 = vmatmul.mubr.bf16.gmra.mxu0 %v5286
    %v5413 = vpop.f32.mrf.mxu0
    %v5414 = vadd.f32 0.0, %v5413
    %v5415 = vpop.f32.mrf.mxu0
    %v5416 = vpop.f32.mrf.mxu0
    %v5417 = vadd.f32 0.0, %v5416
    %v5418 = vpop.f32.mrf.mxu0
    %5419 = vmatprep.mubr.bf16.mxu0 0
    %5420 = vmatmul.mubr.bf16.gmra.mxu0 %v5287
    %v5421 = vpop.f32.mrf.mxu0
    %v5422 = vadd.f32 0.0, %v5421
    %v5423 = vpop.f32.mrf.mxu0
    %v5424 = vpop.f32.mrf.mxu0
    %v5425 = vadd.f32 0.0, %v5424
    %v5426 = vpop.f32.mrf.mxu0
    %5427 = vmatprep.mubr.bf16.mxu0 0
    %5428 = vmatmul.mubr.bf16.gmra.mxu0 %v5288
    %v5429 = vpop.f32.mrf.mxu0
    %v5430 = vadd.f32 0.0, %v5429
    %v5431 = vpop.f32.mrf.mxu0
    %v5432 = vpop.f32.mrf.mxu0
    %v5433 = vadd.f32 0.0, %v5432
    %v5434 = vpop.f32.mrf.mxu0
    %5435 = vmatprep.mubr.bf16.mxu0 0
    %5436 = vmatmul.mubr.bf16.gmra.mxu0 %v5289
    %v5437 = vpop.f32.mrf.mxu0
    %v5438 = vadd.f32 0.0, %v5437
    %v5439 = vpop.f32.mrf.mxu0
    %v5440 = vpop.f32.mrf.mxu0
    %v5441 = vadd.f32 0.0, %v5440
    %v5442 = vpop.f32.mrf.mxu0
    %5443 = vmatprep.mubr.bf16.mxu0 0
    %5444 = vmatmul.mubr.bf16.gmra.mxu0 %v5290
    %v5445 = vpop.f32.mrf.mxu0
    %v5446 = vadd.f32 0.0, %v5445
    %v5447 = vpop.f32.mrf.mxu0
    %v5448 = vpop.f32.mrf.mxu0
    %v5449 = vadd.f32 0.0, %v5448
    %v5450 = vpop.f32.mrf.mxu0
    %5451 = vdwg.mxu0
    %v5452 = vadd.f32 %v5251, %v5390
    %v5453 = vadd.f32 %v5252, %v5393
    %v5454 = vadd.f32 %v5253, %v5398
    %v5455 = vadd.f32 %v5254, %v5401
    %v5456 = vadd.f32 %v5255, %v5406
    %v5457 = vadd.f32 %v5256, %v5409
    %v5458 = vadd.f32 %v5257, %v5414
    %v5459 = vadd.f32 %v5258, %v5417
    %v5460 = vadd.f32 %v5259, %v5422
    %v5461 = vadd.f32 %v5260, %v5425
    %v5462 = vadd.f32 %v5261, %v5430
    %v5463 = vadd.f32 %v5262, %v5433
    %v5464 = vadd.f32 %v5263, %v5438
    %v5465 = vadd.f32 %v5264, %v5441
    %v5466 = vadd.f32 %v5265, %v5446
    %v5467 = vadd.f32 %v5266, %v5449
    %v5468 = vld [vmem:[#allocation5 + $0x11] sm:$0xff]
    %v5469 = vld [vmem:[#allocation5 + $0x19] sm:$0xff]
    %v5470 = vld [vmem:[#allocation5 + $0x21] sm:$0xff]
    %v5471 = vld [vmem:[#allocation5 + $0x29] sm:$0xff]
    %v5472 = vld [vmem:[#allocation5 + $0x31] sm:$0xff]
    %v5473 = vld [vmem:[#allocation5 + $0x39] sm:$0xff]
    %v5474 = vld [vmem:[#allocation5 + $0x41] sm:$0xff]
    %v5475 = vld [vmem:[#allocation5 + $0x49] sm:$0xff]
    %v5476 = vld [vmem:[#allocation5 + $0x51] sm:$0xff]
    %v5477 = vld [vmem:[#allocation5 + $0x59] sm:$0xff]
    %v5478 = vld [vmem:[#allocation5 + $0x61] sm:$0xff]
    %v5479 = vld [vmem:[#allocation5 + $0x69] sm:$0xff]
    %v5480 = vld [vmem:[#allocation5 + $0x71] sm:$0xff]
    %v5481 = vld [vmem:[#allocation5 + $0x79] sm:$0xff]
    %v5482 = vld [vmem:[#allocation5 + $0x81] sm:$0xff]
    %v5483 = vld [vmem:[#allocation5 + $0x89] sm:$0xff]
    %v5484 = vmul.f32 %v5468, %v1269
    %v5485 = vmul.f32 %v5469, %v1273
    %v5486 = vmul.f32 %v5470, %v1277
    %v5487 = vmul.f32 %v5471, %v1281
    %v5488 = vmul.f32 %v5472, %v1285
    %v5489 = vmul.f32 %v5473, %v1289
    %v5490 = vmul.f32 %v5474, %v1293
    %v5491 = vmul.f32 %v5475, %v1297
    %v5492 = vmul.f32 %v5476, %v1301
    %v5493 = vmul.f32 %v5477, %v1305
    %v5494 = vmul.f32 %v5478, %v1309
    %v5495 = vmul.f32 %v5479, %v1313
    %v5496 = vmul.f32 %v5480, %v1317
    %v5497 = vmul.f32 %v5481, %v1321
    %v5498 = vmul.f32 %v5482, %v1325
    %v5499 = vmul.f32 %v5483, %v1329
    %v5500 = vpack.c.bf16 %v5485, %v5484
    %v5501 = vpack.c.bf16 %v5487, %v5486
    %v5502 = vpack.c.bf16 %v5489, %v5488
    %v5503 = vpack.c.bf16 %v5491, %v5490
    %v5504 = vpack.c.bf16 %v5493, %v5492
    %v5505 = vpack.c.bf16 %v5495, %v5494
    %v5506 = vpack.c.bf16 %v5497, %v5496
    %v5507 = vpack.c.bf16 %v5499, %v5498
    %v5508 = vld [vmem:[#allocation3 + $0x140] sm:$0xf]
    %v5509 = vld [vmem:[#allocation3 + $0x144] sm:$0xf]
    %v5510 = vld [vmem:[#allocation3 + $0x148] sm:$0xf]
    %v5511 = vld [vmem:[#allocation3 + $0x14c] sm:$0xf]
    %v5512 = vld [vmem:[#allocation3 + $0x150] sm:$0xf]
    %v5513 = vld [vmem:[#allocation3 + $0x154] sm:$0xf]
    %v5514 = vld [vmem:[#allocation3 + $0x158] sm:$0xf]
    %v5515 = vld [vmem:[#allocation3 + $0x15c] sm:$0xf]
    %v5516 = vld [vmem:[#allocation3 + $0x160] sm:$0xf]
    %v5517 = vld [vmem:[#allocation3 + $0x164] sm:$0xf]
    %v5518 = vld [vmem:[#allocation3 + $0x168] sm:$0xf]
    %v5519 = vld [vmem:[#allocation3 + $0x16c] sm:$0xf]
    %v5520 = vld [vmem:[#allocation3 + $0x170] sm:$0xf]
    %v5521 = vld [vmem:[#allocation3 + $0x174] sm:$0xf]
    %v5522 = vld [vmem:[#allocation3 + $0x178] sm:$0xf]
    %v5523 = vld [vmem:[#allocation3 + $0x17c] sm:$0xf]
    %v5540 = vunpack.c.l.b16 %v5508
    %v5541 = vunpack.c.l.b16 %v5509
    %v5542 = vunpack.c.l.b16 %v5510
    %v5543 = vunpack.c.l.b16 %v5511
    %v5544 = vunpack.c.l.b16 %v5512
    %v5545 = vunpack.c.l.b16 %v5513
    %v5546 = vunpack.c.l.b16 %v5514
    %v5547 = vunpack.c.l.b16 %v5515
    %v5548 = vunpack.c.l.b16 %v5516
    %v5549 = vunpack.c.l.b16 %v5517
    %v5550 = vunpack.c.l.b16 %v5518
    %v5551 = vunpack.c.l.b16 %v5519
    %v5552 = vunpack.c.l.b16 %v5520
    %v5553 = vunpack.c.l.b16 %v5521
    %v5554 = vunpack.c.l.b16 %v5522
    %v5555 = vunpack.c.l.b16 %v5523
    %v5556 = vpack.c.b16 %v5541, %v5540
    %v5557 = vpack.c.b16 %v5543, %v5542
    %v5558 = vpack.c.b16 %v5545, %v5544
    %v5559 = vpack.c.b16 %v5547, %v5546
    %v5560 = vpack.c.b16 %v5549, %v5548
    %v5561 = vpack.c.b16 %v5551, %v5550
    %v5562 = vpack.c.b16 %v5553, %v5552
    %v5563 = vpack.c.b16 %v5555, %v5554
    %5572 = vmatprep.subr.bf16.mxu0 0
    %5573 = vmatpush1.bf16.msra.mxu0 %v5563
    %5574 = vmatprep.subr.bf16.mxu0 0
    %5575 = vmatpush1.bf16.msra.mxu0 %v5562
    %5576 = vmatprep.subr.bf16.mxu0 0
    %5577 = vmatpush1.bf16.msra.mxu0 %v5561
    %5578 = vmatprep.subr.bf16.mxu0 0
    %5579 = vmatpush1.bf16.msra.mxu0 %v5560
    %5580 = vmatprep.subr.bf16.mxu0 0
    %5581 = vmatpush1.bf16.msra.mxu0 %v5559
    %5582 = vmatprep.subr.bf16.mxu0 0
    %5583 = vmatpush1.bf16.msra.mxu0 %v5558
    %5584 = vmatprep.subr.bf16.mxu0 0
    %5585 = vmatpush1.bf16.msra.mxu0 %v5557
    %5586 = vmatprep.subr.bf16.mxu0 0
    %5587 = vmatpush1.bf16.msra.mxu0 %v5556
    %5588 = vmatprep.subr.bf16.mxu0 0
    %5589 = vmatpush2.bf16.msra.mxu0 0
    %5590 = vmatprep.subr.bf16.mxu0 0
    %5591 = vmatpush2.bf16.msra.mxu0 0
    %5592 = vmatprep.subr.bf16.mxu0 0
    %5593 = vmatpush2.bf16.msra.mxu0 0
    %5594 = vmatprep.subr.bf16.mxu0 0
    %5595 = vmatpush2.bf16.msra.mxu0 0
    %5596 = vmatprep.subr.bf16.mxu0 0
    %5597 = vmatpush2.bf16.msra.mxu0 0
    %5598 = vmatprep.subr.bf16.mxu0 0
    %5599 = vmatpush2.bf16.msra.mxu0 0
    %5600 = vmatprep.subr.bf16.mxu0 0
    %5601 = vmatpush2.bf16.msra.mxu0 0
    %5602 = vmatprep.subr.bf16.mxu0 0
    %5603 = vmatpush2.bf16.msra.mxu0 0
    %5604 = vmatprep.mubr.bf16.mxu0 0
    %5605 = vmatmul.mubr.bf16.gmra.mxu0 %v5500
    %v5606 = vpop.f32.mrf.mxu0
    %v5607 = vadd.f32 0.0, %v5606
    %v5608 = vpop.f32.mrf.mxu0
    %v5609 = vpop.f32.mrf.mxu0
    %v5610 = vadd.f32 0.0, %v5609
    %v5611 = vpop.f32.mrf.mxu0
    %5612 = vmatprep.mubr.bf16.mxu0 0
    %5613 = vmatmul.mubr.bf16.gmra.mxu0 %v5501
    %v5614 = vpop.f32.mrf.mxu0
    %v5615 = vadd.f32 0.0, %v5614
    %v5616 = vpop.f32.mrf.mxu0
    %v5617 = vpop.f32.mrf.mxu0
    %v5618 = vadd.f32 0.0, %v5617
    %v5619 = vpop.f32.mrf.mxu0
    %5620 = vmatprep.mubr.bf16.mxu0 0
    %5621 = vmatmul.mubr.bf16.gmra.mxu0 %v5502
    %v5622 = vpop.f32.mrf.mxu0
    %v5623 = vadd.f32 0.0, %v5622
    %v5624 = vpop.f32.mrf.mxu0
    %v5625 = vpop.f32.mrf.mxu0
    %v5626 = vadd.f32 0.0, %v5625
    %v5627 = vpop.f32.mrf.mxu0
    %5628 = vmatprep.mubr.bf16.mxu0 0
    %5629 = vmatmul.mubr.bf16.gmra.mxu0 %v5503
    %v5630 = vpop.f32.mrf.mxu0
    %v5631 = vadd.f32 0.0, %v5630
    %v5632 = vpop.f32.mrf.mxu0
    %v5633 = vpop.f32.mrf.mxu0
    %v5634 = vadd.f32 0.0, %v5633
    %v5635 = vpop.f32.mrf.mxu0
    %5636 = vmatprep.mubr.bf16.mxu0 0
    %5637 = vmatmul.mubr.bf16.gmra.mxu0 %v5504
    %v5638 = vpop.f32.mrf.mxu0
    %v5639 = vadd.f32 0.0, %v5638
    %v5640 = vpop.f32.mrf.mxu0
    %v5641 = vpop.f32.mrf.mxu0
    %v5642 = vadd.f32 0.0, %v5641
    %v5643 = vpop.f32.mrf.mxu0
    %5644 = vmatprep.mubr.bf16.mxu0 0
    %5645 = vmatmul.mubr.bf16.gmra.mxu0 %v5505
    %v5646 = vpop.f32.mrf.mxu0
    %v5647 = vadd.f32 0.0, %v5646
    %v5648 = vpop.f32.mrf.mxu0
    %v5649 = vpop.f32.mrf.mxu0
    %v5650 = vadd.f32 0.0, %v5649
    %v5651 = vpop.f32.mrf.mxu0
    %5652 = vmatprep.mubr.bf16.mxu0 0
    %5653 = vmatmul.mubr.bf16.gmra.mxu0 %v5506
    %v5654 = vpop.f32.mrf.mxu0
    %v5655 = vadd.f32 0.0, %v5654
    %v5656 = vpop.f32.mrf.mxu0
    %v5657 = vpop.f32.mrf.mxu0
    %v5658 = vadd.f32 0.0, %v5657
    %v5659 = vpop.f32.mrf.mxu0
    %5660 = vmatprep.mubr.bf16.mxu0 0
    %5661 = vmatmul.mubr.bf16.gmra.mxu0 %v5507
    %v5662 = vpop.f32.mrf.mxu0
    %v5663 = vadd.f32 0.0, %v5662
    %v5664 = vpop.f32.mrf.mxu0
    %v5665 = vpop.f32.mrf.mxu0
    %v5666 = vadd.f32 0.0, %v5665
    %v5667 = vpop.f32.mrf.mxu0
    %5668 = vdwg.mxu0
    %v5669 = vadd.f32 %v5452, %v5607
    %v5670 = vadd.f32 %v5453, %v5610
    %v5671 = vadd.f32 %v5454, %v5615
    %v5672 = vadd.f32 %v5455, %v5618
    %v5673 = vadd.f32 %v5456, %v5623
    %v5674 = vadd.f32 %v5457, %v5626
    %v5675 = vadd.f32 %v5458, %v5631
    %v5676 = vadd.f32 %v5459, %v5634
    %v5677 = vadd.f32 %v5460, %v5639
    %v5678 = vadd.f32 %v5461, %v5642
    %v5679 = vadd.f32 %v5462, %v5647
    %v5680 = vadd.f32 %v5463, %v5650
    %v5681 = vadd.f32 %v5464, %v5655
    %v5682 = vadd.f32 %v5465, %v5658
    %v5683 = vadd.f32 %v5466, %v5663
    %v5684 = vadd.f32 %v5467, %v5666
    %v5685 = vld [vmem:[#allocation5 + $0x17] sm:$0xff]
    %v5686 = vld [vmem:[#allocation5 + $0x1f] sm:$0xff]
    %v5687 = vld [vmem:[#allocation5 + $0x27] sm:$0xff]
    %v5688 = vld [vmem:[#allocation5 + $0x2f] sm:$0xff]
    %v5689 = vld [vmem:[#allocation5 + $0x37] sm:$0xff]
    %v5690 = vld [vmem:[#allocation5 + $0x3f] sm:$0xff]
    %v5691 = vld [vmem:[#allocation5 + $0x47] sm:$0xff]
    %v5692 = vld [vmem:[#allocation5 + $0x4f] sm:$0xff]
    %v5693 = vld [vmem:[#allocation5 + $0x57] sm:$0xff]
    %v5694 = vld [vmem:[#allocation5 + $0x5f] sm:$0xff]
    %v5695 = vld [vmem:[#allocation5 + $0x67] sm:$0xff]
    %v5696 = vld [vmem:[#allocation5 + $0x6f] sm:$0xff]
    %v5697 = vld [vmem:[#allocation5 + $0x77] sm:$0xff]
    %v5698 = vld [vmem:[#allocation5 + $0x7f] sm:$0xff]
    %v5699 = vld [vmem:[#allocation5 + $0x87] sm:$0xff]
    %v5700 = vld [vmem:[#allocation5 + $0x8f] sm:$0xff]
    %v5701 = vmul.f32 %v5685, %v1517
    %v5702 = vmul.f32 %v5686, %v1521
    %v5703 = vmul.f32 %v5687, %v1525
    %v5704 = vmul.f32 %v5688, %v1529
    %v5705 = vmul.f32 %v5689, %v1533
    %v5706 = vmul.f32 %v5690, %v1537
    %v5707 = vmul.f32 %v5691, %v1541
    %v5708 = vmul.f32 %v5692, %v1545
    %v5709 = vmul.f32 %v5693, %v1549
    %v5710 = vmul.f32 %v5694, %v1553
    %v5711 = vmul.f32 %v5695, %v1557
    %v5712 = vmul.f32 %v5696, %v1561
    %v5713 = vmul.f32 %v5697, %v1565
    %v5714 = vmul.f32 %v5698, %v1569
    %v5715 = vmul.f32 %v5699, %v1573
    %v5716 = vmul.f32 %v5700, %v1577
    %v5717 = vpack.c.bf16 %v5702, %v5701
    %v5718 = vpack.c.bf16 %v5704, %v5703
    %v5719 = vpack.c.bf16 %v5706, %v5705
    %v5720 = vpack.c.bf16 %v5708, %v5707
    %v5721 = vpack.c.bf16 %v5710, %v5709
    %v5722 = vpack.c.bf16 %v5712, %v5711
    %v5723 = vpack.c.bf16 %v5714, %v5713
    %v5724 = vpack.c.bf16 %v5716, %v5715
    %v5725 = vld [vmem:[#allocation3 + $0x180] sm:$0xf]
    %v5726 = vld [vmem:[#allocation3 + $0x184] sm:$0xf]
    %v5727 = vld [vmem:[#allocation3 + $0x188] sm:$0xf]
    %v5728 = vld [vmem:[#allocation3 + $0x18c] sm:$0xf]
    %v5729 = vld [vmem:[#allocation3 + $0x190] sm:$0xf]
    %v5730 = vld [vmem:[#allocation3 + $0x194] sm:$0xf]
    %v5731 = vld [vmem:[#allocation3 + $0x198] sm:$0xf]
    %v5732 = vld [vmem:[#allocation3 + $0x19c] sm:$0xf]
    %v5733 = vld [vmem:[#allocation3 + $0x1a0] sm:$0xf]
    %v5734 = vld [vmem:[#allocation3 + $0x1a4] sm:$0xf]
    %v5735 = vld [vmem:[#allocation3 + $0x1a8] sm:$0xf]
    %v5736 = vld [vmem:[#allocation3 + $0x1ac] sm:$0xf]
    %v5737 = vld [vmem:[#allocation3 + $0x1b0] sm:$0xf]
    %v5738 = vld [vmem:[#allocation3 + $0x1b4] sm:$0xf]
    %v5739 = vld [vmem:[#allocation3 + $0x1b8] sm:$0xf]
    %v5740 = vld [vmem:[#allocation3 + $0x1bc] sm:$0xf]
    %v5757 = vunpack.c.l.b16 %v5725
    %v5758 = vunpack.c.l.b16 %v5726
    %v5759 = vunpack.c.l.b16 %v5727
    %v5760 = vunpack.c.l.b16 %v5728
    %v5761 = vunpack.c.l.b16 %v5729
    %v5762 = vunpack.c.l.b16 %v5730
    %v5763 = vunpack.c.l.b16 %v5731
    %v5764 = vunpack.c.l.b16 %v5732
    %v5765 = vunpack.c.l.b16 %v5733
    %v5766 = vunpack.c.l.b16 %v5734
    %v5767 = vunpack.c.l.b16 %v5735
    %v5768 = vunpack.c.l.b16 %v5736
    %v5769 = vunpack.c.l.b16 %v5737
    %v5770 = vunpack.c.l.b16 %v5738
    %v5771 = vunpack.c.l.b16 %v5739
    %v5772 = vunpack.c.l.b16 %v5740
    %v5773 = vpack.c.b16 %v5758, %v5757
    %v5774 = vpack.c.b16 %v5760, %v5759
    %v5775 = vpack.c.b16 %v5762, %v5761
    %v5776 = vpack.c.b16 %v5764, %v5763
    %v5777 = vpack.c.b16 %v5766, %v5765
    %v5778 = vpack.c.b16 %v5768, %v5767
    %v5779 = vpack.c.b16 %v5770, %v5769
    %v5780 = vpack.c.b16 %v5772, %v5771
    %5789 = vmatprep.subr.bf16.mxu0 0
    %5790 = vmatpush1.bf16.msra.mxu0 %v5780
    %5791 = vmatprep.subr.bf16.mxu0 0
    %5792 = vmatpush1.bf16.msra.mxu0 %v5779
    %5793 = vmatprep.subr.bf16.mxu0 0
    %5794 = vmatpush1.bf16.msra.mxu0 %v5778
    %5795 = vmatprep.subr.bf16.mxu0 0
    %5796 = vmatpush1.bf16.msra.mxu0 %v5777
    %5797 = vmatprep.subr.bf16.mxu0 0
    %5798 = vmatpush1.bf16.msra.mxu0 %v5776
    %5799 = vmatprep.subr.bf16.mxu0 0
    %5800 = vmatpush1.bf16.msra.mxu0 %v5775
    %5801 = vmatprep.subr.bf16.mxu0 0
    %5802 = vmatpush1.bf16.msra.mxu0 %v5774
    %5803 = vmatprep.subr.bf16.mxu0 0
    %5804 = vmatpush1.bf16.msra.mxu0 %v5773
    %5805 = vmatprep.subr.bf16.mxu0 0
    %5806 = vmatpush2.bf16.msra.mxu0 0
    %5807 = vmatprep.subr.bf16.mxu0 0
    %5808 = vmatpush2.bf16.msra.mxu0 0
    %5809 = vmatprep.subr.bf16.mxu0 0
    %5810 = vmatpush2.bf16.msra.mxu0 0
    %5811 = vmatprep.subr.bf16.mxu0 0
    %5812 = vmatpush2.bf16.msra.mxu0 0
    %5813 = vmatprep.subr.bf16.mxu0 0
    %5814 = vmatpush2.bf16.msra.mxu0 0
    %5815 = vmatprep.subr.bf16.mxu0 0
    %5816 = vmatpush2.bf16.msra.mxu0 0
    %5817 = vmatprep.subr.bf16.mxu0 0
    %5818 = vmatpush2.bf16.msra.mxu0 0
    %5819 = vmatprep.subr.bf16.mxu0 0
    %5820 = vmatpush2.bf16.msra.mxu0 0
    %5821 = vmatprep.mubr.bf16.mxu0 0
    %5822 = vmatmul.mubr.bf16.gmra.mxu0 %v5717
    %v5823 = vpop.f32.mrf.mxu0
    %v5824 = vadd.f32 0.0, %v5823
    %v5825 = vpop.f32.mrf.mxu0
    %v5826 = vpop.f32.mrf.mxu0
    %v5827 = vadd.f32 0.0, %v5826
    %v5828 = vpop.f32.mrf.mxu0
    %5829 = vmatprep.mubr.bf16.mxu0 0
    %5830 = vmatmul.mubr.bf16.gmra.mxu0 %v5718
    %v5831 = vpop.f32.mrf.mxu0
    %v5832 = vadd.f32 0.0, %v5831
    %v5833 = vpop.f32.mrf.mxu0
    %v5834 = vpop.f32.mrf.mxu0
    %v5835 = vadd.f32 0.0, %v5834
    %v5836 = vpop.f32.mrf.mxu0
    %5837 = vmatprep.mubr.bf16.mxu0 0
    %5838 = vmatmul.mubr.bf16.gmra.mxu0 %v5719
    %v5839 = vpop.f32.mrf.mxu0
    %v5840 = vadd.f32 0.0, %v5839
    %v5841 = vpop.f32.mrf.mxu0
    %v5842 = vpop.f32.mrf.mxu0
    %v5843 = vadd.f32 0.0, %v5842
    %v5844 = vpop.f32.mrf.mxu0
    %5845 = vmatprep.mubr.bf16.mxu0 0
    %5846 = vmatmul.mubr.bf16.gmra.mxu0 %v5720
    %v5847 = vpop.f32.mrf.mxu0
    %v5848 = vadd.f32 0.0, %v5847
    %v5849 = vpop.f32.mrf.mxu0
    %v5850 = vpop.f32.mrf.mxu0
    %v5851 = vadd.f32 0.0, %v5850
    %v5852 = vpop.f32.mrf.mxu0
    %5853 = vmatprep.mubr.bf16.mxu0 0
    %5854 = vmatmul.mubr.bf16.gmra.mxu0 %v5721
    %v5855 = vpop.f32.mrf.mxu0
    %v5856 = vadd.f32 0.0, %v5855
    %v5857 = vpop.f32.mrf.mxu0
    %v5858 = vpop.f32.mrf.mxu0
    %v5859 = vadd.f32 0.0, %v5858
    %v5860 = vpop.f32.mrf.mxu0
    %5861 = vmatprep.mubr.bf16.mxu0 0
    %5862 = vmatmul.mubr.bf16.gmra.mxu0 %v5722
    %v5863 = vpop.f32.mrf.mxu0
    %v5864 = vadd.f32 0.0, %v5863
    %v5865 = vpop.f32.mrf.mxu0
    %v5866 = vpop.f32.mrf.mxu0
    %v5867 = vadd.f32 0.0, %v5866
    %v5868 = vpop.f32.mrf.mxu0
    %5869 = vmatprep.mubr.bf16.mxu0 0
    %5870 = vmatmul.mubr.bf16.gmra.mxu0 %v5723
    %v5871 = vpop.f32.mrf.mxu0
    %v5872 = vadd.f32 0.0, %v5871
    %v5873 = vpop.f32.mrf.mxu0
    %v5874 = vpop.f32.mrf.mxu0
    %v5875 = vadd.f32 0.0, %v5874
    %v5876 = vpop.f32.mrf.mxu0
    %5877 = vmatprep.mubr.bf16.mxu0 0
    %5878 = vmatmul.mubr.bf16.gmra.mxu0 %v5724
    %v5879 = vpop.f32.mrf.mxu0
    %v5880 = vadd.f32 0.0, %v5879
    %v5881 = vpop.f32.mrf.mxu0
    %v5882 = vpop.f32.mrf.mxu0
    %v5883 = vadd.f32 0.0, %v5882
    %v5884 = vpop.f32.mrf.mxu0
    %5885 = vdwg.mxu0
    %v5886 = vadd.f32 %v5669, %v5824
    %v5887 = vadd.f32 %v5670, %v5827
    %v5888 = vadd.f32 %v5671, %v5832
    %v5889 = vadd.f32 %v5672, %v5835
    %v5890 = vadd.f32 %v5673, %v5840
    %v5891 = vadd.f32 %v5674, %v5843
    %v5892 = vadd.f32 %v5675, %v5848
    %v5893 = vadd.f32 %v5676, %v5851
    %v5894 = vadd.f32 %v5677, %v5856
    %v5895 = vadd.f32 %v5678, %v5859
    %v5896 = vadd.f32 %v5679, %v5864
    %v5897 = vadd.f32 %v5680, %v5867
    %v5898 = vadd.f32 %v5681, %v5872
    %v5899 = vadd.f32 %v5682, %v5875
    %v5900 = vadd.f32 %v5683, %v5880
    %v5901 = vadd.f32 %v5684, %v5883
    %v5902 = vld [vmem:[#allocation5 + $0x18] sm:$0xff]
    %v5903 = vld [vmem:[#allocation5 + $0x20] sm:$0xff]
    %v5904 = vld [vmem:[#allocation5 + $0x28] sm:$0xff]
    %v5905 = vld [vmem:[#allocation5 + $0x30] sm:$0xff]
    %v5906 = vld [vmem:[#allocation5 + $0x38] sm:$0xff]
    %v5907 = vld [vmem:[#allocation5 + $0x40] sm:$0xff]
    %v5908 = vld [vmem:[#allocation5 + $0x48] sm:$0xff]
    %v5909 = vld [vmem:[#allocation5 + $0x50] sm:$0xff]
    %v5910 = vld [vmem:[#allocation5 + $0x58] sm:$0xff]
    %v5911 = vld [vmem:[#allocation5 + $0x60] sm:$0xff]
    %v5912 = vld [vmem:[#allocation5 + $0x68] sm:$0xff]
    %v5913 = vld [vmem:[#allocation5 + $0x70] sm:$0xff]
    %v5914 = vld [vmem:[#allocation5 + $0x78] sm:$0xff]
    %v5915 = vld [vmem:[#allocation5 + $0x80] sm:$0xff]
    %v5916 = vld [vmem:[#allocation5 + $0x88] sm:$0xff]
    %v5917 = vld [vmem:[#allocation5 + $0x90] sm:$0xff]
    %v5918 = vmul.f32 %v5902, %v1761
    %v5919 = vmul.f32 %v5903, %v1765
    %v5920 = vmul.f32 %v5904, %v1769
    %v5921 = vmul.f32 %v5905, %v1773
    %v5922 = vmul.f32 %v5906, %v1777
    %v5923 = vmul.f32 %v5907, %v1781
    %v5924 = vmul.f32 %v5908, %v1785
    %v5925 = vmul.f32 %v5909, %v1789
    %v5926 = vmul.f32 %v5910, %v1793
    %v5927 = vmul.f32 %v5911, %v1797
    %v5928 = vmul.f32 %v5912, %v1801
    %v5929 = vmul.f32 %v5913, %v1805
    %v5930 = vmul.f32 %v5914, %v1809
    %v5931 = vmul.f32 %v5915, %v1813
    %v5932 = vmul.f32 %v5916, %v1817
    %v5933 = vmul.f32 %v5917, %v1821
    %v5934 = vpack.c.bf16 %v5919, %v5918
    %v5935 = vpack.c.bf16 %v5921, %v5920
    %v5936 = vpack.c.bf16 %v5923, %v5922
    %v5937 = vpack.c.bf16 %v5925, %v5924
    %v5938 = vpack.c.bf16 %v5927, %v5926
    %v5939 = vpack.c.bf16 %v5929, %v5928
    %v5940 = vpack.c.bf16 %v5931, %v5930
    %v5941 = vpack.c.bf16 %v5933, %v5932
    %v5942 = vld [vmem:[#allocation3 + $0x1c0] sm:$0xf]
    %v5943 = vld [vmem:[#allocation3 + $0x1c4] sm:$0xf]
    %v5944 = vld [vmem:[#allocation3 + $0x1c8] sm:$0xf]
    %v5945 = vld [vmem:[#allocation3 + $0x1cc] sm:$0xf]
    %v5946 = vld [vmem:[#allocation3 + $0x1d0] sm:$0xf]
    %v5947 = vld [vmem:[#allocation3 + $0x1d4] sm:$0xf]
    %v5948 = vld [vmem:[#allocation3 + $0x1d8] sm:$0xf]
    %v5949 = vld [vmem:[#allocation3 + $0x1dc] sm:$0xf]
    %v5950 = vld [vmem:[#allocation3 + $0x1e0] sm:$0xf]
    %v5951 = vld [vmem:[#allocation3 + $0x1e4] sm:$0xf]
    %v5952 = vld [vmem:[#allocation3 + $0x1e8] sm:$0xf]
    %v5953 = vld [vmem:[#allocation3 + $0x1ec] sm:$0xf]
    %v5954 = vld [vmem:[#allocation3 + $0x1f0] sm:$0xf]
    %v5955 = vld [vmem:[#allocation3 + $0x1f4] sm:$0xf]
    %v5956 = vld [vmem:[#allocation3 + $0x1f8] sm:$0xf]
    %v5957 = vld [vmem:[#allocation3 + $0x1fc] sm:$0xf]
    %v5974 = vunpack.c.l.b16 %v5942
    %v5975 = vunpack.c.l.b16 %v5943
    %v5976 = vunpack.c.l.b16 %v5944
    %v5977 = vunpack.c.l.b16 %v5945
    %v5978 = vunpack.c.l.b16 %v5946
    %v5979 = vunpack.c.l.b16 %v5947
    %v5980 = vunpack.c.l.b16 %v5948
    %v5981 = vunpack.c.l.b16 %v5949
    %v5982 = vunpack.c.l.b16 %v5950
    %v5983 = vunpack.c.l.b16 %v5951
    %v5984 = vunpack.c.l.b16 %v5952
    %v5985 = vunpack.c.l.b16 %v5953
    %v5986 = vunpack.c.l.b16 %v5954
    %v5987 = vunpack.c.l.b16 %v5955
    %v5988 = vunpack.c.l.b16 %v5956
    %v5989 = vunpack.c.l.b16 %v5957
    %v5990 = vpack.c.b16 %v5975, %v5974
    %v5991 = vpack.c.b16 %v5977, %v5976
    %v5992 = vpack.c.b16 %v5979, %v5978
    %v5993 = vpack.c.b16 %v5981, %v5980
    %v5994 = vpack.c.b16 %v5983, %v5982
    %v5995 = vpack.c.b16 %v5985, %v5984
    %v5996 = vpack.c.b16 %v5987, %v5986
    %v5997 = vpack.c.b16 %v5989, %v5988
    %6006 = vmatprep.subr.bf16.mxu0 0
    %6007 = vmatpush1.bf16.msra.mxu0 %v5997
    %6008 = vmatprep.subr.bf16.mxu0 0
    %6009 = vmatpush1.bf16.msra.mxu0 %v5996
    %6010 = vmatprep.subr.bf16.mxu0 0
    %6011 = vmatpush1.bf16.msra.mxu0 %v5995
    %6012 = vmatprep.subr.bf16.mxu0 0
    %6013 = vmatpush1.bf16.msra.mxu0 %v5994
    %6014 = vmatprep.subr.bf16.mxu0 0
    %6015 = vmatpush1.bf16.msra.mxu0 %v5993
    %6016 = vmatprep.subr.bf16.mxu0 0
    %6017 = vmatpush1.bf16.msra.mxu0 %v5992
    %6018 = vmatprep.subr.bf16.mxu0 0
    %6019 = vmatpush1.bf16.msra.mxu0 %v5991
    %6020 = vmatprep.subr.bf16.mxu0 0
    %6021 = vmatpush1.bf16.msra.mxu0 %v5990
    %6022 = vmatprep.subr.bf16.mxu0 0
    %6023 = vmatpush2.bf16.msra.mxu0 0
    %6024 = vmatprep.subr.bf16.mxu0 0
    %6025 = vmatpush2.bf16.msra.mxu0 0
    %6026 = vmatprep.subr.bf16.mxu0 0
    %6027 = vmatpush2.bf16.msra.mxu0 0
    %6028 = vmatprep.subr.bf16.mxu0 0
    %6029 = vmatpush2.bf16.msra.mxu0 0
    %6030 = vmatprep.subr.bf16.mxu0 0
    %6031 = vmatpush2.bf16.msra.mxu0 0
    %6032 = vmatprep.subr.bf16.mxu0 0
    %6033 = vmatpush2.bf16.msra.mxu0 0
    %6034 = vmatprep.subr.bf16.mxu0 0
    %6035 = vmatpush2.bf16.msra.mxu0 0
    %6036 = vmatprep.subr.bf16.mxu0 0
    %6037 = vmatpush2.bf16.msra.mxu0 0
    %6038 = vmatprep.mubr.bf16.mxu0 0
    %6039 = vmatmul.mubr.bf16.gmra.mxu0 %v5934
    %v6040 = vpop.f32.mrf.mxu0
    %v6041 = vadd.f32 0.0, %v6040
    %v6042 = vpop.f32.mrf.mxu0
    %v6043 = vpop.f32.mrf.mxu0
    %v6044 = vadd.f32 0.0, %v6043
    %v6045 = vpop.f32.mrf.mxu0
    %6046 = vmatprep.mubr.bf16.mxu0 0
    %6047 = vmatmul.mubr.bf16.gmra.mxu0 %v5935
    %v6048 = vpop.f32.mrf.mxu0
    %v6049 = vadd.f32 0.0, %v6048
    %v6050 = vpop.f32.mrf.mxu0
    %v6051 = vpop.f32.mrf.mxu0
    %v6052 = vadd.f32 0.0, %v6051
    %v6053 = vpop.f32.mrf.mxu0
    %6054 = vmatprep.mubr.bf16.mxu0 0
    %6055 = vmatmul.mubr.bf16.gmra.mxu0 %v5936
    %v6056 = vpop.f32.mrf.mxu0
    %v6057 = vadd.f32 0.0, %v6056
    %v6058 = vpop.f32.mrf.mxu0
    %v6059 = vpop.f32.mrf.mxu0
    %v6060 = vadd.f32 0.0, %v6059
    %v6061 = vpop.f32.mrf.mxu0
    %6062 = vmatprep.mubr.bf16.mxu0 0
    %6063 = vmatmul.mubr.bf16.gmra.mxu0 %v5937
    %v6064 = vpop.f32.mrf.mxu0
    %v6065 = vadd.f32 0.0, %v6064
    %v6066 = vpop.f32.mrf.mxu0
    %v6067 = vpop.f32.mrf.mxu0
    %v6068 = vadd.f32 0.0, %v6067
    %v6069 = vpop.f32.mrf.mxu0
    %6070 = vmatprep.mubr.bf16.mxu0 0
    %6071 = vmatmul.mubr.bf16.gmra.mxu0 %v5938
    %v6072 = vpop.f32.mrf.mxu0
    %v6073 = vadd.f32 0.0, %v6072
    %v6074 = vpop.f32.mrf.mxu0
    %v6075 = vpop.f32.mrf.mxu0
    %v6076 = vadd.f32 0.0, %v6075
    %v6077 = vpop.f32.mrf.mxu0
    %6078 = vmatprep.mubr.bf16.mxu0 0
    %6079 = vmatmul.mubr.bf16.gmra.mxu0 %v5939
    %v6080 = vpop.f32.mrf.mxu0
    %v6081 = vadd.f32 0.0, %v6080
    %v6082 = vpop.f32.mrf.mxu0
    %v6083 = vpop.f32.mrf.mxu0
    %v6084 = vadd.f32 0.0, %v6083
    %v6085 = vpop.f32.mrf.mxu0
    %6086 = vmatprep.mubr.bf16.mxu0 0
    %6087 = vmatmul.mubr.bf16.gmra.mxu0 %v5940
    %v6088 = vpop.f32.mrf.mxu0
    %v6089 = vadd.f32 0.0, %v6088
    %v6090 = vpop.f32.mrf.mxu0
    %v6091 = vpop.f32.mrf.mxu0
    %v6092 = vadd.f32 0.0, %v6091
    %v6093 = vpop.f32.mrf.mxu0
    %6094 = vmatprep.mubr.bf16.mxu0 0
    %6095 = vmatmul.mubr.bf16.gmra.mxu0 %v5941
    %v6096 = vpop.f32.mrf.mxu0
    %v6097 = vadd.f32 0.0, %v6096
    %v6098 = vpop.f32.mrf.mxu0
    %v6099 = vpop.f32.mrf.mxu0
    %v6100 = vadd.f32 0.0, %v6099
    %v6101 = vpop.f32.mrf.mxu0
    %6102 = vdwg.mxu0
    %v6103 = vadd.f32 %v5886, %v6041
    %v6104 = vadd.f32 %v5887, %v6044
    %v6105 = vadd.f32 %v5888, %v6049
    %v6106 = vadd.f32 %v5889, %v6052
    %v6107 = vadd.f32 %v5890, %v6057
    %v6108 = vadd.f32 %v5891, %v6060
    %v6109 = vadd.f32 %v5892, %v6065
    %v6110 = vadd.f32 %v5893, %v6068
    %v6111 = vadd.f32 %v5894, %v6073
    %v6112 = vadd.f32 %v5895, %v6076
    %v6113 = vadd.f32 %v5896, %v6081
    %v6114 = vadd.f32 %v5897, %v6084
    %v6115 = vadd.f32 %v5898, %v6089
    %v6116 = vadd.f32 %v5899, %v6092
    %v6117 = vadd.f32 %v5900, %v6097
    %v6118 = vadd.f32 %v5901, %v6100
    %v6119 = vld [vmem:[#allocation5 + $0x19] sm:$0xff]
    %v6120 = vld [vmem:[#allocation5 + $0x21] sm:$0xff]
    %v6121 = vld [vmem:[#allocation5 + $0x29] sm:$0xff]
    %v6122 = vld [vmem:[#allocation5 + $0x31] sm:$0xff]
    %v6123 = vld [vmem:[#allocation5 + $0x39] sm:$0xff]
    %v6124 = vld [vmem:[#allocation5 + $0x41] sm:$0xff]
    %v6125 = vld [vmem:[#allocation5 + $0x49] sm:$0xff]
    %v6126 = vld [vmem:[#allocation5 + $0x51] sm:$0xff]
    %v6127 = vld [vmem:[#allocation5 + $0x59] sm:$0xff]
    %v6128 = vld [vmem:[#allocation5 + $0x61] sm:$0xff]
    %v6129 = vld [vmem:[#allocation5 + $0x69] sm:$0xff]
    %v6130 = vld [vmem:[#allocation5 + $0x71] sm:$0xff]
    %v6131 = vld [vmem:[#allocation5 + $0x79] sm:$0xff]
    %v6132 = vld [vmem:[#allocation5 + $0x81] sm:$0xff]
    %v6133 = vld [vmem:[#allocation5 + $0x89] sm:$0xff]
    %v6134 = vld [vmem:[#allocation5 + $0x91] sm:$0xff]
    %v6135 = vmul.f32 %v6119, %v2009
    %v6136 = vmul.f32 %v6120, %v2013
    %v6137 = vmul.f32 %v6121, %v2017
    %v6138 = vmul.f32 %v6122, %v2021
    %v6139 = vmul.f32 %v6123, %v2025
    %v6140 = vmul.f32 %v6124, %v2029
    %v6141 = vmul.f32 %v6125, %v2033
    %v6142 = vmul.f32 %v6126, %v2037
    %v6143 = vmul.f32 %v6127, %v2041
    %v6144 = vmul.f32 %v6128, %v2045
    %v6145 = vmul.f32 %v6129, %v2049
    %v6146 = vmul.f32 %v6130, %v2053
    %v6147 = vmul.f32 %v6131, %v2057
    %v6148 = vmul.f32 %v6132, %v2061
    %v6149 = vmul.f32 %v6133, %v2065
    %v6150 = vmul.f32 %v6134, %v2069
    %v6151 = vpack.c.bf16 %v6136, %v6135
    %v6152 = vpack.c.bf16 %v6138, %v6137
    %v6153 = vpack.c.bf16 %v6140, %v6139
    %v6154 = vpack.c.bf16 %v6142, %v6141
    %v6155 = vpack.c.bf16 %v6144, %v6143
    %v6156 = vpack.c.bf16 %v6146, %v6145
    %v6157 = vpack.c.bf16 %v6148, %v6147
    %v6158 = vpack.c.bf16 %v6150, %v6149
    %v6159 = vld [vmem:[#allocation3 + $0x200] sm:$0xf]
    %v6160 = vld [vmem:[#allocation3 + $0x204] sm:$0xf]
    %v6161 = vld [vmem:[#allocation3 + $0x208] sm:$0xf]
    %v6162 = vld [vmem:[#allocation3 + $0x20c] sm:$0xf]
    %v6163 = vld [vmem:[#allocation3 + $0x210] sm:$0xf]
    %v6164 = vld [vmem:[#allocation3 + $0x214] sm:$0xf]
    %v6165 = vld [vmem:[#allocation3 + $0x218] sm:$0xf]
    %v6166 = vld [vmem:[#allocation3 + $0x21c] sm:$0xf]
    %v6167 = vld [vmem:[#allocation3 + $0x220] sm:$0xf]
    %v6168 = vld [vmem:[#allocation3 + $0x224] sm:$0xf]
    %v6169 = vld [vmem:[#allocation3 + $0x228] sm:$0xf]
    %v6170 = vld [vmem:[#allocation3 + $0x22c] sm:$0xf]
    %v6171 = vld [vmem:[#allocation3 + $0x230] sm:$0xf]
    %v6172 = vld [vmem:[#allocation3 + $0x234] sm:$0xf]
    %v6173 = vld [vmem:[#allocation3 + $0x238] sm:$0xf]
    %v6174 = vld [vmem:[#allocation3 + $0x23c] sm:$0xf]
    %v6191 = vunpack.c.l.b16 %v6159
    %v6192 = vunpack.c.l.b16 %v6160
    %v6193 = vunpack.c.l.b16 %v6161
    %v6194 = vunpack.c.l.b16 %v6162
    %v6195 = vunpack.c.l.b16 %v6163
    %v6196 = vunpack.c.l.b16 %v6164
    %v6197 = vunpack.c.l.b16 %v6165
    %v6198 = vunpack.c.l.b16 %v6166
    %v6199 = vunpack.c.l.b16 %v6167
    %v6200 = vunpack.c.l.b16 %v6168
    %v6201 = vunpack.c.l.b16 %v6169
    %v6202 = vunpack.c.l.b16 %v6170
    %v6203 = vunpack.c.l.b16 %v6171
    %v6204 = vunpack.c.l.b16 %v6172
    %v6205 = vunpack.c.l.b16 %v6173
    %v6206 = vunpack.c.l.b16 %v6174
    %v6207 = vpack.c.b16 %v6192, %v6191
    %v6208 = vpack.c.b16 %v6194, %v6193
    %v6209 = vpack.c.b16 %v6196, %v6195
    %v6210 = vpack.c.b16 %v6198, %v6197
    %v6211 = vpack.c.b16 %v6200, %v6199
    %v6212 = vpack.c.b16 %v6202, %v6201
    %v6213 = vpack.c.b16 %v6204, %v6203
    %v6214 = vpack.c.b16 %v6206, %v6205
    %6223 = vmatprep.subr.bf16.mxu0 0
    %6224 = vmatpush1.bf16.msra.mxu0 %v6214
    %6225 = vmatprep.subr.bf16.mxu0 0
    %6226 = vmatpush1.bf16.msra.mxu0 %v6213
    %6227 = vmatprep.subr.bf16.mxu0 0
    %6228 = vmatpush1.bf16.msra.mxu0 %v6212
    %6229 = vmatprep.subr.bf16.mxu0 0
    %6230 = vmatpush1.bf16.msra.mxu0 %v6211
    %6231 = vmatprep.subr.bf16.mxu0 0
    %6232 = vmatpush1.bf16.msra.mxu0 %v6210
    %6233 = vmatprep.subr.bf16.mxu0 0
    %6234 = vmatpush1.bf16.msra.mxu0 %v6209
    %6235 = vmatprep.subr.bf16.mxu0 0
    %6236 = vmatpush1.bf16.msra.mxu0 %v6208
    %6237 = vmatprep.subr.bf16.mxu0 0
    %6238 = vmatpush1.bf16.msra.mxu0 %v6207
    %6239 = vmatprep.subr.bf16.mxu0 0
    %6240 = vmatpush2.bf16.msra.mxu0 0
    %6241 = vmatprep.subr.bf16.mxu0 0
    %6242 = vmatpush2.bf16.msra.mxu0 0
    %6243 = vmatprep.subr.bf16.mxu0 0
    %6244 = vmatpush2.bf16.msra.mxu0 0
    %6245 = vmatprep.subr.bf16.mxu0 0
    %6246 = vmatpush2.bf16.msra.mxu0 0
    %6247 = vmatprep.subr.bf16.mxu0 0
    %6248 = vmatpush2.bf16.msra.mxu0 0
    %6249 = vmatprep.subr.bf16.mxu0 0
    %6250 = vmatpush2.bf16.msra.mxu0 0
    %6251 = vmatprep.subr.bf16.mxu0 0
    %6252 = vmatpush2.bf16.msra.mxu0 0
    %6253 = vmatprep.subr.bf16.mxu0 0
    %6254 = vmatpush2.bf16.msra.mxu0 0
    %6255 = vmatprep.mubr.bf16.mxu0 0
    %6256 = vmatmul.mubr.bf16.gmra.mxu0 %v6151
    %v6257 = vpop.f32.mrf.mxu0
    %v6258 = vadd.f32 0.0, %v6257
    %v6259 = vpop.f32.mrf.mxu0
    %v6260 = vpop.f32.mrf.mxu0
    %v6261 = vadd.f32 0.0, %v6260
    %v6262 = vpop.f32.mrf.mxu0
    %6263 = vmatprep.mubr.bf16.mxu0 0
    %6264 = vmatmul.mubr.bf16.gmra.mxu0 %v6152
    %v6265 = vpop.f32.mrf.mxu0
    %v6266 = vadd.f32 0.0, %v6265
    %v6267 = vpop.f32.mrf.mxu0
    %v6268 = vpop.f32.mrf.mxu0
    %v6269 = vadd.f32 0.0, %v6268
    %v6270 = vpop.f32.mrf.mxu0
    %6271 = vmatprep.mubr.bf16.mxu0 0
    %6272 = vmatmul.mubr.bf16.gmra.mxu0 %v6153
    %v6273 = vpop.f32.mrf.mxu0
    %v6274 = vadd.f32 0.0, %v6273
    %v6275 = vpop.f32.mrf.mxu0
    %v6276 = vpop.f32.mrf.mxu0
    %v6277 = vadd.f32 0.0, %v6276
    %v6278 = vpop.f32.mrf.mxu0
    %6279 = vmatprep.mubr.bf16.mxu0 0
    %6280 = vmatmul.mubr.bf16.gmra.mxu0 %v6154
    %v6281 = vpop.f32.mrf.mxu0
    %v6282 = vadd.f32 0.0, %v6281
    %v6283 = vpop.f32.mrf.mxu0
    %v6284 = vpop.f32.mrf.mxu0
    %v6285 = vadd.f32 0.0, %v6284
    %v6286 = vpop.f32.mrf.mxu0
    %6287 = vmatprep.mubr.bf16.mxu0 0
    %6288 = vmatmul.mubr.bf16.gmra.mxu0 %v6155
    %v6289 = vpop.f32.mrf.mxu0
    %v6290 = vadd.f32 0.0, %v6289
    %v6291 = vpop.f32.mrf.mxu0
    %v6292 = vpop.f32.mrf.mxu0
    %v6293 = vadd.f32 0.0, %v6292
    %v6294 = vpop.f32.mrf.mxu0
    %6295 = vmatprep.mubr.bf16.mxu0 0
    %6296 = vmatmul.mubr.bf16.gmra.mxu0 %v6156
    %v6297 = vpop.f32.mrf.mxu0
    %v6298 = vadd.f32 0.0, %v6297
    %v6299 = vpop.f32.mrf.mxu0
    %v6300 = vpop.f32.mrf.mxu0
    %v6301 = vadd.f32 0.0, %v6300
    %v6302 = vpop.f32.mrf.mxu0
    %6303 = vmatprep.mubr.bf16.mxu0 0
    %6304 = vmatmul.mubr.bf16.gmra.mxu0 %v6157
    %v6305 = vpop.f32.mrf.mxu0
    %v6306 = vadd.f32 0.0, %v6305
    %v6307 = vpop.f32.mrf.mxu0
    %v6308 = vpop.f32.mrf.mxu0
    %v6309 = vadd.f32 0.0, %v6308
    %v6310 = vpop.f32.mrf.mxu0
    %6311 = vmatprep.mubr.bf16.mxu0 0
    %6312 = vmatmul.mubr.bf16.gmra.mxu0 %v6158
    %v6313 = vpop.f32.mrf.mxu0
    %v6314 = vadd.f32 0.0, %v6313
    %v6315 = vpop.f32.mrf.mxu0
    %v6316 = vpop.f32.mrf.mxu0
    %v6317 = vadd.f32 0.0, %v6316
    %v6318 = vpop.f32.mrf.mxu0
    %6319 = vdwg.mxu0
    %v6320 = vadd.f32 %v6103, %v6258
    %v6321 = vadd.f32 %v6104, %v6261
    %v6322 = vadd.f32 %v6105, %v6266
    %v6323 = vadd.f32 %v6106, %v6269
    %v6324 = vadd.f32 %v6107, %v6274
    %v6325 = vadd.f32 %v6108, %v6277
    %v6326 = vadd.f32 %v6109, %v6282
    %v6327 = vadd.f32 %v6110, %v6285
    %v6328 = vadd.f32 %v6111, %v6290
    %v6329 = vadd.f32 %v6112, %v6293
    %v6330 = vadd.f32 %v6113, %v6298
    %v6331 = vadd.f32 %v6114, %v6301
    %v6332 = vadd.f32 %v6115, %v6306
    %v6333 = vadd.f32 %v6116, %v6309
    %v6334 = vadd.f32 %v6117, %v6314
    %v6335 = vadd.f32 %v6118, %v6317
    %v6336 = vadd.f32 %v6320, %v6321
    %v6337 = vadd.f32 %v6336, %v6322
    %v6338 = vadd.f32 %v6337, %v6323
    %v6339 = vadd.f32 %v6338, %v6324
    %v6340 = vadd.f32 %v6339, %v6325
    %v6341 = vadd.f32 %v6340, %v6326
    %v6342 = vadd.f32 %v6341, %v6327
    %v6343 = vadd.f32 %v6342, %v6328
    %v6344 = vadd.f32 %v6343, %v6329
    %v6345 = vadd.f32 %v6344, %v6330
    %v6346 = vadd.f32 %v6345, %v6331
    %v6347 = vadd.f32 %v6346, %v6332
    %v6348 = vadd.f32 %v6347, %v6333
    %v6349 = vadd.f32 %v6348, %v6334
    %v6350 = vadd.f32 %v6349, %v6335
    %v6351 = vrot.slane %v6350, 4
    %v6352 = vadd.f32 %v6350, %v6351
    %v6353 = vrot.slane %v6352, 2
    %v6354 = vadd.f32 %v6352, %v6353
    %v6355 = vrot.slane %v6354, 1
    %v6356 = vadd.f32 %v6354, %v6355
    %v6357 = vmul.f32 %v6356, %v2256
    %v6358 = vmul.f32 %v6320, %v6320
    %v6359 = vmul.f32 %v6321, %v6321
    %v6360 = vmul.f32 %v6322, %v6322
    %v6361 = vmul.f32 %v6323, %v6323
    %v6362 = vmul.f32 %v6324, %v6324
    %v6363 = vmul.f32 %v6325, %v6325
    %v6364 = vmul.f32 %v6326, %v6326
    %v6365 = vmul.f32 %v6327, %v6327
    %v6366 = vmul.f32 %v6328, %v6328
    %v6367 = vmul.f32 %v6329, %v6329
    %v6368 = vmul.f32 %v6330, %v6330
    %v6369 = vmul.f32 %v6331, %v6331
    %v6370 = vmul.f32 %v6332, %v6332
    %v6371 = vmul.f32 %v6333, %v6333
    %v6372 = vmul.f32 %v6334, %v6334
    %v6373 = vmul.f32 %v6335, %v6335
    %v6374 = vadd.f32 %v6358, %v6359
    %v6375 = vadd.f32 %v6374, %v6360
    %v6376 = vadd.f32 %v6375, %v6361
    %v6377 = vadd.f32 %v6376, %v6362
    %v6378 = vadd.f32 %v6377, %v6363
    %v6379 = vadd.f32 %v6378, %v6364
    %v6380 = vadd.f32 %v6379, %v6365
    %v6381 = vadd.f32 %v6380, %v6366
    %v6382 = vadd.f32 %v6381, %v6367
    %v6383 = vadd.f32 %v6382, %v6368
    %v6384 = vadd.f32 %v6383, %v6369
    %v6385 = vadd.f32 %v6384, %v6370
    %v6386 = vadd.f32 %v6385, %v6371
    %v6387 = vadd.f32 %v6386, %v6372
    %v6388 = vadd.f32 %v6387, %v6373
    %v6389 = vrot.slane %v6388, 4
    %v6390 = vadd.f32 %v6388, %v6389
    %v6391 = vrot.slane %v6390, 2
    %v6392 = vadd.f32 %v6390, %v6391
    %v6393 = vrot.slane %v6392, 1
    %v6394 = vadd.f32 %v6392, %v6393
    %v6395 = vmul.f32 %v6394, %v2256
    %v6396 = vmul.f32 %v6357, %v6357
    %v6397 = vsub.f32 %v6395, %v6396
    %v6398 = vmax.f32 %v6397, 0.0
    %v6399 = vadd.f32 %v6398, 1e-05
    %v6400 = vrsqrt.pop %v6399
    %v6401 = vmul.f32 %v4413, %v6400
    %v6402 = vlaneseq
    %v6403 = vshrl.u32 %v6402, 7
    %v6404 = vsub.s32 0, %v6403
    %v6405 = vrot.slane %v6401, %v6404
    %v6406 = vmul.f32 %v6320, %v6405
    %v6407 = vmul.f32 %v6321, %v6405
    %v6408 = vmul.f32 %v6322, %v6405
    %v6409 = vmul.f32 %v6323, %v6405
    %v6410 = vmul.f32 %v6324, %v6405
    %v6411 = vmul.f32 %v6325, %v6405
    %v6412 = vmul.f32 %v6326, %v6405
    %v6413 = vmul.f32 %v6327, %v6405
    %v6414 = vmul.f32 %v6328, %v6405
    %v6415 = vmul.f32 %v6329, %v6405
    %v6416 = vmul.f32 %v6330, %v6405
    %v6417 = vmul.f32 %v6331, %v6405
    %v6418 = vmul.f32 %v6332, %v6405
    %v6419 = vmul.f32 %v6333, %v6405
    %v6420 = vmul.f32 %v6334, %v6405
    %v6421 = vmul.f32 %v6335, %v6405
    %v6422 = vmul.f32 %v6357, %v6401
    %v6423 = vsub.f32 %v4414, %v6422
    %v6424 = vlaneseq
    %v6425 = vshrl.u32 %v6424, 7
    %v6426 = vsub.s32 0, %v6425
    %v6427 = vrot.slane %v6423, %v6426
    %v6428 = vadd.f32 %v6406, %v6427
    %v6429 = vadd.f32 %v6407, %v6427
    %v6430 = vadd.f32 %v6408, %v6427
    %v6431 = vadd.f32 %v6409, %v6427
    %v6432 = vadd.f32 %v6410, %v6427
    %v6433 = vadd.f32 %v6411, %v6427
    %v6434 = vadd.f32 %v6412, %v6427
    %v6435 = vadd.f32 %v6413, %v6427
    %v6436 = vadd.f32 %v6414, %v6427
    %v6437 = vadd.f32 %v6415, %v6427
    %v6438 = vadd.f32 %v6416, %v6427
    %v6439 = vadd.f32 %v6417, %v6427
    %v6440 = vadd.f32 %v6418, %v6427
    %v6441 = vadd.f32 %v6419, %v6427
    %v6442 = vadd.f32 %v6420, %v6427
    %v6443 = vadd.f32 %v6421, %v6427
    %v6444 = vmax.f32 %v6428, 0.0
    %v6445 = vmax.f32 %v6429, 0.0
    %v6446 = vmax.f32 %v6430, 0.0
    %v6447 = vmax.f32 %v6431, 0.0
    %v6448 = vmax.f32 %v6432, 0.0
    %v6449 = vmax.f32 %v6433, 0.0
    %v6450 = vmax.f32 %v6434, 0.0
    %v6451 = vmax.f32 %v6435, 0.0
    %v6452 = vmax.f32 %v6436, 0.0
    %v6453 = vmax.f32 %v6437, 0.0
    %v6454 = vmax.f32 %v6438, 0.0
    %v6455 = vmax.f32 %v6439, 0.0
    %v6456 = vmax.f32 %v6440, 0.0
    %v6457 = vmax.f32 %v6441, 0.0
    %v6458 = vmax.f32 %v6442, 0.0
    %v6459 = vmax.f32 %v6443, 0.0
    %v6460 = vpack.c.bf16 %v6445, %v6444
    %v6461 = vpack.c.bf16 %v6447, %v6446
    %v6462 = vpack.c.bf16 %v6449, %v6448
    %v6463 = vpack.c.bf16 %v6451, %v6450
    %v6464 = vpack.c.bf16 %v6453, %v6452
    %v6465 = vpack.c.bf16 %v6455, %v6454
    %v6466 = vpack.c.bf16 %v6457, %v6456
    %v6467 = vpack.c.bf16 %v6459, %v6458
    %v6468 = vld [vmem:[%s5] sm:$0xf]
    %v6469 = vld [vmem:[%s5 + $0x4] sm:$0xf]
    %v6470 = vld [vmem:[%s5 + $0x8] sm:$0xf]
    %v6471 = vld [vmem:[%s5 + $0xc] sm:$0xf]
    %v6472 = vld [vmem:[%s5 + $0x10] sm:$0xf]
    %v6473 = vld [vmem:[%s5 + $0x14] sm:$0xf]
    %v6474 = vld [vmem:[%s5 + $0x18] sm:$0xf]
    %v6475 = vld [vmem:[%s5 + $0x1c] sm:$0xf]
    %v6476 = vld [vmem:[%s5 + $0x20] sm:$0xf]
    %v6477 = vld [vmem:[%s5 + $0x24] sm:$0xf]
    %v6478 = vld [vmem:[%s5 + $0x28] sm:$0xf]
    %v6479 = vld [vmem:[%s5 + $0x2c] sm:$0xf]
    %v6480 = vld [vmem:[%s5 + $0x30] sm:$0xf]
    %v6481 = vld [vmem:[%s5 + $0x34] sm:$0xf]
    %v6482 = vld [vmem:[%s5 + $0x38] sm:$0xf]
    %v6483 = vld [vmem:[%s5 + $0x3c] sm:$0xf]
    %v6500 = vunpack.c.l.b16 %v6468
    %v6501 = vunpack.c.l.b16 %v6469
    %v6502 = vunpack.c.l.b16 %v6470
    %v6503 = vunpack.c.l.b16 %v6471
    %v6504 = vunpack.c.l.b16 %v6472
    %v6505 = vunpack.c.l.b16 %v6473
    %v6506 = vunpack.c.l.b16 %v6474
    %v6507 = vunpack.c.l.b16 %v6475
    %v6508 = vunpack.c.l.b16 %v6476
    %v6509 = vunpack.c.l.b16 %v6477
    %v6510 = vunpack.c.l.b16 %v6478
    %v6511 = vunpack.c.l.b16 %v6479
    %v6512 = vunpack.c.l.b16 %v6480
    %v6513 = vunpack.c.l.b16 %v6481
    %v6514 = vunpack.c.l.b16 %v6482
    %v6515 = vunpack.c.l.b16 %v6483
    %v6516 = vpack.c.b16 %v6501, %v6500
    %v6517 = vpack.c.b16 %v6503, %v6502
    %v6518 = vpack.c.b16 %v6505, %v6504
    %v6519 = vpack.c.b16 %v6507, %v6506
    %v6520 = vpack.c.b16 %v6509, %v6508
    %v6521 = vpack.c.b16 %v6511, %v6510
    %v6522 = vpack.c.b16 %v6513, %v6512
    %v6523 = vpack.c.b16 %v6515, %v6514
    %6532 = vmatprep.subr.bf16.mxu0 0
    %6533 = vmatpush1.bf16.msra.mxu0 %v6523
    %6534 = vmatprep.subr.bf16.mxu0 0
    %6535 = vmatpush1.bf16.msra.mxu0 %v6522
    %6536 = vmatprep.subr.bf16.mxu0 0
    %6537 = vmatpush1.bf16.msra.mxu0 %v6521
    %6538 = vmatprep.subr.bf16.mxu0 0
    %6539 = vmatpush1.bf16.msra.mxu0 %v6520
    %6540 = vmatprep.subr.bf16.mxu0 0
    %6541 = vmatpush1.bf16.msra.mxu0 %v6519
    %6542 = vmatprep.subr.bf16.mxu0 0
    %6543 = vmatpush1.bf16.msra.mxu0 %v6518
    %6544 = vmatprep.subr.bf16.mxu0 0
    %6545 = vmatpush1.bf16.msra.mxu0 %v6517
    %6546 = vmatprep.subr.bf16.mxu0 0
    %6547 = vmatpush1.bf16.msra.mxu0 %v6516
    %6548 = vmatprep.subr.bf16.mxu0 0
    %6549 = vmatpush2.bf16.msra.mxu0 0
    %6550 = vmatprep.subr.bf16.mxu0 0
    %6551 = vmatpush2.bf16.msra.mxu0 0
    %6552 = vmatprep.subr.bf16.mxu0 0
    %6553 = vmatpush2.bf16.msra.mxu0 0
    %6554 = vmatprep.subr.bf16.mxu0 0
    %6555 = vmatpush2.bf16.msra.mxu0 0
    %6556 = vmatprep.subr.bf16.mxu0 0
    %6557 = vmatpush2.bf16.msra.mxu0 0
    %6558 = vmatprep.subr.bf16.mxu0 0
    %6559 = vmatpush2.bf16.msra.mxu0 0
    %6560 = vmatprep.subr.bf16.mxu0 0
    %6561 = vmatpush2.bf16.msra.mxu0 0
    %6562 = vmatprep.subr.bf16.mxu0 0
    %6563 = vmatpush2.bf16.msra.mxu0 0
    %6564 = vmatprep.mubr.bf16.mxu0 0
    %6565 = vmatmul.mubr.bf16.gmra.mxu0 %v6460
    %v6566 = vpop.f32.mrf.mxu0
    %v6567 = vadd.f32 0.0, %v6566
    %v6568 = vpop.f32.mrf.mxu0
    %v6569 = vpop.f32.mrf.mxu0
    %v6570 = vadd.f32 0.0, %v6569
    %v6571 = vpop.f32.mrf.mxu0
    %6572 = vmatprep.mubr.bf16.mxu0 0
    %6573 = vmatmul.mubr.bf16.gmra.mxu0 %v6461
    %v6574 = vpop.f32.mrf.mxu0
    %v6575 = vadd.f32 0.0, %v6574
    %v6576 = vpop.f32.mrf.mxu0
    %v6577 = vpop.f32.mrf.mxu0
    %v6578 = vadd.f32 0.0, %v6577
    %v6579 = vpop.f32.mrf.mxu0
    %6580 = vmatprep.mubr.bf16.mxu0 0
    %6581 = vmatmul.mubr.bf16.gmra.mxu0 %v6462
    %v6582 = vpop.f32.mrf.mxu0
    %v6583 = vadd.f32 0.0, %v6582
    %v6584 = vpop.f32.mrf.mxu0
    %v6585 = vpop.f32.mrf.mxu0
    %v6586 = vadd.f32 0.0, %v6585
    %v6587 = vpop.f32.mrf.mxu0
    %6588 = vmatprep.mubr.bf16.mxu0 0
    %6589 = vmatmul.mubr.bf16.gmra.mxu0 %v6463
    %v6590 = vpop.f32.mrf.mxu0
    %v6591 = vadd.f32 0.0, %v6590
    %v6592 = vpop.f32.mrf.mxu0
    %v6593 = vpop.f32.mrf.mxu0
    %v6594 = vadd.f32 0.0, %v6593
    %v6595 = vpop.f32.mrf.mxu0
    %6596 = vmatprep.mubr.bf16.mxu0 0
    %6597 = vmatmul.mubr.bf16.gmra.mxu0 %v6464
    %v6598 = vpop.f32.mrf.mxu0
    %v6599 = vadd.f32 0.0, %v6598
    %v6600 = vpop.f32.mrf.mxu0
    %v6601 = vpop.f32.mrf.mxu0
    %v6602 = vadd.f32 0.0, %v6601
    %v6603 = vpop.f32.mrf.mxu0
    %6604 = vmatprep.mubr.bf16.mxu0 0
    %6605 = vmatmul.mubr.bf16.gmra.mxu0 %v6465
    %v6606 = vpop.f32.mrf.mxu0
    %v6607 = vadd.f32 0.0, %v6606
    %v6608 = vpop.f32.mrf.mxu0
    %v6609 = vpop.f32.mrf.mxu0
    %v6610 = vadd.f32 0.0, %v6609
    %v6611 = vpop.f32.mrf.mxu0
    %6612 = vmatprep.mubr.bf16.mxu0 0
    %6613 = vmatmul.mubr.bf16.gmra.mxu0 %v6466
    %v6614 = vpop.f32.mrf.mxu0
    %v6615 = vadd.f32 0.0, %v6614
    %v6616 = vpop.f32.mrf.mxu0
    %v6617 = vpop.f32.mrf.mxu0
    %v6618 = vadd.f32 0.0, %v6617
    %v6619 = vpop.f32.mrf.mxu0
    %6620 = vmatprep.mubr.bf16.mxu0 0
    %6621 = vmatmul.mubr.bf16.gmra.mxu0 %v6467
    %v6622 = vpop.f32.mrf.mxu0
    %v6623 = vadd.f32 0.0, %v6622
    %v6624 = vpop.f32.mrf.mxu0
    %v6625 = vpop.f32.mrf.mxu0
    %v6626 = vadd.f32 0.0, %v6625
    %v6627 = vpop.f32.mrf.mxu0
    %6628 = vdwg.mxu0
    %v6629 = vld [vmem:[%s8 + $0x6] sm:$0x1]
    %vm6630 = vcmask 23552
    %v6631 = vsel %vm6630, %v6567, 0.0
    %v6632 = vsel %vm6630, %v6570, 0.0
    %v6633 = vadd.f32 %v6631, %v6632
    %v6634 = vsel %vm6630, %v6575, 0.0
    %v6635 = vadd.f32 %v6633, %v6634
    %v6636 = vsel %vm6630, %v6578, 0.0
    %v6637 = vadd.f32 %v6635, %v6636
    %v6638 = vsel %vm6630, %v6583, 0.0
    %v6639 = vadd.f32 %v6637, %v6638
    %v6640 = vsel %vm6630, %v6586, 0.0
    %v6641 = vadd.f32 %v6639, %v6640
    %v6642 = vsel %vm6630, %v6591, 0.0
    %v6643 = vadd.f32 %v6641, %v6642
    %v6644 = vsel %vm6630, %v6594, 0.0
    %v6645 = vadd.f32 %v6643, %v6644
    %v6646 = vsel %vm6630, %v6599, 0.0
    %v6647 = vadd.f32 %v6645, %v6646
    %v6648 = vsel %vm6630, %v6602, 0.0
    %v6649 = vadd.f32 %v6647, %v6648
    %v6650 = vsel %vm6630, %v6607, 0.0
    %v6651 = vadd.f32 %v6649, %v6650
    %v6652 = vsel %vm6630, %v6610, 0.0
    %v6653 = vadd.f32 %v6651, %v6652
    %v6654 = vsel %vm6630, %v6615, 0.0
    %v6655 = vadd.f32 %v6653, %v6654
    %v6656 = vsel %vm6630, %v6618, 0.0
    %v6657 = vadd.f32 %v6655, %v6656
    %v6658 = vsel %vm6630, %v6623, 0.0
    %v6659 = vadd.f32 %v6657, %v6658
    %v6660 = vsel %vm6630, %v6626, 0.0
    %v6661 = vadd.f32 %v6659, %v6660
    %v6662 = vrot.slane %v6661, 4
    %v6663 = vadd.f32 %v6661, %v6662
    %v6664 = vrot.slane %v6663, 2
    %v6665 = vadd.f32 %v6663, %v6664
    %v6666 = vrot.slane %v6665, 1
    %v6667 = vadd.f32 %v6665, %v6666
    %v6668 = vmul.f32 %v6667, %v2256
    %v6669 = vmul.f32 %v6567, %v6567
    %v6670 = vmul.f32 %v6570, %v6570
    %v6671 = vmul.f32 %v6575, %v6575
    %v6672 = vmul.f32 %v6578, %v6578
    %v6673 = vmul.f32 %v6583, %v6583
    %v6674 = vmul.f32 %v6586, %v6586
    %v6675 = vmul.f32 %v6591, %v6591
    %v6676 = vmul.f32 %v6594, %v6594
    %v6677 = vmul.f32 %v6599, %v6599
    %v6678 = vmul.f32 %v6602, %v6602
    %v6679 = vmul.f32 %v6607, %v6607
    %v6680 = vmul.f32 %v6610, %v6610
    %v6681 = vmul.f32 %v6615, %v6615
    %v6682 = vmul.f32 %v6618, %v6618
    %v6683 = vmul.f32 %v6623, %v6623
    %v6684 = vmul.f32 %v6626, %v6626
    %v6685 = vsel %vm6630, %v6669, 0.0
    %v6686 = vsel %vm6630, %v6670, 0.0
    %v6687 = vadd.f32 %v6685, %v6686
    %v6688 = vsel %vm6630, %v6671, 0.0
    %v6689 = vadd.f32 %v6687, %v6688
    %v6690 = vsel %vm6630, %v6672, 0.0
    %v6691 = vadd.f32 %v6689, %v6690
    %v6692 = vsel %vm6630, %v6673, 0.0
    %v6693 = vadd.f32 %v6691, %v6692
    %v6694 = vsel %vm6630, %v6674, 0.0
    %v6695 = vadd.f32 %v6693, %v6694
    %v6696 = vsel %vm6630, %v6675, 0.0
    %v6697 = vadd.f32 %v6695, %v6696
    %v6698 = vsel %vm6630, %v6676, 0.0
    %v6699 = vadd.f32 %v6697, %v6698
    %v6700 = vsel %vm6630, %v6677, 0.0
    %v6701 = vadd.f32 %v6699, %v6700
    %v6702 = vsel %vm6630, %v6678, 0.0
    %v6703 = vadd.f32 %v6701, %v6702
    %v6704 = vsel %vm6630, %v6679, 0.0
    %v6705 = vadd.f32 %v6703, %v6704
    %v6706 = vsel %vm6630, %v6680, 0.0
    %v6707 = vadd.f32 %v6705, %v6706
    %v6708 = vsel %vm6630, %v6681, 0.0
    %v6709 = vadd.f32 %v6707, %v6708
    %v6710 = vsel %vm6630, %v6682, 0.0
    %v6711 = vadd.f32 %v6709, %v6710
    %v6712 = vsel %vm6630, %v6683, 0.0
    %v6713 = vadd.f32 %v6711, %v6712
    %v6714 = vsel %vm6630, %v6684, 0.0
    %v6715 = vadd.f32 %v6713, %v6714
    %v6716 = vrot.slane %v6715, 4
    %v6717 = vadd.f32 %v6715, %v6716
    %v6718 = vrot.slane %v6717, 2
    %v6719 = vadd.f32 %v6717, %v6718
    %v6720 = vrot.slane %v6719, 1
    %v6721 = vadd.f32 %v6719, %v6720
    %v6722 = vmul.f32 %v6721, %v2256
    %v6723 = vmul.f32 %v6668, %v6668
    %v6724 = vsub.f32 %v6722, %v6723
    %v6725 = vmax.f32 %v6724, 0.0
    %v6726 = vadd.f32 %v6725, 1e-05
    %v6727 = vrsqrt.pop %v6726
    %v6728 = vmul.f32 %v6629, %v6727
    %v6729 = vlaneseq
    %v6730 = vshrl.u32 %v6729, 7
    %v6731 = vsub.s32 0, %v6730
    %v6732 = vrot.slane %v6728, %v6731
    %v6733 = vmul.f32 %v6567, %v6732
    %v6734 = vmul.f32 %v6570, %v6732
    %v6735 = vmul.f32 %v6575, %v6732
    %v6736 = vmul.f32 %v6578, %v6732
    %v6737 = vmul.f32 %v6583, %v6732
    %v6738 = vmul.f32 %v6586, %v6732
    %v6739 = vmul.f32 %v6591, %v6732
    %v6740 = vmul.f32 %v6594, %v6732
    %v6741 = vmul.f32 %v6599, %v6732
    %v6742 = vmul.f32 %v6602, %v6732
    %v6743 = vmul.f32 %v6607, %v6732
    %v6744 = vmul.f32 %v6610, %v6732
    %v6745 = vmul.f32 %v6615, %v6732
    %v6746 = vmul.f32 %v6618, %v6732
    %v6747 = vmul.f32 %v6623, %v6732
    %v6748 = vmul.f32 %v6626, %v6732
    %v6749 = vmul.f32 %v6668, %v6728
    %6751 = vrot.lane.b32.xlu0 %v6749, 3
    %v6752 = vpop.permute.xlu0 %6751
    %v6754 = vsub.f32 %v6629, %v6752
    %v6755 = vlaneseq
    %v6756 = vshrl.u32 %v6755, 7
    %v6757 = vsub.s32 0, %v6756
    %v6758 = vrot.slane %v6754, %v6757
    %6760 = vrot.lane.b32.xlu0 %v6758, 125
    %v6761 = vpop.permute.xlu0 %6760
    %v6763 = vadd.f32 %v6733, %v6761
    %v6764 = vadd.f32 %v6734, %v6761
    %v6765 = vadd.f32 %v6735, %v6761
    %v6766 = vadd.f32 %v6736, %v6761
    %v6767 = vadd.f32 %v6737, %v6761
    %v6768 = vadd.f32 %v6738, %v6761
    %v6769 = vadd.f32 %v6739, %v6761
    %v6770 = vadd.f32 %v6740, %v6761
    %v6771 = vadd.f32 %v6741, %v6761
    %v6772 = vadd.f32 %v6742, %v6761
    %v6773 = vadd.f32 %v6743, %v6761
    %v6774 = vadd.f32 %v6744, %v6761
    %v6775 = vadd.f32 %v6745, %v6761
    %v6776 = vadd.f32 %v6746, %v6761
    %v6777 = vadd.f32 %v6747, %v6761
    %v6778 = vadd.f32 %v6748, %v6761
    %v6779 = vmax.f32 %v6763, 0.0
    %v6780 = vmax.f32 %v6764, 0.0
    %v6781 = vmax.f32 %v6765, 0.0
    %v6782 = vmax.f32 %v6766, 0.0
    %v6783 = vmax.f32 %v6767, 0.0
    %v6784 = vmax.f32 %v6768, 0.0
    %v6785 = vmax.f32 %v6769, 0.0
    %v6786 = vmax.f32 %v6770, 0.0
    %v6787 = vmax.f32 %v6771, 0.0
    %v6788 = vmax.f32 %v6772, 0.0
    %v6789 = vmax.f32 %v6773, 0.0
    %v6790 = vmax.f32 %v6774, 0.0
    %v6791 = vmax.f32 %v6775, 0.0
    %v6792 = vmax.f32 %v6776, 0.0
    %v6793 = vmax.f32 %v6777, 0.0
    %v6794 = vmax.f32 %v6778, 0.0
    %v6795 = vld [vmem:[%s6] sm:$0xff]
    %v6796 = vld [vmem:[%s6 + $0x8] sm:$0xff]
    %v6797 = vld [vmem:[%s6 + $0x10] sm:$0xff]
    %v6798 = vld [vmem:[%s6 + $0x18] sm:$0xff]
    %v6799 = vld [vmem:[%s6 + $0x20] sm:$0xff]
    %v6800 = vld [vmem:[%s6 + $0x28] sm:$0xff]
    %v6801 = vld [vmem:[%s6 + $0x30] sm:$0xff]
    %v6802 = vld [vmem:[%s6 + $0x38] sm:$0xff]
    %v6803 = vld [vmem:[%s6 + $0x40] sm:$0xff]
    %v6804 = vld [vmem:[%s6 + $0x48] sm:$0xff]
    %v6805 = vld [vmem:[%s6 + $0x50] sm:$0xff]
    %v6806 = vld [vmem:[%s6 + $0x58] sm:$0xff]
    %v6807 = vld [vmem:[%s6 + $0x60] sm:$0xff]
    %v6808 = vld [vmem:[%s6 + $0x68] sm:$0xff]
    %v6809 = vld [vmem:[%s6 + $0x70] sm:$0xff]
    %v6810 = vld [vmem:[%s6 + $0x78] sm:$0xff]
    %v6811 = vld [vmem:[%s7] sm:$0xff]
    %v6812 = vld [vmem:[%s7 + $0x8] sm:$0xff]
    %v6813 = vld [vmem:[%s7 + $0x10] sm:$0xff]
    %v6814 = vld [vmem:[%s7 + $0x18] sm:$0xff]
    %v6815 = vld [vmem:[%s7 + $0x20] sm:$0xff]
    %v6816 = vld [vmem:[%s7 + $0x28] sm:$0xff]
    %v6817 = vld [vmem:[%s7 + $0x30] sm:$0xff]
    %v6818 = vld [vmem:[%s7 + $0x38] sm:$0xff]
    %v6819 = vld [vmem:[%s7 + $0x40] sm:$0xff]
    %v6820 = vld [vmem:[%s7 + $0x48] sm:$0xff]
    %v6821 = vld [vmem:[%s7 + $0x50] sm:$0xff]
    %v6822 = vld [vmem:[%s7 + $0x58] sm:$0xff]
    %v6823 = vld [vmem:[%s7 + $0x60] sm:$0xff]
    %v6824 = vld [vmem:[%s7 + $0x68] sm:$0xff]
    %v6825 = vld [vmem:[%s7 + $0x70] sm:$0xff]
    %v6826 = vld [vmem:[%s7 + $0x78] sm:$0xff]
    %v6827 = vld [vmem:[%s9] ss:$2 sm:$0x3]
    %s6828 = scalar_lea.vmem %s9, 1
    %v6829 = vld [vmem:[%s6828] ss:$2 sm:$0x3]
    %v6830 = vld [vmem:[%s8 + $0x7] sm:$0x1]
    %6832 = vset.pattern.permute.xlu0 0
    %6833 = vperm.xlu0 %6832, %v6779
    %v6834 = vpop.permute.xlu0 %6833
    %6837 = vset.pattern.permute.xlu0 0
    %6838 = vperm.xlu0 %6837, %v6780
    %v6839 = vpop.permute.xlu0 %6838
    %6842 = vset.pattern.permute.xlu0 0
    %6843 = vperm.xlu0 %6842, %v6781
    %v6844 = vpop.permute.xlu0 %6843
    %6847 = vset.pattern.permute.xlu0 0
    %6848 = vperm.xlu0 %6847, %v6782
    %v6849 = vpop.permute.xlu0 %6848
    %6852 = vset.pattern.permute.xlu0 0
    %6853 = vperm.xlu0 %6852, %v6783
    %v6854 = vpop.permute.xlu0 %6853
    %6857 = vset.pattern.permute.xlu0 0
    %6858 = vperm.xlu0 %6857, %v6784
    %v6859 = vpop.permute.xlu0 %6858
    %6862 = vset.pattern.permute.xlu0 0
    %6863 = vperm.xlu0 %6862, %v6785
    %v6864 = vpop.permute.xlu0 %6863
    %6867 = vset.pattern.permute.xlu0 0
    %6868 = vperm.xlu0 %6867, %v6786
    %v6869 = vpop.permute.xlu0 %6868
    %v6871 = vmul.f32 %v6834, %v6795
    %v6872 = vmul.f32 %v6839, %v6796
    %v6873 = vmul.f32 %v6844, %v6797
    %v6874 = vmul.f32 %v6849, %v6798
    %v6875 = vmul.f32 %v6854, %v6799
    %v6876 = vmul.f32 %v6859, %v6800
    %v6877 = vmul.f32 %v6864, %v6801
    %v6878 = vmul.f32 %v6869, %v6802
    %6879 = vset.pattern.permute.xlu0 1
    %6880 = vperm.xlu0 %6879, %v6779
    %v6881 = vpop.permute.xlu0 %6880
    %6883 = vset.pattern.permute.xlu0 1
    %6884 = vperm.xlu0 %6883, %v6780
    %v6885 = vpop.permute.xlu0 %6884
    %6887 = vset.pattern.permute.xlu0 1
    %6888 = vperm.xlu0 %6887, %v6781
    %v6889 = vpop.permute.xlu0 %6888
    %6891 = vset.pattern.permute.xlu0 1
    %6892 = vperm.xlu0 %6891, %v6782
    %v6893 = vpop.permute.xlu0 %6892
    %6895 = vset.pattern.permute.xlu0 1
    %6896 = vperm.xlu0 %6895, %v6783
    %v6897 = vpop.permute.xlu0 %6896
    %6899 = vset.pattern.permute.xlu0 1
    %6900 = vperm.xlu0 %6899, %v6784
    %v6901 = vpop.permute.xlu0 %6900
    %6903 = vset.pattern.permute.xlu0 1
    %6904 = vperm.xlu0 %6903, %v6785
    %v6905 = vpop.permute.xlu0 %6904
    %6907 = vset.pattern.permute.xlu0 1
    %6908 = vperm.xlu0 %6907, %v6786
    %v6909 = vpop.permute.xlu0 %6908
    %v6911 = vmul.f32 %v6881, %v6803
    %v6912 = vmul.f32 %v6885, %v6804
    %v6913 = vmul.f32 %v6889, %v6805
    %v6914 = vmul.f32 %v6893, %v6806
    %v6915 = vmul.f32 %v6897, %v6807
    %v6916 = vmul.f32 %v6901, %v6808
    %v6917 = vmul.f32 %v6905, %v6809
    %v6918 = vmul.f32 %v6909, %v6810
    %v6919 = vadd.f32 %v6871, %v6911
    %v6920 = vadd.f32 %v6872, %v6912
    %v6921 = vadd.f32 %v6873, %v6913
    %v6922 = vadd.f32 %v6874, %v6914
    %v6923 = vadd.f32 %v6875, %v6915
    %v6924 = vadd.f32 %v6876, %v6916
    %v6925 = vadd.f32 %v6877, %v6917
    %v6926 = vadd.f32 %v6878, %v6918
    %vm6927 = vcmask 261120
    %v6928 = vsel %vm6927, %v6919, 0.0
    %v6929 = vsel %vm6927, %v6920, 0.0
    %v6930 = vadd.f32 %v6928, %v6929
    %v6931 = vsel %vm6927, %v6921, 0.0
    %v6932 = vadd.f32 %v6930, %v6931
    %v6933 = vsel %vm6927, %v6922, 0.0
    %v6934 = vadd.f32 %v6932, %v6933
    %v6935 = vsel %vm6927, %v6923, 0.0
    %v6936 = vadd.f32 %v6934, %v6935
    %v6937 = vsel %vm6927, %v6924, 0.0
    %v6938 = vadd.f32 %v6936, %v6937
    %v6939 = vsel %vm6927, %v6925, 0.0
    %v6940 = vadd.f32 %v6938, %v6939
    %v6941 = vsel %vm6927, %v6926, 0.0
    %v6942 = vadd.f32 %v6940, %v6941
    %v6943 = vrot.slane %v6942, 4
    %v6944 = vadd.f32 %v6942, %v6943
    %v6945 = vrot.slane %v6944, 2
    %v6946 = vadd.f32 %v6944, %v6945
    %v6947 = vrot.slane %v6946, 1
    %v6948 = vadd.f32 %v6946, %v6947
    %v6949 = vadd.f32 %v6948, %v6830
    %vm6950 = vcmask 253952
    %6951 = vst.msk [vmem:[#allocation6] sm:$0x1] %vm6950, %v6949
    %6952 = vset.pattern.permute.xlu0 2
    %6953 = vperm.xlu0 %6952, %v6779
    %v6954 = vpop.permute.xlu0 %6953
    %6956 = vset.pattern.permute.xlu0 2
    %6957 = vperm.xlu0 %6956, %v6780
    %v6958 = vpop.permute.xlu0 %6957
    %6960 = vset.pattern.permute.xlu0 2
    %6961 = vperm.xlu0 %6960, %v6781
    %v6962 = vpop.permute.xlu0 %6961
    %6964 = vset.pattern.permute.xlu0 2
    %6965 = vperm.xlu0 %6964, %v6782
    %v6966 = vpop.permute.xlu0 %6965
    %6968 = vset.pattern.permute.xlu0 2
    %6969 = vperm.xlu0 %6968, %v6783
    %v6970 = vpop.permute.xlu0 %6969
    %6972 = vset.pattern.permute.xlu0 2
    %6973 = vperm.xlu0 %6972, %v6784
    %v6974 = vpop.permute.xlu0 %6973
    %6976 = vset.pattern.permute.xlu0 2
    %6977 = vperm.xlu0 %6976, %v6785
    %v6978 = vpop.permute.xlu0 %6977
    %6980 = vset.pattern.permute.xlu0 2
    %6981 = vperm.xlu0 %6980, %v6786
    %v6982 = vpop.permute.xlu0 %6981
    %v6984 = vmul.f32 %v6954, %v6811
    %v6985 = vmul.f32 %v6954, %v6812
    %v6986 = vmul.f32 %v6958, %v6813
    %v6987 = vmul.f32 %v6958, %v6814
    %v6988 = vmul.f32 %v6962, %v6815
    %v6989 = vmul.f32 %v6962, %v6816
    %v6990 = vmul.f32 %v6966, %v6817
    %v6991 = vmul.f32 %v6966, %v6818
    %v6992 = vmul.f32 %v6970, %v6819
    %v6993 = vmul.f32 %v6970, %v6820
    %v6994 = vmul.f32 %v6974, %v6821
    %v6995 = vmul.f32 %v6974, %v6822
    %v6996 = vmul.f32 %v6978, %v6823
    %v6997 = vmul.f32 %v6978, %v6824
    %v6998 = vmul.f32 %v6982, %v6825
    %v6999 = vmul.f32 %v6982, %v6826
    %v7000 = vadd.f32 %v6984, %v6986
    %v7001 = vadd.f32 %v7000, %v6988
    %v7002 = vadd.f32 %v7001, %v6990
    %v7003 = vadd.f32 %v7002, %v6992
    %v7004 = vadd.f32 %v7003, %v6994
    %v7005 = vadd.f32 %v7004, %v6996
    %v7006 = vadd.f32 %v7005, %v6998
    %v7007 = vrot.slane %v7006, 4
    %v7008 = vadd.f32 %v7006, %v7007
    %v7009 = vrot.slane %v7008, 2
    %v7010 = vadd.f32 %v7008, %v7009
    %v7011 = vrot.slane %v7010, 1
    %v7012 = vadd.f32 %v7010, %v7011
    %v7013 = vadd.f32 %v6985, %v6987
    %v7014 = vadd.f32 %v7013, %v6989
    %v7015 = vadd.f32 %v7014, %v6991
    %v7016 = vadd.f32 %v7015, %v6993
    %v7017 = vadd.f32 %v7016, %v6995
    %v7018 = vadd.f32 %v7017, %v6997
    %v7019 = vadd.f32 %v7018, %v6999
    %v7020 = vrot.slane %v7019, 4
    %v7021 = vadd.f32 %v7019, %v7020
    %v7022 = vrot.slane %v7021, 2
    %v7023 = vadd.f32 %v7021, %v7022
    %v7024 = vrot.slane %v7023, 1
    %v7025 = vadd.f32 %v7023, %v7024
    %v7027 = vlaneseq
    %v7028 = vshrl.u32 %v7027, 7
    %v7029 = vsub.s32 0, %v7028
    %v7030 = vrot.slane %v6827, %v7029
    %v7031 = vlaneseq
    %v7032 = vshrl.u32 %v7031, 7
    %v7033 = vsub.s32 1, %v7032
    %v7034 = vrot.slane %v6827, %v7033
    %v7037 = vadd.f32 %v7012, %v7030
    %v7038 = vadd.f32 %v7025, %v7034
    %v7039 = vmax.f32 %v7037, 0.0
    %v7040 = vmax.f32 %v7038, 0.0
    %v7042 = vlaneseq
    %v7043 = vshrl.u32 %v7042, 7
    %v7044 = vsub.s32 0, %v7043
    %v7045 = vrot.slane %v6829, %v7044
    %v7046 = vlaneseq
    %v7047 = vshrl.u32 %v7046, 7
    %v7048 = vsub.s32 1, %v7047
    %v7049 = vrot.slane %v6829, %v7048
    %v7052 = vmul.f32 %v7039, %v7045
    %v7053 = vmul.f32 %v7040, %v7049
    %vm7054 = vcmask 1040384
    %v7055 = vsel %vm7054, %v7052, 0.0
    %v7056 = vsel %vm7054, %v7053, 0.0
    %v7057 = vadd.f32 %v7055, %v7056
    %7058 = vadd.xlane.f32.xlu0 %v7057
    %v7059 = vpop.xlane.xlu0 %7058
    %v7060 = vadd.f32 %v7059, %v6629
    %v7061 = vtanh.pop %v7060
    %7063 = vrot.lane.b32.xlu0 %v7061, 122
    %v7064 = vpop.permute.xlu0 %7063
    %vm7066 = vcmask 0
    %7067 = vst.msk [vmem:[%s11] sm:$0x1] %vm7066, %v7064
    %7069 = vset.pattern.permute.xlu0 0
    %7070 = vperm.xlu0 %7069, %v6787
    %v7071 = vpop.permute.xlu0 %7070
    %7074 = vset.pattern.permute.xlu0 0
    %7075 = vperm.xlu0 %7074, %v6788
    %v7076 = vpop.permute.xlu0 %7075
    %7079 = vset.pattern.permute.xlu0 0
    %7080 = vperm.xlu0 %7079, %v6789
    %v7081 = vpop.permute.xlu0 %7080
    %7084 = vset.pattern.permute.xlu0 0
    %7085 = vperm.xlu0 %7084, %v6790
    %v7086 = vpop.permute.xlu0 %7085
    %7089 = vset.pattern.permute.xlu0 0
    %7090 = vperm.xlu0 %7089, %v6791
    %v7091 = vpop.permute.xlu0 %7090
    %7094 = vset.pattern.permute.xlu0 0
    %7095 = vperm.xlu0 %7094, %v6792
    %v7096 = vpop.permute.xlu0 %7095
    %7099 = vset.pattern.permute.xlu0 0
    %7100 = vperm.xlu0 %7099, %v6793
    %v7101 = vpop.permute.xlu0 %7100
    %7104 = vset.pattern.permute.xlu0 0
    %7105 = vperm.xlu0 %7104, %v6794
    %v7106 = vpop.permute.xlu0 %7105
    %v7108 = vmul.f32 %v7071, %v6795
    %v7109 = vmul.f32 %v7076, %v6796
    %v7110 = vmul.f32 %v7081, %v6797
    %v7111 = vmul.f32 %v7086, %v6798
    %v7112 = vmul.f32 %v7091, %v6799
    %v7113 = vmul.f32 %v7096, %v6800
    %v7114 = vmul.f32 %v7101, %v6801
    %v7115 = vmul.f32 %v7106, %v6802
    %7116 = vset.pattern.permute.xlu0 1
    %7117 = vperm.xlu0 %7116, %v6787
    %v7118 = vpop.permute.xlu0 %7117
    %7120 = vset.pattern.permute.xlu0 1
    %7121 = vperm.xlu0 %7120, %v6788
    %v7122 = vpop.permute.xlu0 %7121
    %7124 = vset.pattern.permute.xlu0 1
    %7125 = vperm.xlu0 %7124, %v6789
    %v7126 = vpop.permute.xlu0 %7125
    %7128 = vset.pattern.permute.xlu0 1
    %7129 = vperm.xlu0 %7128, %v6790
    %v7130 = vpop.permute.xlu0 %7129
    %7132 = vset.pattern.permute.xlu0 1
    %7133 = vperm.xlu0 %7132, %v6791
    %v7134 = vpop.permute.xlu0 %7133
    %7136 = vset.pattern.permute.xlu0 1
    %7137 = vperm.xlu0 %7136, %v6792
    %v7138 = vpop.permute.xlu0 %7137
    %7140 = vset.pattern.permute.xlu0 1
    %7141 = vperm.xlu0 %7140, %v6793
    %v7142 = vpop.permute.xlu0 %7141
    %7144 = vset.pattern.permute.xlu0 1
    %7145 = vperm.xlu0 %7144, %v6794
    %v7146 = vpop.permute.xlu0 %7145
    %v7148 = vmul.f32 %v7118, %v6803
    %v7149 = vmul.f32 %v7122, %v6804
    %v7150 = vmul.f32 %v7126, %v6805
    %v7151 = vmul.f32 %v7130, %v6806
    %v7152 = vmul.f32 %v7134, %v6807
    %v7153 = vmul.f32 %v7138, %v6808
    %v7154 = vmul.f32 %v7142, %v6809
    %v7155 = vmul.f32 %v7146, %v6810
    %v7156 = vadd.f32 %v7108, %v7148
    %v7157 = vadd.f32 %v7109, %v7149
    %v7158 = vadd.f32 %v7110, %v7150
    %v7159 = vadd.f32 %v7111, %v7151
    %v7160 = vadd.f32 %v7112, %v7152
    %v7161 = vadd.f32 %v7113, %v7153
    %v7162 = vadd.f32 %v7114, %v7154
    %v7163 = vadd.f32 %v7115, %v7155
    %v7164 = vsel %vm6927, %v7156, 0.0
    %v7165 = vsel %vm6927, %v7157, 0.0
    %v7166 = vadd.f32 %v7164, %v7165
    %v7167 = vsel %vm6927, %v7158, 0.0
    %v7168 = vadd.f32 %v7166, %v7167
    %v7169 = vsel %vm6927, %v7159, 0.0
    %v7170 = vadd.f32 %v7168, %v7169
    %v7171 = vsel %vm6927, %v7160, 0.0
    %v7172 = vadd.f32 %v7170, %v7171
    %v7173 = vsel %vm6927, %v7161, 0.0
    %v7174 = vadd.f32 %v7172, %v7173
    %v7175 = vsel %vm6927, %v7162, 0.0
    %v7176 = vadd.f32 %v7174, %v7175
    %v7177 = vsel %vm6927, %v7163, 0.0
    %v7178 = vadd.f32 %v7176, %v7177
    %v7179 = vrot.slane %v7178, 4
    %v7180 = vadd.f32 %v7178, %v7179
    %v7181 = vrot.slane %v7180, 2
    %v7182 = vadd.f32 %v7180, %v7181
    %v7183 = vrot.slane %v7182, 1
    %v7184 = vadd.f32 %v7182, %v7183
    %v7185 = vadd.f32 %v7184, %v6830
    %7186 = vst.msk [vmem:[#allocation6 + $0x1] sm:$0x1] %vm6950, %v7185
    %7187 = vset.pattern.permute.xlu0 2
    %7188 = vperm.xlu0 %7187, %v6787
    %v7189 = vpop.permute.xlu0 %7188
    %7191 = vset.pattern.permute.xlu0 2
    %7192 = vperm.xlu0 %7191, %v6788
    %v7193 = vpop.permute.xlu0 %7192
    %7195 = vset.pattern.permute.xlu0 2
    %7196 = vperm.xlu0 %7195, %v6789
    %v7197 = vpop.permute.xlu0 %7196
    %7199 = vset.pattern.permute.xlu0 2
    %7200 = vperm.xlu0 %7199, %v6790
    %v7201 = vpop.permute.xlu0 %7200
    %7203 = vset.pattern.permute.xlu0 2
    %7204 = vperm.xlu0 %7203, %v6791
    %v7205 = vpop.permute.xlu0 %7204
    %7207 = vset.pattern.permute.xlu0 2
    %7208 = vperm.xlu0 %7207, %v6792
    %v7209 = vpop.permute.xlu0 %7208
    %7211 = vset.pattern.permute.xlu0 2
    %7212 = vperm.xlu0 %7211, %v6793
    %v7213 = vpop.permute.xlu0 %7212
    %7215 = vset.pattern.permute.xlu0 2
    %7216 = vperm.xlu0 %7215, %v6794
    %v7217 = vpop.permute.xlu0 %7216
    %v7219 = vmul.f32 %v7189, %v6811
    %v7220 = vmul.f32 %v7189, %v6812
    %v7221 = vmul.f32 %v7193, %v6813
    %v7222 = vmul.f32 %v7193, %v6814
    %v7223 = vmul.f32 %v7197, %v6815
    %v7224 = vmul.f32 %v7197, %v6816
    %v7225 = vmul.f32 %v7201, %v6817
    %v7226 = vmul.f32 %v7201, %v6818
    %v7227 = vmul.f32 %v7205, %v6819
    %v7228 = vmul.f32 %v7205, %v6820
    %v7229 = vmul.f32 %v7209, %v6821
    %v7230 = vmul.f32 %v7209, %v6822
    %v7231 = vmul.f32 %v7213, %v6823
    %v7232 = vmul.f32 %v7213, %v6824
    %v7233 = vmul.f32 %v7217, %v6825
    %v7234 = vmul.f32 %v7217, %v6826
    %v7235 = vadd.f32 %v7219, %v7221
    %v7236 = vadd.f32 %v7235, %v7223
    %v7237 = vadd.f32 %v7236, %v7225
    %v7238 = vadd.f32 %v7237, %v7227
    %v7239 = vadd.f32 %v7238, %v7229
    %v7240 = vadd.f32 %v7239, %v7231
    %v7241 = vadd.f32 %v7240, %v7233
    %v7242 = vrot.slane %v7241, 4
    %v7243 = vadd.f32 %v7241, %v7242
    %v7244 = vrot.slane %v7243, 2
    %v7245 = vadd.f32 %v7243, %v7244
    %v7246 = vrot.slane %v7245, 1
    %v7247 = vadd.f32 %v7245, %v7246
    %v7248 = vadd.f32 %v7220, %v7222
    %v7249 = vadd.f32 %v7248, %v7224
    %v7250 = vadd.f32 %v7249, %v7226
    %v7251 = vadd.f32 %v7250, %v7228
    %v7252 = vadd.f32 %v7251, %v7230
    %v7253 = vadd.f32 %v7252, %v7232
    %v7254 = vadd.f32 %v7253, %v7234
    %v7255 = vrot.slane %v7254, 4
    %v7256 = vadd.f32 %v7254, %v7255
    %v7257 = vrot.slane %v7256, 2
    %v7258 = vadd.f32 %v7256, %v7257
    %v7259 = vrot.slane %v7258, 1
    %v7260 = vadd.f32 %v7258, %v7259
    %v7261 = vadd.f32 %v7247, %v7030
    %v7262 = vadd.f32 %v7260, %v7034
    %v7263 = vmax.f32 %v7261, 0.0
    %v7264 = vmax.f32 %v7262, 0.0
    %v7265 = vmul.f32 %v7263, %v7045
    %v7266 = vmul.f32 %v7264, %v7049
    %v7267 = vsel %vm7054, %v7265, 0.0
    %v7268 = vsel %vm7054, %v7266, 0.0
    %v7269 = vadd.f32 %v7267, %v7268
    %7270 = vadd.xlane.f32.xlu0 %v7269
    %v7271 = vpop.xlane.xlu0 %7270
    %v7272 = vadd.f32 %v7271, %v6629
    %v7273 = vtanh.pop %v7272
    %7275 = vrot.lane.b32.xlu0 %v7273, 122
    %v7276 = vpop.permute.xlu0 %7275
    %7278 = vst.msk [vmem:[%s11 + $0x1] sm:$0x1] %vm7066, %v7276
    // Predicated region
    $region42: #{alphazero_forward.1} parent=1 // pred_check
      _
    $region43: #{alphazero_forward.1} parent=1 // pred_check_branch
      %7280 = sbr.rel (0) target = $region45
    $region44: #{alphazero_forward.1} parent=1 // pred_region
      %s7282 = ssub.s32 32, 32
      %7283 = vsyncadd [#allocation7], %s7282
      %s7285 = sshll.u32 [#allocation6], 4
      %s7286 = int_to_ptr.vmem [resolvable:$true] %s7285
      %7288 = dma.vmem_to_hbm [thread:$0]  %s7286, 32, %s10, [#allocation7]
    $region45: #{alphazero_forward.1} parent=1 // pred_fallthru
      _
    // Predicated region
    $region46: #{alphazero_forward.1} parent=1 // pred_check
      _
    $region47: #{alphazero_forward.1} parent=1 // pred_check_branch
      %7290 = sbr.rel (0) target = $region49
    $region48: #{alphazero_forward.1} parent=1 // pred_region
      _
    $region49: #{alphazero_forward.1} parent=1 // pred_fallthru
      _
    // Predicated region
    $region50: #{alphazero_forward.1} parent=1 // pred_check
      _
    $region51: #{alphazero_forward.1} parent=1 // pred_check_branch
      %7292 = sbr.rel (0) target = $region53
    $region52: #{alphazero_forward.1} parent=1 // pred_region
      %7293 = dma.done [#allocation7], 32
    $region53: #{alphazero_forward.1} parent=1 // pred_fallthru
      _
    // Predicated region
    $region54: #{alphazero_forward.1} parent=1 // pred_check
      _
    $region55: #{alphazero_forward.1} parent=1 // pred_check_branch
      %7295 = sbr.rel (0) target = $region57
    $region56: #{alphazero_forward.1} parent=1 // pred_region
      _
    $region57: #{alphazero_forward.1} parent=1 // pred_fallthru
      _
    %7296 = vsyncpa [#allocation7], 1
  %7297 = vsyncmov [#allocation4]
  %s7298 = vpop.sfrf %7297
  %p7299 = scmp.eq.s32.totalorder %s7298, 0
  %p7300 = pneg %p7299
  %7302 = shalt.err (%p7300)
  %s7303 = scalar_lea.sflag [#allocation4], 1
  %7304 = vsyncmov %s7303
  %s7305 = vpop.sfrf %7304
  %p7306 = scmp.eq.s32.totalorder %s7305, 0
  %p7307 = pneg %p7306
  %7309 = shalt.err (%p7307)

</llo_original>
